<compile_context>
chip_gen: v7x
topology: tpu7x:2x2x1
jax: 0.10.0
libtpu: 0.0.40
codegen_flags: <defaults>
</compile_context>

<pallas_src>
import math
from functools import partial

import numpy as np
import jax
import jax.numpy as jnp
from jax.experimental import pallas as pl
from jax.experimental.pallas import tpu as pltpu


# ----------------------------------------------------------------------------
# Conv kernels (batch folded into M; taps accumulated in-kernel; bf16 MXU)
# ----------------------------------------------------------------------------

def _conv_accum(x_ref, w_ref, taps, w_stride, hw, acc):
    # x_ref: (rows, K) f32 block for one image; w_ref: (taps, K, Cout) bf16
    for t in range(taps):
        patch = x_ref[pl.ds(t * w_stride, hw), :].astype(jnp.bfloat16)
        acc = acc + jnp.dot(patch, w_ref[t], preferred_element_type=jnp.float32)
    return acc


def _finish_conv(acc, b_ref, o_ref, act):
    y = acc + b_ref[...]
    if act == "relu":
        y = jnp.maximum(y, 0.0)
    elif act == "softmax":
        if y.shape[-1] == 2:
            # softmax over 2 classes == sigmoid of the logit difference
            # (avoids 2-lane cross-lane max/sum; exp+reciprocal go to the EUP).
            d = y[:, 1:2] - y[:, 0:1]
            p1 = pl.reciprocal(1.0 + jnp.exp(-d), approx=True)
            y = jnp.concatenate([1.0 - p1, p1], axis=-1)
        else:
            y = y - jnp.max(y, axis=-1, keepdims=True)
            e = jnp.exp(y)
            y = e * pl.reciprocal(jnp.sum(e, axis=-1, keepdims=True), approx=True)
    o_ref[...] = y


def _conv1_kernel(x_ref, w_ref, b_ref, o_ref, *, taps, w_stride, hw, act):
    acc = jnp.zeros((hw, o_ref.shape[-1]), jnp.float32)
    acc = _conv_accum(x_ref, w_ref, taps, w_stride, hw, acc)
    _finish_conv(acc, b_ref, o_ref, act)


def _conv2_kernel(xa_ref, wa_ref, xb_ref, wb_ref, b_ref, o_ref, *,
                  taps, w_stride, hw, act):
    # two-source conv: conv(concat([a, b], -1), w) == conv(a, w_a) + conv(b, w_b)
    acc = jnp.zeros((hw, o_ref.shape[-1]), jnp.float32)
    acc = _conv_accum(xa_ref, wa_ref, taps, w_stride, hw, acc)
    acc = _conv_accum(xb_ref, wb_ref, taps, w_stride, hw, acc)
    _finish_conv(acc, b_ref, o_ref, act)


def conv2d(srcs, b, act):
    """srcs: list of (x NHWC, w (KH,KW,Ci,Cout)) pairs sharing B,H,W,KH,KW,Cout."""
    assert len(srcs) in (1, 2)
    x0, w0 = srcs[0]
    B, H, W, _ = x0.shape
    KH, KW, _, Cout = w0.shape
    assert KH == KW and KH in (1, 3)
    HW = H * W

    if KH == 3 and W % 8 == 0:
        taps, rows = 3, (H + 2) * W          # dy taps gathered in-kernel (aligned)
    else:
        taps, rows = 1, HW                   # 1x1 conv, or small-spatial fallback

    inputs, in_specs = [], []
    for x, w in srcs:
        Cin = x.shape[-1]
        if KH == 1:
            cols = x
            K = Cin
        elif taps == 3:
            # gather only the 3 dx shifts in XLA (3x traffic instead of 9x);
            # the 3 dy shifts become aligned row slices inside the kernel.
            xw = jnp.pad(x, ((0, 0), (0, 0), (1, 1), (0, 0)))
            cols = jnp.concatenate([xw[:, :, dx:dx + W, :] for dx in range(3)], axis=-1)
            cols = jnp.pad(cols, ((0, 0), (1, 1), (0, 0), (0, 0)))
            K = 3 * Cin
        else:
            # W not a multiple of 8 (tiny bottleneck maps): full im2col fallback.
            xp = jnp.pad(x, ((0, 0), (1, 1), (1, 1), (0, 0)))
            cols = jnp.concatenate(
                [xp[:, dy:dy + H, dx:dx + W, :] for dy in range(3) for dx in range(3)],
                axis=-1)
            K = 9 * Cin

        x2d = cols.reshape(B * rows, K)                       # f32 activations
        w3 = w.reshape(taps, K, Cout).astype(jnp.bfloat16)    # bf16 MXU weights
        inputs += [x2d, w3]
        in_specs += [pl.BlockSpec((rows, K), lambda i: (i, 0)),
                     pl.BlockSpec((taps, K, Cout), lambda i: (0, 0, 0))]

    inputs.append(b.reshape(1, Cout).astype(jnp.float32))
    in_specs.append(pl.BlockSpec((1, Cout), lambda i: (0, 0)))

    kern = _conv1_kernel if len(srcs) == 1 else _conv2_kernel
    out = pl.pallas_call(
        partial(kern, taps=taps, w_stride=W, hw=HW, act=act),
        grid=(B,),
        in_specs=in_specs,
        out_specs=pl.BlockSpec((HW, Cout), lambda i: (i, 0)),
        out_shape=jax.ShapeDtypeStruct((B * HW, Cout), jnp.float32),
        compiler_params=pltpu.CompilerParams(dimension_semantics=("parallel",)),
    )(*inputs)
    return out.reshape(B, H, W, Cout)


# ----------------------------------------------------------------------------
# Max-pool 2x2 (no XLA transpose: pure row-major reshape view + in-kernel max)
# ----------------------------------------------------------------------------

def _maxpool_kernel(x_ref, o_ref):
    # x_ref: (Ho, 2, Wo, 2, C)  ->  o_ref: (Ho, Wo, C)
    a = jnp.maximum(x_ref[:, 0, :, 0, :], x_ref[:, 0, :, 1, :])
    b = jnp.maximum(x_ref[:, 1, :, 0, :], x_ref[:, 1, :, 1, :])
    o_ref[...] = jnp.maximum(a, b)


def maxpool2(x):
    B, H, W, C = x.shape
    Ho, Wo = H // 2, W // 2
    xr = x.reshape(B * Ho, 2, Wo, 2, C)          # metadata-only reshape
    y = pl.pallas_call(
        _maxpool_kernel,
        grid=(B,),
        in_specs=[pl.BlockSpec((Ho, 2, Wo, 2, C), lambda i: (i, 0, 0, 0, 0))],
        out_specs=pl.BlockSpec((Ho, Wo, C), lambda i: (i, 0, 0)),
        out_shape=jax.ShapeDtypeStruct((B * Ho, Wo, C), jnp.float32),
        compiler_params=pltpu.CompilerParams(dimension_semantics=("parallel",)),
    )(xr)
    return y.reshape(B, Ho, Wo, C)


def upsample2(x):
    # TODO(synk): fuse nearest-neighbor upsample into the decoder conv at scale.
    x = jnp.repeat(x, 2, axis=1)
    x = jnp.repeat(x, 2, axis=2)
    return x


# ----------------------------------------------------------------------------
# Fused AG head: Contour -> Spline -> FillPolygon in a single kernel
# ----------------------------------------------------------------------------

def _ag_head_kernel(p_ref, xs_ref, ys_ref, dirs_ref, d_ref, bsp_ref, o_ref,
                    *, kappa, tau):
    # p_ref: (1,1,HW) prob map; xs/ys: (1,HW); dirs: (Np,2); d: (Cc,Np); bsp: (Np,Cc)
    # o_ref: (1, 2, HW) = [1-mask, mask]
    p = p_ref[0]                                   # (1, HW)
    xs = xs_ref[...]
    ys = ys_ref[...]

    # --- contour: radial soft-contour extraction around the soft centroid ---
    s = jnp.sum(p) + 1e-6
    cx = jnp.sum(p * xs) / s
    cy = jnp.sum(p * ys) / s
    dx = xs - cx
    dy = ys - cy
    r = jnp.sqrt(dx * dx + dy * dy + 1e-6)         # (1, HW)
    inv_r = pl.reciprocal(r, approx=True)
    ux = dx * inv_r
    uy = dy * inv_r
    dcos = dirs_ref[:, 0:1]                        # (Np, 1)
    dsin = dirs_ref[:, 1:2]
    sim = dcos * ux + dsin * uy                    # (Np, HW)
    w = jnp.exp(kappa * sim)
    pw = w * p
    num = jnp.sum(pw * r, axis=1, keepdims=True)   # (Np, 1)
    den = jnp.sum(pw, axis=1, keepdims=True) + 1e-6
    rad = num * pl.reciprocal(den, approx=True)
    px = cx + rad * dcos
    py = cy + rad * dsin
    pts = jnp.concatenate([px, py], axis=1)        # (Np, 2)

    # --- spline: Np->Cc block-average then periodic cubic B-spline basis ---
    ctrl = jnp.dot(d_ref[...], pts, preferred_element_type=jnp.float32)     # (Cc, 2)
    pts_s = jnp.dot(bsp_ref[...], ctrl, preferred_element_type=jnp.float32)  # (Np, 2)

    # --- fill polygon: soft radial rasterization of the smoothed contour ---
    spx = pts_s[:, 0:1]
    spy = pts_s[:, 1:2]
    n = pts_s.shape[0]
    ccx = jnp.sum(spx) / n
    ccy = jnp.sum(spy) / n
    dpx = spx - ccx
    dpy = spy - ccy
    rp = jnp.sqrt(dpx * dpx + dpy * dpy + 1e-6)    # (Np, 1)
    inv_rp = pl.reciprocal(rp, approx=True)
    upx = dpx * inv_rp
    upy = dpy * inv_rp
    gx = xs - ccx
    gy = ys - ccy
    rg = jnp.sqrt(gx * gx + gy * gy + 1e-6)        # (1, HW)
    inv_rg = pl.reciprocal(rg, approx=True)
    ugx = gx * inv_rg
    ugy = gy * inv_rg
    sim2 = upx * ugx + upy * ugy                   # (Np, HW)
    w2 = jnp.exp(kappa * sim2)
    rpoly = jnp.sum(w2 * rp, axis=0, keepdims=True) * pl.reciprocal(
        jnp.sum(w2, axis=0, keepdims=True) + 1e-6, approx=True)             # (1, HW)
    z = tau * (rpoly - rg)
    mask = pl.reciprocal(1.0 + jnp.exp(-z), approx=True)                    # (1, HW)
    o_ref[0] = jnp.concatenate([1.0 - mask, mask], axis=0)                  # (2, HW)


def ag_head(p_flat, consts):
    # p_flat: (B, 1, HW) foreground probability map -> (B, 2, HW) [1-mask, mask]
    B, _, HW = p_flat.shape
    Np = consts["dirs"].shape[0]
    Cc = consts["spline_down"].shape[0]
    return pl.pallas_call(
        partial(_ag_head_kernel, kappa=8.0, tau=2.0),
        grid=(B,),
        in_specs=[
            pl.BlockSpec((1, 1, HW), lambda i: (i, 0, 0)),
            pl.BlockSpec((1, HW), lambda i: (0, 0)),
            pl.BlockSpec((1, HW), lambda i: (0, 0)),
            pl.BlockSpec((Np, 2), lambda i: (0, 0)),
            pl.BlockSpec((Cc, Np), lambda i: (0, 0)),
            pl.BlockSpec((Np, Cc), lambda i: (0, 0)),
        ],
        out_specs=pl.BlockSpec((1, 2, HW), lambda i: (i, 0, 0)),
        out_shape=jax.ShapeDtypeStruct((B, 2, HW), jnp.float32),
        compiler_params=pltpu.CompilerParams(dimension_semantics=("parallel",)),
    )(p_flat, consts["xs"], consts["ys"], consts["dirs"],
      consts["spline_down"], consts["spline_basis"])


# ----------------------------------------------------------------------------
# Parameter / constant construction (deterministic, no checkpoints)
# ----------------------------------------------------------------------------

def xavier_uniform(key, shape):
    kh, kw, cin, cout = shape
    limit = math.sqrt(6.0 / (cin * kh * kw + cout * kh * kw))
    return jax.random.uniform(key, shape, jnp.float32, -limit, limit)


def make_unet_params(key, n_channels, n_classes, base=8):
    layer_defs = [
        ("enc1_1", 3, 3, n_channels, base),
        ("enc1_2", 3, 3, base, base),
        ("enc2_1", 3, 3, base, 2 * base),
        ("enc2_2", 3, 3, 2 * base, 2 * base),
        ("bott_1", 3, 3, 2 * base, 4 * base),
        ("bott_2", 3, 3, 4 * base, 4 * base),
        ("dec2_1", 3, 3, 4 * base + 2 * base, 2 * base),
        ("dec2_2", 3, 3, 2 * base, 2 * base),
        ("dec1_1", 3, 3, 2 * base + base, base),
        ("dec1_2", 3, 3, base, base),
        ("out", 1, 1, base, n_classes),
    ]
    params = {}
    keys = jax.random.split(key, len(layer_defs))
    for k, (name, kh, kw, cin, cout) in zip(keys, layer_defs):
        params[name + "_w"] = xavier_uniform(k, (kh, kw, cin, cout))
        params[name + "_b"] = jnp.zeros((cout,), jnp.float32)   # nn.init.zeros_
    return params


def make_consts(H, W, control_pts, contour_pts):
    yy, xx = np.meshgrid(np.arange(H, dtype=np.float32),
                         np.arange(W, dtype=np.float32), indexing="ij")
    xs = xx.reshape(1, H * W)
    ys = yy.reshape(1, H * W)
    theta = 2.0 * np.pi * np.arange(contour_pts, dtype=np.float32) / contour_pts
    dirs = np.stack([np.cos(theta), np.sin(theta)], axis=1)           # (Np, 2)

    assert contour_pts % control_pts == 0
    step = contour_pts // control_pts
    D = np.zeros((control_pts, contour_pts), np.float32)
    for i in range(control_pts):
        D[i, i * step:(i + 1) * step] = 1.0 / step

    Bsp = np.zeros((contour_pts, control_pts), np.float32)
    for j in range(contour_pts):
        t = j * control_pts / contour_pts
        k = int(np.floor(t))
        u = t - k
        bm = [(1 - u) ** 3 / 6.0,
              (3 * u ** 3 - 6 * u ** 2 + 4) / 6.0,
              (-3 * u ** 3 + 3 * u ** 2 + 3 * u + 1) / 6.0,
              u ** 3 / 6.0]
        for m in range(4):
            Bsp[j, (k + m - 1) % control_pts] += bm[m]

    return {
        "xs": jnp.asarray(xs),
        "ys": jnp.asarray(ys),
        "dirs": jnp.asarray(dirs),
        "spline_down": jnp.asarray(D),
        "spline_basis": jnp.asarray(Bsp),
    }


# ----------------------------------------------------------------------------
# Forward pass
# ----------------------------------------------------------------------------

def unet_forward(params, x):
    e1 = conv2d([(x, params["enc1_1_w"])], params["enc1_1_b"], "relu")
    e1 = conv2d([(e1, params["enc1_2_w"])], params["enc1_2_b"], "relu")
    p1 = maxpool2(e1)
    e2 = conv2d([(p1, params["enc2_1_w"])], params["enc2_1_b"], "relu")
    e2 = conv2d([(e2, params["enc2_2_w"])], params["enc2_2_b"], "relu")
    p2 = maxpool2(e2)
    bn = conv2d([(p2, params["bott_1_w"])], params["bott_1_b"], "relu")
    bn = conv2d([(bn, params["bott_2_w"])], params["bott_2_b"], "relu")

    up2 = upsample2(bn)
    c2 = up2.shape[-1]        # skip-concat avoided: split weight, sum in-kernel
    d2 = conv2d([(up2, params["dec2_1_w"][:, :, :c2, :]),
                 (e2,  params["dec2_1_w"][:, :, c2:, :])],
                params["dec2_1_b"], "relu")
    d2 = conv2d([(d2, params["dec2_2_w"])], params["dec2_2_b"], "relu")

    up1 = upsample2(d2)
    c1 = up1.shape[-1]
    d1 = conv2d([(up1, params["dec1_1_w"][:, :, :c1, :]),
                 (e1,  params["dec1_1_w"][:, :, c1:, :])],
                params["dec1_1_b"], "relu")
    d1 = conv2d([(d1, params["dec1_2_w"])], params["dec1_2_b"], "relu")

    out = conv2d([(d1, params["out_w"])], params["out_b"], "softmax")
    return out                                         # (B, H, W, n_classes)


def unet_ag_forward(params, consts, x_nchw):
    # x_nchw: (B, Cin, H, W)  ->  out: (2B, n_classes, H, W)   (PyTorch NCHW semantics)
    x = jnp.transpose(x_nchw, (0, 2, 3, 1))            # NHWC
    out_unet = unet_forward(params, x)                 # (B, H, W, 2)
    B, H, W, _ = out_unet.shape
    p_fg = out_unet[..., 1].reshape(B, 1, H * W)       # foreground probability map
    mask2 = ag_head(p_fg, consts)                      # (B, 2, HW) = cat([1-x, x], 1)
    x_mask = mask2.reshape(B, 2, H, W)
    out_unet_nchw = jnp.transpose(out_unet, (0, 3, 1, 2))
    return jnp.concatenate([out_unet_nchw, x_mask], axis=0)


# ----------------------------------------------------------------------------
# Main
# ----------------------------------------------------------------------------

if __name__ == "__main__":
    batch_size, n_channels, n_classes = 2, 3, 2
    height = width = 16
    control_pts, contour_pts = 8, 32

    key = jax.random.PRNGKey(0)
    k_params, k_input = jax.random.split(key)

    params = make_unet_params(k_params, n_channels, n_classes, base=8)
    consts = make_consts(height, width, control_pts, contour_pts)

    x = jax.random.normal(k_input, (batch_size, n_channels, height, width), jnp.float32)

    fwd = jax.jit(partial(unet_ag_forward, params, consts))
    out = fwd(x)
    out = jax.block_until_ready(out)

    assert out.shape == (2 * batch_size, n_classes, height, width), out.shape
    assert bool(jnp.all(jnp.isfinite(out)))
    print("KERNEL_OK")
</pallas_src>

<mosaic_0001>
module attributes {stable_mosaic.version = 11 : i64} {
  func.func @_conv1_kernel(%arg0: i32, %arg1: memref<288x24xf32, #tpu.memory_space<vmem>>, %arg2: memref<3x24x8xbf16, #tpu.memory_space<vmem>>, %arg3: memref<1x8xf32, #tpu.memory_space<vmem>>, %arg4: memref<256x8xf32, #tpu.memory_space<vmem>>) attributes {dimension_semantics = [#tpu.dimension_semantics<parallel>], iteration_bounds = array<i64: 2>, scalar_prefetch = 0 : i64, scratch_operands = 0 : i64, tpu.core_type = #tpu.core_type<tc>, window_params = [{transform_indices = @transform_0, window_bounds = array<i64: 288, 24>}, {pipeline_mode = #tpu.pipeline_mode<synchronous>, transform_indices = @transform_1, window_bounds = array<i64: 3, 24, 8>}, {pipeline_mode = #tpu.pipeline_mode<synchronous>, transform_indices = @transform_2, window_bounds = array<i64: 1, 8>}, {transform_indices = @transform_3, window_bounds = array<i64: 256, 8>}]} {
    %cst = arith.constant 0.000000e+00 : f32
    %0 = vector.broadcast %cst : f32 to vector<256x8xf32>
    %c0 = arith.constant 0 : index
    %c0_0 = arith.constant 0 : index
    %1 = vector.load %arg1[%c0, %c0_0] : memref<288x24xf32, #tpu.memory_space<vmem>>, vector<256x24xf32>
    %2 = arith.truncf %1 : vector<256x24xf32> to vector<256x24xbf16>
    %c0_1 = arith.constant 0 : index
    %c0_2 = arith.constant 0 : index
    %c0_3 = arith.constant 0 : index
    %3 = vector.load %arg2[%c0_1, %c0_2, %c0_3] : memref<3x24x8xbf16, #tpu.memory_space<vmem>>, vector<1x24x8xbf16>
    %4 = vector.shape_cast %3 : vector<1x24x8xbf16> to vector<24x8xbf16>
    %cst_4 = arith.constant dense<0.000000e+00> : vector<256x8xf32>
    %5 = tpu.matmul %2, %4, %cst_4 {dimension_numbers = #tpu.dot_dimension_numbers<[1], [0], [0], [1], [0, 0, 1, 1], [], []>} : vector<256x24xbf16>, vector<24x8xbf16>, vector<256x8xf32> -> vector<256x8xf32>
    %6 = arith.addf %0, %5 : vector<256x8xf32>
    %c16 = arith.constant 16 : index
    %c0_5 = arith.constant 0 : index
    %7 = vector.load %arg1[%c16, %c0_5] : memref<288x24xf32, #tpu.memory_space<vmem>>, vector<256x24xf32>
    %8 = arith.truncf %7 : vector<256x24xf32> to vector<256x24xbf16>
    %c1 = arith.constant 1 : index
    %c0_6 = arith.constant 0 : index
    %c0_7 = arith.constant 0 : index
    %9 = vector.load %arg2[%c1, %c0_6, %c0_7] : memref<3x24x8xbf16, #tpu.memory_space<vmem>>, vector<1x24x8xbf16>
    %10 = vector.shape_cast %9 : vector<1x24x8xbf16> to vector<24x8xbf16>
    %cst_8 = arith.constant dense<0.000000e+00> : vector<256x8xf32>
    %11 = tpu.matmul %8, %10, %cst_8 {dimension_numbers = #tpu.dot_dimension_numbers<[1], [0], [0], [1], [0, 0, 1, 1], [], []>} : vector<256x24xbf16>, vector<24x8xbf16>, vector<256x8xf32> -> vector<256x8xf32>
    %12 = arith.addf %6, %11 : vector<256x8xf32>
    %c32 = arith.constant 32 : index
    %c0_9 = arith.constant 0 : index
    %13 = vector.load %arg1[%c32, %c0_9] : memref<288x24xf32, #tpu.memory_space<vmem>>, vector<256x24xf32>
    %14 = arith.truncf %13 : vector<256x24xf32> to vector<256x24xbf16>
    %c2 = arith.constant 2 : index
    %c0_10 = arith.constant 0 : index
    %c0_11 = arith.constant 0 : index
    %15 = vector.load %arg2[%c2, %c0_10, %c0_11] : memref<3x24x8xbf16, #tpu.memory_space<vmem>>, vector<1x24x8xbf16>
    %16 = vector.shape_cast %15 : vector<1x24x8xbf16> to vector<24x8xbf16>
    %cst_12 = arith.constant dense<0.000000e+00> : vector<256x8xf32>
    %17 = tpu.matmul %14, %16, %cst_12 {dimension_numbers = #tpu.dot_dimension_numbers<[1], [0], [0], [1], [0, 0, 1, 1], [], []>} : vector<256x24xbf16>, vector<24x8xbf16>, vector<256x8xf32> -> vector<256x8xf32>
    %18 = arith.addf %12, %17 : vector<256x8xf32>
    %c0_13 = arith.constant 0 : index
    %c0_14 = arith.constant 0 : index
    %19 = vector.load %arg3[%c0_13, %c0_14] : memref<1x8xf32, #tpu.memory_space<vmem>>, vector<1x8xf32>
    %20 = vector.broadcast %19 : vector<1x8xf32> to vector<256x8xf32>
    %21 = arith.addf %18, %20 : vector<256x8xf32>
    %cst_15 = arith.constant 0.000000e+00 : f32
    %22 = vector.broadcast %cst_15 : f32 to vector<256x8xf32>
    %23 = arith.maximumf %21, %22 : vector<256x8xf32>
    %c0_16 = arith.constant 0 : index
    %c0_17 = arith.constant 0 : index
    %24 = vector.load %arg4[%c0_16, %c0_17] : memref<256x8xf32, #tpu.memory_space<vmem>>, vector<256x8xf32>
    tpu.vector_store %arg4[%c0_16, %c0_17], %23 {strides = array<i32>} : memref<256x8xf32, #tpu.memory_space<vmem>>, vector<256x8xf32>,
    return
  }
  func.func @transform_0(%arg0: i32) -> (i32, i32) {
    %c0_i32 = arith.constant 0 : i32
    %c0_i32_0 = arith.constant 0 : i32
    return %arg0, %c0_i32 : i32, i32
  }
  func.func @transform_1(%arg0: i32) -> (i32, i32, i32) {
    %c0_i32 = arith.constant 0 : i32
    %c0_i32_0 = arith.constant 0 : i32
    %c0_i32_1 = arith.constant 0 : i32
    %c0_i32_2 = arith.constant 0 : i32
    return %c0_i32, %c0_i32_0, %c0_i32_1 : i32, i32, i32
  }
  func.func @transform_2(%arg0: i32) -> (i32, i32) {
    %c0_i32 = arith.constant 0 : i32
    %c0_i32_0 = arith.constant 0 : i32
    %c0_i32_1 = arith.constant 0 : i32
    return %c0_i32, %c0_i32_0 : i32, i32
  }
  func.func @transform_3(%arg0: i32) -> (i32, i32) {
    %c0_i32 = arith.constant 0 : i32
    %c0_i32_0 = arith.constant 0 : i32
    return %arg0, %c0_i32 : i32, i32
  }
}

module attributes {stable_mosaic.version = 11 : i64} {
  func.func @_conv1_kernel(%arg0: i32, %arg1: memref<288x9xf32, #tpu.memory_space<vmem>>, %arg2: memref<3x9x8xbf16, #tpu.memory_space<vmem>>, %arg3: memref<1x8xf32, #tpu.memory_space<vmem>>, %arg4: memref<256x8xf32, #tpu.memory_space<vmem>>) attributes {dimension_semantics = [#tpu.dimension_semantics<parallel>], iteration_bounds = array<i64: 2>, scalar_prefetch = 0 : i64, scratch_operands = 0 : i64, tpu.core_type = #tpu.core_type<tc>, window_params = [{transform_indices = @transform_0, window_bounds = array<i64: 288, 9>}, {pipeline_mode = #tpu.pipeline_mode<synchronous>, transform_indices = @transform_1, window_bounds = array<i64: 3, 9, 8>}, {pipeline_mode = #tpu.pipeline_mode<synchronous>, transform_indices = @transform_2, window_bounds = array<i64: 1, 8>}, {transform_indices = @transform_3, window_bounds = array<i64: 256, 8>}]} {
    %cst = arith.constant 0.000000e+00 : f32
    %0 = vector.broadcast %cst : f32 to vector<256x8xf32>
    %c0 = arith.constant 0 : index
    %c0_0 = arith.constant 0 : index
    %1 = vector.load %arg1[%c0, %c0_0] : memref<288x9xf32, #tpu.memory_space<vmem>>, vector<256x9xf32>
    %2 = arith.truncf %1 : vector<256x9xf32> to vector<256x9xbf16>
    %c0_1 = arith.constant 0 : index
    %c0_2 = arith.constant 0 : index
    %c0_3 = arith.constant 0 : index
    %3 = vector.load %arg2[%c0_1, %c0_2, %c0_3] : memref<3x9x8xbf16, #tpu.memory_space<vmem>>, vector<1x9x8xbf16>
    %4 = vector.shape_cast %3 : vector<1x9x8xbf16> to vector<9x8xbf16>
    %cst_4 = arith.constant dense<0.000000e+00> : vector<256x8xf32>
    %5 = tpu.matmul %2, %4, %cst_4 {dimension_numbers = #tpu.dot_dimension_numbers<[1], [0], [0], [1], [0, 0, 1, 1], [], []>} : vector<256x9xbf16>, vector<9x8xbf16>, vector<256x8xf32> -> vector<256x8xf32>
    %6 = arith.addf %0, %5 : vector<256x8xf32>
    %c16 = arith.constant 16 : index
    %c0_5 = arith.constant 0 : index
    %7 = vector.load %arg1[%c16, %c0_5] : memref<288x9xf32, #tpu.memory_space<vmem>>, vector<256x9xf32>
    %8 = arith.truncf %7 : vector<256x9xf32> to vector<256x9xbf16>
    %c1 = arith.constant 1 : index
    %c0_6 = arith.constant 0 : index
    %c0_7 = arith.constant 0 : index
    %9 = vector.load %arg2[%c1, %c0_6, %c0_7] : memref<3x9x8xbf16, #tpu.memory_space<vmem>>, vector<1x9x8xbf16>
    %10 = vector.shape_cast %9 : vector<1x9x8xbf16> to vector<9x8xbf16>
    %cst_8 = arith.constant dense<0.000000e+00> : vector<256x8xf32>
    %11 = tpu.matmul %8, %10, %cst_8 {dimension_numbers = #tpu.dot_dimension_numbers<[1], [0], [0], [1], [0, 0, 1, 1], [], []>} : vector<256x9xbf16>, vector<9x8xbf16>, vector<256x8xf32> -> vector<256x8xf32>
    %12 = arith.addf %6, %11 : vector<256x8xf32>
    %c32 = arith.constant 32 : index
    %c0_9 = arith.constant 0 : index
    %13 = vector.load %arg1[%c32, %c0_9] : memref<288x9xf32, #tpu.memory_space<vmem>>, vector<256x9xf32>
    %14 = arith.truncf %13 : vector<256x9xf32> to vector<256x9xbf16>
    %c2 = arith.constant 2 : index
    %c0_10 = arith.constant 0 : index
    %c0_11 = arith.constant 0 : index
    %15 = vector.load %arg2[%c2, %c0_10, %c0_11] : memref<3x9x8xbf16, #tpu.memory_space<vmem>>, vector<1x9x8xbf16>
    %16 = vector.shape_cast %15 : vector<1x9x8xbf16> to vector<9x8xbf16>
    %cst_12 = arith.constant dense<0.000000e+00> : vector<256x8xf32>
    %17 = tpu.matmul %14, %16, %cst_12 {dimension_numbers = #tpu.dot_dimension_numbers<[1], [0], [0], [1], [0, 0, 1, 1], [], []>} : vector<256x9xbf16>, vector<9x8xbf16>, vector<256x8xf32> -> vector<256x8xf32>
    %18 = arith.addf %12, %17 : vector<256x8xf32>
    %c0_13 = arith.constant 0 : index
    %c0_14 = arith.constant 0 : index
    %19 = vector.load %arg3[%c0_13, %c0_14] : memref<1x8xf32, #tpu.memory_space<vmem>>, vector<1x8xf32>
    %20 = vector.broadcast %19 : vector<1x8xf32> to vector<256x8xf32>
    %21 = arith.addf %18, %20 : vector<256x8xf32>
    %cst_15 = arith.constant 0.000000e+00 : f32
    %22 = vector.broadcast %cst_15 : f32 to vector<256x8xf32>
    %23 = arith.maximumf %21, %22 : vector<256x8xf32>
    %c0_16 = arith.constant 0 : index
    %c0_17 = arith.constant 0 : index
    %24 = vector.load %arg4[%c0_16, %c0_17] : memref<256x8xf32, #tpu.memory_space<vmem>>, vector<256x8xf32>
    tpu.vector_store %arg4[%c0_16, %c0_17], %23 {strides = array<i32>} : memref<256x8xf32, #tpu.memory_space<vmem>>, vector<256x8xf32>,
    return
  }
  func.func @transform_0(%arg0: i32) -> (i32, i32) {
    %c0_i32 = arith.constant 0 : i32
    %c0_i32_0 = arith.constant 0 : i32
    return %arg0, %c0_i32 : i32, i32
  }
  func.func @transform_1(%arg0: i32) -> (i32, i32, i32) {
    %c0_i32 = arith.constant 0 : i32
    %c0_i32_0 = arith.constant 0 : i32
    %c0_i32_1 = arith.constant 0 : i32
    %c0_i32_2 = arith.constant 0 : i32
    return %c0_i32, %c0_i32_0, %c0_i32_1 : i32, i32, i32
  }
  func.func @transform_2(%arg0: i32) -> (i32, i32) {
    %c0_i32 = arith.constant 0 : i32
    %c0_i32_0 = arith.constant 0 : i32
    %c0_i32_1 = arith.constant 0 : i32
    return %c0_i32, %c0_i32_0 : i32, i32
  }
  func.func @transform_3(%arg0: i32) -> (i32, i32) {
    %c0_i32 = arith.constant 0 : i32
    %c0_i32_0 = arith.constant 0 : i32
    return %arg0, %c0_i32 : i32, i32
  }
}

module attributes {stable_mosaic.version = 11 : i64} {
  func.func @_maxpool_kernel(%arg0: i32, %arg1: memref<8x2x8x2x8xf32, #tpu.memory_space<vmem>>, %arg2: memref<8x8x8xf32, #tpu.memory_space<vmem>>) attributes {dimension_semantics = [#tpu.dimension_semantics<parallel>], iteration_bounds = array<i64: 2>, scalar_prefetch = 0 : i64, scratch_operands = 0 : i64, tpu.core_type = #tpu.core_type<tc>, window_params = [{transform_indices = @transform_0, window_bounds = array<i64: 8, 2, 8, 2, 8>}, {transform_indices = @transform_1, window_bounds = array<i64: 8, 8, 8>}]} {
    %c0 = arith.constant 0 : index
    %c0_0 = arith.constant 0 : index
    %c0_1 = arith.constant 0 : index
    %c0_2 = arith.constant 0 : index
    %c0_3 = arith.constant 0 : index
    %0 = vector.load %arg1[%c0, %c0_0, %c0_1, %c0_2, %c0_3] : memref<8x2x8x2x8xf32, #tpu.memory_space<vmem>>, vector<8x1x8x1x8xf32>
    %1 = vector.shape_cast %0 : vector<8x1x8x1x8xf32> to vector<8x8x8xf32>
    %c0_4 = arith.constant 0 : index
    %c0_5 = arith.constant 0 : index
    %c0_6 = arith.constant 0 : index
    %c1 = arith.constant 1 : index
    %c0_7 = arith.constant 0 : index
    %2 = vector.load %arg1[%c0_4, %c0_5, %c0_6, %c1, %c0_7] : memref<8x2x8x2x8xf32, #tpu.memory_space<vmem>>, vector<8x1x8x1x8xf32>
    %3 = vector.shape_cast %2 : vector<8x1x8x1x8xf32> to vector<8x8x8xf32>
    %4 = arith.maximumf %1, %3 : vector<8x8x8xf32>
    %c0_8 = arith.constant 0 : index
    %c1_9 = arith.constant 1 : index
    %c0_10 = arith.constant 0 : index
    %c0_11 = arith.constant 0 : index
    %c0_12 = arith.constant 0 : index
    %5 = vector.load %arg1[%c0_8, %c1_9, %c0_10, %c0_11, %c0_12] : memref<8x2x8x2x8xf32, #tpu.memory_space<vmem>>, vector<8x1x8x1x8xf32>
    %6 = vector.shape_cast %5 : vector<8x1x8x1x8xf32> to vector<8x8x8xf32>
    %c0_13 = arith.constant 0 : index
    %c1_14 = arith.constant 1 : index
    %c0_15 = arith.constant 0 : index
    %c1_16 = arith.constant 1 : index
    %c0_17 = arith.constant 0 : index
    %7 = vector.load %arg1[%c0_13, %c1_14, %c0_15, %c1_16, %c0_17] : memref<8x2x8x2x8xf32, #tpu.memory_space<vmem>>, vector<8x1x8x1x8xf32>
    %8 = vector.shape_cast %7 : vector<8x1x8x1x8xf32> to vector<8x8x8xf32>
    %9 = arith.maximumf %6, %8 : vector<8x8x8xf32>
    %10 = arith.maximumf %4, %9 : vector<8x8x8xf32>
    %c0_18 = arith.constant 0 : index
    %c0_19 = arith.constant 0 : index
    %c0_20 = arith.constant 0 : index
    %11 = vector.load %arg2[%c0_18, %c0_19, %c0_20] : memref<8x8x8xf32, #tpu.memory_space<vmem>>, vector<8x8x8xf32>
    tpu.vector_store %arg2[%c0_18, %c0_19, %c0_20], %10 {strides = array<i32>} : memref<8x8x8xf32, #tpu.memory_space<vmem>>, vector<8x8x8xf32>,
    return
  }
  func.func @transform_0(%arg0: i32) -> (i32, i32, i32, i32, i32) {
    %c0_i32 = arith.constant 0 : i32
    %c0_i32_0 = arith.constant 0 : i32
    %c0_i32_1 = arith.constant 0 : i32
    %c0_i32_2 = arith.constant 0 : i32
    %c0_i32_3 = arith.constant 0 : i32
    return %arg0, %c0_i32, %c0_i32_0, %c0_i32_1, %c0_i32_2 : i32, i32, i32, i32, i32
  }
  func.func @transform_1(%arg0: i32) -> (i32, i32, i32) {
    %c0_i32 = arith.constant 0 : i32
    %c0_i32_0 = arith.constant 0 : i32
    %c0_i32_1 = arith.constant 0 : i32
    return %arg0, %c0_i32, %c0_i32_0 : i32, i32, i32
  }
}

module attributes {stable_mosaic.version = 11 : i64} {
  func.func @_conv1_kernel(%arg0: i32, %arg1: memref<80x24xf32, #tpu.memory_space<vmem>>, %arg2: memref<3x24x16xbf16, #tpu.memory_space<vmem>>, %arg3: memref<1x16xf32, #tpu.memory_space<vmem>>, %arg4: memref<64x16xf32, #tpu.memory_space<vmem>>) attributes {dimension_semantics = [#tpu.dimension_semantics<parallel>], iteration_bounds = array<i64: 2>, scalar_prefetch = 0 : i64, scratch_operands = 0 : i64, tpu.core_type = #tpu.core_type<tc>, window_params = [{transform_indices = @transform_0, window_bounds = array<i64: 80, 24>}, {pipeline_mode = #tpu.pipeline_mode<synchronous>, transform_indices = @transform_1, window_bounds = array<i64: 3, 24, 16>}, {pipeline_mode = #tpu.pipeline_mode<synchronous>, transform_indices = @transform_2, window_bounds = array<i64: 1, 16>}, {transform_indices = @transform_3, window_bounds = array<i64: 64, 16>}]} {
    %cst = arith.constant 0.000000e+00 : f32
    %0 = vector.broadcast %cst : f32 to vector<64x16xf32>
    %c0 = arith.constant 0 : index
    %c0_0 = arith.constant 0 : index
    %1 = vector.load %arg1[%c0, %c0_0] : memref<80x24xf32, #tpu.memory_space<vmem>>, vector<64x24xf32>
    %2 = arith.truncf %1 : vector<64x24xf32> to vector<64x24xbf16>
    %c0_1 = arith.constant 0 : index
    %c0_2 = arith.constant 0 : index
    %c0_3 = arith.constant 0 : index
    %3 = vector.load %arg2[%c0_1, %c0_2, %c0_3] : memref<3x24x16xbf16, #tpu.memory_space<vmem>>, vector<1x24x16xbf16>
    %4 = vector.shape_cast %3 : vector<1x24x16xbf16> to vector<24x16xbf16>
    %cst_4 = arith.constant dense<0.000000e+00> : vector<64x16xf32>
    %5 = tpu.matmul %2, %4, %cst_4 {dimension_numbers = #tpu.dot_dimension_numbers<[1], [0], [0], [1], [0, 0, 1, 1], [], []>} : vector<64x24xbf16>, vector<24x16xbf16>, vector<64x16xf32> -> vector<64x16xf32>
    %6 = arith.addf %0, %5 : vector<64x16xf32>
    %c8 = arith.constant 8 : index
    %c0_5 = arith.constant 0 : index
    %7 = vector.load %arg1[%c8, %c0_5] : memref<80x24xf32, #tpu.memory_space<vmem>>, vector<64x24xf32>
    %8 = arith.truncf %7 : vector<64x24xf32> to vector<64x24xbf16>
    %c1 = arith.constant 1 : index
    %c0_6 = arith.constant 0 : index
    %c0_7 = arith.constant 0 : index
    %9 = vector.load %arg2[%c1, %c0_6, %c0_7] : memref<3x24x16xbf16, #tpu.memory_space<vmem>>, vector<1x24x16xbf16>
    %10 = vector.shape_cast %9 : vector<1x24x16xbf16> to vector<24x16xbf16>
    %cst_8 = arith.constant dense<0.000000e+00> : vector<64x16xf32>
    %11 = tpu.matmul %8, %10, %cst_8 {dimension_numbers = #tpu.dot_dimension_numbers<[1], [0], [0], [1], [0, 0, 1, 1], [], []>} : vector<64x24xbf16>, vector<24x16xbf16>, vector<64x16xf32> -> vector<64x16xf32>
    %12 = arith.addf %6, %11 : vector<64x16xf32>
    %c16 = arith.constant 16 : index
    %c0_9 = arith.constant 0 : index
    %13 = vector.load %arg1[%c16, %c0_9] : memref<80x24xf32, #tpu.memory_space<vmem>>, vector<64x24xf32>
    %14 = arith.truncf %13 : vector<64x24xf32> to vector<64x24xbf16>
    %c2 = arith.constant 2 : index
    %c0_10 = arith.constant 0 : index
    %c0_11 = arith.constant 0 : index
    %15 = vector.load %arg2[%c2, %c0_10, %c0_11] : memref<3x24x16xbf16, #tpu.memory_space<vmem>>, vector<1x24x16xbf16>
    %16 = vector.shape_cast %15 : vector<1x24x16xbf16> to vector<24x16xbf16>
    %cst_12 = arith.constant dense<0.000000e+00> : vector<64x16xf32>
    %17 = tpu.matmul %14, %16, %cst_12 {dimension_numbers = #tpu.dot_dimension_numbers<[1], [0], [0], [1], [0, 0, 1, 1], [], []>} : vector<64x24xbf16>, vector<24x16xbf16>, vector<64x16xf32> -> vector<64x16xf32>
    %18 = arith.addf %12, %17 : vector<64x16xf32>
    %c0_13 = arith.constant 0 : index
    %c0_14 = arith.constant 0 : index
    %19 = vector.load %arg3[%c0_13, %c0_14] : memref<1x16xf32, #tpu.memory_space<vmem>>, vector<1x16xf32>
    %20 = vector.broadcast %19 : vector<1x16xf32> to vector<64x16xf32>
    %21 = arith.addf %18, %20 : vector<64x16xf32>
    %cst_15 = arith.constant 0.000000e+00 : f32
    %22 = vector.broadcast %cst_15 : f32 to vector<64x16xf32>
    %23 = arith.maximumf %21, %22 : vector<64x16xf32>
    %c0_16 = arith.constant 0 : index
    %c0_17 = arith.constant 0 : index
    %24 = vector.load %arg4[%c0_16, %c0_17] : memref<64x16xf32, #tpu.memory_space<vmem>>, vector<64x16xf32>
    tpu.vector_store %arg4[%c0_16, %c0_17], %23 {strides = array<i32>} : memref<64x16xf32, #tpu.memory_space<vmem>>, vector<64x16xf32>,
    return
  }
  func.func @transform_0(%arg0: i32) -> (i32, i32) {
    %c0_i32 = arith.constant 0 : i32
    %c0_i32_0 = arith.constant 0 : i32
    return %arg0, %c0_i32 : i32, i32
  }
  func.func @transform_1(%arg0: i32) -> (i32, i32, i32) {
    %c0_i32 = arith.constant 0 : i32
    %c0_i32_0 = arith.constant 0 : i32
    %c0_i32_1 = arith.constant 0 : i32
    %c0_i32_2 = arith.constant 0 : i32
    return %c0_i32, %c0_i32_0, %c0_i32_1 : i32, i32, i32
  }
  func.func @transform_2(%arg0: i32) -> (i32, i32) {
    %c0_i32 = arith.constant 0 : i32
    %c0_i32_0 = arith.constant 0 : i32
    %c0_i32_1 = arith.constant 0 : i32
    return %c0_i32, %c0_i32_0 : i32, i32
  }
  func.func @transform_3(%arg0: i32) -> (i32, i32) {
    %c0_i32 = arith.constant 0 : i32
    %c0_i32_0 = arith.constant 0 : i32
    return %arg0, %c0_i32 : i32, i32
  }
}

module attributes {stable_mosaic.version = 11 : i64} {
  func.func @_conv1_kernel(%arg0: i32, %arg1: memref<80x48xf32, #tpu.memory_space<vmem>>, %arg2: memref<3x48x16xbf16, #tpu.memory_space<vmem>>, %arg3: memref<1x16xf32, #tpu.memory_space<vmem>>, %arg4: memref<64x16xf32, #tpu.memory_space<vmem>>) attributes {dimension_semantics = [#tpu.dimension_semantics<parallel>], iteration_bounds = array<i64: 2>, scalar_prefetch = 0 : i64, scratch_operands = 0 : i64, tpu.core_type = #tpu.core_type<tc>, window_params = [{transform_indices = @transform_0, window_bounds = array<i64: 80, 48>}, {pipeline_mode = #tpu.pipeline_mode<synchronous>, transform_indices = @transform_1, window_bounds = array<i64: 3, 48, 16>}, {pipeline_mode = #tpu.pipeline_mode<synchronous>, transform_indices = @transform_2, window_bounds = array<i64: 1, 16>}, {transform_indices = @transform_3, window_bounds = array<i64: 64, 16>}]} {
    %cst = arith.constant 0.000000e+00 : f32
    %0 = vector.broadcast %cst : f32 to vector<64x16xf32>
    %c0 = arith.constant 0 : index
    %c0_0 = arith.constant 0 : index
    %1 = vector.load %arg1[%c0, %c0_0] : memref<80x48xf32, #tpu.memory_space<vmem>>, vector<64x48xf32>
    %2 = arith.truncf %1 : vector<64x48xf32> to vector<64x48xbf16>
    %c0_1 = arith.constant 0 : index
    %c0_2 = arith.constant 0 : index
    %c0_3 = arith.constant 0 : index
    %3 = vector.load %arg2[%c0_1, %c0_2, %c0_3] : memref<3x48x16xbf16, #tpu.memory_space<vmem>>, vector<1x48x16xbf16>
    %4 = vector.shape_cast %3 : vector<1x48x16xbf16> to vector<48x16xbf16>
    %cst_4 = arith.constant dense<0.000000e+00> : vector<64x16xf32>
    %5 = tpu.matmul %2, %4, %cst_4 {dimension_numbers = #tpu.dot_dimension_numbers<[1], [0], [0], [1], [0, 0, 1, 1], [], []>} : vector<64x48xbf16>, vector<48x16xbf16>, vector<64x16xf32> -> vector<64x16xf32>
    %6 = arith.addf %0, %5 : vector<64x16xf32>
    %c8 = arith.constant 8 : index
    %c0_5 = arith.constant 0 : index
    %7 = vector.load %arg1[%c8, %c0_5] : memref<80x48xf32, #tpu.memory_space<vmem>>, vector<64x48xf32>
    %8 = arith.truncf %7 : vector<64x48xf32> to vector<64x48xbf16>
    %c1 = arith.constant 1 : index
    %c0_6 = arith.constant 0 : index
    %c0_7 = arith.constant 0 : index
    %9 = vector.load %arg2[%c1, %c0_6, %c0_7] : memref<3x48x16xbf16, #tpu.memory_space<vmem>>, vector<1x48x16xbf16>
    %10 = vector.shape_cast %9 : vector<1x48x16xbf16> to vector<48x16xbf16>
    %cst_8 = arith.constant dense<0.000000e+00> : vector<64x16xf32>
    %11 = tpu.matmul %8, %10, %cst_8 {dimension_numbers = #tpu.dot_dimension_numbers<[1], [0], [0], [1], [0, 0, 1, 1], [], []>} : vector<64x48xbf16>, vector<48x16xbf16>, vector<64x16xf32> -> vector<64x16xf32>
    %12 = arith.addf %6, %11 : vector<64x16xf32>
    %c16 = arith.constant 16 : index
    %c0_9 = arith.constant 0 : index
    %13 = vector.load %arg1[%c16, %c0_9] : memref<80x48xf32, #tpu.memory_space<vmem>>, vector<64x48xf32>
    %14 = arith.truncf %13 : vector<64x48xf32> to vector<64x48xbf16>
    %c2 = arith.constant 2 : index
    %c0_10 = arith.constant 0 : index
    %c0_11 = arith.constant 0 : index
    %15 = vector.load %arg2[%c2, %c0_10, %c0_11] : memref<3x48x16xbf16, #tpu.memory_space<vmem>>, vector<1x48x16xbf16>
    %16 = vector.shape_cast %15 : vector<1x48x16xbf16> to vector<48x16xbf16>
    %cst_12 = arith.constant dense<0.000000e+00> : vector<64x16xf32>
    %17 = tpu.matmul %14, %16, %cst_12 {dimension_numbers = #tpu.dot_dimension_numbers<[1], [0], [0], [1], [0, 0, 1, 1], [], []>} : vector<64x48xbf16>, vector<48x16xbf16>, vector<64x16xf32> -> vector<64x16xf32>
    %18 = arith.addf %12, %17 : vector<64x16xf32>
    %c0_13 = arith.constant 0 : index
    %c0_14 = arith.constant 0 : index
    %19 = vector.load %arg3[%c0_13, %c0_14] : memref<1x16xf32, #tpu.memory_space<vmem>>, vector<1x16xf32>
    %20 = vector.broadcast %19 : vector<1x16xf32> to vector<64x16xf32>
    %21 = arith.addf %18, %20 : vector<64x16xf32>
    %cst_15 = arith.constant 0.000000e+00 : f32
    %22 = vector.broadcast %cst_15 : f32 to vector<64x16xf32>
    %23 = arith.maximumf %21, %22 : vector<64x16xf32>
    %c0_16 = arith.constant 0 : index
    %c0_17 = arith.constant 0 : index
    %24 = vector.load %arg4[%c0_16, %c0_17] : memref<64x16xf32, #tpu.memory_space<vmem>>, vector<64x16xf32>
    tpu.vector_store %arg4[%c0_16, %c0_17], %23 {strides = array<i32>} : memref<64x16xf32, #tpu.memory_space<vmem>>, vector<64x16xf32>,
    return
  }
  func.func @transform_0(%arg0: i32) -> (i32, i32) {
    %c0_i32 = arith.constant 0 : i32
    %c0_i32_0 = arith.constant 0 : i32
    return %arg0, %c0_i32 : i32, i32
  }
  func.func @transform_1(%arg0: i32) -> (i32, i32, i32) {
    %c0_i32 = arith.constant 0 : i32
    %c0_i32_0 = arith.constant 0 : i32
    %c0_i32_1 = arith.constant 0 : i32
    %c0_i32_2 = arith.constant 0 : i32
    return %c0_i32, %c0_i32_0, %c0_i32_1 : i32, i32, i32
  }
  func.func @transform_2(%arg0: i32) -> (i32, i32) {
    %c0_i32 = arith.constant 0 : i32
    %c0_i32_0 = arith.constant 0 : i32
    %c0_i32_1 = arith.constant 0 : i32
    return %c0_i32, %c0_i32_0 : i32, i32
  }
  func.func @transform_3(%arg0: i32) -> (i32, i32) {
    %c0_i32 = arith.constant 0 : i32
    %c0_i32_0 = arith.constant 0 : i32
    return %arg0, %c0_i32 : i32, i32
  }
}

module attributes {stable_mosaic.version = 11 : i64} {
  func.func @_maxpool_kernel(%arg0: i32, %arg1: memref<4x2x4x2x16xf32, #tpu.memory_space<vmem>>, %arg2: memref<4x4x16xf32, #tpu.memory_space<vmem>>) attributes {dimension_semantics = [#tpu.dimension_semantics<parallel>], iteration_bounds = array<i64: 2>, scalar_prefetch = 0 : i64, scratch_operands = 0 : i64, tpu.core_type = #tpu.core_type<tc>, window_params = [{transform_indices = @transform_0, window_bounds = array<i64: 4, 2, 4, 2, 16>}, {transform_indices = @transform_1, window_bounds = array<i64: 4, 4, 16>}]} {
    %c0 = arith.constant 0 : index
    %c0_0 = arith.constant 0 : index
    %c0_1 = arith.constant 0 : index
    %c0_2 = arith.constant 0 : index
    %c0_3 = arith.constant 0 : index
    %0 = vector.load %arg1[%c0, %c0_0, %c0_1, %c0_2, %c0_3] : memref<4x2x4x2x16xf32, #tpu.memory_space<vmem>>, vector<4x1x4x1x16xf32>
    %1 = vector.shape_cast %0 : vector<4x1x4x1x16xf32> to vector<4x4x16xf32>
    %c0_4 = arith.constant 0 : index
    %c0_5 = arith.constant 0 : index
    %c0_6 = arith.constant 0 : index
    %c1 = arith.constant 1 : index
    %c0_7 = arith.constant 0 : index
    %2 = vector.load %arg1[%c0_4, %c0_5, %c0_6, %c1, %c0_7] : memref<4x2x4x2x16xf32, #tpu.memory_space<vmem>>, vector<4x1x4x1x16xf32>
    %3 = vector.shape_cast %2 : vector<4x1x4x1x16xf32> to vector<4x4x16xf32>
    %4 = arith.maximumf %1, %3 : vector<4x4x16xf32>
    %c0_8 = arith.constant 0 : index
    %c1_9 = arith.constant 1 : index
    %c0_10 = arith.constant 0 : index
    %c0_11 = arith.constant 0 : index
    %c0_12 = arith.constant 0 : index
    %5 = vector.load %arg1[%c0_8, %c1_9, %c0_10, %c0_11, %c0_12] : memref<4x2x4x2x16xf32, #tpu.memory_space<vmem>>, vector<4x1x4x1x16xf32>
    %6 = vector.shape_cast %5 : vector<4x1x4x1x16xf32> to vector<4x4x16xf32>
    %c0_13 = arith.constant 0 : index
    %c1_14 = arith.constant 1 : index
    %c0_15 = arith.constant 0 : index
    %c1_16 = arith.constant 1 : index
    %c0_17 = arith.constant 0 : index
    %7 = vector.load %arg1[%c0_13, %c1_14, %c0_15, %c1_16, %c0_17] : memref<4x2x4x2x16xf32, #tpu.memory_space<vmem>>, vector<4x1x4x1x16xf32>
    %8 = vector.shape_cast %7 : vector<4x1x4x1x16xf32> to vector<4x4x16xf32>
    %9 = arith.maximumf %6, %8 : vector<4x4x16xf32>
    %10 = arith.maximumf %4, %9 : vector<4x4x16xf32>
    %c0_18 = arith.constant 0 : index
    %c0_19 = arith.constant 0 : index
    %c0_20 = arith.constant 0 : index
    %11 = vector.load %arg2[%c0_18, %c0_19, %c0_20] : memref<4x4x16xf32, #tpu.memory_space<vmem>>, vector<4x4x16xf32>
    tpu.vector_store %arg2[%c0_18, %c0_19, %c0_20], %10 {strides = array<i32>} : memref<4x4x16xf32, #tpu.memory_space<vmem>>, vector<4x4x16xf32>,
    return
  }
  func.func @transform_0(%arg0: i32) -> (i32, i32, i32, i32, i32) {
    %c0_i32 = arith.constant 0 : i32
    %c0_i32_0 = arith.constant 0 : i32
    %c0_i32_1 = arith.constant 0 : i32
    %c0_i32_2 = arith.constant 0 : i32
    %c0_i32_3 = arith.constant 0 : i32
    return %arg0, %c0_i32, %c0_i32_0, %c0_i32_1, %c0_i32_2 : i32, i32, i32, i32, i32
  }
  func.func @transform_1(%arg0: i32) -> (i32, i32, i32) {
    %c0_i32 = arith.constant 0 : i32
    %c0_i32_0 = arith.constant 0 : i32
    %c0_i32_1 = arith.constant 0 : i32
    return %arg0, %c0_i32, %c0_i32_0 : i32, i32, i32
  }
}

module attributes {stable_mosaic.version = 11 : i64} {
  func.func @_conv1_kernel(%arg0: i32, %arg1: memref<16x144xf32, #tpu.memory_space<vmem>>, %arg2: memref<1x144x32xbf16, #tpu.memory_space<vmem>>, %arg3: memref<1x32xf32, #tpu.memory_space<vmem>>, %arg4: memref<16x32xf32, #tpu.memory_space<vmem>>) attributes {dimension_semantics = [#tpu.dimension_semantics<parallel>], iteration_bounds = array<i64: 2>, scalar_prefetch = 0 : i64, scratch_operands = 0 : i64, tpu.core_type = #tpu.core_type<tc>, window_params = [{transform_indices = @transform_0, window_bounds = array<i64: 16, 144>}, {pipeline_mode = #tpu.pipeline_mode<synchronous>, transform_indices = @transform_1, window_bounds = array<i64: 1, 144, 32>}, {pipeline_mode = #tpu.pipeline_mode<synchronous>, transform_indices = @transform_2, window_bounds = array<i64: 1, 32>}, {transform_indices = @transform_3, window_bounds = array<i64: 16, 32>}]} {
    %cst = arith.constant 0.000000e+00 : f32
    %0 = vector.broadcast %cst : f32 to vector<16x32xf32>
    %c0 = arith.constant 0 : index
    %c0_0 = arith.constant 0 : index
    %1 = vector.load %arg1[%c0, %c0_0] : memref<16x144xf32, #tpu.memory_space<vmem>>, vector<16x144xf32>
    %2 = arith.truncf %1 : vector<16x144xf32> to vector<16x144xbf16>
    %c0_1 = arith.constant 0 : index
    %c0_2 = arith.constant 0 : index
    %c0_3 = arith.constant 0 : index
    %3 = vector.load %arg2[%c0_1, %c0_2, %c0_3] : memref<1x144x32xbf16, #tpu.memory_space<vmem>>, vector<1x144x32xbf16>
    %4 = vector.shape_cast %3 : vector<1x144x32xbf16> to vector<144x32xbf16>
    %cst_4 = arith.constant dense<0.000000e+00> : vector<16x32xf32>
    %5 = tpu.matmul %2, %4, %cst_4 {dimension_numbers = #tpu.dot_dimension_numbers<[1], [0], [0], [1], [0, 0, 1, 1], [], []>} : vector<16x144xbf16>, vector<144x32xbf16>, vector<16x32xf32> -> vector<16x32xf32>
    %6 = arith.addf %0, %5 : vector<16x32xf32>
    %c0_5 = arith.constant 0 : index
    %c0_6 = arith.constant 0 : index
    %7 = vector.load %arg3[%c0_5, %c0_6] : memref<1x32xf32, #tpu.memory_space<vmem>>, vector<1x32xf32>
    %8 = vector.broadcast %7 : vector<1x32xf32> to vector<16x32xf32>
    %9 = arith.addf %6, %8 : vector<16x32xf32>
    %cst_7 = arith.constant 0.000000e+00 : f32
    %10 = vector.broadcast %cst_7 : f32 to vector<16x32xf32>
    %11 = arith.maximumf %9, %10 : vector<16x32xf32>
    %c0_8 = arith.constant 0 : index
    %c0_9 = arith.constant 0 : index
    %12 = vector.load %arg4[%c0_8, %c0_9] : memref<16x32xf32, #tpu.memory_space<vmem>>, vector<16x32xf32>
    tpu.vector_store %arg4[%c0_8, %c0_9], %11 {strides = array<i32>} : memref<16x32xf32, #tpu.memory_space<vmem>>, vector<16x32xf32>,
    return
  }
  func.func @transform_0(%arg0: i32) -> (i32, i32) {
    %c0_i32 = arith.constant 0 : i32
    %c0_i32_0 = arith.constant 0 : i32
    return %arg0, %c0_i32 : i32, i32
  }
  func.func @transform_1(%arg0: i32) -> (i32, i32, i32) {
    %c0_i32 = arith.constant 0 : i32
    %c0_i32_0 = arith.constant 0 : i32
    %c0_i32_1 = arith.constant 0 : i32
    %c0_i32_2 = arith.constant 0 : i32
    return %c0_i32, %c0_i32_0, %c0_i32_1 : i32, i32, i32
  }
  func.func @transform_2(%arg0: i32) -> (i32, i32) {
    %c0_i32 = arith.constant 0 : i32
    %c0_i32_0 = arith.constant 0 : i32
    %c0_i32_1 = arith.constant 0 : i32
    return %c0_i32, %c0_i32_0 : i32, i32
  }
  func.func @transform_3(%arg0: i32) -> (i32, i32) {
    %c0_i32 = arith.constant 0 : i32
    %c0_i32_0 = arith.constant 0 : i32
    return %arg0, %c0_i32 : i32, i32
  }
}

module attributes {stable_mosaic.version = 11 : i64} {
  func.func @_conv1_kernel(%arg0: i32, %arg1: memref<16x288xf32, #tpu.memory_space<vmem>>, %arg2: memref<1x288x32xbf16, #tpu.memory_space<vmem>>, %arg3: memref<1x32xf32, #tpu.memory_space<vmem>>, %arg4: memref<16x32xf32, #tpu.memory_space<vmem>>) attributes {dimension_semantics = [#tpu.dimension_semantics<parallel>], iteration_bounds = array<i64: 2>, scalar_prefetch = 0 : i64, scratch_operands = 0 : i64, tpu.core_type = #tpu.core_type<tc>, window_params = [{transform_indices = @transform_0, window_bounds = array<i64: 16, 288>}, {pipeline_mode = #tpu.pipeline_mode<synchronous>, transform_indices = @transform_1, window_bounds = array<i64: 1, 288, 32>}, {pipeline_mode = #tpu.pipeline_mode<synchronous>, transform_indices = @transform_2, window_bounds = array<i64: 1, 32>}, {transform_indices = @transform_3, window_bounds = array<i64: 16, 32>}]} {
    %cst = arith.constant 0.000000e+00 : f32
    %0 = vector.broadcast %cst : f32 to vector<16x32xf32>
    %c0 = arith.constant 0 : index
    %c0_0 = arith.constant 0 : index
    %1 = vector.load %arg1[%c0, %c0_0] : memref<16x288xf32, #tpu.memory_space<vmem>>, vector<16x288xf32>
    %2 = arith.truncf %1 : vector<16x288xf32> to vector<16x288xbf16>
    %c0_1 = arith.constant 0 : index
    %c0_2 = arith.constant 0 : index
    %c0_3 = arith.constant 0 : index
    %3 = vector.load %arg2[%c0_1, %c0_2, %c0_3] : memref<1x288x32xbf16, #tpu.memory_space<vmem>>, vector<1x288x32xbf16>
    %4 = vector.shape_cast %3 : vector<1x288x32xbf16> to vector<288x32xbf16>
    %cst_4 = arith.constant dense<0.000000e+00> : vector<16x32xf32>
    %5 = tpu.matmul %2, %4, %cst_4 {dimension_numbers = #tpu.dot_dimension_numbers<[1], [0], [0], [1], [0, 0, 1, 1], [], []>} : vector<16x288xbf16>, vector<288x32xbf16>, vector<16x32xf32> -> vector<16x32xf32>
    %6 = arith.addf %0, %5 : vector<16x32xf32>
    %c0_5 = arith.constant 0 : index
    %c0_6 = arith.constant 0 : index
    %7 = vector.load %arg3[%c0_5, %c0_6] : memref<1x32xf32, #tpu.memory_space<vmem>>, vector<1x32xf32>
    %8 = vector.broadcast %7 : vector<1x32xf32> to vector<16x32xf32>
    %9 = arith.addf %6, %8 : vector<16x32xf32>
    %cst_7 = arith.constant 0.000000e+00 : f32
    %10 = vector.broadcast %cst_7 : f32 to vector<16x32xf32>
    %11 = arith.maximumf %9, %10 : vector<16x32xf32>
    %c0_8 = arith.constant 0 : index
    %c0_9 = arith.constant 0 : index
    %12 = vector.load %arg4[%c0_8, %c0_9] : memref<16x32xf32, #tpu.memory_space<vmem>>, vector<16x32xf32>
    tpu.vector_store %arg4[%c0_8, %c0_9], %11 {strides = array<i32>} : memref<16x32xf32, #tpu.memory_space<vmem>>, vector<16x32xf32>,
    return
  }
  func.func @transform_0(%arg0: i32) -> (i32, i32) {
    %c0_i32 = arith.constant 0 : i32
    %c0_i32_0 = arith.constant 0 : i32
    return %arg0, %c0_i32 : i32, i32
  }
  func.func @transform_1(%arg0: i32) -> (i32, i32, i32) {
    %c0_i32 = arith.constant 0 : i32
    %c0_i32_0 = arith.constant 0 : i32
    %c0_i32_1 = arith.constant 0 : i32
    %c0_i32_2 = arith.constant 0 : i32
    return %c0_i32, %c0_i32_0, %c0_i32_1 : i32, i32, i32
  }
  func.func @transform_2(%arg0: i32) -> (i32, i32) {
    %c0_i32 = arith.constant 0 : i32
    %c0_i32_0 = arith.constant 0 : i32
    %c0_i32_1 = arith.constant 0 : i32
    return %c0_i32, %c0_i32_0 : i32, i32
  }
  func.func @transform_3(%arg0: i32) -> (i32, i32) {
    %c0_i32 = arith.constant 0 : i32
    %c0_i32_0 = arith.constant 0 : i32
    return %arg0, %c0_i32 : i32, i32
  }
}

module attributes {stable_mosaic.version = 11 : i64} {
  func.func @_conv2_kernel(%arg0: i32, %arg1: memref<80x96xf32, #tpu.memory_space<vmem>>, %arg2: memref<3x96x16xbf16, #tpu.memory_space<vmem>>, %arg3: memref<80x48xf32, #tpu.memory_space<vmem>>, %arg4: memref<3x48x16xbf16, #tpu.memory_space<vmem>>, %arg5: memref<1x16xf32, #tpu.memory_space<vmem>>, %arg6: memref<64x16xf32, #tpu.memory_space<vmem>>) attributes {dimension_semantics = [#tpu.dimension_semantics<parallel>], iteration_bounds = array<i64: 2>, scalar_prefetch = 0 : i64, scratch_operands = 0 : i64, tpu.core_type = #tpu.core_type<tc>, window_params = [{transform_indices = @transform_0, window_bounds = array<i64: 80, 96>}, {pipeline_mode = #tpu.pipeline_mode<synchronous>, transform_indices = @transform_1, window_bounds = array<i64: 3, 96, 16>}, {transform_indices = @transform_2, window_bounds = array<i64: 80, 48>}, {pipeline_mode = #tpu.pipeline_mode<synchronous>, transform_indices = @transform_3, window_bounds = array<i64: 3, 48, 16>}, {pipeline_mode = #tpu.pipeline_mode<synchronous>, transform_indices = @transform_4, window_bounds = array<i64: 1, 16>}, {transform_indices = @transform_5, window_bounds = array<i64: 64, 16>}]} {
    %cst = arith.constant 0.000000e+00 : f32
    %0 = vector.broadcast %cst : f32 to vector<64x16xf32>
    %c0 = arith.constant 0 : index
    %c0_0 = arith.constant 0 : index
    %1 = vector.load %arg1[%c0, %c0_0] : memref<80x96xf32, #tpu.memory_space<vmem>>, vector<64x96xf32>
    %2 = arith.truncf %1 : vector<64x96xf32> to vector<64x96xbf16>
    %c0_1 = arith.constant 0 : index
    %c0_2 = arith.constant 0 : index
    %c0_3 = arith.constant 0 : index
    %3 = vector.load %arg2[%c0_1, %c0_2, %c0_3] : memref<3x96x16xbf16, #tpu.memory_space<vmem>>, vector<1x96x16xbf16>
    %4 = vector.shape_cast %3 : vector<1x96x16xbf16> to vector<96x16xbf16>
    %cst_4 = arith.constant dense<0.000000e+00> : vector<64x16xf32>
    %5 = tpu.matmul %2, %4, %cst_4 {dimension_numbers = #tpu.dot_dimension_numbers<[1], [0], [0], [1], [0, 0, 1, 1], [], []>} : vector<64x96xbf16>, vector<96x16xbf16>, vector<64x16xf32> -> vector<64x16xf32>
    %6 = arith.addf %0, %5 : vector<64x16xf32>
    %c8 = arith.constant 8 : index
    %c0_5 = arith.constant 0 : index
    %7 = vector.load %arg1[%c8, %c0_5] : memref<80x96xf32, #tpu.memory_space<vmem>>, vector<64x96xf32>
    %8 = arith.truncf %7 : vector<64x96xf32> to vector<64x96xbf16>
    %c1 = arith.constant 1 : index
    %c0_6 = arith.constant 0 : index
    %c0_7 = arith.constant 0 : index
    %9 = vector.load %arg2[%c1, %c0_6, %c0_7] : memref<3x96x16xbf16, #tpu.memory_space<vmem>>, vector<1x96x16xbf16>
    %10 = vector.shape_cast %9 : vector<1x96x16xbf16> to vector<96x16xbf16>
    %cst_8 = arith.constant dense<0.000000e+00> : vector<64x16xf32>
    %11 = tpu.matmul %8, %10, %cst_8 {dimension_numbers = #tpu.dot_dimension_numbers<[1], [0], [0], [1], [0, 0, 1, 1], [], []>} : vector<64x96xbf16>, vector<96x16xbf16>, vector<64x16xf32> -> vector<64x16xf32>
    %12 = arith.addf %6, %11 : vector<64x16xf32>
    %c16 = arith.constant 16 : index
    %c0_9 = arith.constant 0 : index
    %13 = vector.load %arg1[%c16, %c0_9] : memref<80x96xf32, #tpu.memory_space<vmem>>, vector<64x96xf32>
    %14 = arith.truncf %13 : vector<64x96xf32> to vector<64x96xbf16>
    %c2 = arith.constant 2 : index
    %c0_10 = arith.constant 0 : index
    %c0_11 = arith.constant 0 : index
    %15 = vector.load %arg2[%c2, %c0_10, %c0_11] : memref<3x96x16xbf16, #tpu.memory_space<vmem>>, vector<1x96x16xbf16>
    %16 = vector.shape_cast %15 : vector<1x96x16xbf16> to vector<96x16xbf16>
    %cst_12 = arith.constant dense<0.000000e+00> : vector<64x16xf32>
    %17 = tpu.matmul %14, %16, %cst_12 {dimension_numbers = #tpu.dot_dimension_numbers<[1], [0], [0], [1], [0, 0, 1, 1], [], []>} : vector<64x96xbf16>, vector<96x16xbf16>, vector<64x16xf32> -> vector<64x16xf32>
    %18 = arith.addf %12, %17 : vector<64x16xf32>
    %c0_13 = arith.constant 0 : index
    %c0_14 = arith.constant 0 : index
    %19 = vector.load %arg3[%c0_13, %c0_14] : memref<80x48xf32, #tpu.memory_space<vmem>>, vector<64x48xf32>
    %20 = arith.truncf %19 : vector<64x48xf32> to vector<64x48xbf16>
    %c0_15 = arith.constant 0 : index
    %c0_16 = arith.constant 0 : index
    %c0_17 = arith.constant 0 : index
    %21 = vector.load %arg4[%c0_15, %c0_16, %c0_17] : memref<3x48x16xbf16, #tpu.memory_space<vmem>>, vector<1x48x16xbf16>
    %22 = vector.shape_cast %21 : vector<1x48x16xbf16> to vector<48x16xbf16>
    %cst_18 = arith.constant dense<0.000000e+00> : vector<64x16xf32>
    %23 = tpu.matmul %20, %22, %cst_18 {dimension_numbers = #tpu.dot_dimension_numbers<[1], [0], [0], [1], [0, 0, 1, 1], [], []>} : vector<64x48xbf16>, vector<48x16xbf16>, vector<64x16xf32> -> vector<64x16xf32>
    %24 = arith.addf %18, %23 : vector<64x16xf32>
    %c8_19 = arith.constant 8 : index
    %c0_20 = arith.constant 0 : index
    %25 = vector.load %arg3[%c8_19, %c0_20] : memref<80x48xf32, #tpu.memory_space<vmem>>, vector<64x48xf32>
    %26 = arith.truncf %25 : vector<64x48xf32> to vector<64x48xbf16>
    %c1_21 = arith.constant 1 : index
    %c0_22 = arith.constant 0 : index
    %c0_23 = arith.constant 0 : index
    %27 = vector.load %arg4[%c1_21, %c0_22, %c0_23] : memref<3x48x16xbf16, #tpu.memory_space<vmem>>, vector<1x48x16xbf16>
    %28 = vector.shape_cast %27 : vector<1x48x16xbf16> to vector<48x16xbf16>
    %cst_24 = arith.constant dense<0.000000e+00> : vector<64x16xf32>
    %29 = tpu.matmul %26, %28, %cst_24 {dimension_numbers = #tpu.dot_dimension_numbers<[1], [0], [0], [1], [0, 0, 1, 1], [], []>} : vector<64x48xbf16>, vector<48x16xbf16>, vector<64x16xf32> -> vector<64x16xf32>
    %30 = arith.addf %24, %29 : vector<64x16xf32>
    %c16_25 = arith.constant 16 : index
    %c0_26 = arith.constant 0 : index
    %31 = vector.load %arg3[%c16_25, %c0_26] : memref<80x48xf32, #tpu.memory_space<vmem>>, vector<64x48xf32>
    %32 = arith.truncf %31 : vector<64x48xf32> to vector<64x48xbf16>
    %c2_27 = arith.constant 2 : index
    %c0_28 = arith.constant 0 : index
    %c0_29 = arith.constant 0 : index
    %33 = vector.load %arg4[%c2_27, %c0_28, %c0_29] : memref<3x48x16xbf16, #tpu.memory_space<vmem>>, vector<1x48x16xbf16>
    %34 = vector.shape_cast %33 : vector<1x48x16xbf16> to vector<48x16xbf16>
    %cst_30 = arith.constant dense<0.000000e+00> : vector<64x16xf32>
    %35 = tpu.matmul %32, %34, %cst_30 {dimension_numbers = #tpu.dot_dimension_numbers<[1], [0], [0], [1], [0, 0, 1, 1], [], []>} : vector<64x48xbf16>, vector<48x16xbf16>, vector<64x16xf32> -> vector<64x16xf32>
    %36 = arith.addf %30, %35 : vector<64x16xf32>
    %c0_31 = arith.constant 0 : index
    %c0_32 = arith.constant 0 : index
    %37 = vector.load %arg5[%c0_31, %c0_32] : memref<1x16xf32, #tpu.memory_space<vmem>>, vector<1x16xf32>
    %38 = vector.broadcast %37 : vector<1x16xf32> to vector<64x16xf32>
    %39 = arith.addf %36, %38 : vector<64x16xf32>
    %cst_33 = arith.constant 0.000000e+00 : f32
    %40 = vector.broadcast %cst_33 : f32 to vector<64x16xf32>
    %41 = arith.maximumf %39, %40 : vector<64x16xf32>
    %c0_34 = arith.constant 0 : index
    %c0_35 = arith.constant 0 : index
    %42 = vector.load %arg6[%c0_34, %c0_35] : memref<64x16xf32, #tpu.memory_space<vmem>>, vector<64x16xf32>
    tpu.vector_store %arg6[%c0_34, %c0_35], %41 {strides = array<i32>} : memref<64x16xf32, #tpu.memory_space<vmem>>, vector<64x16xf32>,
    return
  }
  func.func @transform_0(%arg0: i32) -> (i32, i32) {
    %c0_i32 = arith.constant 0 : i32
    %c0_i32_0 = arith.constant 0 : i32
    return %arg0, %c0_i32 : i32, i32
  }
  func.func @transform_1(%arg0: i32) -> (i32, i32, i32) {
    %c0_i32 = arith.constant 0 : i32
    %c0_i32_0 = arith.constant 0 : i32
    %c0_i32_1 = arith.constant 0 : i32
    %c0_i32_2 = arith.constant 0 : i32
    return %c0_i32, %c0_i32_0, %c0_i32_1 : i32, i32, i32
  }
  func.func @transform_2(%arg0: i32) -> (i32, i32) {
    %c0_i32 = arith.constant 0 : i32
    %c0_i32_0 = arith.constant 0 : i32
    return %arg0, %c0_i32 : i32, i32
  }
  func.func @transform_3(%arg0: i32) -> (i32, i32, i32) {
    %c0_i32 = arith.constant 0 : i32
    %c0_i32_0 = arith.constant 0 : i32
    %c0_i32_1 = arith.constant 0 : i32
    %c0_i32_2 = arith.constant 0 : i32
    return %c0_i32, %c0_i32_0, %c0_i32_1 : i32, i32, i32
  }
  func.func @transform_4(%arg0: i32) -> (i32, i32) {
    %c0_i32 = arith.constant 0 : i32
    %c0_i32_0 = arith.constant 0 : i32
    %c0_i32_1 = arith.constant 0 : i32
    return %c0_i32, %c0_i32_0 : i32, i32
  }
  func.func @transform_5(%arg0: i32) -> (i32, i32) {
    %c0_i32 = arith.constant 0 : i32
    %c0_i32_0 = arith.constant 0 : i32
    return %arg0, %c0_i32 : i32, i32
  }
}

module attributes {stable_mosaic.version = 11 : i64} {
  func.func @_conv1_kernel(%arg0: i32, %arg1: memref<256x8xf32, #tpu.memory_space<vmem>>, %arg2: memref<1x8x2xbf16, #tpu.memory_space<vmem>>, %arg3: memref<1x2xf32, #tpu.memory_space<vmem>>, %arg4: memref<256x2xf32, #tpu.memory_space<vmem>>) attributes {dimension_semantics = [#tpu.dimension_semantics<parallel>], iteration_bounds = array<i64: 2>, scalar_prefetch = 0 : i64, scratch_operands = 0 : i64, tpu.core_type = #tpu.core_type<tc>, window_params = [{transform_indices = @transform_0, window_bounds = array<i64: 256, 8>}, {pipeline_mode = #tpu.pipeline_mode<synchronous>, transform_indices = @transform_1, window_bounds = array<i64: 1, 8, 2>}, {pipeline_mode = #tpu.pipeline_mode<synchronous>, transform_indices = @transform_2, window_bounds = array<i64: 1, 2>}, {transform_indices = @transform_3, window_bounds = array<i64: 256, 2>}]} {
    %cst = arith.constant 0.000000e+00 : f32
    %0 = vector.broadcast %cst : f32 to vector<256x2xf32>
    %c0 = arith.constant 0 : index
    %c0_0 = arith.constant 0 : index
    %1 = vector.load %arg1[%c0, %c0_0] : memref<256x8xf32, #tpu.memory_space<vmem>>, vector<256x8xf32>
    %2 = arith.truncf %1 : vector<256x8xf32> to vector<256x8xbf16>
    %c0_1 = arith.constant 0 : index
    %c0_2 = arith.constant 0 : index
    %c0_3 = arith.constant 0 : index
    %3 = vector.load %arg2[%c0_1, %c0_2, %c0_3] : memref<1x8x2xbf16, #tpu.memory_space<vmem>>, vector<1x8x2xbf16>
    %4 = vector.shape_cast %3 : vector<1x8x2xbf16> to vector<8x2xbf16>
    %cst_4 = arith.constant dense<0.000000e+00> : vector<256x2xf32>
    %5 = tpu.matmul %2, %4, %cst_4 {dimension_numbers = #tpu.dot_dimension_numbers<[1], [0], [0], [1], [0, 0, 1, 1], [], []>} : vector<256x8xbf16>, vector<8x2xbf16>, vector<256x2xf32> -> vector<256x2xf32>
    %6 = arith.addf %0, %5 : vector<256x2xf32>
    %c0_5 = arith.constant 0 : index
    %c0_6 = arith.constant 0 : index
    %7 = vector.load %arg3[%c0_5, %c0_6] : memref<1x2xf32, #tpu.memory_space<vmem>>, vector<1x2xf32>
    %8 = vector.broadcast %7 : vector<1x2xf32> to vector<256x2xf32>
    %9 = arith.addf %6, %8 : vector<256x2xf32>
    %10 = vector.extract_strided_slice %9 {offsets = [0, 1], sizes = [256, 1], strides = [1, 1]} : vector<256x2xf32> to vector<256x1xf32>
    %11 = vector.extract_strided_slice %9 {offsets = [0, 0], sizes = [256, 1], strides = [1, 1]} : vector<256x2xf32> to vector<256x1xf32>
    %12 = arith.subf %10, %11 : vector<256x1xf32>
    %cst_7 = arith.constant 0.000000e+00 : f32
    %13 = vector.broadcast %cst_7 : f32 to vector<256x1xf32>
    %14 = arith.subf %13, %12 : vector<256x1xf32>
    %15 = math.exp %14 : vector<256x1xf32>
    %cst_8 = arith.constant 1.000000e+00 : f32
    %16 = vector.broadcast %cst_8 : f32 to vector<256x1xf32>
    %17 = arith.addf %16, %15 : vector<256x1xf32>
    %18 = tpu.reciprocal %17 {approx = true} : vector<256x1xf32> -> vector<256x1xf32>
    %cst_9 = arith.constant 1.000000e+00 : f32
    %19 = vector.broadcast %cst_9 : f32 to vector<256x1xf32>
    %20 = arith.subf %19, %18 : vector<256x1xf32>
    %21 = tpu.concatenate %20, %18 in 1 : vector<256x1xf32>, vector<256x1xf32> -> vector<256x2xf32>
    %c0_10 = arith.constant 0 : index
    %c0_11 = arith.constant 0 : index
    %22 = vector.load %arg4[%c0_10, %c0_11] : memref<256x2xf32, #tpu.memory_space<vmem>>, vector<256x2xf32>
    tpu.vector_store %arg4[%c0_10, %c0_11], %21 {strides = array<i32>} : memref<256x2xf32, #tpu.memory_space<vmem>>, vector<256x2xf32>,
    return
  }
  func.func @transform_0(%arg0: i32) -> (i32, i32) {
    %c0_i32 = arith.constant 0 : i32
    %c0_i32_0 = arith.constant 0 : i32
    return %arg0, %c0_i32 : i32, i32
  }
  func.func @transform_1(%arg0: i32) -> (i32, i32, i32) {
    %c0_i32 = arith.constant 0 : i32
    %c0_i32_0 = arith.constant 0 : i32
    %c0_i32_1 = arith.constant 0 : i32
    %c0_i32_2 = arith.constant 0 : i32
    return %c0_i32, %c0_i32_0, %c0_i32_1 : i32, i32, i32
  }
  func.func @transform_2(%arg0: i32) -> (i32, i32) {
    %c0_i32 = arith.constant 0 : i32
    %c0_i32_0 = arith.constant 0 : i32
    %c0_i32_1 = arith.constant 0 : i32
    return %c0_i32, %c0_i32_0 : i32, i32
  }
  func.func @transform_3(%arg0: i32) -> (i32, i32) {
    %c0_i32 = arith.constant 0 : i32
    %c0_i32_0 = arith.constant 0 : i32
    return %arg0, %c0_i32 : i32, i32
  }
}

module attributes {stable_mosaic.version = 11 : i64} {
  func.func @_conv2_kernel(%arg0: i32, %arg1: memref<288x48xf32, #tpu.memory_space<vmem>>, %arg2: memref<3x48x8xbf16, #tpu.memory_space<vmem>>, %arg3: memref<288x24xf32, #tpu.memory_space<vmem>>, %arg4: memref<3x24x8xbf16, #tpu.memory_space<vmem>>, %arg5: memref<1x8xf32, #tpu.memory_space<vmem>>, %arg6: memref<256x8xf32, #tpu.memory_space<vmem>>) attributes {dimension_semantics = [#tpu.dimension_semantics<parallel>], iteration_bounds = array<i64: 2>, scalar_prefetch = 0 : i64, scratch_operands = 0 : i64, tpu.core_type = #tpu.core_type<tc>, window_params = [{transform_indices = @transform_0, window_bounds = array<i64: 288, 48>}, {pipeline_mode = #tpu.pipeline_mode<synchronous>, transform_indices = @transform_1, window_bounds = array<i64: 3, 48, 8>}, {transform_indices = @transform_2, window_bounds = array<i64: 288, 24>}, {pipeline_mode = #tpu.pipeline_mode<synchronous>, transform_indices = @transform_3, window_bounds = array<i64: 3, 24, 8>}, {pipeline_mode = #tpu.pipeline_mode<synchronous>, transform_indices = @transform_4, window_bounds = array<i64: 1, 8>}, {transform_indices = @transform_5, window_bounds = array<i64: 256, 8>}]} {
    %cst = arith.constant 0.000000e+00 : f32
    %0 = vector.broadcast %cst : f32 to vector<256x8xf32>
    %c0 = arith.constant 0 : index
    %c0_0 = arith.constant 0 : index
    %1 = vector.load %arg1[%c0, %c0_0] : memref<288x48xf32, #tpu.memory_space<vmem>>, vector<256x48xf32>
    %2 = arith.truncf %1 : vector<256x48xf32> to vector<256x48xbf16>
    %c0_1 = arith.constant 0 : index
    %c0_2 = arith.constant 0 : index
    %c0_3 = arith.constant 0 : index
    %3 = vector.load %arg2[%c0_1, %c0_2, %c0_3] : memref<3x48x8xbf16, #tpu.memory_space<vmem>>, vector<1x48x8xbf16>
    %4 = vector.shape_cast %3 : vector<1x48x8xbf16> to vector<48x8xbf16>
    %cst_4 = arith.constant dense<0.000000e+00> : vector<256x8xf32>
    %5 = tpu.matmul %2, %4, %cst_4 {dimension_numbers = #tpu.dot_dimension_numbers<[1], [0], [0], [1], [0, 0, 1, 1], [], []>} : vector<256x48xbf16>, vector<48x8xbf16>, vector<256x8xf32> -> vector<256x8xf32>
    %6 = arith.addf %0, %5 : vector<256x8xf32>
    %c16 = arith.constant 16 : index
    %c0_5 = arith.constant 0 : index
    %7 = vector.load %arg1[%c16, %c0_5] : memref<288x48xf32, #tpu.memory_space<vmem>>, vector<256x48xf32>
    %8 = arith.truncf %7 : vector<256x48xf32> to vector<256x48xbf16>
    %c1 = arith.constant 1 : index
    %c0_6 = arith.constant 0 : index
    %c0_7 = arith.constant 0 : index
    %9 = vector.load %arg2[%c1, %c0_6, %c0_7] : memref<3x48x8xbf16, #tpu.memory_space<vmem>>, vector<1x48x8xbf16>
    %10 = vector.shape_cast %9 : vector<1x48x8xbf16> to vector<48x8xbf16>
    %cst_8 = arith.constant dense<0.000000e+00> : vector<256x8xf32>
    %11 = tpu.matmul %8, %10, %cst_8 {dimension_numbers = #tpu.dot_dimension_numbers<[1], [0], [0], [1], [0, 0, 1, 1], [], []>} : vector<256x48xbf16>, vector<48x8xbf16>, vector<256x8xf32> -> vector<256x8xf32>
    %12 = arith.addf %6, %11 : vector<256x8xf32>
    %c32 = arith.constant 32 : index
    %c0_9 = arith.constant 0 : index
    %13 = vector.load %arg1[%c32, %c0_9] : memref<288x48xf32, #tpu.memory_space<vmem>>, vector<256x48xf32>
    %14 = arith.truncf %13 : vector<256x48xf32> to vector<256x48xbf16>
    %c2 = arith.constant 2 : index
    %c0_10 = arith.constant 0 : index
    %c0_11 = arith.constant 0 : index
    %15 = vector.load %arg2[%c2, %c0_10, %c0_11] : memref<3x48x8xbf16, #tpu.memory_space<vmem>>, vector<1x48x8xbf16>
    %16 = vector.shape_cast %15 : vector<1x48x8xbf16> to vector<48x8xbf16>
    %cst_12 = arith.constant dense<0.000000e+00> : vector<256x8xf32>
    %17 = tpu.matmul %14, %16, %cst_12 {dimension_numbers = #tpu.dot_dimension_numbers<[1], [0], [0], [1], [0, 0, 1, 1], [], []>} : vector<256x48xbf16>, vector<48x8xbf16>, vector<256x8xf32> -> vector<256x8xf32>
    %18 = arith.addf %12, %17 : vector<256x8xf32>
    %c0_13 = arith.constant 0 : index
    %c0_14 = arith.constant 0 : index
    %19 = vector.load %arg3[%c0_13, %c0_14] : memref<288x24xf32, #tpu.memory_space<vmem>>, vector<256x24xf32>
    %20 = arith.truncf %19 : vector<256x24xf32> to vector<256x24xbf16>
    %c0_15 = arith.constant 0 : index
    %c0_16 = arith.constant 0 : index
    %c0_17 = arith.constant 0 : index
    %21 = vector.load %arg4[%c0_15, %c0_16, %c0_17] : memref<3x24x8xbf16, #tpu.memory_space<vmem>>, vector<1x24x8xbf16>
    %22 = vector.shape_cast %21 : vector<1x24x8xbf16> to vector<24x8xbf16>
    %cst_18 = arith.constant dense<0.000000e+00> : vector<256x8xf32>
    %23 = tpu.matmul %20, %22, %cst_18 {dimension_numbers = #tpu.dot_dimension_numbers<[1], [0], [0], [1], [0, 0, 1, 1], [], []>} : vector<256x24xbf16>, vector<24x8xbf16>, vector<256x8xf32> -> vector<256x8xf32>
    %24 = arith.addf %18, %23 : vector<256x8xf32>
    %c16_19 = arith.constant 16 : index
    %c0_20 = arith.constant 0 : index
    %25 = vector.load %arg3[%c16_19, %c0_20] : memref<288x24xf32, #tpu.memory_space<vmem>>, vector<256x24xf32>
    %26 = arith.truncf %25 : vector<256x24xf32> to vector<256x24xbf16>
    %c1_21 = arith.constant 1 : index
    %c0_22 = arith.constant 0 : index
    %c0_23 = arith.constant 0 : index
    %27 = vector.load %arg4[%c1_21, %c0_22, %c0_23] : memref<3x24x8xbf16, #tpu.memory_space<vmem>>, vector<1x24x8xbf16>
    %28 = vector.shape_cast %27 : vector<1x24x8xbf16> to vector<24x8xbf16>
    %cst_24 = arith.constant dense<0.000000e+00> : vector<256x8xf32>
    %29 = tpu.matmul %26, %28, %cst_24 {dimension_numbers = #tpu.dot_dimension_numbers<[1], [0], [0], [1], [0, 0, 1, 1], [], []>} : vector<256x24xbf16>, vector<24x8xbf16>, vector<256x8xf32> -> vector<256x8xf32>
    %30 = arith.addf %24, %29 : vector<256x8xf32>
    %c32_25 = arith.constant 32 : index
    %c0_26 = arith.constant 0 : index
    %31 = vector.load %arg3[%c32_25, %c0_26] : memref<288x24xf32, #tpu.memory_space<vmem>>, vector<256x24xf32>
    %32 = arith.truncf %31 : vector<256x24xf32> to vector<256x24xbf16>
    %c2_27 = arith.constant 2 : index
    %c0_28 = arith.constant 0 : index
    %c0_29 = arith.constant 0 : index
    %33 = vector.load %arg4[%c2_27, %c0_28, %c0_29] : memref<3x24x8xbf16, #tpu.memory_space<vmem>>, vector<1x24x8xbf16>
    %34 = vector.shape_cast %33 : vector<1x24x8xbf16> to vector<24x8xbf16>
    %cst_30 = arith.constant dense<0.000000e+00> : vector<256x8xf32>
    %35 = tpu.matmul %32, %34, %cst_30 {dimension_numbers = #tpu.dot_dimension_numbers<[1], [0], [0], [1], [0, 0, 1, 1], [], []>} : vector<256x24xbf16>, vector<24x8xbf16>, vector<256x8xf32> -> vector<256x8xf32>
    %36 = arith.addf %30, %35 : vector<256x8xf32>
    %c0_31 = arith.constant 0 : index
    %c0_32 = arith.constant 0 : index
    %37 = vector.load %arg5[%c0_31, %c0_32] : memref<1x8xf32, #tpu.memory_space<vmem>>, vector<1x8xf32>
    %38 = vector.broadcast %37 : vector<1x8xf32> to vector<256x8xf32>
    %39 = arith.addf %36, %38 : vector<256x8xf32>
    %cst_33 = arith.constant 0.000000e+00 : f32
    %40 = vector.broadcast %cst_33 : f32 to vector<256x8xf32>
    %41 = arith.maximumf %39, %40 : vector<256x8xf32>
    %c0_34 = arith.constant 0 : index
    %c0_35 = arith.constant 0 : index
    %42 = vector.load %arg6[%c0_34, %c0_35] : memref<256x8xf32, #tpu.memory_space<vmem>>, vector<256x8xf32>
    tpu.vector_store %arg6[%c0_34, %c0_35], %41 {strides = array<i32>} : memref<256x8xf32, #tpu.memory_space<vmem>>, vector<256x8xf32>,
    return
  }
  func.func @transform_0(%arg0: i32) -> (i32, i32) {
    %c0_i32 = arith.constant 0 : i32
    %c0_i32_0 = arith.constant 0 : i32
    return %arg0, %c0_i32 : i32, i32
  }
  func.func @transform_1(%arg0: i32) -> (i32, i32, i32) {
    %c0_i32 = arith.constant 0 : i32
    %c0_i32_0 = arith.constant 0 : i32
    %c0_i32_1 = arith.constant 0 : i32
    %c0_i32_2 = arith.constant 0 : i32
    return %c0_i32, %c0_i32_0, %c0_i32_1 : i32, i32, i32
  }
  func.func @transform_2(%arg0: i32) -> (i32, i32) {
    %c0_i32 = arith.constant 0 : i32
    %c0_i32_0 = arith.constant 0 : i32
    return %arg0, %c0_i32 : i32, i32
  }
  func.func @transform_3(%arg0: i32) -> (i32, i32, i32) {
    %c0_i32 = arith.constant 0 : i32
    %c0_i32_0 = arith.constant 0 : i32
    %c0_i32_1 = arith.constant 0 : i32
    %c0_i32_2 = arith.constant 0 : i32
    return %c0_i32, %c0_i32_0, %c0_i32_1 : i32, i32, i32
  }
  func.func @transform_4(%arg0: i32) -> (i32, i32) {
    %c0_i32 = arith.constant 0 : i32
    %c0_i32_0 = arith.constant 0 : i32
    %c0_i32_1 = arith.constant 0 : i32
    return %c0_i32, %c0_i32_0 : i32, i32
  }
  func.func @transform_5(%arg0: i32) -> (i32, i32) {
    %c0_i32 = arith.constant 0 : i32
    %c0_i32_0 = arith.constant 0 : i32
    return %arg0, %c0_i32 : i32, i32
  }
}

module attributes {stable_mosaic.version = 11 : i64} {
  func.func @_ag_head_kernel(%arg0: i32, %arg1: memref<1x1x256xf32, #tpu.memory_space<vmem>>, %arg2: memref<1x256xf32, #tpu.memory_space<vmem>>, %arg3: memref<1x256xf32, #tpu.memory_space<vmem>>, %arg4: memref<32x2xf32, #tpu.memory_space<vmem>>, %arg5: memref<8x32xf32, #tpu.memory_space<vmem>>, %arg6: memref<32x8xf32, #tpu.memory_space<vmem>>, %arg7: memref<1x2x256xf32, #tpu.memory_space<vmem>>) attributes {dimension_semantics = [#tpu.dimension_semantics<parallel>], iteration_bounds = array<i64: 2>, scalar_prefetch = 0 : i64, scratch_operands = 0 : i64, tpu.core_type = #tpu.core_type<tc>, window_params = [{transform_indices = @transform_0, window_bounds = array<i64: 1, 1, 256>}, {pipeline_mode = #tpu.pipeline_mode<synchronous>, transform_indices = @transform_1, window_bounds = array<i64: 1, 256>}, {pipeline_mode = #tpu.pipeline_mode<synchronous>, transform_indices = @transform_2, window_bounds = array<i64: 1, 256>}, {pipeline_mode = #tpu.pipeline_mode<synchronous>, transform_indices = @transform_3, window_bounds = array<i64: 32, 2>}, {pipeline_mode = #tpu.pipeline_mode<synchronous>, transform_indices = @transform_4, window_bounds = array<i64: 8, 32>}, {pipeline_mode = #tpu.pipeline_mode<synchronous>, transform_indices = @transform_5, window_bounds = array<i64: 32, 8>}, {transform_indices = @transform_6, window_bounds = array<i64: 1, 2, 256>}]} {
    %c0 = arith.constant 0 : index
    %c0_0 = arith.constant 0 : index
    %c0_1 = arith.constant 0 : index
    %0 = vector.load %arg1[%c0, %c0_0, %c0_1] : memref<1x1x256xf32, #tpu.memory_space<vmem>>, vector<1x1x256xf32>
    %1 = vector.shape_cast %0 : vector<1x1x256xf32> to vector<1x256xf32>
    %c0_2 = arith.constant 0 : index
    %c0_3 = arith.constant 0 : index
    %2 = vector.load %arg2[%c0_2, %c0_3] : memref<1x256xf32, #tpu.memory_space<vmem>>, vector<1x256xf32>
    %c0_4 = arith.constant 0 : index
    %c0_5 = arith.constant 0 : index
    %3 = vector.load %arg3[%c0_4, %c0_5] : memref<1x256xf32, #tpu.memory_space<vmem>>, vector<1x256xf32>
    %4 = vector.shape_cast %1 : vector<1x256xf32> to vector<1x1x256xf32>
    %cst = arith.constant dense<0.000000e+00> : vector<1xf32>
    %5 = vector.multi_reduction <add>, %4, %cst [1, 2] : vector<1x1x256xf32> to vector<1xf32>
    %6 = vector.shape_cast %5 : vector<1xf32> to vector<1x1x1xf32>
    %7 = vector.extract %6[0, 0, 0] : f32 from vector<1x1x1xf32>
    %cst_6 = arith.constant 9.99999997E-7 : f32
    %8 = arith.addf %7, %cst_6 : f32
    %9 = arith.mulf %1, %2 : vector<1x256xf32>
    %10 = vector.shape_cast %9 : vector<1x256xf32> to vector<1x1x256xf32>
    %cst_7 = arith.constant dense<0.000000e+00> : vector<1xf32>
    %11 = vector.multi_reduction <add>, %10, %cst_7 [1, 2] : vector<1x1x256xf32> to vector<1xf32>
    %12 = vector.shape_cast %11 : vector<1xf32> to vector<1x1x1xf32>
    %13 = vector.extract %12[0, 0, 0] : f32 from vector<1x1x1xf32>
    %14 = arith.divf %13, %8 : f32
    %15 = arith.mulf %1, %3 : vector<1x256xf32>
    %16 = vector.shape_cast %15 : vector<1x256xf32> to vector<1x1x256xf32>
    %cst_8 = arith.constant dense<0.000000e+00> : vector<1xf32>
    %17 = vector.multi_reduction <add>, %16, %cst_8 [1, 2] : vector<1x1x256xf32> to vector<1xf32>
    %18 = vector.shape_cast %17 : vector<1xf32> to vector<1x1x1xf32>
    %19 = vector.extract %18[0, 0, 0] : f32 from vector<1x1x1xf32>
    %20 = arith.divf %19, %8 : f32
    %21 = vector.broadcast %14 : f32 to vector<1x256xf32>
    %22 = arith.subf %2, %21 : vector<1x256xf32>
    %23 = vector.broadcast %20 : f32 to vector<1x256xf32>
    %24 = arith.subf %3, %23 : vector<1x256xf32>
    %25 = arith.mulf %22, %22 : vector<1x256xf32>
    %26 = arith.mulf %24, %24 : vector<1x256xf32>
    %27 = arith.addf %25, %26 : vector<1x256xf32>
    %cst_9 = arith.constant 9.99999997E-7 : f32
    %28 = vector.broadcast %cst_9 : f32 to vector<1x256xf32>
    %29 = arith.addf %27, %28 : vector<1x256xf32>
    %30 = math.sqrt %29 : vector<1x256xf32>
    %31 = tpu.reciprocal %30 {approx = true} : vector<1x256xf32> -> vector<1x256xf32>
    %32 = arith.mulf %22, %31 : vector<1x256xf32>
    %33 = arith.mulf %24, %31 : vector<1x256xf32>
    %c0_10 = arith.constant 0 : index
    %c0_11 = arith.constant 0 : index
    %34 = vector.load %arg4[%c0_10, %c0_11] : memref<32x2xf32, #tpu.memory_space<vmem>>, vector<32x1xf32>
    %c0_12 = arith.constant 0 : index
    %c1 = arith.constant 1 : index
    %35 = vector.load %arg4[%c0_12, %c1] : memref<32x2xf32, #tpu.memory_space<vmem>>, vector<32x1xf32>
    %36 = vector.broadcast %34 : vector<32x1xf32> to vector<32x256xf32>
    %37 = vector.broadcast %32 : vector<1x256xf32> to vector<32x256xf32>
    %38 = arith.mulf %36, %37 : vector<32x256xf32>
    %39 = vector.broadcast %35 : vector<32x1xf32> to vector<32x256xf32>
    %40 = vector.broadcast %33 : vector<1x256xf32> to vector<32x256xf32>
    %41 = arith.mulf %39, %40 : vector<32x256xf32>
    %42 = arith.addf %38, %41 : vector<32x256xf32>
    %cst_13 = arith.constant 8.000000e+00 : f32
    %43 = vector.broadcast %cst_13 : f32 to vector<32x256xf32>
    %44 = arith.mulf %43, %42 : vector<32x256xf32>
    %45 = math.exp %44 : vector<32x256xf32>
    %46 = vector.broadcast %1 : vector<1x256xf32> to vector<32x256xf32>
    %47 = arith.mulf %45, %46 : vector<32x256xf32>
    %48 = vector.broadcast %30 : vector<1x256xf32> to vector<32x256xf32>
    %49 = arith.mulf %47, %48 : vector<32x256xf32>
    %cst_14 = arith.constant dense<0.000000e+00> : vector<32xf32>
    %50 = vector.multi_reduction <add>, %49, %cst_14 [1] : vector<32x256xf32> to vector<32xf32>
    %51 = vector.shape_cast %50 : vector<32xf32> to vector<32x1xf32>
    %cst_15 = arith.constant dense<0.000000e+00> : vector<32xf32>
    %52 = vector.multi_reduction <add>, %47, %cst_15 [1] : vector<32x256xf32> to vector<32xf32>
    %53 = vector.shape_cast %52 : vector<32xf32> to vector<32x1xf32>
    %cst_16 = arith.constant 9.99999997E-7 : f32
    %54 = vector.broadcast %cst_16 : f32 to vector<32x1xf32>
    %55 = arith.addf %53, %54 : vector<32x1xf32>
    %56 = tpu.reciprocal %55 {approx = true} : vector<32x1xf32> -> vector<32x1xf32>
    %57 = arith.mulf %51, %56 : vector<32x1xf32>
    %58 = arith.mulf %57, %34 : vector<32x1xf32>
    %59 = vector.broadcast %14 : f32 to vector<32x1xf32>
    %60 = arith.addf %59, %58 : vector<32x1xf32>
    %61 = arith.mulf %57, %35 : vector<32x1xf32>
    %62 = vector.broadcast %20 : f32 to vector<32x1xf32>
    %63 = arith.addf %62, %61 : vector<32x1xf32>
    %64 = tpu.concatenate %60, %63 in 1 : vector<32x1xf32>, vector<32x1xf32> -> vector<32x2xf32>
    %c0_17 = arith.constant 0 : index
    %c0_18 = arith.constant 0 : index
    %65 = vector.load %arg5[%c0_17, %c0_18] : memref<8x32xf32, #tpu.memory_space<vmem>>, vector<8x32xf32>
    %cst_19 = arith.constant dense<0.000000e+00> : vector<8x2xf32>
    %66 = tpu.matmul %65, %64, %cst_19 {dimension_numbers = #tpu.dot_dimension_numbers<[1], [0], [0], [1], [0, 0, 1, 1], [], []>} : vector<8x32xf32>, vector<32x2xf32>, vector<8x2xf32> -> vector<8x2xf32>
    %c0_20 = arith.constant 0 : index
    %c0_21 = arith.constant 0 : index
    %67 = vector.load %arg6[%c0_20, %c0_21] : memref<32x8xf32, #tpu.memory_space<vmem>>, vector<32x8xf32>
    %cst_22 = arith.constant dense<0.000000e+00> : vector<32x2xf32>
    %68 = tpu.matmul %67, %66, %cst_22 {dimension_numbers = #tpu.dot_dimension_numbers<[1], [0], [0], [1], [0, 0, 1, 1], [], []>} : vector<32x8xf32>, vector<8x2xf32>, vector<32x2xf32> -> vector<32x2xf32>
    %69 = vector.extract_strided_slice %68 {offsets = [0, 0], sizes = [32, 1], strides = [1, 1]} : vector<32x2xf32> to vector<32x1xf32>
    %70 = vector.extract_strided_slice %68 {offsets = [0, 1], sizes = [32, 1], strides = [1, 1]} : vector<32x2xf32> to vector<32x1xf32>
    %71 = vector.shape_cast %69 : vector<32x1xf32> to vector<1x32x1xf32>
    %cst_23 = arith.constant dense<0.000000e+00> : vector<1xf32>
    %72 = vector.multi_reduction <add>, %71, %cst_23 [1, 2] : vector<1x32x1xf32> to vector<1xf32>
    %73 = vector.shape_cast %72 : vector<1xf32> to vector<1x1x1xf32>
    %74 = vector.extract %73[0, 0, 0] : f32 from vector<1x1x1xf32>
    %cst_24 = arith.constant 3.200000e+01 : f32
    %75 = arith.divf %74, %cst_24 : f32
    %76 = vector.shape_cast %70 : vector<32x1xf32> to vector<1x32x1xf32>
    %cst_25 = arith.constant dense<0.000000e+00> : vector<1xf32>
    %77 = vector.multi_reduction <add>, %76, %cst_25 [1, 2] : vector<1x32x1xf32> to vector<1xf32>
    %78 = vector.shape_cast %77 : vector<1xf32> to vector<1x1x1xf32>
    %79 = vector.extract %78[0, 0, 0] : f32 from vector<1x1x1xf32>
    %cst_26 = arith.constant 3.200000e+01 : f32
    %80 = arith.divf %79, %cst_26 : f32
    %81 = vector.broadcast %75 : f32 to vector<32x1xf32>
    %82 = arith.subf %69, %81 : vector<32x1xf32>
    %83 = vector.broadcast %80 : f32 to vector<32x1xf32>
    %84 = arith.subf %70, %83 : vector<32x1xf32>
    %85 = arith.mulf %82, %82 : vector<32x1xf32>
    %86 = arith.mulf %84, %84 : vector<32x1xf32>
    %87 = arith.addf %85, %86 : vector<32x1xf32>
    %cst_27 = arith.constant 9.99999997E-7 : f32
    %88 = vector.broadcast %cst_27 : f32 to vector<32x1xf32>
    %89 = arith.addf %87, %88 : vector<32x1xf32>
    %90 = math.sqrt %89 : vector<32x1xf32>
    %91 = tpu.reciprocal %90 {approx = true} : vector<32x1xf32> -> vector<32x1xf32>
    %92 = arith.mulf %82, %91 : vector<32x1xf32>
    %93 = arith.mulf %84, %91 : vector<32x1xf32>
    %94 = vector.broadcast %75 : f32 to vector<1x256xf32>
    %95 = arith.subf %2, %94 : vector<1x256xf32>
    %96 = vector.broadcast %80 : f32 to vector<1x256xf32>
    %97 = arith.subf %3, %96 : vector<1x256xf32>
    %98 = arith.mulf %95, %95 : vector<1x256xf32>
    %99 = arith.mulf %97, %97 : vector<1x256xf32>
    %100 = arith.addf %98, %99 : vector<1x256xf32>
    %cst_28 = arith.constant 9.99999997E-7 : f32
    %101 = vector.broadcast %cst_28 : f32 to vector<1x256xf32>
    %102 = arith.addf %100, %101 : vector<1x256xf32>
    %103 = math.sqrt %102 : vector<1x256xf32>
    %104 = tpu.reciprocal %103 {approx = true} : vector<1x256xf32> -> vector<1x256xf32>
    %105 = arith.mulf %95, %104 : vector<1x256xf32>
    %106 = arith.mulf %97, %104 : vector<1x256xf32>
    %107 = vector.broadcast %92 : vector<32x1xf32> to vector<32x256xf32>
    %108 = vector.broadcast %105 : vector<1x256xf32> to vector<32x256xf32>
    %109 = arith.mulf %107, %108 : vector<32x256xf32>
    %110 = vector.broadcast %93 : vector<32x1xf32> to vector<32x256xf32>
    %111 = vector.broadcast %106 : vector<1x256xf32> to vector<32x256xf32>
    %112 = arith.mulf %110, %111 : vector<32x256xf32>
    %113 = arith.addf %109, %112 : vector<32x256xf32>
    %cst_29 = arith.constant 8.000000e+00 : f32
    %114 = vector.broadcast %cst_29 : f32 to vector<32x256xf32>
    %115 = arith.mulf %114, %113 : vector<32x256xf32>
    %116 = math.exp %115 : vector<32x256xf32>
    %117 = vector.broadcast %90 : vector<32x1xf32> to vector<32x256xf32>
    %118 = arith.mulf %116, %117 : vector<32x256xf32>
    %cst_30 = arith.constant dense<0.000000e+00> : vector<256xf32>
    %119 = vector.multi_reduction <add>, %118, %cst_30 [0] : vector<32x256xf32> to vector<256xf32>
    %120 = vector.shape_cast %119 : vector<256xf32> to vector<1x256xf32>
    %cst_31 = arith.constant dense<0.000000e+00> : vector<256xf32>
    %121 = vector.multi_reduction <add>, %116, %cst_31 [0] : vector<32x256xf32> to vector<256xf32>
    %122 = vector.shape_cast %121 : vector<256xf32> to vector<1x256xf32>
    %cst_32 = arith.constant 9.99999997E-7 : f32
    %123 = vector.broadcast %cst_32 : f32 to vector<1x256xf32>
    %124 = arith.addf %122, %123 : vector<1x256xf32>
    %125 = tpu.reciprocal %124 {approx = true} : vector<1x256xf32> -> vector<1x256xf32>
    %126 = arith.mulf %120, %125 : vector<1x256xf32>
    %127 = arith.subf %126, %103 : vector<1x256xf32>
    %cst_33 = arith.constant 2.000000e+00 : f32
    %128 = vector.broadcast %cst_33 : f32 to vector<1x256xf32>
    %129 = arith.mulf %128, %127 : vector<1x256xf32>
    %cst_34 = arith.constant 0.000000e+00 : f32
    %130 = vector.broadcast %cst_34 : f32 to vector<1x256xf32>
    %131 = arith.subf %130, %129 : vector<1x256xf32>
    %132 = math.exp %131 : vector<1x256xf32>
    %cst_35 = arith.constant 1.000000e+00 : f32
    %133 = vector.broadcast %cst_35 : f32 to vector<1x256xf32>
    %134 = arith.addf %133, %132 : vector<1x256xf32>
    %135 = tpu.reciprocal %134 {approx = true} : vector<1x256xf32> -> vector<1x256xf32>
    %cst_36 = arith.constant 1.000000e+00 : f32
    %136 = vector.broadcast %cst_36 : f32 to vector<1x256xf32>
    %137 = arith.subf %136, %135 : vector<1x256xf32>
    %138 = tpu.concatenate %137, %135 in 0 : vector<1x256xf32>, vector<1x256xf32> -> vector<2x256xf32>
    %c0_37 = arith.constant 0 : index
    %c0_38 = arith.constant 0 : index
    %c0_39 = arith.constant 0 : index
    %139 = vector.load %arg7[%c0_37, %c0_38, %c0_39] : memref<1x2x256xf32, #tpu.memory_space<vmem>>, vector<1x2x256xf32>
    %140 = vector.shape_cast %139 : vector<1x2x256xf32> to vector<2x256xf32>
    %141 = vector.shape_cast %138 : vector<2x256xf32> to vector<1x2x256xf32>
    tpu.vector_store %arg7[%c0_37, %c0_38, %c0_39], %141 {strides = array<i32>} : memref<1x2x256xf32, #tpu.memory_space<vmem>>, vector<1x2x256xf32>,
    return
  }
  func.func @transform_0(%arg0: i32) -> (i32, i32, i32) {
    %c0_i32 = arith.constant 0 : i32
    %c0_i32_0 = arith.constant 0 : i32
    %c0_i32_1 = arith.constant 0 : i32
    return %arg0, %c0_i32, %c0_i32_0 : i32, i32, i32
  }
  func.func @transform_1(%arg0: i32) -> (i32, i32) {
    %c0_i32 = arith.constant 0 : i32
    %c0_i32_0 = arith.constant 0 : i32
    %c0_i32_1 = arith.constant 0 : i32
    return %c0_i32, %c0_i32_0 : i32, i32
  }
  func.func @transform_2(%arg0: i32) -> (i32, i32) {
    %c0_i32 = arith.constant 0 : i32
    %c0_i32_0 = arith.constant 0 : i32
    %c0_i32_1 = arith.constant 0 : i32
    return %c0_i32, %c0_i32_0 : i32, i32
  }
  func.func @transform_3(%arg0: i32) -> (i32, i32) {
    %c0_i32 = arith.constant 0 : i32
    %c0_i32_0 = arith.constant 0 : i32
    %c0_i32_1 = arith.constant 0 : i32
    return %c0_i32, %c0_i32_0 : i32, i32
  }
  func.func @transform_4(%arg0: i32) -> (i32, i32) {
    %c0_i32 = arith.constant 0 : i32
    %c0_i32_0 = arith.constant 0 : i32
    %c0_i32_1 = arith.constant 0 : i32
    return %c0_i32, %c0_i32_0 : i32, i32
  }
  func.func @transform_5(%arg0: i32) -> (i32, i32) {
    %c0_i32 = arith.constant 0 : i32
    %c0_i32_0 = arith.constant 0 : i32
    %c0_i32_1 = arith.constant 0 : i32
    return %c0_i32, %c0_i32_0 : i32, i32
  }
  func.func @transform_6(%arg0: i32) -> (i32, i32, i32) {
    %c0_i32 = arith.constant 0 : i32
    %c0_i32_0 = arith.constant 0 : i32
    %c0_i32_1 = arith.constant 0 : i32
    return %arg0, %c0_i32, %c0_i32_0 : i32, i32, i32
  }
}

</mosaic_0001>

<llo_original>
// kernel: unet_ag_forward.17
$region0: #{unet_ag_forward.17}
  #allocation0 [shape = 'u32[]', space=smem, size = 0x4, offset = 0x4, fixed_abs, tag = 'smem constant byte address 0x4 - core index']
  #allocation1 [shape = 'u32[144,128]{1,0:T(1,128)}', space=vmem, size = 0x12000, scoped, tag = 'internal scratch']
  %s0 = inlined_call_operand.vmem [shape: f32[160,24], index: 0, kind: input, shape index: {}]
  %s1 = inlined_call_operand.vmem [shape: bf16[3,24,16], index: 1, kind: input, shape index: {}]
  %s2 = inlined_call_operand.vmem [shape: f32[1,16], index: 2, kind: input, shape index: {}]
  %s3 = inlined_call_operand.vmem [shape: f32[128,16], index: 3, kind: output, shape index: {}]
  %s4 = sld [smem:[#allocation0]]
  $region45: #{unet_ag_forward.17} parent=0
    _
  %s6 = ssub.s32 1, %s4
  %s7 = scalar_select 0, %s6, %s4
  loop: start=0, step=1, limit=4
  $region2: #{unet_ag_forward.17} parent=0 // loop_pre_header
    _
  $region3: #{unet_ag_forward.17} parent=0 // loop_header
    %s9 = sphi 0, %s13
    %p10 = scmp.ge.s32.totalorder %s9, 4
    %s19 = sphi 0, %s21
    %s22 = sphi 0, %s19
    %s23 = sphi 0, %s22
    %s39 = sphi 0, %s23
    %s43 = sphi 0, %s43
    %s45 = sphi 0, %s43
    %s46 = sphi 0, %s45
    %s60 = sphi 0, %s46
    %s64 = sphi 0, %s64
    %s66 = sphi 0, %s64
    %s67 = sphi 0, %s66
    %s81 = sphi 0, %s67
    %s87 = sphi 0, %s89
    %s90 = sphi 0, %s87
    %s91 = sphi 0, %s90
    %s107 = sphi 0, %s91
  $region4: #{unet_ag_forward.17} parent=0 // loop_header_branch
    %12 = sbr.rel (%p10) target = $region8
  $region5: #{unet_ag_forward.17} parent=0 // loop_body
    %s14 = ssub.s32 %s9, 1
    %s15 = ssub.s32 %s9, 2
    %s16 = sadd.s32 %s9, 1
    %s17 = ssub.s32 %s9, %s16
    %p18 = scmp.eq.s32.totalorder %s17, 0
    %s20 = sadd.s32 %s19, 1
    %s21 = scalar_select %p18, %s19, %s20
    %p24 = pneg %p18
    %p25 = scmp.eq.s32.totalorder %s9, 1
    %p26 = por %p24, %p25
    %p27 = scmp.ne.s32.totalorder %s19, %s22
    %p28 = scmp.eq.s32.totalorder %s9, 0
    %p29 = por %p27, %p28
    %p30 = scmp.ne.s32.totalorder %s19, %s22
    %p31 = scmp.eq.s32.totalorder %s14, 1
    %p32 = por %p30, %p31
    %p33 = scmp.ne.s32.totalorder %s22, %s23
    %p34 = scmp.eq.s32.totalorder %s14, 0
    %p35 = por %p33, %p34
    %p36 = scmp.ne.s32.totalorder %s22, %s23
    %p37 = scmp.eq.s32.totalorder %s15, 1
    %p38 = por %p36, %p37
    %p40 = scmp.ne.s32.totalorder %s23, %s39
    %p41 = scmp.eq.s32.totalorder %s15, 0
    %p42 = por %p40, %p41
    %s44 = sadd.s32 %s43, 1
    %p47 = scmp.eq.s32.totalorder %s9, 1
    %p48 = scmp.ne.s32.totalorder %s43, %s45
    %p49 = scmp.eq.s32.totalorder %s9, 0
    %p50 = por %p48, %p49
    %p51 = scmp.ne.s32.totalorder %s43, %s45
    %p52 = scmp.eq.s32.totalorder %s14, 1
    %p53 = por %p51, %p52
    %p54 = scmp.ne.s32.totalorder %s45, %s46
    %p55 = scmp.eq.s32.totalorder %s14, 0
    %p56 = por %p54, %p55
    %p57 = scmp.ne.s32.totalorder %s45, %s46
    %p58 = scmp.eq.s32.totalorder %s15, 1
    %p59 = por %p57, %p58
    %p61 = scmp.ne.s32.totalorder %s46, %s60
    %p62 = scmp.eq.s32.totalorder %s15, 0
    %p63 = por %p61, %p62
    %s65 = sadd.s32 %s64, 1
    %p68 = scmp.eq.s32.totalorder %s9, 1
    %p69 = scmp.ne.s32.totalorder %s64, %s66
    %p70 = scmp.eq.s32.totalorder %s9, 0
    %p71 = por %p69, %p70
    %p72 = scmp.ne.s32.totalorder %s64, %s66
    %p73 = scmp.eq.s32.totalorder %s14, 1
    %p74 = por %p72, %p73
    %p75 = scmp.ne.s32.totalorder %s66, %s67
    %p76 = scmp.eq.s32.totalorder %s14, 0
    %p77 = por %p75, %p76
    %p78 = scmp.ne.s32.totalorder %s66, %s67
    %p79 = scmp.eq.s32.totalorder %s15, 1
    %p80 = por %p78, %p79
    %p82 = scmp.ne.s32.totalorder %s67, %s81
    %p83 = scmp.eq.s32.totalorder %s15, 0
    %p84 = por %p82, %p83
    %s85 = ssub.s32 %s9, %s16
    %p86 = scmp.eq.s32.totalorder %s85, 0
    %s88 = sadd.s32 %s87, 1
    %s89 = scalar_select %p86, %s87, %s88
    %p92 = pneg %p86
    %p93 = scmp.eq.s32.totalorder %s9, 1
    %p94 = por %p92, %p93
    %p95 = scmp.ne.s32.totalorder %s87, %s90
    %p96 = scmp.eq.s32.totalorder %s9, 0
    %p97 = por %p95, %p96
    %p98 = scmp.ne.s32.totalorder %s87, %s90
    %p99 = scmp.eq.s32.totalorder %s14, 1
    %p100 = por %p98, %p99
    %p101 = scmp.ne.s32.totalorder %s90, %s91
    %p102 = scmp.eq.s32.totalorder %s14, 0
    %p103 = por %p101, %p102
    %p104 = scmp.ne.s32.totalorder %s90, %s91
    %p105 = scmp.eq.s32.totalorder %s15, 1
    %p106 = por %p104, %p105
    %p108 = scmp.ne.s32.totalorder %s91, %s107
    %p109 = scmp.eq.s32.totalorder %s15, 0
    %p110 = por %p108, %p109
    %p111 = scmp.le.s32.totalorder 1, %s9
    %p112 = scmp.lt.s32.totalorder %s9, 3
    %p113 = pnand %p111, %p112
    %p114 = pneg %p113
    // Predicated region
    $region9: #{unet_ag_forward.17} parent=5 // pred_check
      _
    $region10: #{unet_ag_forward.17} parent=5 // pred_check_branch
      %116 = sbr.rel (%p113) target = $region12
    $region11: #{unet_ag_forward.17} parent=5 // pred_region
      %s117 = ssub.s32 %s9, 1
      // Predicated region
      $region13: #{unet_ag_forward.17} parent=11 // pred_check
        %p118 = pneg %p56
      $region14: #{unet_ag_forward.17} parent=11 // pred_check_branch
        %120 = sbr.rel (%p118) target = $region16
      $region15: #{unet_ag_forward.17} parent=11 // pred_region
        _
      $region16: #{unet_ag_forward.17} parent=11 // pred_fallthru
        _
      // Predicated region
      $region17: #{unet_ag_forward.17} parent=11 // pred_check
        %p121 = pneg %p77
      $region18: #{unet_ag_forward.17} parent=11 // pred_check_branch
        %123 = sbr.rel (%p121) target = $region20
      $region19: #{unet_ag_forward.17} parent=11 // pred_region
        _
      $region20: #{unet_ag_forward.17} parent=11 // pred_fallthru
        _
    $region12: #{unet_ag_forward.17} parent=5 // pred_fallthru
      _
    %p124 = scmp.lt.s32.totalorder %s9, 2
    // Predicated region
    $region21: #{unet_ag_forward.17} parent=5 // pred_check
      %p125 = pneg %p124
    $region22: #{unet_ag_forward.17} parent=5 // pred_check_branch
      %127 = sbr.rel (%p125) target = $region24
    $region23: #{unet_ag_forward.17} parent=5 // pred_region
      // Predicated region
      $region25: #{unet_ag_forward.17} parent=23 // pred_check
        %p128 = pneg %p29
      $region26: #{unet_ag_forward.17} parent=23 // pred_check_branch
        %130 = sbr.rel (%p128) target = $region28
      $region27: #{unet_ag_forward.17} parent=23 // pred_region
        %s131 = smul.u32 10, %s9
        %p132 = scmp.lt.s32.totalorder %s131, 19
        %s133 = scalar_select %p132, %s131, 19
        %s134 = smul.addr %s133, 8
        %s135 = scalar_lea.vmem %s0, %s134
        %s136 = smul.u32 10, %s9
      $region28: #{unet_ag_forward.17} parent=23 // pred_fallthru
        _
    $region24: #{unet_ag_forward.17} parent=5 // pred_fallthru
      _
    %p137 = scmp.le.s32.totalorder 1, %s9
    %p138 = scmp.lt.s32.totalorder %s9, 3
    %p139 = pnand %p137, %p138
    %p140 = pneg %p139
    // Predicated region
    $region29: #{unet_ag_forward.17} parent=5 // pred_check
      _
    $region30: #{unet_ag_forward.17} parent=5 // pred_check_branch
      %142 = sbr.rel (%p139) target = $region32
    $region31: #{unet_ag_forward.17} parent=5 // pred_region
      %s143 = ssub.s32 %s9, 1
      %s144 = smul.u32 10, %s14
      %p145 = scmp.lt.s32.totalorder %s144, 19
      %s146 = scalar_select %p145, %s144, 19
      %s147 = smul.addr %s146, 8
      %s148 = scalar_lea.vmem %s0, %s147
      %p149 = pneg %p35
      %p150 = pneg %p32
      %p151 = pneg %p56
      %p152 = pneg %p53
      %p153 = pneg %p77
      %p154 = pneg %p74
      %p155 = pneg %p103
      %p156 = pneg %p100
      %s157 = smul.u32 8, %s14
      %p158 = scmp.lt.s32.totalorder %s157, 15
      %s159 = scalar_select %p158, %s157, 15
      %s160 = smul.addr %s159, 8
      %s161 = scalar_lea.vmem %s3, %s160
      %s162 = smul.u32 10, %s14
      %p163 = scmp.lt.s32.totalorder %s162, 19
      %s164 = scalar_select %p163, %s162, 19
      %s165 = smul.addr %s164, 8
      %s166 = scalar_lea.vmem %s0, %s165
      %s167 = smul.u32 10, %s14
      %s168 = smul.u32 8, %s14
      %p169 = scmp.lt.s32.totalorder %s168, 15
      %s170 = scalar_select %p169, %s168, 15
      %s171 = smul.addr %s170, 8
      %s172 = scalar_lea.vmem %s3, %s171
      %s173 = smul.u32 8, %s14
      %v175 = vld [vmem:[%s166] sm:$0xff]
      %v176 = vld [vmem:[%s166 + $0x8] sm:$0xff]
      %v177 = vld [vmem:[%s166 + $0x10] sm:$0xff]
      %v178 = vld [vmem:[%s166 + $0x18] sm:$0xff]
      %v179 = vld [vmem:[%s166 + $0x20] sm:$0xff]
      %v180 = vld [vmem:[%s166 + $0x28] sm:$0xff]
      %v181 = vld [vmem:[%s166 + $0x30] sm:$0xff]
      %v182 = vld [vmem:[%s166 + $0x38] sm:$0xff]
      %v183 = vpack.c.bf16 %v176, %v175
      %v184 = vpack.c.bf16 %v178, %v177
      %v185 = vpack.c.bf16 %v180, %v179
      %v186 = vpack.c.bf16 %v182, %v181
      %v187 = vld [vmem:[%s1] sm:$0xf]
      %v188 = vld [vmem:[%s1 + $0x4] sm:$0xf]
      %v189 = vld [vmem:[%s1 + $0x8] sm:$0xf]
      %v190 = vld [vmem:[%s166 + $0x40] sm:$0xff]
      %v191 = vpack.c.bf16 %v177, %v176
      %v192 = vpack.c.bf16 %v179, %v178
      %v193 = vpack.c.bf16 %v181, %v180
      %v194 = vpack.c.bf16 %v190, %v182
      %s195 = scalar_lea.vmem %s1, 12
      %v196 = vld [vmem:[%s195] sm:$0xf]
      %v197 = vld [vmem:[%s195 + $0x4] sm:$0xf]
      %v198 = vld [vmem:[%s195 + $0x8] sm:$0xf]
      %v202 = vunpack.c.l.b16 %v196
      %v203 = vunpack.c.l.b16 %v197
      %v204 = vunpack.c.l.b16 %v198
      %v205 = vpack.c.b16 %v203, %v202
      %v206 = vpack.c.b16 %v204, %v204
      %vm208 = vcmask 195584
      %v210 = vsel %vm208, %v191, 0
      %v213 = vsel %vm208, %v192, 0
      %v216 = vsel %vm208, %v193, 0
      %v219 = vsel %vm208, %v194, 0
      %vm221 = vcmask 1043456
      %v223 = vsel %vm221, %v206, 0
      %225 = vmatprep.subr.bf16.mxu0 0
      %226 = vmatpush1.bf16.msra.mxu0 %v205
      %227 = vmatprep.subr.bf16.mxu0 0
      %228 = vmatpush1.bf16.msra.mxu0 %v223
      %229 = vmatprep.subr.bf16.mxu0 0
      %230 = vmatpush1.bf16.msra.mxu0 0
      %231 = vmatprep.subr.bf16.mxu0 0
      %232 = vmatpush1.bf16.msra.mxu0 0
      %233 = vmatprep.subr.bf16.mxu0 0
      %234 = vmatpush1.bf16.msra.mxu0 0
      %235 = vmatprep.subr.bf16.mxu0 0
      %236 = vmatpush1.bf16.msra.mxu0 0
      %237 = vmatprep.subr.bf16.mxu0 0
      %238 = vmatpush1.bf16.msra.mxu0 0
      %239 = vmatprep.subr.bf16.mxu0 0
      %240 = vmatpush1.bf16.msra.mxu0 0
      %241 = vmatprep.subr.bf16.mxu0 0
      %242 = vmatpush1.bf16.msra.mxu0 0
      %243 = vmatprep.subr.bf16.mxu0 0
      %244 = vmatpush1.bf16.msra.mxu0 0
      %245 = vmatprep.subr.bf16.mxu0 0
      %246 = vmatpush1.bf16.msra.mxu0 0
      %247 = vmatprep.subr.bf16.mxu0 0
      %248 = vmatpush1.bf16.msra.mxu0 0
      %249 = vmatprep.subr.bf16.mxu0 0
      %250 = vmatpush1.bf16.msra.mxu0 0
      %251 = vmatprep.subr.bf16.mxu0 0
      %252 = vmatpush1.bf16.msra.mxu0 0
      %253 = vmatprep.subr.bf16.mxu0 0
      %254 = vmatpush1.bf16.msra.mxu0 0
      %255 = vmatprep.subr.bf16.mxu0 0
      %256 = vmatpush1.bf16.msra.mxu0 0
      %257 = vmatprep.mubr.bf16.mxu0 0
      %258 = vmatmul.mubr.bf16.gmra.mrb[0].mxu0 %v210
      %v259 = vpop.f32.mrb[0].mxu0
      %v260 = vadd.f32 0.0, %v259
      %v261 = vpop.f32.mrb[0].mxu0
      %v262 = vpop.f32.mrb[0].mxu0
      %v263 = vadd.f32 0.0, %v262
      %v264 = vpop.f32.mrb[0].mxu0
      %265 = vmatprep.mubr.bf16.mxu0 0
      %266 = vmatmul.mubr.bf16.gmra.mrb[0].mxu0 %v213
      %v267 = vpop.f32.mrb[0].mxu0
      %v268 = vadd.f32 0.0, %v267
      %v269 = vpop.f32.mrb[0].mxu0
      %v270 = vpop.f32.mrb[0].mxu0
      %v271 = vadd.f32 0.0, %v270
      %v272 = vpop.f32.mrb[0].mxu0
      %273 = vmatprep.mubr.bf16.mxu0 0
      %274 = vmatmul.mubr.bf16.gmra.mrb[0].mxu0 %v216
      %v275 = vpop.f32.mrb[0].mxu0
      %v276 = vadd.f32 0.0, %v275
      %v277 = vpop.f32.mrb[0].mxu0
      %v278 = vpop.f32.mrb[0].mxu0
      %v279 = vadd.f32 0.0, %v278
      %v280 = vpop.f32.mrb[0].mxu0
      %281 = vmatprep.mubr.bf16.mxu0 0
      %282 = vmatmul.mubr.bf16.gmra.mrb[0].mxu0 %v219
      %v283 = vpop.f32.mrb[0].mxu0
      %v284 = vadd.f32 0.0, %v283
      %v285 = vpop.f32.mrb[0].mxu0
      %v286 = vpop.f32.mrb[0].mxu0
      %v287 = vadd.f32 0.0, %v286
      %v288 = vpop.f32.mrb[0].mxu0
      %289 = vdwg.mxu0
      %v293 = vunpack.c.l.b16 %v187
      %v294 = vunpack.c.l.b16 %v188
      %v295 = vunpack.c.l.b16 %v189
      %v296 = vpack.c.b16 %v294, %v293
      %v297 = vpack.c.b16 %v295, %v295
      %v300 = vsel %vm208, %v183, 0
      %v303 = vsel %vm208, %v184, 0
      %v306 = vsel %vm208, %v185, 0
      %v309 = vsel %vm208, %v186, 0
      %v312 = vsel %vm221, %v297, 0
      %314 = vmatprep.subr.bf16.mxu0 0
      %315 = vmatpush1.bf16.msra.mxu0 %v296
      %316 = vmatprep.subr.bf16.mxu0 0
      %317 = vmatpush1.bf16.msra.mxu0 %v312
      %318 = vmatprep.subr.bf16.mxu0 0
      %319 = vmatpush1.bf16.msra.mxu0 0
      %320 = vmatprep.subr.bf16.mxu0 0
      %321 = vmatpush1.bf16.msra.mxu0 0
      %322 = vmatprep.subr.bf16.mxu0 0
      %323 = vmatpush1.bf16.msra.mxu0 0
      %324 = vmatprep.subr.bf16.mxu0 0
      %325 = vmatpush1.bf16.msra.mxu0 0
      %326 = vmatprep.subr.bf16.mxu0 0
      %327 = vmatpush1.bf16.msra.mxu0 0
      %328 = vmatprep.subr.bf16.mxu0 0
      %329 = vmatpush1.bf16.msra.mxu0 0
      %330 = vmatprep.subr.bf16.mxu0 0
      %331 = vmatpush1.bf16.msra.mxu0 0
      %332 = vmatprep.subr.bf16.mxu0 0
      %333 = vmatpush1.bf16.msra.mxu0 0
      %334 = vmatprep.subr.bf16.mxu0 0
      %335 = vmatpush1.bf16.msra.mxu0 0
      %336 = vmatprep.subr.bf16.mxu0 0
      %337 = vmatpush1.bf16.msra.mxu0 0
      %338 = vmatprep.subr.bf16.mxu0 0
      %339 = vmatpush1.bf16.msra.mxu0 0
      %340 = vmatprep.subr.bf16.mxu0 0
      %341 = vmatpush1.bf16.msra.mxu0 0
      %342 = vmatprep.subr.bf16.mxu0 0
      %343 = vmatpush1.bf16.msra.mxu0 0
      %344 = vmatprep.subr.bf16.mxu0 0
      %345 = vmatpush1.bf16.msra.mxu0 0
      %346 = vmatprep.mubr.bf16.mxu0 0
      %347 = vmatmul.mubr.bf16.gmra.mrb[0].mxu0 %v300
      %v348 = vpop.f32.mrb[0].mxu0
      %v349 = vadd.f32 %v260, %v348
      %v350 = vpop.f32.mrb[0].mxu0
      %v351 = vpop.f32.mrb[0].mxu0
      %v352 = vadd.f32 %v263, %v351
      %v353 = vpop.f32.mrb[0].mxu0
      %354 = vmatprep.mubr.bf16.mxu0 0
      %355 = vmatmul.mubr.bf16.gmra.mrb[0].mxu0 %v303
      %v356 = vpop.f32.mrb[0].mxu0
      %v357 = vadd.f32 %v268, %v356
      %v358 = vpop.f32.mrb[0].mxu0
      %v359 = vpop.f32.mrb[0].mxu0
      %v360 = vadd.f32 %v271, %v359
      %v361 = vpop.f32.mrb[0].mxu0
      %362 = vmatprep.mubr.bf16.mxu0 0
      %363 = vmatmul.mubr.bf16.gmra.mrb[0].mxu0 %v306
      %v364 = vpop.f32.mrb[0].mxu0
      %v365 = vadd.f32 %v276, %v364
      %v366 = vpop.f32.mrb[0].mxu0
      %v367 = vpop.f32.mrb[0].mxu0
      %v368 = vadd.f32 %v279, %v367
      %v369 = vpop.f32.mrb[0].mxu0
      %370 = vmatprep.mubr.bf16.mxu0 0
      %371 = vmatmul.mubr.bf16.gmra.mrb[0].mxu0 %v309
      %v372 = vpop.f32.mrb[0].mxu0
      %v373 = vadd.f32 %v284, %v372
      %v374 = vpop.f32.mrb[0].mxu0
      %v375 = vpop.f32.mrb[0].mxu0
      %v376 = vadd.f32 %v287, %v375
      %v377 = vpop.f32.mrb[0].mxu0
      %378 = vdwg.mxu0
      %v379 = vld [vmem:[%s166 + $0x10] sm:$0xff]
      %v380 = vld [vmem:[%s166 + $0x18] sm:$0xff]
      %v381 = vld [vmem:[%s166 + $0x20] sm:$0xff]
      %v382 = vld [vmem:[%s166 + $0x28] sm:$0xff]
      %v383 = vld [vmem:[%s166 + $0x30] sm:$0xff]
      %v384 = vld [vmem:[%s166 + $0x38] sm:$0xff]
      %v385 = vld [vmem:[%s166 + $0x40] sm:$0xff]
      %v386 = vld [vmem:[%s166 + $0x48] sm:$0xff]
      %v387 = vpack.c.bf16 %v380, %v379
      %v388 = vpack.c.bf16 %v382, %v381
      %v389 = vpack.c.bf16 %v384, %v383
      %v390 = vpack.c.bf16 %v386, %v385
      %s391 = scalar_lea.vmem %s1, 24
      %v392 = vld [vmem:[%s391] sm:$0xf]
      %v393 = vld [vmem:[%s391 + $0x4] sm:$0xf]
      %v394 = vld [vmem:[%s391 + $0x8] sm:$0xf]
      %v398 = vunpack.c.l.b16 %v392
      %v399 = vunpack.c.l.b16 %v393
      %v400 = vunpack.c.l.b16 %v394
      %v401 = vpack.c.b16 %v399, %v398
      %v402 = vpack.c.b16 %v400, %v400
      %v405 = vsel %vm208, %v387, 0
      %v408 = vsel %vm208, %v388, 0
      %v411 = vsel %vm208, %v389, 0
      %v414 = vsel %vm208, %v390, 0
      %v417 = vsel %vm221, %v402, 0
      %419 = vmatprep.subr.bf16.mxu0 0
      %420 = vmatpush1.bf16.msra.mxu0 %v401
      %421 = vmatprep.subr.bf16.mxu0 0
      %422 = vmatpush1.bf16.msra.mxu0 %v417
      %423 = vmatprep.subr.bf16.mxu0 0
      %424 = vmatpush1.bf16.msra.mxu0 0
      %425 = vmatprep.subr.bf16.mxu0 0
      %426 = vmatpush1.bf16.msra.mxu0 0
      %427 = vmatprep.subr.bf16.mxu0 0
      %428 = vmatpush1.bf16.msra.mxu0 0
      %429 = vmatprep.subr.bf16.mxu0 0
      %430 = vmatpush1.bf16.msra.mxu0 0
      %431 = vmatprep.subr.bf16.mxu0 0
      %432 = vmatpush1.bf16.msra.mxu0 0
      %433 = vmatprep.subr.bf16.mxu0 0
      %434 = vmatpush1.bf16.msra.mxu0 0
      %435 = vmatprep.subr.bf16.mxu0 0
      %436 = vmatpush1.bf16.msra.mxu0 0
      %437 = vmatprep.subr.bf16.mxu0 0
      %438 = vmatpush1.bf16.msra.mxu0 0
      %439 = vmatprep.subr.bf16.mxu0 0
      %440 = vmatpush1.bf16.msra.mxu0 0
      %441 = vmatprep.subr.bf16.mxu0 0
      %442 = vmatpush1.bf16.msra.mxu0 0
      %443 = vmatprep.subr.bf16.mxu0 0
      %444 = vmatpush1.bf16.msra.mxu0 0
      %445 = vmatprep.subr.bf16.mxu0 0
      %446 = vmatpush1.bf16.msra.mxu0 0
      %447 = vmatprep.subr.bf16.mxu0 0
      %448 = vmatpush1.bf16.msra.mxu0 0
      %449 = vmatprep.subr.bf16.mxu0 0
      %450 = vmatpush1.bf16.msra.mxu0 0
      %451 = vmatprep.mubr.bf16.mxu0 0
      %452 = vmatmul.mubr.bf16.gmra.mrb[0].mxu0 %v405
      %v453 = vpop.f32.mrb[0].mxu0
      %v454 = vadd.f32 0.0, %v453
      %v455 = vpop.f32.mrb[0].mxu0
      %v456 = vpop.f32.mrb[0].mxu0
      %v457 = vadd.f32 0.0, %v456
      %v458 = vpop.f32.mrb[0].mxu0
      %459 = vmatprep.mubr.bf16.mxu0 0
      %460 = vmatmul.mubr.bf16.gmra.mrb[0].mxu0 %v408
      %v461 = vpop.f32.mrb[0].mxu0
      %v462 = vadd.f32 0.0, %v461
      %v463 = vpop.f32.mrb[0].mxu0
      %v464 = vpop.f32.mrb[0].mxu0
      %v465 = vadd.f32 0.0, %v464
      %v466 = vpop.f32.mrb[0].mxu0
      %467 = vmatprep.mubr.bf16.mxu0 0
      %468 = vmatmul.mubr.bf16.gmra.mrb[0].mxu0 %v411
      %v469 = vpop.f32.mrb[0].mxu0
      %v470 = vadd.f32 0.0, %v469
      %v471 = vpop.f32.mrb[0].mxu0
      %v472 = vpop.f32.mrb[0].mxu0
      %v473 = vadd.f32 0.0, %v472
      %v474 = vpop.f32.mrb[0].mxu0
      %475 = vmatprep.mubr.bf16.mxu0 0
      %476 = vmatmul.mubr.bf16.gmra.mrb[0].mxu0 %v414
      %v477 = vpop.f32.mrb[0].mxu0
      %v478 = vadd.f32 0.0, %v477
      %v479 = vpop.f32.mrb[0].mxu0
      %v480 = vpop.f32.mrb[0].mxu0
      %v481 = vadd.f32 0.0, %v480
      %v482 = vpop.f32.mrb[0].mxu0
      %483 = vdwg.mxu0
      %v484 = vadd.f32 %v349, %v454
      %v485 = vadd.f32 %v352, %v457
      %v486 = vadd.f32 %v357, %v462
      %v487 = vadd.f32 %v360, %v465
      %v488 = vadd.f32 %v365, %v470
      %v489 = vadd.f32 %v368, %v473
      %v490 = vadd.f32 %v373, %v478
      %v491 = vadd.f32 %v376, %v481
      %v492 = vld [vmem:[%s2] sm:$0x1]
      %v494 = vlaneseq
      %v495 = vshrl.u32 %v494, 7
      %v496 = vsub.s32 0, %v495
      %v497 = vrot.slane %v492, %v496
      %v499 = vadd.f32 %v484, %v497
      %v500 = vadd.f32 %v485, %v497
      %v501 = vadd.f32 %v486, %v497
      %v502 = vadd.f32 %v487, %v497
      %v503 = vadd.f32 %v488, %v497
      %v504 = vadd.f32 %v489, %v497
      %v505 = vadd.f32 %v490, %v497
      %v506 = vadd.f32 %v491, %v497
      %v507 = vmax.f32 %v499, 0.0
      %v508 = vmax.f32 %v500, 0.0
      %v509 = vmax.f32 %v501, 0.0
      %v510 = vmax.f32 %v502, 0.0
      %v511 = vmax.f32 %v503, 0.0
      %v512 = vmax.f32 %v504, 0.0
      %v513 = vmax.f32 %v505, 0.0
      %v514 = vmax.f32 %v506, 0.0
      %vm515 = vcmask 130048
      %516 = vst.msk [vmem:[%s172] sm:$0xff] %vm515, %v507
      %517 = vst.msk [vmem:[%s172 + $0x8] sm:$0xff] %vm515, %v508
      %518 = vst.msk [vmem:[%s172 + $0x10] sm:$0xff] %vm515, %v509
      %519 = vst.msk [vmem:[%s172 + $0x18] sm:$0xff] %vm515, %v510
      %520 = vst.msk [vmem:[%s172 + $0x20] sm:$0xff] %vm515, %v511
      %521 = vst.msk [vmem:[%s172 + $0x28] sm:$0xff] %vm515, %v512
      %522 = vst.msk [vmem:[%s172 + $0x30] sm:$0xff] %vm515, %v513
      %523 = vst.msk [vmem:[%s172 + $0x38] sm:$0xff] %vm515, %v514
      %s524 = smul.u32 8, %s14
      %p525 = scmp.lt.s32.totalorder %s524, 15
      %s526 = scalar_select %p525, %s524, 15
      %s527 = smul.addr %s526, 8
      %s528 = scalar_lea.vmem %s3, %s527
      // Predicated region
      $region33: #{unet_ag_forward.17} parent=31 // pred_check
        %p529 = pneg %p100
      $region34: #{unet_ag_forward.17} parent=31 // pred_check_branch
        %531 = sbr.rel (%p529) target = $region36
      $region35: #{unet_ag_forward.17} parent=31 // pred_region
        %s532 = smul.u32 8, %s14
      $region36: #{unet_ag_forward.17} parent=31 // pred_fallthru
        _
    $region32: #{unet_ag_forward.17} parent=5 // pred_fallthru
      _
    %p533 = scmp.le.s32.totalorder 2, %s9
    // Predicated region
    $region37: #{unet_ag_forward.17} parent=5 // pred_check
      %p534 = pneg %p533
    $region38: #{unet_ag_forward.17} parent=5 // pred_check_branch
      %536 = sbr.rel (%p534) target = $region40
    $region39: #{unet_ag_forward.17} parent=5 // pred_region
      %s537 = ssub.s32 %s9, 2
      // Predicated region
      $region41: #{unet_ag_forward.17} parent=39 // pred_check
        %p538 = pneg %p106
      $region42: #{unet_ag_forward.17} parent=39 // pred_check_branch
        %540 = sbr.rel (%p538) target = $region44
      $region43: #{unet_ag_forward.17} parent=39 // pred_region
        %s541 = smul.u32 8, %s15
        %p542 = scmp.lt.s32.totalorder %s541, 15
        %s543 = scalar_select %p542, %s541, 15
        %s544 = smul.addr %s543, 8
        %s545 = scalar_lea.vmem %s3, %s544
      $region44: #{unet_ag_forward.17} parent=39 // pred_fallthru
        _
    $region40: #{unet_ag_forward.17} parent=5 // pred_fallthru
      _
  $region6: #{unet_ag_forward.17} parent=0 // loop_footer
    %s13 = sadd.s32 1, %s9
  $region7: #{unet_ag_forward.17} parent=0 // loop_footer_branch
    %8 = sbr.rel target = $region3
  $region8: #{unet_ag_forward.17} parent=0 // loop_exit
    _

// kernel: unet_ag_forward.15
$region0: #{unet_ag_forward.15}
  #allocation0 [shape = 'u32[]', space=smem, size = 0x4, offset = 0x4, fixed_abs, tag = 'smem constant byte address 0x4 - core index']
  #allocation1 [shape = 'u32[144,128]{1,0:T(1,128)}', space=vmem, size = 0x12000, scoped, tag = 'internal scratch']
  %s0 = inlined_call_operand.vmem [shape: f32[576,24], index: 0, kind: input, shape index: {}]
  %s1 = inlined_call_operand.vmem [shape: bf16[3,24,8], index: 1, kind: input, shape index: {}]
  %s2 = inlined_call_operand.vmem [shape: f32[1,8], index: 2, kind: input, shape index: {}]
  %s3 = inlined_call_operand.vmem [shape: f32[512,8], index: 3, kind: output, shape index: {}]
  %s4 = sld [smem:[#allocation0]]
  $region45: #{unet_ag_forward.15} parent=0
    _
  %s6 = ssub.s32 1, %s4
  %s7 = scalar_select 0, %s6, %s4
  loop: start=0, step=1, limit=4
  $region2: #{unet_ag_forward.15} parent=0 // loop_pre_header
    _
  $region3: #{unet_ag_forward.15} parent=0 // loop_header
    %s9 = sphi 0, %s13
    %p10 = scmp.ge.s32.totalorder %s9, 4
    %s19 = sphi 0, %s21
    %s22 = sphi 0, %s19
    %s23 = sphi 0, %s22
    %s39 = sphi 0, %s23
    %s43 = sphi 0, %s43
    %s45 = sphi 0, %s43
    %s46 = sphi 0, %s45
    %s60 = sphi 0, %s46
    %s64 = sphi 0, %s64
    %s66 = sphi 0, %s64
    %s67 = sphi 0, %s66
    %s81 = sphi 0, %s67
    %s87 = sphi 0, %s89
    %s90 = sphi 0, %s87
    %s91 = sphi 0, %s90
    %s107 = sphi 0, %s91
  $region4: #{unet_ag_forward.15} parent=0 // loop_header_branch
    %12 = sbr.rel (%p10) target = $region8
  $region5: #{unet_ag_forward.15} parent=0 // loop_body
    %s14 = ssub.s32 %s9, 1
    %s15 = ssub.s32 %s9, 2
    %s16 = sadd.s32 %s9, 1
    %s17 = ssub.s32 %s9, %s16
    %p18 = scmp.eq.s32.totalorder %s17, 0
    %s20 = sadd.s32 %s19, 1
    %s21 = scalar_select %p18, %s19, %s20
    %p24 = pneg %p18
    %p25 = scmp.eq.s32.totalorder %s9, 1
    %p26 = por %p24, %p25
    %p27 = scmp.ne.s32.totalorder %s19, %s22
    %p28 = scmp.eq.s32.totalorder %s9, 0
    %p29 = por %p27, %p28
    %p30 = scmp.ne.s32.totalorder %s19, %s22
    %p31 = scmp.eq.s32.totalorder %s14, 1
    %p32 = por %p30, %p31
    %p33 = scmp.ne.s32.totalorder %s22, %s23
    %p34 = scmp.eq.s32.totalorder %s14, 0
    %p35 = por %p33, %p34
    %p36 = scmp.ne.s32.totalorder %s22, %s23
    %p37 = scmp.eq.s32.totalorder %s15, 1
    %p38 = por %p36, %p37
    %p40 = scmp.ne.s32.totalorder %s23, %s39
    %p41 = scmp.eq.s32.totalorder %s15, 0
    %p42 = por %p40, %p41
    %s44 = sadd.s32 %s43, 1
    %p47 = scmp.eq.s32.totalorder %s9, 1
    %p48 = scmp.ne.s32.totalorder %s43, %s45
    %p49 = scmp.eq.s32.totalorder %s9, 0
    %p50 = por %p48, %p49
    %p51 = scmp.ne.s32.totalorder %s43, %s45
    %p52 = scmp.eq.s32.totalorder %s14, 1
    %p53 = por %p51, %p52
    %p54 = scmp.ne.s32.totalorder %s45, %s46
    %p55 = scmp.eq.s32.totalorder %s14, 0
    %p56 = por %p54, %p55
    %p57 = scmp.ne.s32.totalorder %s45, %s46
    %p58 = scmp.eq.s32.totalorder %s15, 1
    %p59 = por %p57, %p58
    %p61 = scmp.ne.s32.totalorder %s46, %s60
    %p62 = scmp.eq.s32.totalorder %s15, 0
    %p63 = por %p61, %p62
    %s65 = sadd.s32 %s64, 1
    %p68 = scmp.eq.s32.totalorder %s9, 1
    %p69 = scmp.ne.s32.totalorder %s64, %s66
    %p70 = scmp.eq.s32.totalorder %s9, 0
    %p71 = por %p69, %p70
    %p72 = scmp.ne.s32.totalorder %s64, %s66
    %p73 = scmp.eq.s32.totalorder %s14, 1
    %p74 = por %p72, %p73
    %p75 = scmp.ne.s32.totalorder %s66, %s67
    %p76 = scmp.eq.s32.totalorder %s14, 0
    %p77 = por %p75, %p76
    %p78 = scmp.ne.s32.totalorder %s66, %s67
    %p79 = scmp.eq.s32.totalorder %s15, 1
    %p80 = por %p78, %p79
    %p82 = scmp.ne.s32.totalorder %s67, %s81
    %p83 = scmp.eq.s32.totalorder %s15, 0
    %p84 = por %p82, %p83
    %s85 = ssub.s32 %s9, %s16
    %p86 = scmp.eq.s32.totalorder %s85, 0
    %s88 = sadd.s32 %s87, 1
    %s89 = scalar_select %p86, %s87, %s88
    %p92 = pneg %p86
    %p93 = scmp.eq.s32.totalorder %s9, 1
    %p94 = por %p92, %p93
    %p95 = scmp.ne.s32.totalorder %s87, %s90
    %p96 = scmp.eq.s32.totalorder %s9, 0
    %p97 = por %p95, %p96
    %p98 = scmp.ne.s32.totalorder %s87, %s90
    %p99 = scmp.eq.s32.totalorder %s14, 1
    %p100 = por %p98, %p99
    %p101 = scmp.ne.s32.totalorder %s90, %s91
    %p102 = scmp.eq.s32.totalorder %s14, 0
    %p103 = por %p101, %p102
    %p104 = scmp.ne.s32.totalorder %s90, %s91
    %p105 = scmp.eq.s32.totalorder %s15, 1
    %p106 = por %p104, %p105
    %p108 = scmp.ne.s32.totalorder %s91, %s107
    %p109 = scmp.eq.s32.totalorder %s15, 0
    %p110 = por %p108, %p109
    %p111 = scmp.le.s32.totalorder 1, %s9
    %p112 = scmp.lt.s32.totalorder %s9, 3
    %p113 = pnand %p111, %p112
    %p114 = pneg %p113
    // Predicated region
    $region9: #{unet_ag_forward.15} parent=5 // pred_check
      _
    $region10: #{unet_ag_forward.15} parent=5 // pred_check_branch
      %116 = sbr.rel (%p113) target = $region12
    $region11: #{unet_ag_forward.15} parent=5 // pred_region
      %s117 = ssub.s32 %s9, 1
      // Predicated region
      $region13: #{unet_ag_forward.15} parent=11 // pred_check
        %p118 = pneg %p56
      $region14: #{unet_ag_forward.15} parent=11 // pred_check_branch
        %120 = sbr.rel (%p118) target = $region16
      $region15: #{unet_ag_forward.15} parent=11 // pred_region
        _
      $region16: #{unet_ag_forward.15} parent=11 // pred_fallthru
        _
      // Predicated region
      $region17: #{unet_ag_forward.15} parent=11 // pred_check
        %p121 = pneg %p77
      $region18: #{unet_ag_forward.15} parent=11 // pred_check_branch
        %123 = sbr.rel (%p121) target = $region20
      $region19: #{unet_ag_forward.15} parent=11 // pred_region
        _
      $region20: #{unet_ag_forward.15} parent=11 // pred_fallthru
        _
    $region12: #{unet_ag_forward.15} parent=5 // pred_fallthru
      _
    %p124 = scmp.lt.s32.totalorder %s9, 2
    // Predicated region
    $region21: #{unet_ag_forward.15} parent=5 // pred_check
      %p125 = pneg %p124
    $region22: #{unet_ag_forward.15} parent=5 // pred_check_branch
      %127 = sbr.rel (%p125) target = $region24
    $region23: #{unet_ag_forward.15} parent=5 // pred_region
      // Predicated region
      $region25: #{unet_ag_forward.15} parent=23 // pred_check
        %p128 = pneg %p29
      $region26: #{unet_ag_forward.15} parent=23 // pred_check_branch
        %130 = sbr.rel (%p128) target = $region28
      $region27: #{unet_ag_forward.15} parent=23 // pred_region
        %s131 = smul.u32 36, %s9
        %p132 = scmp.lt.s32.totalorder %s131, 71
        %s133 = scalar_select %p132, %s131, 71
        %s134 = smul.addr %s133, 8
        %s135 = scalar_lea.vmem %s0, %s134
        %s136 = smul.u32 36, %s9
      $region28: #{unet_ag_forward.15} parent=23 // pred_fallthru
        _
    $region24: #{unet_ag_forward.15} parent=5 // pred_fallthru
      _
    %p137 = scmp.le.s32.totalorder 1, %s9
    %p138 = scmp.lt.s32.totalorder %s9, 3
    %p139 = pnand %p137, %p138
    %p140 = pneg %p139
    // Predicated region
    $region29: #{unet_ag_forward.15} parent=5 // pred_check
      _
    $region30: #{unet_ag_forward.15} parent=5 // pred_check_branch
      %142 = sbr.rel (%p139) target = $region32
    $region31: #{unet_ag_forward.15} parent=5 // pred_region
      %s143 = ssub.s32 %s9, 1
      %s144 = smul.u32 36, %s14
      %p145 = scmp.lt.s32.totalorder %s144, 71
      %s146 = scalar_select %p145, %s144, 71
      %s147 = smul.addr %s146, 8
      %s148 = scalar_lea.vmem %s0, %s147
      %p149 = pneg %p35
      %p150 = pneg %p32
      %p151 = pneg %p56
      %p152 = pneg %p53
      %p153 = pneg %p77
      %p154 = pneg %p74
      %p155 = pneg %p103
      %p156 = pneg %p100
      %s157 = smul.u32 32, %s14
      %p158 = scmp.lt.s32.totalorder %s157, 63
      %s159 = scalar_select %p158, %s157, 63
      %s160 = smul.addr %s159, 8
      %s161 = scalar_lea.vmem %s3, %s160
      %s162 = smul.u32 36, %s14
      %p163 = scmp.lt.s32.totalorder %s162, 71
      %s164 = scalar_select %p163, %s162, 71
      %s165 = smul.addr %s164, 8
      %s166 = scalar_lea.vmem %s0, %s165
      %s167 = smul.u32 36, %s14
      %s168 = smul.u32 32, %s14
      %p169 = scmp.lt.s32.totalorder %s168, 63
      %s170 = scalar_select %p169, %s168, 63
      %s171 = smul.addr %s170, 8
      %s172 = scalar_lea.vmem %s3, %s171
      %s173 = smul.u32 32, %s14
      %v175 = vld [vmem:[%s166] sm:$0xff]
      %v176 = vld [vmem:[%s166 + $0x8] sm:$0xff]
      %v177 = vld [vmem:[%s166 + $0x10] sm:$0xff]
      %v178 = vld [vmem:[%s166 + $0x18] sm:$0xff]
      %v179 = vld [vmem:[%s166 + $0x20] sm:$0xff]
      %v180 = vld [vmem:[%s166 + $0x28] sm:$0xff]
      %v181 = vld [vmem:[%s166 + $0x30] sm:$0xff]
      %v182 = vld [vmem:[%s166 + $0x38] sm:$0xff]
      %v183 = vld [vmem:[%s166 + $0x40] sm:$0xff]
      %v184 = vld [vmem:[%s166 + $0x48] sm:$0xff]
      %v185 = vld [vmem:[%s166 + $0x50] sm:$0xff]
      %v186 = vld [vmem:[%s166 + $0x58] sm:$0xff]
      %v187 = vld [vmem:[%s166 + $0x60] sm:$0xff]
      %v188 = vld [vmem:[%s166 + $0x68] sm:$0xff]
      %v189 = vld [vmem:[%s166 + $0x70] sm:$0xff]
      %v190 = vld [vmem:[%s166 + $0x78] sm:$0xff]
      %v191 = vld [vmem:[%s166 + $0x80] sm:$0xff]
      %v192 = vld [vmem:[%s166 + $0x88] sm:$0xff]
      %v193 = vld [vmem:[%s166 + $0x90] sm:$0xff]
      %v194 = vld [vmem:[%s166 + $0x98] sm:$0xff]
      %v195 = vld [vmem:[%s166 + $0xa0] sm:$0xff]
      %v196 = vld [vmem:[%s166 + $0xa8] sm:$0xff]
      %v197 = vld [vmem:[%s166 + $0xb0] sm:$0xff]
      %v198 = vld [vmem:[%s166 + $0xb8] sm:$0xff]
      %v199 = vld [vmem:[%s166 + $0xc0] sm:$0xff]
      %v200 = vld [vmem:[%s166 + $0xc8] sm:$0xff]
      %v201 = vld [vmem:[%s166 + $0xd0] sm:$0xff]
      %v202 = vld [vmem:[%s166 + $0xd8] sm:$0xff]
      %v203 = vld [vmem:[%s166 + $0xe0] sm:$0xff]
      %v204 = vld [vmem:[%s166 + $0xe8] sm:$0xff]
      %v205 = vld [vmem:[%s166 + $0xf0] sm:$0xff]
      %v206 = vld [vmem:[%s166 + $0xf8] sm:$0xff]
      %v207 = vpack.c.bf16 %v176, %v175
      %v208 = vpack.c.bf16 %v178, %v177
      %v209 = vpack.c.bf16 %v180, %v179
      %v210 = vpack.c.bf16 %v182, %v181
      %v211 = vpack.c.bf16 %v184, %v183
      %v212 = vpack.c.bf16 %v186, %v185
      %v213 = vpack.c.bf16 %v188, %v187
      %v214 = vpack.c.bf16 %v190, %v189
      %v215 = vpack.c.bf16 %v192, %v191
      %v216 = vpack.c.bf16 %v194, %v193
      %v217 = vpack.c.bf16 %v196, %v195
      %v218 = vpack.c.bf16 %v198, %v197
      %v219 = vpack.c.bf16 %v200, %v199
      %v220 = vpack.c.bf16 %v202, %v201
      %v221 = vpack.c.bf16 %v204, %v203
      %v222 = vpack.c.bf16 %v206, %v205
      %v223 = vld [vmem:[%s1] sm:$0xf]
      %v224 = vld [vmem:[%s1 + $0x4] sm:$0xf]
      %v225 = vld [vmem:[%s1 + $0x8] sm:$0xf]
      %v226 = vld [vmem:[%s166 + $0x100] sm:$0xff]
      %v227 = vld [vmem:[%s166 + $0x108] sm:$0xff]
      %v228 = vpack.c.bf16 %v227, %v226
      %s229 = scalar_lea.vmem %s1, 12
      %v230 = vld [vmem:[%s229] sm:$0xf]
      %v231 = vld [vmem:[%s229 + $0x4] sm:$0xf]
      %v232 = vld [vmem:[%s229 + $0x8] sm:$0xf]
      %v236 = vunpack.c.l.b16 %v230
      %v237 = vunpack.c.l.b16 %v231
      %v238 = vunpack.c.l.b16 %v232
      %v239 = vpack.c.b16 %v237, %v236
      %v240 = vpack.c.b16 %v238, %v238
      %vm242 = vcmask 195584
      %v244 = vsel %vm242, %v208, 0
      %v247 = vsel %vm242, %v209, 0
      %v250 = vsel %vm242, %v210, 0
      %v253 = vsel %vm242, %v211, 0
      %v256 = vsel %vm242, %v212, 0
      %v259 = vsel %vm242, %v213, 0
      %v262 = vsel %vm242, %v214, 0
      %v265 = vsel %vm242, %v215, 0
      %v268 = vsel %vm242, %v216, 0
      %v271 = vsel %vm242, %v217, 0
      %v274 = vsel %vm242, %v218, 0
      %v277 = vsel %vm242, %v219, 0
      %v280 = vsel %vm242, %v220, 0
      %v283 = vsel %vm242, %v221, 0
      %v286 = vsel %vm242, %v222, 0
      %v289 = vsel %vm242, %v228, 0
      %vm291 = vcmask 1043456
      %v293 = vsel %vm291, %v240, 0
      %295 = vmatprep.subr.bf16.mxu0 0
      %296 = vmatpush1.bf16.msra.mxu0 %v239
      %297 = vmatprep.subr.bf16.mxu0 0
      %298 = vmatpush1.bf16.msra.mxu0 %v293
      %299 = vmatprep.subr.bf16.mxu0 0
      %300 = vmatpush1.bf16.msra.mxu0 0
      %301 = vmatprep.subr.bf16.mxu0 0
      %302 = vmatpush1.bf16.msra.mxu0 0
      %303 = vmatprep.subr.bf16.mxu0 0
      %304 = vmatpush1.bf16.msra.mxu0 0
      %305 = vmatprep.subr.bf16.mxu0 0
      %306 = vmatpush1.bf16.msra.mxu0 0
      %307 = vmatprep.subr.bf16.mxu0 0
      %308 = vmatpush1.bf16.msra.mxu0 0
      %309 = vmatprep.subr.bf16.mxu0 0
      %310 = vmatpush1.bf16.msra.mxu0 0
      %311 = vmatprep.subr.bf16.mxu0 0
      %312 = vmatpush1.bf16.msra.mxu0 0
      %313 = vmatprep.subr.bf16.mxu0 0
      %314 = vmatpush1.bf16.msra.mxu0 0
      %315 = vmatprep.subr.bf16.mxu0 0
      %316 = vmatpush1.bf16.msra.mxu0 0
      %317 = vmatprep.subr.bf16.mxu0 0
      %318 = vmatpush1.bf16.msra.mxu0 0
      %319 = vmatprep.subr.bf16.mxu0 0
      %320 = vmatpush1.bf16.msra.mxu0 0
      %321 = vmatprep.subr.bf16.mxu0 0
      %322 = vmatpush1.bf16.msra.mxu0 0
      %323 = vmatprep.subr.bf16.mxu0 0
      %324 = vmatpush1.bf16.msra.mxu0 0
      %325 = vmatprep.subr.bf16.mxu0 0
      %326 = vmatpush1.bf16.msra.mxu0 0
      %327 = vmatprep.mubr.bf16.mxu0 0
      %328 = vmatmul.mubr.bf16.gmra.mrb[0].mxu0 %v244
      %v329 = vpop.f32.mrb[0].mxu0
      %v330 = vadd.f32 0.0, %v329
      %v331 = vpop.f32.mrb[0].mxu0
      %v332 = vpop.f32.mrb[0].mxu0
      %v333 = vadd.f32 0.0, %v332
      %v334 = vpop.f32.mrb[0].mxu0
      %335 = vmatprep.mubr.bf16.mxu0 0
      %336 = vmatmul.mubr.bf16.gmra.mrb[0].mxu0 %v247
      %v337 = vpop.f32.mrb[0].mxu0
      %v338 = vadd.f32 0.0, %v337
      %v339 = vpop.f32.mrb[0].mxu0
      %v340 = vpop.f32.mrb[0].mxu0
      %v341 = vadd.f32 0.0, %v340
      %v342 = vpop.f32.mrb[0].mxu0
      %343 = vmatprep.mubr.bf16.mxu0 0
      %344 = vmatmul.mubr.bf16.gmra.mrb[0].mxu0 %v250
      %v345 = vpop.f32.mrb[0].mxu0
      %v346 = vadd.f32 0.0, %v345
      %v347 = vpop.f32.mrb[0].mxu0
      %v348 = vpop.f32.mrb[0].mxu0
      %v349 = vadd.f32 0.0, %v348
      %v350 = vpop.f32.mrb[0].mxu0
      %351 = vmatprep.mubr.bf16.mxu0 0
      %352 = vmatmul.mubr.bf16.gmra.mrb[0].mxu0 %v253
      %v353 = vpop.f32.mrb[0].mxu0
      %v354 = vadd.f32 0.0, %v353
      %v355 = vpop.f32.mrb[0].mxu0
      %v356 = vpop.f32.mrb[0].mxu0
      %v357 = vadd.f32 0.0, %v356
      %v358 = vpop.f32.mrb[0].mxu0
      %359 = vmatprep.mubr.bf16.mxu0 0
      %360 = vmatmul.mubr.bf16.gmra.mrb[0].mxu0 %v256
      %v361 = vpop.f32.mrb[0].mxu0
      %v362 = vadd.f32 0.0, %v361
      %v363 = vpop.f32.mrb[0].mxu0
      %v364 = vpop.f32.mrb[0].mxu0
      %v365 = vadd.f32 0.0, %v364
      %v366 = vpop.f32.mrb[0].mxu0
      %367 = vmatprep.mubr.bf16.mxu0 0
      %368 = vmatmul.mubr.bf16.gmra.mrb[0].mxu0 %v259
      %v369 = vpop.f32.mrb[0].mxu0
      %v370 = vadd.f32 0.0, %v369
      %v371 = vpop.f32.mrb[0].mxu0
      %v372 = vpop.f32.mrb[0].mxu0
      %v373 = vadd.f32 0.0, %v372
      %v374 = vpop.f32.mrb[0].mxu0
      %375 = vmatprep.mubr.bf16.mxu0 0
      %376 = vmatmul.mubr.bf16.gmra.mrb[0].mxu0 %v262
      %v377 = vpop.f32.mrb[0].mxu0
      %v378 = vadd.f32 0.0, %v377
      %v379 = vpop.f32.mrb[0].mxu0
      %v380 = vpop.f32.mrb[0].mxu0
      %v381 = vadd.f32 0.0, %v380
      %v382 = vpop.f32.mrb[0].mxu0
      %383 = vmatprep.mubr.bf16.mxu0 0
      %384 = vmatmul.mubr.bf16.gmra.mrb[0].mxu0 %v265
      %v385 = vpop.f32.mrb[0].mxu0
      %v386 = vadd.f32 0.0, %v385
      %v387 = vpop.f32.mrb[0].mxu0
      %v388 = vpop.f32.mrb[0].mxu0
      %v389 = vadd.f32 0.0, %v388
      %v390 = vpop.f32.mrb[0].mxu0
      %391 = vmatprep.mubr.bf16.mxu0 0
      %392 = vmatmul.mubr.bf16.gmra.mrb[0].mxu0 %v268
      %v393 = vpop.f32.mrb[0].mxu0
      %v394 = vadd.f32 0.0, %v393
      %v395 = vpop.f32.mrb[0].mxu0
      %v396 = vpop.f32.mrb[0].mxu0
      %v397 = vadd.f32 0.0, %v396
      %v398 = vpop.f32.mrb[0].mxu0
      %399 = vmatprep.mubr.bf16.mxu0 0
      %400 = vmatmul.mubr.bf16.gmra.mrb[0].mxu0 %v271
      %v401 = vpop.f32.mrb[0].mxu0
      %v402 = vadd.f32 0.0, %v401
      %v403 = vpop.f32.mrb[0].mxu0
      %v404 = vpop.f32.mrb[0].mxu0
      %v405 = vadd.f32 0.0, %v404
      %v406 = vpop.f32.mrb[0].mxu0
      %407 = vmatprep.mubr.bf16.mxu0 0
      %408 = vmatmul.mubr.bf16.gmra.mrb[0].mxu0 %v274
      %v409 = vpop.f32.mrb[0].mxu0
      %v410 = vadd.f32 0.0, %v409
      %v411 = vpop.f32.mrb[0].mxu0
      %v412 = vpop.f32.mrb[0].mxu0
      %v413 = vadd.f32 0.0, %v412
      %v414 = vpop.f32.mrb[0].mxu0
      %415 = vmatprep.mubr.bf16.mxu0 0
      %416 = vmatmul.mubr.bf16.gmra.mrb[0].mxu0 %v277
      %v417 = vpop.f32.mrb[0].mxu0
      %v418 = vadd.f32 0.0, %v417
      %v419 = vpop.f32.mrb[0].mxu0
      %v420 = vpop.f32.mrb[0].mxu0
      %v421 = vadd.f32 0.0, %v420
      %v422 = vpop.f32.mrb[0].mxu0
      %423 = vmatprep.mubr.bf16.mxu0 0
      %424 = vmatmul.mubr.bf16.gmra.mrb[0].mxu0 %v280
      %v425 = vpop.f32.mrb[0].mxu0
      %v426 = vadd.f32 0.0, %v425
      %v427 = vpop.f32.mrb[0].mxu0
      %v428 = vpop.f32.mrb[0].mxu0
      %v429 = vadd.f32 0.0, %v428
      %v430 = vpop.f32.mrb[0].mxu0
      %431 = vmatprep.mubr.bf16.mxu0 0
      %432 = vmatmul.mubr.bf16.gmra.mrb[0].mxu0 %v283
      %v433 = vpop.f32.mrb[0].mxu0
      %v434 = vadd.f32 0.0, %v433
      %v435 = vpop.f32.mrb[0].mxu0
      %v436 = vpop.f32.mrb[0].mxu0
      %v437 = vadd.f32 0.0, %v436
      %v438 = vpop.f32.mrb[0].mxu0
      %439 = vmatprep.mubr.bf16.mxu0 0
      %440 = vmatmul.mubr.bf16.gmra.mrb[0].mxu0 %v286
      %v441 = vpop.f32.mrb[0].mxu0
      %v442 = vadd.f32 0.0, %v441
      %v443 = vpop.f32.mrb[0].mxu0
      %v444 = vpop.f32.mrb[0].mxu0
      %v445 = vadd.f32 0.0, %v444
      %v446 = vpop.f32.mrb[0].mxu0
      %447 = vmatprep.mubr.bf16.mxu0 0
      %448 = vmatmul.mubr.bf16.gmra.mrb[0].mxu0 %v289
      %v449 = vpop.f32.mrb[0].mxu0
      %v450 = vadd.f32 0.0, %v449
      %v451 = vpop.f32.mrb[0].mxu0
      %v452 = vpop.f32.mrb[0].mxu0
      %v453 = vadd.f32 0.0, %v452
      %v454 = vpop.f32.mrb[0].mxu0
      %455 = vdwg.mxu0
      %v459 = vunpack.c.l.b16 %v223
      %v460 = vunpack.c.l.b16 %v224
      %v461 = vunpack.c.l.b16 %v225
      %v462 = vpack.c.b16 %v460, %v459
      %v463 = vpack.c.b16 %v461, %v461
      %v466 = vsel %vm242, %v207, 0
      %v469 = vsel %vm291, %v463, 0
      %471 = vmatprep.subr.bf16.mxu0 0
      %472 = vmatpush1.bf16.msra.mxu0 %v462
      %473 = vmatprep.subr.bf16.mxu0 0
      %474 = vmatpush1.bf16.msra.mxu0 %v469
      %475 = vmatprep.subr.bf16.mxu0 0
      %476 = vmatpush1.bf16.msra.mxu0 0
      %477 = vmatprep.subr.bf16.mxu0 0
      %478 = vmatpush1.bf16.msra.mxu0 0
      %479 = vmatprep.subr.bf16.mxu0 0
      %480 = vmatpush1.bf16.msra.mxu0 0
      %481 = vmatprep.subr.bf16.mxu0 0
      %482 = vmatpush1.bf16.msra.mxu0 0
      %483 = vmatprep.subr.bf16.mxu0 0
      %484 = vmatpush1.bf16.msra.mxu0 0
      %485 = vmatprep.subr.bf16.mxu0 0
      %486 = vmatpush1.bf16.msra.mxu0 0
      %487 = vmatprep.subr.bf16.mxu0 0
      %488 = vmatpush1.bf16.msra.mxu0 0
      %489 = vmatprep.subr.bf16.mxu0 0
      %490 = vmatpush1.bf16.msra.mxu0 0
      %491 = vmatprep.subr.bf16.mxu0 0
      %492 = vmatpush1.bf16.msra.mxu0 0
      %493 = vmatprep.subr.bf16.mxu0 0
      %494 = vmatpush1.bf16.msra.mxu0 0
      %495 = vmatprep.subr.bf16.mxu0 0
      %496 = vmatpush1.bf16.msra.mxu0 0
      %497 = vmatprep.subr.bf16.mxu0 0
      %498 = vmatpush1.bf16.msra.mxu0 0
      %499 = vmatprep.subr.bf16.mxu0 0
      %500 = vmatpush1.bf16.msra.mxu0 0
      %501 = vmatprep.subr.bf16.mxu0 0
      %502 = vmatpush1.bf16.msra.mxu0 0
      %503 = vmatprep.mubr.bf16.mxu0 0
      %504 = vmatmul.mubr.bf16.gmra.mrb[0].mxu0 %v466
      %v505 = vpop.f32.mrb[0].mxu0
      %v506 = vadd.f32 %v330, %v505
      %v507 = vpop.f32.mrb[0].mxu0
      %v508 = vpop.f32.mrb[0].mxu0
      %v509 = vadd.f32 %v333, %v508
      %v510 = vpop.f32.mrb[0].mxu0
      %511 = vmatprep.mubr.bf16.mxu0 0
      %512 = vmatmul.mubr.bf16.gmra.mrb[0].mxu0 %v244
      %v513 = vpop.f32.mrb[0].mxu0
      %v514 = vadd.f32 %v338, %v513
      %v515 = vpop.f32.mrb[0].mxu0
      %v516 = vpop.f32.mrb[0].mxu0
      %v517 = vadd.f32 %v341, %v516
      %v518 = vpop.f32.mrb[0].mxu0
      %519 = vmatprep.mubr.bf16.mxu0 0
      %520 = vmatmul.mubr.bf16.gmra.mrb[0].mxu0 %v247
      %v521 = vpop.f32.mrb[0].mxu0
      %v522 = vadd.f32 %v346, %v521
      %v523 = vpop.f32.mrb[0].mxu0
      %v524 = vpop.f32.mrb[0].mxu0
      %v525 = vadd.f32 %v349, %v524
      %v526 = vpop.f32.mrb[0].mxu0
      %527 = vmatprep.mubr.bf16.mxu0 0
      %528 = vmatmul.mubr.bf16.gmra.mrb[0].mxu0 %v250
      %v529 = vpop.f32.mrb[0].mxu0
      %v530 = vadd.f32 %v354, %v529
      %v531 = vpop.f32.mrb[0].mxu0
      %v532 = vpop.f32.mrb[0].mxu0
      %v533 = vadd.f32 %v357, %v532
      %v534 = vpop.f32.mrb[0].mxu0
      %535 = vmatprep.mubr.bf16.mxu0 0
      %536 = vmatmul.mubr.bf16.gmra.mrb[0].mxu0 %v253
      %v537 = vpop.f32.mrb[0].mxu0
      %v538 = vadd.f32 %v362, %v537
      %v539 = vpop.f32.mrb[0].mxu0
      %v540 = vpop.f32.mrb[0].mxu0
      %v541 = vadd.f32 %v365, %v540
      %v542 = vpop.f32.mrb[0].mxu0
      %543 = vmatprep.mubr.bf16.mxu0 0
      %544 = vmatmul.mubr.bf16.gmra.mrb[0].mxu0 %v256
      %v545 = vpop.f32.mrb[0].mxu0
      %v546 = vadd.f32 %v370, %v545
      %v547 = vpop.f32.mrb[0].mxu0
      %v548 = vpop.f32.mrb[0].mxu0
      %v549 = vadd.f32 %v373, %v548
      %v550 = vpop.f32.mrb[0].mxu0
      %551 = vmatprep.mubr.bf16.mxu0 0
      %552 = vmatmul.mubr.bf16.gmra.mrb[0].mxu0 %v259
      %v553 = vpop.f32.mrb[0].mxu0
      %v554 = vadd.f32 %v378, %v553
      %v555 = vpop.f32.mrb[0].mxu0
      %v556 = vpop.f32.mrb[0].mxu0
      %v557 = vadd.f32 %v381, %v556
      %v558 = vpop.f32.mrb[0].mxu0
      %559 = vmatprep.mubr.bf16.mxu0 0
      %560 = vmatmul.mubr.bf16.gmra.mrb[0].mxu0 %v262
      %v561 = vpop.f32.mrb[0].mxu0
      %v562 = vadd.f32 %v386, %v561
      %v563 = vpop.f32.mrb[0].mxu0
      %v564 = vpop.f32.mrb[0].mxu0
      %v565 = vadd.f32 %v389, %v564
      %v566 = vpop.f32.mrb[0].mxu0
      %567 = vmatprep.mubr.bf16.mxu0 0
      %568 = vmatmul.mubr.bf16.gmra.mrb[0].mxu0 %v265
      %v569 = vpop.f32.mrb[0].mxu0
      %v570 = vadd.f32 %v394, %v569
      %v571 = vpop.f32.mrb[0].mxu0
      %v572 = vpop.f32.mrb[0].mxu0
      %v573 = vadd.f32 %v397, %v572
      %v574 = vpop.f32.mrb[0].mxu0
      %575 = vmatprep.mubr.bf16.mxu0 0
      %576 = vmatmul.mubr.bf16.gmra.mrb[0].mxu0 %v268
      %v577 = vpop.f32.mrb[0].mxu0
      %v578 = vadd.f32 %v402, %v577
      %v579 = vpop.f32.mrb[0].mxu0
      %v580 = vpop.f32.mrb[0].mxu0
      %v581 = vadd.f32 %v405, %v580
      %v582 = vpop.f32.mrb[0].mxu0
      %583 = vmatprep.mubr.bf16.mxu0 0
      %584 = vmatmul.mubr.bf16.gmra.mrb[0].mxu0 %v271
      %v585 = vpop.f32.mrb[0].mxu0
      %v586 = vadd.f32 %v410, %v585
      %v587 = vpop.f32.mrb[0].mxu0
      %v588 = vpop.f32.mrb[0].mxu0
      %v589 = vadd.f32 %v413, %v588
      %v590 = vpop.f32.mrb[0].mxu0
      %591 = vmatprep.mubr.bf16.mxu0 0
      %592 = vmatmul.mubr.bf16.gmra.mrb[0].mxu0 %v274
      %v593 = vpop.f32.mrb[0].mxu0
      %v594 = vadd.f32 %v418, %v593
      %v595 = vpop.f32.mrb[0].mxu0
      %v596 = vpop.f32.mrb[0].mxu0
      %v597 = vadd.f32 %v421, %v596
      %v598 = vpop.f32.mrb[0].mxu0
      %599 = vmatprep.mubr.bf16.mxu0 0
      %600 = vmatmul.mubr.bf16.gmra.mrb[0].mxu0 %v277
      %v601 = vpop.f32.mrb[0].mxu0
      %v602 = vadd.f32 %v426, %v601
      %v603 = vpop.f32.mrb[0].mxu0
      %v604 = vpop.f32.mrb[0].mxu0
      %v605 = vadd.f32 %v429, %v604
      %v606 = vpop.f32.mrb[0].mxu0
      %607 = vmatprep.mubr.bf16.mxu0 0
      %608 = vmatmul.mubr.bf16.gmra.mrb[0].mxu0 %v280
      %v609 = vpop.f32.mrb[0].mxu0
      %v610 = vadd.f32 %v434, %v609
      %v611 = vpop.f32.mrb[0].mxu0
      %v612 = vpop.f32.mrb[0].mxu0
      %v613 = vadd.f32 %v437, %v612
      %v614 = vpop.f32.mrb[0].mxu0
      %615 = vmatprep.mubr.bf16.mxu0 0
      %616 = vmatmul.mubr.bf16.gmra.mrb[0].mxu0 %v283
      %v617 = vpop.f32.mrb[0].mxu0
      %v618 = vadd.f32 %v442, %v617
      %v619 = vpop.f32.mrb[0].mxu0
      %v620 = vpop.f32.mrb[0].mxu0
      %v621 = vadd.f32 %v445, %v620
      %v622 = vpop.f32.mrb[0].mxu0
      %623 = vmatprep.mubr.bf16.mxu0 0
      %624 = vmatmul.mubr.bf16.gmra.mrb[0].mxu0 %v286
      %v625 = vpop.f32.mrb[0].mxu0
      %v626 = vadd.f32 %v450, %v625
      %v627 = vpop.f32.mrb[0].mxu0
      %v628 = vpop.f32.mrb[0].mxu0
      %v629 = vadd.f32 %v453, %v628
      %v630 = vpop.f32.mrb[0].mxu0
      %631 = vdwg.mxu0
      %v632 = vld [vmem:[%s166 + $0x20] sm:$0xff]
      %v633 = vld [vmem:[%s166 + $0x28] sm:$0xff]
      %v634 = vld [vmem:[%s166 + $0x30] sm:$0xff]
      %v635 = vld [vmem:[%s166 + $0x38] sm:$0xff]
      %v636 = vld [vmem:[%s166 + $0x40] sm:$0xff]
      %v637 = vld [vmem:[%s166 + $0x48] sm:$0xff]
      %v638 = vld [vmem:[%s166 + $0x50] sm:$0xff]
      %v639 = vld [vmem:[%s166 + $0x58] sm:$0xff]
      %v640 = vld [vmem:[%s166 + $0x60] sm:$0xff]
      %v641 = vld [vmem:[%s166 + $0x68] sm:$0xff]
      %v642 = vld [vmem:[%s166 + $0x70] sm:$0xff]
      %v643 = vld [vmem:[%s166 + $0x78] sm:$0xff]
      %v644 = vld [vmem:[%s166 + $0x80] sm:$0xff]
      %v645 = vld [vmem:[%s166 + $0x88] sm:$0xff]
      %v646 = vld [vmem:[%s166 + $0x90] sm:$0xff]
      %v647 = vld [vmem:[%s166 + $0x98] sm:$0xff]
      %v648 = vld [vmem:[%s166 + $0xa0] sm:$0xff]
      %v649 = vld [vmem:[%s166 + $0xa8] sm:$0xff]
      %v650 = vld [vmem:[%s166 + $0xb0] sm:$0xff]
      %v651 = vld [vmem:[%s166 + $0xb8] sm:$0xff]
      %v652 = vld [vmem:[%s166 + $0xc0] sm:$0xff]
      %v653 = vld [vmem:[%s166 + $0xc8] sm:$0xff]
      %v654 = vld [vmem:[%s166 + $0xd0] sm:$0xff]
      %v655 = vld [vmem:[%s166 + $0xd8] sm:$0xff]
      %v656 = vld [vmem:[%s166 + $0xe0] sm:$0xff]
      %v657 = vld [vmem:[%s166 + $0xe8] sm:$0xff]
      %v658 = vld [vmem:[%s166 + $0xf0] sm:$0xff]
      %v659 = vld [vmem:[%s166 + $0xf8] sm:$0xff]
      %v660 = vld [vmem:[%s166 + $0x100] sm:$0xff]
      %v661 = vld [vmem:[%s166 + $0x108] sm:$0xff]
      %v662 = vld [vmem:[%s166 + $0x110] sm:$0xff]
      %v663 = vld [vmem:[%s166 + $0x118] sm:$0xff]
      %v664 = vpack.c.bf16 %v633, %v632
      %v665 = vpack.c.bf16 %v635, %v634
      %v666 = vpack.c.bf16 %v637, %v636
      %v667 = vpack.c.bf16 %v639, %v638
      %v668 = vpack.c.bf16 %v641, %v640
      %v669 = vpack.c.bf16 %v643, %v642
      %v670 = vpack.c.bf16 %v645, %v644
      %v671 = vpack.c.bf16 %v647, %v646
      %v672 = vpack.c.bf16 %v649, %v648
      %v673 = vpack.c.bf16 %v651, %v650
      %v674 = vpack.c.bf16 %v653, %v652
      %v675 = vpack.c.bf16 %v655, %v654
      %v676 = vpack.c.bf16 %v657, %v656
      %v677 = vpack.c.bf16 %v659, %v658
      %v678 = vpack.c.bf16 %v661, %v660
      %v679 = vpack.c.bf16 %v663, %v662
      %s680 = scalar_lea.vmem %s1, 24
      %v681 = vld [vmem:[%s680] sm:$0xf]
      %v682 = vld [vmem:[%s680 + $0x4] sm:$0xf]
      %v683 = vld [vmem:[%s680 + $0x8] sm:$0xf]
      %v687 = vunpack.c.l.b16 %v681
      %v688 = vunpack.c.l.b16 %v682
      %v689 = vunpack.c.l.b16 %v683
      %v690 = vpack.c.b16 %v688, %v687
      %v691 = vpack.c.b16 %v689, %v689
      %v694 = vsel %vm242, %v664, 0
      %v697 = vsel %vm242, %v665, 0
      %v700 = vsel %vm242, %v666, 0
      %v703 = vsel %vm242, %v667, 0
      %v706 = vsel %vm242, %v668, 0
      %v709 = vsel %vm242, %v669, 0
      %v712 = vsel %vm242, %v670, 0
      %v715 = vsel %vm242, %v671, 0
      %v718 = vsel %vm242, %v672, 0
      %v721 = vsel %vm242, %v673, 0
      %v724 = vsel %vm242, %v674, 0
      %v727 = vsel %vm242, %v675, 0
      %v730 = vsel %vm242, %v676, 0
      %v733 = vsel %vm242, %v677, 0
      %v736 = vsel %vm242, %v678, 0
      %v739 = vsel %vm242, %v679, 0
      %v742 = vsel %vm291, %v691, 0
      %744 = vmatprep.subr.bf16.mxu0 0
      %745 = vmatpush1.bf16.msra.mxu0 %v690
      %746 = vmatprep.subr.bf16.mxu0 0
      %747 = vmatpush1.bf16.msra.mxu0 %v742
      %748 = vmatprep.subr.bf16.mxu0 0
      %749 = vmatpush1.bf16.msra.mxu0 0
      %750 = vmatprep.subr.bf16.mxu0 0
      %751 = vmatpush1.bf16.msra.mxu0 0
      %752 = vmatprep.subr.bf16.mxu0 0
      %753 = vmatpush1.bf16.msra.mxu0 0
      %754 = vmatprep.subr.bf16.mxu0 0
      %755 = vmatpush1.bf16.msra.mxu0 0
      %756 = vmatprep.subr.bf16.mxu0 0
      %757 = vmatpush1.bf16.msra.mxu0 0
      %758 = vmatprep.subr.bf16.mxu0 0
      %759 = vmatpush1.bf16.msra.mxu0 0
      %760 = vmatprep.subr.bf16.mxu0 0
      %761 = vmatpush1.bf16.msra.mxu0 0
      %762 = vmatprep.subr.bf16.mxu0 0
      %763 = vmatpush1.bf16.msra.mxu0 0
      %764 = vmatprep.subr.bf16.mxu0 0
      %765 = vmatpush1.bf16.msra.mxu0 0
      %766 = vmatprep.subr.bf16.mxu0 0
      %767 = vmatpush1.bf16.msra.mxu0 0
      %768 = vmatprep.subr.bf16.mxu0 0
      %769 = vmatpush1.bf16.msra.mxu0 0
      %770 = vmatprep.subr.bf16.mxu0 0
      %771 = vmatpush1.bf16.msra.mxu0 0
      %772 = vmatprep.subr.bf16.mxu0 0
      %773 = vmatpush1.bf16.msra.mxu0 0
      %774 = vmatprep.subr.bf16.mxu0 0
      %775 = vmatpush1.bf16.msra.mxu0 0
      %776 = vmatprep.mubr.bf16.mxu0 0
      %777 = vmatmul.mubr.bf16.gmra.mrb[0].mxu0 %v694
      %v778 = vpop.f32.mrb[0].mxu0
      %v779 = vadd.f32 0.0, %v778
      %v780 = vpop.f32.mrb[0].mxu0
      %v781 = vpop.f32.mrb[0].mxu0
      %v782 = vadd.f32 0.0, %v781
      %v783 = vpop.f32.mrb[0].mxu0
      %784 = vmatprep.mubr.bf16.mxu0 0
      %785 = vmatmul.mubr.bf16.gmra.mrb[0].mxu0 %v697
      %v786 = vpop.f32.mrb[0].mxu0
      %v787 = vadd.f32 0.0, %v786
      %v788 = vpop.f32.mrb[0].mxu0
      %v789 = vpop.f32.mrb[0].mxu0
      %v790 = vadd.f32 0.0, %v789
      %v791 = vpop.f32.mrb[0].mxu0
      %792 = vmatprep.mubr.bf16.mxu0 0
      %793 = vmatmul.mubr.bf16.gmra.mrb[0].mxu0 %v700
      %v794 = vpop.f32.mrb[0].mxu0
      %v795 = vadd.f32 0.0, %v794
      %v796 = vpop.f32.mrb[0].mxu0
      %v797 = vpop.f32.mrb[0].mxu0
      %v798 = vadd.f32 0.0, %v797
      %v799 = vpop.f32.mrb[0].mxu0
      %800 = vmatprep.mubr.bf16.mxu0 0
      %801 = vmatmul.mubr.bf16.gmra.mrb[0].mxu0 %v703
      %v802 = vpop.f32.mrb[0].mxu0
      %v803 = vadd.f32 0.0, %v802
      %v804 = vpop.f32.mrb[0].mxu0
      %v805 = vpop.f32.mrb[0].mxu0
      %v806 = vadd.f32 0.0, %v805
      %v807 = vpop.f32.mrb[0].mxu0
      %808 = vmatprep.mubr.bf16.mxu0 0
      %809 = vmatmul.mubr.bf16.gmra.mrb[0].mxu0 %v706
      %v810 = vpop.f32.mrb[0].mxu0
      %v811 = vadd.f32 0.0, %v810
      %v812 = vpop.f32.mrb[0].mxu0
      %v813 = vpop.f32.mrb[0].mxu0
      %v814 = vadd.f32 0.0, %v813
      %v815 = vpop.f32.mrb[0].mxu0
      %816 = vmatprep.mubr.bf16.mxu0 0
      %817 = vmatmul.mubr.bf16.gmra.mrb[0].mxu0 %v709
      %v818 = vpop.f32.mrb[0].mxu0
      %v819 = vadd.f32 0.0, %v818
      %v820 = vpop.f32.mrb[0].mxu0
      %v821 = vpop.f32.mrb[0].mxu0
      %v822 = vadd.f32 0.0, %v821
      %v823 = vpop.f32.mrb[0].mxu0
      %824 = vmatprep.mubr.bf16.mxu0 0
      %825 = vmatmul.mubr.bf16.gmra.mrb[0].mxu0 %v712
      %v826 = vpop.f32.mrb[0].mxu0
      %v827 = vadd.f32 0.0, %v826
      %v828 = vpop.f32.mrb[0].mxu0
      %v829 = vpop.f32.mrb[0].mxu0
      %v830 = vadd.f32 0.0, %v829
      %v831 = vpop.f32.mrb[0].mxu0
      %832 = vmatprep.mubr.bf16.mxu0 0
      %833 = vmatmul.mubr.bf16.gmra.mrb[0].mxu0 %v715
      %v834 = vpop.f32.mrb[0].mxu0
      %v835 = vadd.f32 0.0, %v834
      %v836 = vpop.f32.mrb[0].mxu0
      %v837 = vpop.f32.mrb[0].mxu0
      %v838 = vadd.f32 0.0, %v837
      %v839 = vpop.f32.mrb[0].mxu0
      %840 = vmatprep.mubr.bf16.mxu0 0
      %841 = vmatmul.mubr.bf16.gmra.mrb[0].mxu0 %v718
      %v842 = vpop.f32.mrb[0].mxu0
      %v843 = vadd.f32 0.0, %v842
      %v844 = vpop.f32.mrb[0].mxu0
      %v845 = vpop.f32.mrb[0].mxu0
      %v846 = vadd.f32 0.0, %v845
      %v847 = vpop.f32.mrb[0].mxu0
      %848 = vmatprep.mubr.bf16.mxu0 0
      %849 = vmatmul.mubr.bf16.gmra.mrb[0].mxu0 %v721
      %v850 = vpop.f32.mrb[0].mxu0
      %v851 = vadd.f32 0.0, %v850
      %v852 = vpop.f32.mrb[0].mxu0
      %v853 = vpop.f32.mrb[0].mxu0
      %v854 = vadd.f32 0.0, %v853
      %v855 = vpop.f32.mrb[0].mxu0
      %856 = vmatprep.mubr.bf16.mxu0 0
      %857 = vmatmul.mubr.bf16.gmra.mrb[0].mxu0 %v724
      %v858 = vpop.f32.mrb[0].mxu0
      %v859 = vadd.f32 0.0, %v858
      %v860 = vpop.f32.mrb[0].mxu0
      %v861 = vpop.f32.mrb[0].mxu0
      %v862 = vadd.f32 0.0, %v861
      %v863 = vpop.f32.mrb[0].mxu0
      %864 = vmatprep.mubr.bf16.mxu0 0
      %865 = vmatmul.mubr.bf16.gmra.mrb[0].mxu0 %v727
      %v866 = vpop.f32.mrb[0].mxu0
      %v867 = vadd.f32 0.0, %v866
      %v868 = vpop.f32.mrb[0].mxu0
      %v869 = vpop.f32.mrb[0].mxu0
      %v870 = vadd.f32 0.0, %v869
      %v871 = vpop.f32.mrb[0].mxu0
      %872 = vmatprep.mubr.bf16.mxu0 0
      %873 = vmatmul.mubr.bf16.gmra.mrb[0].mxu0 %v730
      %v874 = vpop.f32.mrb[0].mxu0
      %v875 = vadd.f32 0.0, %v874
      %v876 = vpop.f32.mrb[0].mxu0
      %v877 = vpop.f32.mrb[0].mxu0
      %v878 = vadd.f32 0.0, %v877
      %v879 = vpop.f32.mrb[0].mxu0
      %880 = vmatprep.mubr.bf16.mxu0 0
      %881 = vmatmul.mubr.bf16.gmra.mrb[0].mxu0 %v733
      %v882 = vpop.f32.mrb[0].mxu0
      %v883 = vadd.f32 0.0, %v882
      %v884 = vpop.f32.mrb[0].mxu0
      %v885 = vpop.f32.mrb[0].mxu0
      %v886 = vadd.f32 0.0, %v885
      %v887 = vpop.f32.mrb[0].mxu0
      %888 = vmatprep.mubr.bf16.mxu0 0
      %889 = vmatmul.mubr.bf16.gmra.mrb[0].mxu0 %v736
      %v890 = vpop.f32.mrb[0].mxu0
      %v891 = vadd.f32 0.0, %v890
      %v892 = vpop.f32.mrb[0].mxu0
      %v893 = vpop.f32.mrb[0].mxu0
      %v894 = vadd.f32 0.0, %v893
      %v895 = vpop.f32.mrb[0].mxu0
      %896 = vmatprep.mubr.bf16.mxu0 0
      %897 = vmatmul.mubr.bf16.gmra.mrb[0].mxu0 %v739
      %v898 = vpop.f32.mrb[0].mxu0
      %v899 = vadd.f32 0.0, %v898
      %v900 = vpop.f32.mrb[0].mxu0
      %v901 = vpop.f32.mrb[0].mxu0
      %v902 = vadd.f32 0.0, %v901
      %v903 = vpop.f32.mrb[0].mxu0
      %904 = vdwg.mxu0
      %v905 = vadd.f32 %v506, %v779
      %v906 = vadd.f32 %v509, %v782
      %v907 = vadd.f32 %v514, %v787
      %v908 = vadd.f32 %v517, %v790
      %v909 = vadd.f32 %v522, %v795
      %v910 = vadd.f32 %v525, %v798
      %v911 = vadd.f32 %v530, %v803
      %v912 = vadd.f32 %v533, %v806
      %v913 = vadd.f32 %v538, %v811
      %v914 = vadd.f32 %v541, %v814
      %v915 = vadd.f32 %v546, %v819
      %v916 = vadd.f32 %v549, %v822
      %v917 = vadd.f32 %v554, %v827
      %v918 = vadd.f32 %v557, %v830
      %v919 = vadd.f32 %v562, %v835
      %v920 = vadd.f32 %v565, %v838
      %v921 = vadd.f32 %v570, %v843
      %v922 = vadd.f32 %v573, %v846
      %v923 = vadd.f32 %v578, %v851
      %v924 = vadd.f32 %v581, %v854
      %v925 = vadd.f32 %v586, %v859
      %v926 = vadd.f32 %v589, %v862
      %v927 = vadd.f32 %v594, %v867
      %v928 = vadd.f32 %v597, %v870
      %v929 = vadd.f32 %v602, %v875
      %v930 = vadd.f32 %v605, %v878
      %v931 = vadd.f32 %v610, %v883
      %v932 = vadd.f32 %v613, %v886
      %v933 = vadd.f32 %v618, %v891
      %v934 = vadd.f32 %v621, %v894
      %v935 = vadd.f32 %v626, %v899
      %v936 = vadd.f32 %v629, %v902
      %v937 = vld [vmem:[%s2] sm:$0x1]
      %v939 = vlaneseq
      %v940 = vshrl.u32 %v939, 7
      %v941 = vsub.s32 0, %v940
      %v942 = vrot.slane %v937, %v941
      %v944 = vadd.f32 %v905, %v942
      %v945 = vadd.f32 %v906, %v942
      %v946 = vadd.f32 %v907, %v942
      %v947 = vadd.f32 %v908, %v942
      %v948 = vadd.f32 %v909, %v942
      %v949 = vadd.f32 %v910, %v942
      %v950 = vadd.f32 %v911, %v942
      %v951 = vadd.f32 %v912, %v942
      %v952 = vadd.f32 %v913, %v942
      %v953 = vadd.f32 %v914, %v942
      %v954 = vadd.f32 %v915, %v942
      %v955 = vadd.f32 %v916, %v942
      %v956 = vadd.f32 %v917, %v942
      %v957 = vadd.f32 %v918, %v942
      %v958 = vadd.f32 %v919, %v942
      %v959 = vadd.f32 %v920, %v942
      %v960 = vadd.f32 %v921, %v942
      %v961 = vadd.f32 %v922, %v942
      %v962 = vadd.f32 %v923, %v942
      %v963 = vadd.f32 %v924, %v942
      %v964 = vadd.f32 %v925, %v942
      %v965 = vadd.f32 %v926, %v942
      %v966 = vadd.f32 %v927, %v942
      %v967 = vadd.f32 %v928, %v942
      %v968 = vadd.f32 %v929, %v942
      %v969 = vadd.f32 %v930, %v942
      %v970 = vadd.f32 %v931, %v942
      %v971 = vadd.f32 %v932, %v942
      %v972 = vadd.f32 %v933, %v942
      %v973 = vadd.f32 %v934, %v942
      %v974 = vadd.f32 %v935, %v942
      %v975 = vadd.f32 %v936, %v942
      %v976 = vmax.f32 %v944, 0.0
      %v977 = vmax.f32 %v945, 0.0
      %v978 = vmax.f32 %v946, 0.0
      %v979 = vmax.f32 %v947, 0.0
      %v980 = vmax.f32 %v948, 0.0
      %v981 = vmax.f32 %v949, 0.0
      %v982 = vmax.f32 %v950, 0.0
      %v983 = vmax.f32 %v951, 0.0
      %v984 = vmax.f32 %v952, 0.0
      %v985 = vmax.f32 %v953, 0.0
      %v986 = vmax.f32 %v954, 0.0
      %v987 = vmax.f32 %v955, 0.0
      %v988 = vmax.f32 %v956, 0.0
      %v989 = vmax.f32 %v957, 0.0
      %v990 = vmax.f32 %v958, 0.0
      %v991 = vmax.f32 %v959, 0.0
      %v992 = vmax.f32 %v960, 0.0
      %v993 = vmax.f32 %v961, 0.0
      %v994 = vmax.f32 %v962, 0.0
      %v995 = vmax.f32 %v963, 0.0
      %v996 = vmax.f32 %v964, 0.0
      %v997 = vmax.f32 %v965, 0.0
      %v998 = vmax.f32 %v966, 0.0
      %v999 = vmax.f32 %v967, 0.0
      %v1000 = vmax.f32 %v968, 0.0
      %v1001 = vmax.f32 %v969, 0.0
      %v1002 = vmax.f32 %v970, 0.0
      %v1003 = vmax.f32 %v971, 0.0
      %v1004 = vmax.f32 %v972, 0.0
      %v1005 = vmax.f32 %v973, 0.0
      %v1006 = vmax.f32 %v974, 0.0
      %v1007 = vmax.f32 %v975, 0.0
      %vm1008 = vcmask 64512
      %1009 = vst.msk [vmem:[%s172] sm:$0xff] %vm1008, %v976
      %1010 = vst.msk [vmem:[%s172 + $0x8] sm:$0xff] %vm1008, %v977
      %1011 = vst.msk [vmem:[%s172 + $0x10] sm:$0xff] %vm1008, %v978
      %1012 = vst.msk [vmem:[%s172 + $0x18] sm:$0xff] %vm1008, %v979
      %1013 = vst.msk [vmem:[%s172 + $0x20] sm:$0xff] %vm1008, %v980
      %1014 = vst.msk [vmem:[%s172 + $0x28] sm:$0xff] %vm1008, %v981
      %1015 = vst.msk [vmem:[%s172 + $0x30] sm:$0xff] %vm1008, %v982
      %1016 = vst.msk [vmem:[%s172 + $0x38] sm:$0xff] %vm1008, %v983
      %1017 = vst.msk [vmem:[%s172 + $0x40] sm:$0xff] %vm1008, %v984
      %1018 = vst.msk [vmem:[%s172 + $0x48] sm:$0xff] %vm1008, %v985
      %1019 = vst.msk [vmem:[%s172 + $0x50] sm:$0xff] %vm1008, %v986
      %1020 = vst.msk [vmem:[%s172 + $0x58] sm:$0xff] %vm1008, %v987
      %1021 = vst.msk [vmem:[%s172 + $0x60] sm:$0xff] %vm1008, %v988
      %1022 = vst.msk [vmem:[%s172 + $0x68] sm:$0xff] %vm1008, %v989
      %1023 = vst.msk [vmem:[%s172 + $0x70] sm:$0xff] %vm1008, %v990
      %1024 = vst.msk [vmem:[%s172 + $0x78] sm:$0xff] %vm1008, %v991
      %1025 = vst.msk [vmem:[%s172 + $0x80] sm:$0xff] %vm1008, %v992
      %1026 = vst.msk [vmem:[%s172 + $0x88] sm:$0xff] %vm1008, %v993
      %1027 = vst.msk [vmem:[%s172 + $0x90] sm:$0xff] %vm1008, %v994
      %1028 = vst.msk [vmem:[%s172 + $0x98] sm:$0xff] %vm1008, %v995
      %1029 = vst.msk [vmem:[%s172 + $0xa0] sm:$0xff] %vm1008, %v996
      %1030 = vst.msk [vmem:[%s172 + $0xa8] sm:$0xff] %vm1008, %v997
      %1031 = vst.msk [vmem:[%s172 + $0xb0] sm:$0xff] %vm1008, %v998
      %1032 = vst.msk [vmem:[%s172 + $0xb8] sm:$0xff] %vm1008, %v999
      %1033 = vst.msk [vmem:[%s172 + $0xc0] sm:$0xff] %vm1008, %v1000
      %1034 = vst.msk [vmem:[%s172 + $0xc8] sm:$0xff] %vm1008, %v1001
      %1035 = vst.msk [vmem:[%s172 + $0xd0] sm:$0xff] %vm1008, %v1002
      %1036 = vst.msk [vmem:[%s172 + $0xd8] sm:$0xff] %vm1008, %v1003
      %1037 = vst.msk [vmem:[%s172 + $0xe0] sm:$0xff] %vm1008, %v1004
      %1038 = vst.msk [vmem:[%s172 + $0xe8] sm:$0xff] %vm1008, %v1005
      %1039 = vst.msk [vmem:[%s172 + $0xf0] sm:$0xff] %vm1008, %v1006
      %1040 = vst.msk [vmem:[%s172 + $0xf8] sm:$0xff] %vm1008, %v1007
      %s1041 = smul.u32 32, %s14
      %p1042 = scmp.lt.s32.totalorder %s1041, 63
      %s1043 = scalar_select %p1042, %s1041, 63
      %s1044 = smul.addr %s1043, 8
      %s1045 = scalar_lea.vmem %s3, %s1044
      // Predicated region
      $region33: #{unet_ag_forward.15} parent=31 // pred_check
        %p1046 = pneg %p100
      $region34: #{unet_ag_forward.15} parent=31 // pred_check_branch
        %1048 = sbr.rel (%p1046) target = $region36
      $region35: #{unet_ag_forward.15} parent=31 // pred_region
        %s1049 = smul.u32 32, %s14
      $region36: #{unet_ag_forward.15} parent=31 // pred_fallthru
        _
    $region32: #{unet_ag_forward.15} parent=5 // pred_fallthru
      _
    %p1050 = scmp.le.s32.totalorder 2, %s9
    // Predicated region
    $region37: #{unet_ag_forward.15} parent=5 // pred_check
      %p1051 = pneg %p1050
    $region38: #{unet_ag_forward.15} parent=5 // pred_check_branch
      %1053 = sbr.rel (%p1051) target = $region40
    $region39: #{unet_ag_forward.15} parent=5 // pred_region
      %s1054 = ssub.s32 %s9, 2
      // Predicated region
      $region41: #{unet_ag_forward.15} parent=39 // pred_check
        %p1055 = pneg %p106
      $region42: #{unet_ag_forward.15} parent=39 // pred_check_branch
        %1057 = sbr.rel (%p1055) target = $region44
      $region43: #{unet_ag_forward.15} parent=39 // pred_region
        %s1058 = smul.u32 32, %s15
        %p1059 = scmp.lt.s32.totalorder %s1058, 63
        %s1060 = scalar_select %p1059, %s1058, 63
        %s1061 = smul.addr %s1060, 8
        %s1062 = scalar_lea.vmem %s3, %s1061
      $region44: #{unet_ag_forward.15} parent=39 // pred_fallthru
        _
    $region40: #{unet_ag_forward.15} parent=5 // pred_fallthru
      _
  $region6: #{unet_ag_forward.15} parent=0 // loop_footer
    %s13 = sadd.s32 1, %s9
  $region7: #{unet_ag_forward.15} parent=0 // loop_footer_branch
    %8 = sbr.rel target = $region3
  $region8: #{unet_ag_forward.15} parent=0 // loop_exit
    _

// kernel: unet_ag_forward.14
$region0: #{unet_ag_forward.14}
  #allocation0 [shape = 'u32[]', space=smem, size = 0x4, offset = 0x4, fixed_abs, tag = 'smem constant byte address 0x4 - core index']
  #allocation1 [shape = 'u32[144,128]{1,0:T(1,128)}', space=vmem, size = 0x12000, scoped, tag = 'internal scratch']
  %s0 = inlined_call_operand.vmem [shape: f32[576,9], index: 0, kind: input, shape index: {}]
  %s1 = inlined_call_operand.vmem [shape: bf16[3,9,8], index: 1, kind: input, shape index: {}]
  %s2 = inlined_call_operand.vmem [shape: f32[1,8], index: 2, kind: input, shape index: {}]
  %s3 = inlined_call_operand.vmem [shape: f32[512,8], index: 3, kind: output, shape index: {}]
  %s4 = sld [smem:[#allocation0]]
  $region45: #{unet_ag_forward.14} parent=0
    _
  %s6 = ssub.s32 1, %s4
  %s7 = scalar_select 0, %s6, %s4
  loop: start=0, step=1, limit=4
  $region2: #{unet_ag_forward.14} parent=0 // loop_pre_header
    _
  $region3: #{unet_ag_forward.14} parent=0 // loop_header
    %s9 = sphi 0, %s13
    %p10 = scmp.ge.s32.totalorder %s9, 4
    %s19 = sphi 0, %s21
    %s22 = sphi 0, %s19
    %s23 = sphi 0, %s22
    %s39 = sphi 0, %s23
    %s43 = sphi 0, %s43
    %s45 = sphi 0, %s43
    %s46 = sphi 0, %s45
    %s60 = sphi 0, %s46
    %s64 = sphi 0, %s64
    %s66 = sphi 0, %s64
    %s67 = sphi 0, %s66
    %s81 = sphi 0, %s67
    %s87 = sphi 0, %s89
    %s90 = sphi 0, %s87
    %s91 = sphi 0, %s90
    %s107 = sphi 0, %s91
  $region4: #{unet_ag_forward.14} parent=0 // loop_header_branch
    %12 = sbr.rel (%p10) target = $region8
  $region5: #{unet_ag_forward.14} parent=0 // loop_body
    %s14 = ssub.s32 %s9, 1
    %s15 = ssub.s32 %s9, 2
    %s16 = sadd.s32 %s9, 1
    %s17 = ssub.s32 %s9, %s16
    %p18 = scmp.eq.s32.totalorder %s17, 0
    %s20 = sadd.s32 %s19, 1
    %s21 = scalar_select %p18, %s19, %s20
    %p24 = pneg %p18
    %p25 = scmp.eq.s32.totalorder %s9, 1
    %p26 = por %p24, %p25
    %p27 = scmp.ne.s32.totalorder %s19, %s22
    %p28 = scmp.eq.s32.totalorder %s9, 0
    %p29 = por %p27, %p28
    %p30 = scmp.ne.s32.totalorder %s19, %s22
    %p31 = scmp.eq.s32.totalorder %s14, 1
    %p32 = por %p30, %p31
    %p33 = scmp.ne.s32.totalorder %s22, %s23
    %p34 = scmp.eq.s32.totalorder %s14, 0
    %p35 = por %p33, %p34
    %p36 = scmp.ne.s32.totalorder %s22, %s23
    %p37 = scmp.eq.s32.totalorder %s15, 1
    %p38 = por %p36, %p37
    %p40 = scmp.ne.s32.totalorder %s23, %s39
    %p41 = scmp.eq.s32.totalorder %s15, 0
    %p42 = por %p40, %p41
    %s44 = sadd.s32 %s43, 1
    %p47 = scmp.eq.s32.totalorder %s9, 1
    %p48 = scmp.ne.s32.totalorder %s43, %s45
    %p49 = scmp.eq.s32.totalorder %s9, 0
    %p50 = por %p48, %p49
    %p51 = scmp.ne.s32.totalorder %s43, %s45
    %p52 = scmp.eq.s32.totalorder %s14, 1
    %p53 = por %p51, %p52
    %p54 = scmp.ne.s32.totalorder %s45, %s46
    %p55 = scmp.eq.s32.totalorder %s14, 0
    %p56 = por %p54, %p55
    %p57 = scmp.ne.s32.totalorder %s45, %s46
    %p58 = scmp.eq.s32.totalorder %s15, 1
    %p59 = por %p57, %p58
    %p61 = scmp.ne.s32.totalorder %s46, %s60
    %p62 = scmp.eq.s32.totalorder %s15, 0
    %p63 = por %p61, %p62
    %s65 = sadd.s32 %s64, 1
    %p68 = scmp.eq.s32.totalorder %s9, 1
    %p69 = scmp.ne.s32.totalorder %s64, %s66
    %p70 = scmp.eq.s32.totalorder %s9, 0
    %p71 = por %p69, %p70
    %p72 = scmp.ne.s32.totalorder %s64, %s66
    %p73 = scmp.eq.s32.totalorder %s14, 1
    %p74 = por %p72, %p73
    %p75 = scmp.ne.s32.totalorder %s66, %s67
    %p76 = scmp.eq.s32.totalorder %s14, 0
    %p77 = por %p75, %p76
    %p78 = scmp.ne.s32.totalorder %s66, %s67
    %p79 = scmp.eq.s32.totalorder %s15, 1
    %p80 = por %p78, %p79
    %p82 = scmp.ne.s32.totalorder %s67, %s81
    %p83 = scmp.eq.s32.totalorder %s15, 0
    %p84 = por %p82, %p83
    %s85 = ssub.s32 %s9, %s16
    %p86 = scmp.eq.s32.totalorder %s85, 0
    %s88 = sadd.s32 %s87, 1
    %s89 = scalar_select %p86, %s87, %s88
    %p92 = pneg %p86
    %p93 = scmp.eq.s32.totalorder %s9, 1
    %p94 = por %p92, %p93
    %p95 = scmp.ne.s32.totalorder %s87, %s90
    %p96 = scmp.eq.s32.totalorder %s9, 0
    %p97 = por %p95, %p96
    %p98 = scmp.ne.s32.totalorder %s87, %s90
    %p99 = scmp.eq.s32.totalorder %s14, 1
    %p100 = por %p98, %p99
    %p101 = scmp.ne.s32.totalorder %s90, %s91
    %p102 = scmp.eq.s32.totalorder %s14, 0
    %p103 = por %p101, %p102
    %p104 = scmp.ne.s32.totalorder %s90, %s91
    %p105 = scmp.eq.s32.totalorder %s15, 1
    %p106 = por %p104, %p105
    %p108 = scmp.ne.s32.totalorder %s91, %s107
    %p109 = scmp.eq.s32.totalorder %s15, 0
    %p110 = por %p108, %p109
    %p111 = scmp.le.s32.totalorder 1, %s9
    %p112 = scmp.lt.s32.totalorder %s9, 3
    %p113 = pnand %p111, %p112
    %p114 = pneg %p113
    // Predicated region
    $region9: #{unet_ag_forward.14} parent=5 // pred_check
      _
    $region10: #{unet_ag_forward.14} parent=5 // pred_check_branch
      %116 = sbr.rel (%p113) target = $region12
    $region11: #{unet_ag_forward.14} parent=5 // pred_region
      %s117 = ssub.s32 %s9, 1
      // Predicated region
      $region13: #{unet_ag_forward.14} parent=11 // pred_check
        %p118 = pneg %p56
      $region14: #{unet_ag_forward.14} parent=11 // pred_check_branch
        %120 = sbr.rel (%p118) target = $region16
      $region15: #{unet_ag_forward.14} parent=11 // pred_region
        _
      $region16: #{unet_ag_forward.14} parent=11 // pred_fallthru
        _
      // Predicated region
      $region17: #{unet_ag_forward.14} parent=11 // pred_check
        %p121 = pneg %p77
      $region18: #{unet_ag_forward.14} parent=11 // pred_check_branch
        %123 = sbr.rel (%p121) target = $region20
      $region19: #{unet_ag_forward.14} parent=11 // pred_region
        _
      $region20: #{unet_ag_forward.14} parent=11 // pred_fallthru
        _
    $region12: #{unet_ag_forward.14} parent=5 // pred_fallthru
      _
    %p124 = scmp.lt.s32.totalorder %s9, 2
    // Predicated region
    $region21: #{unet_ag_forward.14} parent=5 // pred_check
      %p125 = pneg %p124
    $region22: #{unet_ag_forward.14} parent=5 // pred_check_branch
      %127 = sbr.rel (%p125) target = $region24
    $region23: #{unet_ag_forward.14} parent=5 // pred_region
      // Predicated region
      $region25: #{unet_ag_forward.14} parent=23 // pred_check
        %p128 = pneg %p29
      $region26: #{unet_ag_forward.14} parent=23 // pred_check_branch
        %130 = sbr.rel (%p128) target = $region28
      $region27: #{unet_ag_forward.14} parent=23 // pred_region
        %s131 = smul.u32 36, %s9
        %p132 = scmp.lt.s32.totalorder %s131, 71
        %s133 = scalar_select %p132, %s131, 71
        %s134 = smul.addr %s133, 8
        %s135 = scalar_lea.vmem %s0, %s134
        %s136 = smul.u32 36, %s9
      $region28: #{unet_ag_forward.14} parent=23 // pred_fallthru
        _
    $region24: #{unet_ag_forward.14} parent=5 // pred_fallthru
      _
    %p137 = scmp.le.s32.totalorder 1, %s9
    %p138 = scmp.lt.s32.totalorder %s9, 3
    %p139 = pnand %p137, %p138
    %p140 = pneg %p139
    // Predicated region
    $region29: #{unet_ag_forward.14} parent=5 // pred_check
      _
    $region30: #{unet_ag_forward.14} parent=5 // pred_check_branch
      %142 = sbr.rel (%p139) target = $region32
    $region31: #{unet_ag_forward.14} parent=5 // pred_region
      %s143 = ssub.s32 %s9, 1
      %s144 = smul.u32 36, %s14
      %p145 = scmp.lt.s32.totalorder %s144, 71
      %s146 = scalar_select %p145, %s144, 71
      %s147 = smul.addr %s146, 8
      %s148 = scalar_lea.vmem %s0, %s147
      %p149 = pneg %p35
      %p150 = pneg %p32
      %p151 = pneg %p56
      %p152 = pneg %p53
      %p153 = pneg %p77
      %p154 = pneg %p74
      %p155 = pneg %p103
      %p156 = pneg %p100
      %s157 = smul.u32 32, %s14
      %p158 = scmp.lt.s32.totalorder %s157, 63
      %s159 = scalar_select %p158, %s157, 63
      %s160 = smul.addr %s159, 8
      %s161 = scalar_lea.vmem %s3, %s160
      %s162 = smul.u32 36, %s14
      %p163 = scmp.lt.s32.totalorder %s162, 71
      %s164 = scalar_select %p163, %s162, 71
      %s165 = smul.addr %s164, 8
      %s166 = scalar_lea.vmem %s0, %s165
      %s167 = smul.u32 36, %s14
      %s168 = smul.u32 32, %s14
      %p169 = scmp.lt.s32.totalorder %s168, 63
      %s170 = scalar_select %p169, %s168, 63
      %s171 = smul.addr %s170, 8
      %s172 = scalar_lea.vmem %s3, %s171
      %s173 = smul.u32 32, %s14
      %v175 = vld [vmem:[%s166] sm:$0xff]
      %v176 = vld [vmem:[%s166 + $0x8] sm:$0xff]
      %v177 = vld [vmem:[%s166 + $0x10] sm:$0xff]
      %v178 = vld [vmem:[%s166 + $0x18] sm:$0xff]
      %v179 = vld [vmem:[%s166 + $0x20] sm:$0xff]
      %v180 = vld [vmem:[%s166 + $0x28] sm:$0xff]
      %v181 = vld [vmem:[%s166 + $0x30] sm:$0xff]
      %v182 = vld [vmem:[%s166 + $0x38] sm:$0xff]
      %v183 = vld [vmem:[%s166 + $0x40] sm:$0xff]
      %v184 = vld [vmem:[%s166 + $0x48] sm:$0xff]
      %v185 = vld [vmem:[%s166 + $0x50] sm:$0xff]
      %v186 = vld [vmem:[%s166 + $0x58] sm:$0xff]
      %v187 = vld [vmem:[%s166 + $0x60] sm:$0xff]
      %v188 = vld [vmem:[%s166 + $0x68] sm:$0xff]
      %v189 = vld [vmem:[%s166 + $0x70] sm:$0xff]
      %v190 = vld [vmem:[%s166 + $0x78] sm:$0xff]
      %v191 = vld [vmem:[%s166 + $0x80] sm:$0xff]
      %v192 = vld [vmem:[%s166 + $0x88] sm:$0xff]
      %v193 = vld [vmem:[%s166 + $0x90] sm:$0xff]
      %v194 = vld [vmem:[%s166 + $0x98] sm:$0xff]
      %v195 = vld [vmem:[%s166 + $0xa0] sm:$0xff]
      %v196 = vld [vmem:[%s166 + $0xa8] sm:$0xff]
      %v197 = vld [vmem:[%s166 + $0xb0] sm:$0xff]
      %v198 = vld [vmem:[%s166 + $0xb8] sm:$0xff]
      %v199 = vld [vmem:[%s166 + $0xc0] sm:$0xff]
      %v200 = vld [vmem:[%s166 + $0xc8] sm:$0xff]
      %v201 = vld [vmem:[%s166 + $0xd0] sm:$0xff]
      %v202 = vld [vmem:[%s166 + $0xd8] sm:$0xff]
      %v203 = vld [vmem:[%s166 + $0xe0] sm:$0xff]
      %v204 = vld [vmem:[%s166 + $0xe8] sm:$0xff]
      %v205 = vld [vmem:[%s166 + $0xf0] sm:$0xff]
      %v206 = vld [vmem:[%s166 + $0xf8] sm:$0xff]
      %v207 = vpack.c.bf16 %v176, %v175
      %v208 = vpack.c.bf16 %v178, %v177
      %v209 = vpack.c.bf16 %v180, %v179
      %v210 = vpack.c.bf16 %v182, %v181
      %v211 = vpack.c.bf16 %v184, %v183
      %v212 = vpack.c.bf16 %v186, %v185
      %v213 = vpack.c.bf16 %v188, %v187
      %v214 = vpack.c.bf16 %v190, %v189
      %v215 = vpack.c.bf16 %v192, %v191
      %v216 = vpack.c.bf16 %v194, %v193
      %v217 = vpack.c.bf16 %v196, %v195
      %v218 = vpack.c.bf16 %v198, %v197
      %v219 = vpack.c.bf16 %v200, %v199
      %v220 = vpack.c.bf16 %v202, %v201
      %v221 = vpack.c.bf16 %v204, %v203
      %v222 = vpack.c.bf16 %v206, %v205
      %v223 = vld [vmem:[%s1] sm:$0xf]
      %v224 = vld [vmem:[%s1 + $0x4] sm:$0x1]
      %v225 = vld [vmem:[%s166 + $0x100] sm:$0xff]
      %v226 = vld [vmem:[%s166 + $0x108] sm:$0xff]
      %v227 = vpack.c.bf16 %v226, %v225
      %s228 = scalar_lea.vmem %s1, 8
      %v229 = vld [vmem:[%s228] sm:$0xf]
      %v230 = vld [vmem:[%s228 + $0x4] sm:$0x1]
      %v233 = vunpack.c.l.b16 %v229
      %v234 = vunpack.c.l.b16 %v230
      %v235 = vpack.c.b16 %v234, %v233
      %vm236 = vcmask 72704
      %v238 = vsel %vm236, %v208, 0
      %v241 = vsel %vm236, %v209, 0
      %v244 = vsel %vm236, %v210, 0
      %v247 = vsel %vm236, %v211, 0
      %v250 = vsel %vm236, %v212, 0
      %v253 = vsel %vm236, %v213, 0
      %v256 = vsel %vm236, %v214, 0
      %v259 = vsel %vm236, %v215, 0
      %v262 = vsel %vm236, %v216, 0
      %v265 = vsel %vm236, %v217, 0
      %v268 = vsel %vm236, %v218, 0
      %v271 = vsel %vm236, %v219, 0
      %v274 = vsel %vm236, %v220, 0
      %v277 = vsel %vm236, %v221, 0
      %v280 = vsel %vm236, %v222, 0
      %v283 = vsel %vm236, %v227, 0
      %vm285 = vcmask 1043456
      %vm286 = vcmask 1044480
      %v287 = vsel %vm285, 4294967295, 65535
      %v288 = vsel %vm286, %v287, 0
      %v290 = vand.u32 %v235, %v288
      %292 = vmatprep.subr.bf16.mxu0 0
      %293 = vmatpush1.bf16.msra.mxu0 %v290
      %294 = vmatprep.subr.bf16.mxu0 0
      %295 = vmatpush1.bf16.msra.mxu0 0
      %296 = vmatprep.subr.bf16.mxu0 0
      %297 = vmatpush1.bf16.msra.mxu0 0
      %298 = vmatprep.subr.bf16.mxu0 0
      %299 = vmatpush1.bf16.msra.mxu0 0
      %300 = vmatprep.subr.bf16.mxu0 0
      %301 = vmatpush1.bf16.msra.mxu0 0
      %302 = vmatprep.subr.bf16.mxu0 0
      %303 = vmatpush1.bf16.msra.mxu0 0
      %304 = vmatprep.subr.bf16.mxu0 0
      %305 = vmatpush1.bf16.msra.mxu0 0
      %306 = vmatprep.subr.bf16.mxu0 0
      %307 = vmatpush1.bf16.msra.mxu0 0
      %308 = vmatprep.subr.bf16.mxu0 0
      %309 = vmatpush1.bf16.msra.mxu0 0
      %310 = vmatprep.subr.bf16.mxu0 0
      %311 = vmatpush1.bf16.msra.mxu0 0
      %312 = vmatprep.subr.bf16.mxu0 0
      %313 = vmatpush1.bf16.msra.mxu0 0
      %314 = vmatprep.subr.bf16.mxu0 0
      %315 = vmatpush1.bf16.msra.mxu0 0
      %316 = vmatprep.subr.bf16.mxu0 0
      %317 = vmatpush1.bf16.msra.mxu0 0
      %318 = vmatprep.subr.bf16.mxu0 0
      %319 = vmatpush1.bf16.msra.mxu0 0
      %320 = vmatprep.subr.bf16.mxu0 0
      %321 = vmatpush1.bf16.msra.mxu0 0
      %322 = vmatprep.subr.bf16.mxu0 0
      %323 = vmatpush1.bf16.msra.mxu0 0
      %324 = vmatprep.mubr.bf16.mxu0 0
      %325 = vmatmul.mubr.bf16.gmra.mrb[0].mxu0 %v238
      %v326 = vpop.f32.mrb[0].mxu0
      %v327 = vadd.f32 0.0, %v326
      %v328 = vpop.f32.mrb[0].mxu0
      %v329 = vpop.f32.mrb[0].mxu0
      %v330 = vadd.f32 0.0, %v329
      %v331 = vpop.f32.mrb[0].mxu0
      %332 = vmatprep.mubr.bf16.mxu0 0
      %333 = vmatmul.mubr.bf16.gmra.mrb[0].mxu0 %v241
      %v334 = vpop.f32.mrb[0].mxu0
      %v335 = vadd.f32 0.0, %v334
      %v336 = vpop.f32.mrb[0].mxu0
      %v337 = vpop.f32.mrb[0].mxu0
      %v338 = vadd.f32 0.0, %v337
      %v339 = vpop.f32.mrb[0].mxu0
      %340 = vmatprep.mubr.bf16.mxu0 0
      %341 = vmatmul.mubr.bf16.gmra.mrb[0].mxu0 %v244
      %v342 = vpop.f32.mrb[0].mxu0
      %v343 = vadd.f32 0.0, %v342
      %v344 = vpop.f32.mrb[0].mxu0
      %v345 = vpop.f32.mrb[0].mxu0
      %v346 = vadd.f32 0.0, %v345
      %v347 = vpop.f32.mrb[0].mxu0
      %348 = vmatprep.mubr.bf16.mxu0 0
      %349 = vmatmul.mubr.bf16.gmra.mrb[0].mxu0 %v247
      %v350 = vpop.f32.mrb[0].mxu0
      %v351 = vadd.f32 0.0, %v350
      %v352 = vpop.f32.mrb[0].mxu0
      %v353 = vpop.f32.mrb[0].mxu0
      %v354 = vadd.f32 0.0, %v353
      %v355 = vpop.f32.mrb[0].mxu0
      %356 = vmatprep.mubr.bf16.mxu0 0
      %357 = vmatmul.mubr.bf16.gmra.mrb[0].mxu0 %v250
      %v358 = vpop.f32.mrb[0].mxu0
      %v359 = vadd.f32 0.0, %v358
      %v360 = vpop.f32.mrb[0].mxu0
      %v361 = vpop.f32.mrb[0].mxu0
      %v362 = vadd.f32 0.0, %v361
      %v363 = vpop.f32.mrb[0].mxu0
      %364 = vmatprep.mubr.bf16.mxu0 0
      %365 = vmatmul.mubr.bf16.gmra.mrb[0].mxu0 %v253
      %v366 = vpop.f32.mrb[0].mxu0
      %v367 = vadd.f32 0.0, %v366
      %v368 = vpop.f32.mrb[0].mxu0
      %v369 = vpop.f32.mrb[0].mxu0
      %v370 = vadd.f32 0.0, %v369
      %v371 = vpop.f32.mrb[0].mxu0
      %372 = vmatprep.mubr.bf16.mxu0 0
      %373 = vmatmul.mubr.bf16.gmra.mrb[0].mxu0 %v256
      %v374 = vpop.f32.mrb[0].mxu0
      %v375 = vadd.f32 0.0, %v374
      %v376 = vpop.f32.mrb[0].mxu0
      %v377 = vpop.f32.mrb[0].mxu0
      %v378 = vadd.f32 0.0, %v377
      %v379 = vpop.f32.mrb[0].mxu0
      %380 = vmatprep.mubr.bf16.mxu0 0
      %381 = vmatmul.mubr.bf16.gmra.mrb[0].mxu0 %v259
      %v382 = vpop.f32.mrb[0].mxu0
      %v383 = vadd.f32 0.0, %v382
      %v384 = vpop.f32.mrb[0].mxu0
      %v385 = vpop.f32.mrb[0].mxu0
      %v386 = vadd.f32 0.0, %v385
      %v387 = vpop.f32.mrb[0].mxu0
      %388 = vmatprep.mubr.bf16.mxu0 0
      %389 = vmatmul.mubr.bf16.gmra.mrb[0].mxu0 %v262
      %v390 = vpop.f32.mrb[0].mxu0
      %v391 = vadd.f32 0.0, %v390
      %v392 = vpop.f32.mrb[0].mxu0
      %v393 = vpop.f32.mrb[0].mxu0
      %v394 = vadd.f32 0.0, %v393
      %v395 = vpop.f32.mrb[0].mxu0
      %396 = vmatprep.mubr.bf16.mxu0 0
      %397 = vmatmul.mubr.bf16.gmra.mrb[0].mxu0 %v265
      %v398 = vpop.f32.mrb[0].mxu0
      %v399 = vadd.f32 0.0, %v398
      %v400 = vpop.f32.mrb[0].mxu0
      %v401 = vpop.f32.mrb[0].mxu0
      %v402 = vadd.f32 0.0, %v401
      %v403 = vpop.f32.mrb[0].mxu0
      %404 = vmatprep.mubr.bf16.mxu0 0
      %405 = vmatmul.mubr.bf16.gmra.mrb[0].mxu0 %v268
      %v406 = vpop.f32.mrb[0].mxu0
      %v407 = vadd.f32 0.0, %v406
      %v408 = vpop.f32.mrb[0].mxu0
      %v409 = vpop.f32.mrb[0].mxu0
      %v410 = vadd.f32 0.0, %v409
      %v411 = vpop.f32.mrb[0].mxu0
      %412 = vmatprep.mubr.bf16.mxu0 0
      %413 = vmatmul.mubr.bf16.gmra.mrb[0].mxu0 %v271
      %v414 = vpop.f32.mrb[0].mxu0
      %v415 = vadd.f32 0.0, %v414
      %v416 = vpop.f32.mrb[0].mxu0
      %v417 = vpop.f32.mrb[0].mxu0
      %v418 = vadd.f32 0.0, %v417
      %v419 = vpop.f32.mrb[0].mxu0
      %420 = vmatprep.mubr.bf16.mxu0 0
      %421 = vmatmul.mubr.bf16.gmra.mrb[0].mxu0 %v274
      %v422 = vpop.f32.mrb[0].mxu0
      %v423 = vadd.f32 0.0, %v422
      %v424 = vpop.f32.mrb[0].mxu0
      %v425 = vpop.f32.mrb[0].mxu0
      %v426 = vadd.f32 0.0, %v425
      %v427 = vpop.f32.mrb[0].mxu0
      %428 = vmatprep.mubr.bf16.mxu0 0
      %429 = vmatmul.mubr.bf16.gmra.mrb[0].mxu0 %v277
      %v430 = vpop.f32.mrb[0].mxu0
      %v431 = vadd.f32 0.0, %v430
      %v432 = vpop.f32.mrb[0].mxu0
      %v433 = vpop.f32.mrb[0].mxu0
      %v434 = vadd.f32 0.0, %v433
      %v435 = vpop.f32.mrb[0].mxu0
      %436 = vmatprep.mubr.bf16.mxu0 0
      %437 = vmatmul.mubr.bf16.gmra.mrb[0].mxu0 %v280
      %v438 = vpop.f32.mrb[0].mxu0
      %v439 = vadd.f32 0.0, %v438
      %v440 = vpop.f32.mrb[0].mxu0
      %v441 = vpop.f32.mrb[0].mxu0
      %v442 = vadd.f32 0.0, %v441
      %v443 = vpop.f32.mrb[0].mxu0
      %444 = vmatprep.mubr.bf16.mxu0 0
      %445 = vmatmul.mubr.bf16.gmra.mrb[0].mxu0 %v283
      %v446 = vpop.f32.mrb[0].mxu0
      %v447 = vadd.f32 0.0, %v446
      %v448 = vpop.f32.mrb[0].mxu0
      %v449 = vpop.f32.mrb[0].mxu0
      %v450 = vadd.f32 0.0, %v449
      %v451 = vpop.f32.mrb[0].mxu0
      %452 = vdwg.mxu0
      %v455 = vunpack.c.l.b16 %v223
      %v456 = vunpack.c.l.b16 %v224
      %v457 = vpack.c.b16 %v456, %v455
      %v459 = vsel %vm236, %v207, 0
      %v462 = vand.u32 %v457, %v288
      %464 = vmatprep.subr.bf16.mxu0 0
      %465 = vmatpush1.bf16.msra.mxu0 %v462
      %466 = vmatprep.subr.bf16.mxu0 0
      %467 = vmatpush1.bf16.msra.mxu0 0
      %468 = vmatprep.subr.bf16.mxu0 0
      %469 = vmatpush1.bf16.msra.mxu0 0
      %470 = vmatprep.subr.bf16.mxu0 0
      %471 = vmatpush1.bf16.msra.mxu0 0
      %472 = vmatprep.subr.bf16.mxu0 0
      %473 = vmatpush1.bf16.msra.mxu0 0
      %474 = vmatprep.subr.bf16.mxu0 0
      %475 = vmatpush1.bf16.msra.mxu0 0
      %476 = vmatprep.subr.bf16.mxu0 0
      %477 = vmatpush1.bf16.msra.mxu0 0
      %478 = vmatprep.subr.bf16.mxu0 0
      %479 = vmatpush1.bf16.msra.mxu0 0
      %480 = vmatprep.subr.bf16.mxu0 0
      %481 = vmatpush1.bf16.msra.mxu0 0
      %482 = vmatprep.subr.bf16.mxu0 0
      %483 = vmatpush1.bf16.msra.mxu0 0
      %484 = vmatprep.subr.bf16.mxu0 0
      %485 = vmatpush1.bf16.msra.mxu0 0
      %486 = vmatprep.subr.bf16.mxu0 0
      %487 = vmatpush1.bf16.msra.mxu0 0
      %488 = vmatprep.subr.bf16.mxu0 0
      %489 = vmatpush1.bf16.msra.mxu0 0
      %490 = vmatprep.subr.bf16.mxu0 0
      %491 = vmatpush1.bf16.msra.mxu0 0
      %492 = vmatprep.subr.bf16.mxu0 0
      %493 = vmatpush1.bf16.msra.mxu0 0
      %494 = vmatprep.subr.bf16.mxu0 0
      %495 = vmatpush1.bf16.msra.mxu0 0
      %496 = vmatprep.mubr.bf16.mxu0 0
      %497 = vmatmul.mubr.bf16.gmra.mrb[0].mxu0 %v459
      %v498 = vpop.f32.mrb[0].mxu0
      %v499 = vadd.f32 %v327, %v498
      %v500 = vpop.f32.mrb[0].mxu0
      %v501 = vpop.f32.mrb[0].mxu0
      %v502 = vadd.f32 %v330, %v501
      %v503 = vpop.f32.mrb[0].mxu0
      %504 = vmatprep.mubr.bf16.mxu0 0
      %505 = vmatmul.mubr.bf16.gmra.mrb[0].mxu0 %v238
      %v506 = vpop.f32.mrb[0].mxu0
      %v507 = vadd.f32 %v335, %v506
      %v508 = vpop.f32.mrb[0].mxu0
      %v509 = vpop.f32.mrb[0].mxu0
      %v510 = vadd.f32 %v338, %v509
      %v511 = vpop.f32.mrb[0].mxu0
      %512 = vmatprep.mubr.bf16.mxu0 0
      %513 = vmatmul.mubr.bf16.gmra.mrb[0].mxu0 %v241
      %v514 = vpop.f32.mrb[0].mxu0
      %v515 = vadd.f32 %v343, %v514
      %v516 = vpop.f32.mrb[0].mxu0
      %v517 = vpop.f32.mrb[0].mxu0
      %v518 = vadd.f32 %v346, %v517
      %v519 = vpop.f32.mrb[0].mxu0
      %520 = vmatprep.mubr.bf16.mxu0 0
      %521 = vmatmul.mubr.bf16.gmra.mrb[0].mxu0 %v244
      %v522 = vpop.f32.mrb[0].mxu0
      %v523 = vadd.f32 %v351, %v522
      %v524 = vpop.f32.mrb[0].mxu0
      %v525 = vpop.f32.mrb[0].mxu0
      %v526 = vadd.f32 %v354, %v525
      %v527 = vpop.f32.mrb[0].mxu0
      %528 = vmatprep.mubr.bf16.mxu0 0
      %529 = vmatmul.mubr.bf16.gmra.mrb[0].mxu0 %v247
      %v530 = vpop.f32.mrb[0].mxu0
      %v531 = vadd.f32 %v359, %v530
      %v532 = vpop.f32.mrb[0].mxu0
      %v533 = vpop.f32.mrb[0].mxu0
      %v534 = vadd.f32 %v362, %v533
      %v535 = vpop.f32.mrb[0].mxu0
      %536 = vmatprep.mubr.bf16.mxu0 0
      %537 = vmatmul.mubr.bf16.gmra.mrb[0].mxu0 %v250
      %v538 = vpop.f32.mrb[0].mxu0
      %v539 = vadd.f32 %v367, %v538
      %v540 = vpop.f32.mrb[0].mxu0
      %v541 = vpop.f32.mrb[0].mxu0
      %v542 = vadd.f32 %v370, %v541
      %v543 = vpop.f32.mrb[0].mxu0
      %544 = vmatprep.mubr.bf16.mxu0 0
      %545 = vmatmul.mubr.bf16.gmra.mrb[0].mxu0 %v253
      %v546 = vpop.f32.mrb[0].mxu0
      %v547 = vadd.f32 %v375, %v546
      %v548 = vpop.f32.mrb[0].mxu0
      %v549 = vpop.f32.mrb[0].mxu0
      %v550 = vadd.f32 %v378, %v549
      %v551 = vpop.f32.mrb[0].mxu0
      %552 = vmatprep.mubr.bf16.mxu0 0
      %553 = vmatmul.mubr.bf16.gmra.mrb[0].mxu0 %v256
      %v554 = vpop.f32.mrb[0].mxu0
      %v555 = vadd.f32 %v383, %v554
      %v556 = vpop.f32.mrb[0].mxu0
      %v557 = vpop.f32.mrb[0].mxu0
      %v558 = vadd.f32 %v386, %v557
      %v559 = vpop.f32.mrb[0].mxu0
      %560 = vmatprep.mubr.bf16.mxu0 0
      %561 = vmatmul.mubr.bf16.gmra.mrb[0].mxu0 %v259
      %v562 = vpop.f32.mrb[0].mxu0
      %v563 = vadd.f32 %v391, %v562
      %v564 = vpop.f32.mrb[0].mxu0
      %v565 = vpop.f32.mrb[0].mxu0
      %v566 = vadd.f32 %v394, %v565
      %v567 = vpop.f32.mrb[0].mxu0
      %568 = vmatprep.mubr.bf16.mxu0 0
      %569 = vmatmul.mubr.bf16.gmra.mrb[0].mxu0 %v262
      %v570 = vpop.f32.mrb[0].mxu0
      %v571 = vadd.f32 %v399, %v570
      %v572 = vpop.f32.mrb[0].mxu0
      %v573 = vpop.f32.mrb[0].mxu0
      %v574 = vadd.f32 %v402, %v573
      %v575 = vpop.f32.mrb[0].mxu0
      %576 = vmatprep.mubr.bf16.mxu0 0
      %577 = vmatmul.mubr.bf16.gmra.mrb[0].mxu0 %v265
      %v578 = vpop.f32.mrb[0].mxu0
      %v579 = vadd.f32 %v407, %v578
      %v580 = vpop.f32.mrb[0].mxu0
      %v581 = vpop.f32.mrb[0].mxu0
      %v582 = vadd.f32 %v410, %v581
      %v583 = vpop.f32.mrb[0].mxu0
      %584 = vmatprep.mubr.bf16.mxu0 0
      %585 = vmatmul.mubr.bf16.gmra.mrb[0].mxu0 %v268
      %v586 = vpop.f32.mrb[0].mxu0
      %v587 = vadd.f32 %v415, %v586
      %v588 = vpop.f32.mrb[0].mxu0
      %v589 = vpop.f32.mrb[0].mxu0
      %v590 = vadd.f32 %v418, %v589
      %v591 = vpop.f32.mrb[0].mxu0
      %592 = vmatprep.mubr.bf16.mxu0 0
      %593 = vmatmul.mubr.bf16.gmra.mrb[0].mxu0 %v271
      %v594 = vpop.f32.mrb[0].mxu0
      %v595 = vadd.f32 %v423, %v594
      %v596 = vpop.f32.mrb[0].mxu0
      %v597 = vpop.f32.mrb[0].mxu0
      %v598 = vadd.f32 %v426, %v597
      %v599 = vpop.f32.mrb[0].mxu0
      %600 = vmatprep.mubr.bf16.mxu0 0
      %601 = vmatmul.mubr.bf16.gmra.mrb[0].mxu0 %v274
      %v602 = vpop.f32.mrb[0].mxu0
      %v603 = vadd.f32 %v431, %v602
      %v604 = vpop.f32.mrb[0].mxu0
      %v605 = vpop.f32.mrb[0].mxu0
      %v606 = vadd.f32 %v434, %v605
      %v607 = vpop.f32.mrb[0].mxu0
      %608 = vmatprep.mubr.bf16.mxu0 0
      %609 = vmatmul.mubr.bf16.gmra.mrb[0].mxu0 %v277
      %v610 = vpop.f32.mrb[0].mxu0
      %v611 = vadd.f32 %v439, %v610
      %v612 = vpop.f32.mrb[0].mxu0
      %v613 = vpop.f32.mrb[0].mxu0
      %v614 = vadd.f32 %v442, %v613
      %v615 = vpop.f32.mrb[0].mxu0
      %616 = vmatprep.mubr.bf16.mxu0 0
      %617 = vmatmul.mubr.bf16.gmra.mrb[0].mxu0 %v280
      %v618 = vpop.f32.mrb[0].mxu0
      %v619 = vadd.f32 %v447, %v618
      %v620 = vpop.f32.mrb[0].mxu0
      %v621 = vpop.f32.mrb[0].mxu0
      %v622 = vadd.f32 %v450, %v621
      %v623 = vpop.f32.mrb[0].mxu0
      %624 = vdwg.mxu0
      %v625 = vld [vmem:[%s166 + $0x20] sm:$0xff]
      %v626 = vld [vmem:[%s166 + $0x28] sm:$0xff]
      %v627 = vld [vmem:[%s166 + $0x30] sm:$0xff]
      %v628 = vld [vmem:[%s166 + $0x38] sm:$0xff]
      %v629 = vld [vmem:[%s166 + $0x40] sm:$0xff]
      %v630 = vld [vmem:[%s166 + $0x48] sm:$0xff]
      %v631 = vld [vmem:[%s166 + $0x50] sm:$0xff]
      %v632 = vld [vmem:[%s166 + $0x58] sm:$0xff]
      %v633 = vld [vmem:[%s166 + $0x60] sm:$0xff]
      %v634 = vld [vmem:[%s166 + $0x68] sm:$0xff]
      %v635 = vld [vmem:[%s166 + $0x70] sm:$0xff]
      %v636 = vld [vmem:[%s166 + $0x78] sm:$0xff]
      %v637 = vld [vmem:[%s166 + $0x80] sm:$0xff]
      %v638 = vld [vmem:[%s166 + $0x88] sm:$0xff]
      %v639 = vld [vmem:[%s166 + $0x90] sm:$0xff]
      %v640 = vld [vmem:[%s166 + $0x98] sm:$0xff]
      %v641 = vld [vmem:[%s166 + $0xa0] sm:$0xff]
      %v642 = vld [vmem:[%s166 + $0xa8] sm:$0xff]
      %v643 = vld [vmem:[%s166 + $0xb0] sm:$0xff]
      %v644 = vld [vmem:[%s166 + $0xb8] sm:$0xff]
      %v645 = vld [vmem:[%s166 + $0xc0] sm:$0xff]
      %v646 = vld [vmem:[%s166 + $0xc8] sm:$0xff]
      %v647 = vld [vmem:[%s166 + $0xd0] sm:$0xff]
      %v648 = vld [vmem:[%s166 + $0xd8] sm:$0xff]
      %v649 = vld [vmem:[%s166 + $0xe0] sm:$0xff]
      %v650 = vld [vmem:[%s166 + $0xe8] sm:$0xff]
      %v651 = vld [vmem:[%s166 + $0xf0] sm:$0xff]
      %v652 = vld [vmem:[%s166 + $0xf8] sm:$0xff]
      %v653 = vld [vmem:[%s166 + $0x100] sm:$0xff]
      %v654 = vld [vmem:[%s166 + $0x108] sm:$0xff]
      %v655 = vld [vmem:[%s166 + $0x110] sm:$0xff]
      %v656 = vld [vmem:[%s166 + $0x118] sm:$0xff]
      %v657 = vpack.c.bf16 %v626, %v625
      %v658 = vpack.c.bf16 %v628, %v627
      %v659 = vpack.c.bf16 %v630, %v629
      %v660 = vpack.c.bf16 %v632, %v631
      %v661 = vpack.c.bf16 %v634, %v633
      %v662 = vpack.c.bf16 %v636, %v635
      %v663 = vpack.c.bf16 %v638, %v637
      %v664 = vpack.c.bf16 %v640, %v639
      %v665 = vpack.c.bf16 %v642, %v641
      %v666 = vpack.c.bf16 %v644, %v643
      %v667 = vpack.c.bf16 %v646, %v645
      %v668 = vpack.c.bf16 %v648, %v647
      %v669 = vpack.c.bf16 %v650, %v649
      %v670 = vpack.c.bf16 %v652, %v651
      %v671 = vpack.c.bf16 %v654, %v653
      %v672 = vpack.c.bf16 %v656, %v655
      %s673 = scalar_lea.vmem %s1, 16
      %v674 = vld [vmem:[%s673] sm:$0xf]
      %v675 = vld [vmem:[%s673 + $0x4] sm:$0x1]
      %v678 = vunpack.c.l.b16 %v674
      %v679 = vunpack.c.l.b16 %v675
      %v680 = vpack.c.b16 %v679, %v678
      %v682 = vsel %vm236, %v657, 0
      %v685 = vsel %vm236, %v658, 0
      %v688 = vsel %vm236, %v659, 0
      %v691 = vsel %vm236, %v660, 0
      %v694 = vsel %vm236, %v661, 0
      %v697 = vsel %vm236, %v662, 0
      %v700 = vsel %vm236, %v663, 0
      %v703 = vsel %vm236, %v664, 0
      %v706 = vsel %vm236, %v665, 0
      %v709 = vsel %vm236, %v666, 0
      %v712 = vsel %vm236, %v667, 0
      %v715 = vsel %vm236, %v668, 0
      %v718 = vsel %vm236, %v669, 0
      %v721 = vsel %vm236, %v670, 0
      %v724 = vsel %vm236, %v671, 0
      %v727 = vsel %vm236, %v672, 0
      %v730 = vand.u32 %v680, %v288
      %732 = vmatprep.subr.bf16.mxu0 0
      %733 = vmatpush1.bf16.msra.mxu0 %v730
      %734 = vmatprep.subr.bf16.mxu0 0
      %735 = vmatpush1.bf16.msra.mxu0 0
      %736 = vmatprep.subr.bf16.mxu0 0
      %737 = vmatpush1.bf16.msra.mxu0 0
      %738 = vmatprep.subr.bf16.mxu0 0
      %739 = vmatpush1.bf16.msra.mxu0 0
      %740 = vmatprep.subr.bf16.mxu0 0
      %741 = vmatpush1.bf16.msra.mxu0 0
      %742 = vmatprep.subr.bf16.mxu0 0
      %743 = vmatpush1.bf16.msra.mxu0 0
      %744 = vmatprep.subr.bf16.mxu0 0
      %745 = vmatpush1.bf16.msra.mxu0 0
      %746 = vmatprep.subr.bf16.mxu0 0
      %747 = vmatpush1.bf16.msra.mxu0 0
      %748 = vmatprep.subr.bf16.mxu0 0
      %749 = vmatpush1.bf16.msra.mxu0 0
      %750 = vmatprep.subr.bf16.mxu0 0
      %751 = vmatpush1.bf16.msra.mxu0 0
      %752 = vmatprep.subr.bf16.mxu0 0
      %753 = vmatpush1.bf16.msra.mxu0 0
      %754 = vmatprep.subr.bf16.mxu0 0
      %755 = vmatpush1.bf16.msra.mxu0 0
      %756 = vmatprep.subr.bf16.mxu0 0
      %757 = vmatpush1.bf16.msra.mxu0 0
      %758 = vmatprep.subr.bf16.mxu0 0
      %759 = vmatpush1.bf16.msra.mxu0 0
      %760 = vmatprep.subr.bf16.mxu0 0
      %761 = vmatpush1.bf16.msra.mxu0 0
      %762 = vmatprep.subr.bf16.mxu0 0
      %763 = vmatpush1.bf16.msra.mxu0 0
      %764 = vmatprep.mubr.bf16.mxu0 0
      %765 = vmatmul.mubr.bf16.gmra.mrb[0].mxu0 %v682
      %v766 = vpop.f32.mrb[0].mxu0
      %v767 = vadd.f32 0.0, %v766
      %v768 = vpop.f32.mrb[0].mxu0
      %v769 = vpop.f32.mrb[0].mxu0
      %v770 = vadd.f32 0.0, %v769
      %v771 = vpop.f32.mrb[0].mxu0
      %772 = vmatprep.mubr.bf16.mxu0 0
      %773 = vmatmul.mubr.bf16.gmra.mrb[0].mxu0 %v685
      %v774 = vpop.f32.mrb[0].mxu0
      %v775 = vadd.f32 0.0, %v774
      %v776 = vpop.f32.mrb[0].mxu0
      %v777 = vpop.f32.mrb[0].mxu0
      %v778 = vadd.f32 0.0, %v777
      %v779 = vpop.f32.mrb[0].mxu0
      %780 = vmatprep.mubr.bf16.mxu0 0
      %781 = vmatmul.mubr.bf16.gmra.mrb[0].mxu0 %v688
      %v782 = vpop.f32.mrb[0].mxu0
      %v783 = vadd.f32 0.0, %v782
      %v784 = vpop.f32.mrb[0].mxu0
      %v785 = vpop.f32.mrb[0].mxu0
      %v786 = vadd.f32 0.0, %v785
      %v787 = vpop.f32.mrb[0].mxu0
      %788 = vmatprep.mubr.bf16.mxu0 0
      %789 = vmatmul.mubr.bf16.gmra.mrb[0].mxu0 %v691
      %v790 = vpop.f32.mrb[0].mxu0
      %v791 = vadd.f32 0.0, %v790
      %v792 = vpop.f32.mrb[0].mxu0
      %v793 = vpop.f32.mrb[0].mxu0
      %v794 = vadd.f32 0.0, %v793
      %v795 = vpop.f32.mrb[0].mxu0
      %796 = vmatprep.mubr.bf16.mxu0 0
      %797 = vmatmul.mubr.bf16.gmra.mrb[0].mxu0 %v694
      %v798 = vpop.f32.mrb[0].mxu0
      %v799 = vadd.f32 0.0, %v798
      %v800 = vpop.f32.mrb[0].mxu0
      %v801 = vpop.f32.mrb[0].mxu0
      %v802 = vadd.f32 0.0, %v801
      %v803 = vpop.f32.mrb[0].mxu0
      %804 = vmatprep.mubr.bf16.mxu0 0
      %805 = vmatmul.mubr.bf16.gmra.mrb[0].mxu0 %v697
      %v806 = vpop.f32.mrb[0].mxu0
      %v807 = vadd.f32 0.0, %v806
      %v808 = vpop.f32.mrb[0].mxu0
      %v809 = vpop.f32.mrb[0].mxu0
      %v810 = vadd.f32 0.0, %v809
      %v811 = vpop.f32.mrb[0].mxu0
      %812 = vmatprep.mubr.bf16.mxu0 0
      %813 = vmatmul.mubr.bf16.gmra.mrb[0].mxu0 %v700
      %v814 = vpop.f32.mrb[0].mxu0
      %v815 = vadd.f32 0.0, %v814
      %v816 = vpop.f32.mrb[0].mxu0
      %v817 = vpop.f32.mrb[0].mxu0
      %v818 = vadd.f32 0.0, %v817
      %v819 = vpop.f32.mrb[0].mxu0
      %820 = vmatprep.mubr.bf16.mxu0 0
      %821 = vmatmul.mubr.bf16.gmra.mrb[0].mxu0 %v703
      %v822 = vpop.f32.mrb[0].mxu0
      %v823 = vadd.f32 0.0, %v822
      %v824 = vpop.f32.mrb[0].mxu0
      %v825 = vpop.f32.mrb[0].mxu0
      %v826 = vadd.f32 0.0, %v825
      %v827 = vpop.f32.mrb[0].mxu0
      %828 = vmatprep.mubr.bf16.mxu0 0
      %829 = vmatmul.mubr.bf16.gmra.mrb[0].mxu0 %v706
      %v830 = vpop.f32.mrb[0].mxu0
      %v831 = vadd.f32 0.0, %v830
      %v832 = vpop.f32.mrb[0].mxu0
      %v833 = vpop.f32.mrb[0].mxu0
      %v834 = vadd.f32 0.0, %v833
      %v835 = vpop.f32.mrb[0].mxu0
      %836 = vmatprep.mubr.bf16.mxu0 0
      %837 = vmatmul.mubr.bf16.gmra.mrb[0].mxu0 %v709
      %v838 = vpop.f32.mrb[0].mxu0
      %v839 = vadd.f32 0.0, %v838
      %v840 = vpop.f32.mrb[0].mxu0
      %v841 = vpop.f32.mrb[0].mxu0
      %v842 = vadd.f32 0.0, %v841
      %v843 = vpop.f32.mrb[0].mxu0
      %844 = vmatprep.mubr.bf16.mxu0 0
      %845 = vmatmul.mubr.bf16.gmra.mrb[0].mxu0 %v712
      %v846 = vpop.f32.mrb[0].mxu0
      %v847 = vadd.f32 0.0, %v846
      %v848 = vpop.f32.mrb[0].mxu0
      %v849 = vpop.f32.mrb[0].mxu0
      %v850 = vadd.f32 0.0, %v849
      %v851 = vpop.f32.mrb[0].mxu0
      %852 = vmatprep.mubr.bf16.mxu0 0
      %853 = vmatmul.mubr.bf16.gmra.mrb[0].mxu0 %v715
      %v854 = vpop.f32.mrb[0].mxu0
      %v855 = vadd.f32 0.0, %v854
      %v856 = vpop.f32.mrb[0].mxu0
      %v857 = vpop.f32.mrb[0].mxu0
      %v858 = vadd.f32 0.0, %v857
      %v859 = vpop.f32.mrb[0].mxu0
      %860 = vmatprep.mubr.bf16.mxu0 0
      %861 = vmatmul.mubr.bf16.gmra.mrb[0].mxu0 %v718
      %v862 = vpop.f32.mrb[0].mxu0
      %v863 = vadd.f32 0.0, %v862
      %v864 = vpop.f32.mrb[0].mxu0
      %v865 = vpop.f32.mrb[0].mxu0
      %v866 = vadd.f32 0.0, %v865
      %v867 = vpop.f32.mrb[0].mxu0
      %868 = vmatprep.mubr.bf16.mxu0 0
      %869 = vmatmul.mubr.bf16.gmra.mrb[0].mxu0 %v721
      %v870 = vpop.f32.mrb[0].mxu0
      %v871 = vadd.f32 0.0, %v870
      %v872 = vpop.f32.mrb[0].mxu0
      %v873 = vpop.f32.mrb[0].mxu0
      %v874 = vadd.f32 0.0, %v873
      %v875 = vpop.f32.mrb[0].mxu0
      %876 = vmatprep.mubr.bf16.mxu0 0
      %877 = vmatmul.mubr.bf16.gmra.mrb[0].mxu0 %v724
      %v878 = vpop.f32.mrb[0].mxu0
      %v879 = vadd.f32 0.0, %v878
      %v880 = vpop.f32.mrb[0].mxu0
      %v881 = vpop.f32.mrb[0].mxu0
      %v882 = vadd.f32 0.0, %v881
      %v883 = vpop.f32.mrb[0].mxu0
      %884 = vmatprep.mubr.bf16.mxu0 0
      %885 = vmatmul.mubr.bf16.gmra.mrb[0].mxu0 %v727
      %v886 = vpop.f32.mrb[0].mxu0
      %v887 = vadd.f32 0.0, %v886
      %v888 = vpop.f32.mrb[0].mxu0
      %v889 = vpop.f32.mrb[0].mxu0
      %v890 = vadd.f32 0.0, %v889
      %v891 = vpop.f32.mrb[0].mxu0
      %892 = vdwg.mxu0
      %v893 = vadd.f32 %v499, %v767
      %v894 = vadd.f32 %v502, %v770
      %v895 = vadd.f32 %v507, %v775
      %v896 = vadd.f32 %v510, %v778
      %v897 = vadd.f32 %v515, %v783
      %v898 = vadd.f32 %v518, %v786
      %v899 = vadd.f32 %v523, %v791
      %v900 = vadd.f32 %v526, %v794
      %v901 = vadd.f32 %v531, %v799
      %v902 = vadd.f32 %v534, %v802
      %v903 = vadd.f32 %v539, %v807
      %v904 = vadd.f32 %v542, %v810
      %v905 = vadd.f32 %v547, %v815
      %v906 = vadd.f32 %v550, %v818
      %v907 = vadd.f32 %v555, %v823
      %v908 = vadd.f32 %v558, %v826
      %v909 = vadd.f32 %v563, %v831
      %v910 = vadd.f32 %v566, %v834
      %v911 = vadd.f32 %v571, %v839
      %v912 = vadd.f32 %v574, %v842
      %v913 = vadd.f32 %v579, %v847
      %v914 = vadd.f32 %v582, %v850
      %v915 = vadd.f32 %v587, %v855
      %v916 = vadd.f32 %v590, %v858
      %v917 = vadd.f32 %v595, %v863
      %v918 = vadd.f32 %v598, %v866
      %v919 = vadd.f32 %v603, %v871
      %v920 = vadd.f32 %v606, %v874
      %v921 = vadd.f32 %v611, %v879
      %v922 = vadd.f32 %v614, %v882
      %v923 = vadd.f32 %v619, %v887
      %v924 = vadd.f32 %v622, %v890
      %v925 = vld [vmem:[%s2] sm:$0x1]
      %v927 = vlaneseq
      %v928 = vshrl.u32 %v927, 7
      %v929 = vsub.s32 0, %v928
      %v930 = vrot.slane %v925, %v929
      %v932 = vadd.f32 %v893, %v930
      %v933 = vadd.f32 %v894, %v930
      %v934 = vadd.f32 %v895, %v930
      %v935 = vadd.f32 %v896, %v930
      %v936 = vadd.f32 %v897, %v930
      %v937 = vadd.f32 %v898, %v930
      %v938 = vadd.f32 %v899, %v930
      %v939 = vadd.f32 %v900, %v930
      %v940 = vadd.f32 %v901, %v930
      %v941 = vadd.f32 %v902, %v930
      %v942 = vadd.f32 %v903, %v930
      %v943 = vadd.f32 %v904, %v930
      %v944 = vadd.f32 %v905, %v930
      %v945 = vadd.f32 %v906, %v930
      %v946 = vadd.f32 %v907, %v930
      %v947 = vadd.f32 %v908, %v930
      %v948 = vadd.f32 %v909, %v930
      %v949 = vadd.f32 %v910, %v930
      %v950 = vadd.f32 %v911, %v930
      %v951 = vadd.f32 %v912, %v930
      %v952 = vadd.f32 %v913, %v930
      %v953 = vadd.f32 %v914, %v930
      %v954 = vadd.f32 %v915, %v930
      %v955 = vadd.f32 %v916, %v930
      %v956 = vadd.f32 %v917, %v930
      %v957 = vadd.f32 %v918, %v930
      %v958 = vadd.f32 %v919, %v930
      %v959 = vadd.f32 %v920, %v930
      %v960 = vadd.f32 %v921, %v930
      %v961 = vadd.f32 %v922, %v930
      %v962 = vadd.f32 %v923, %v930
      %v963 = vadd.f32 %v924, %v930
      %v964 = vmax.f32 %v932, 0.0
      %v965 = vmax.f32 %v933, 0.0
      %v966 = vmax.f32 %v934, 0.0
      %v967 = vmax.f32 %v935, 0.0
      %v968 = vmax.f32 %v936, 0.0
      %v969 = vmax.f32 %v937, 0.0
      %v970 = vmax.f32 %v938, 0.0
      %v971 = vmax.f32 %v939, 0.0
      %v972 = vmax.f32 %v940, 0.0
      %v973 = vmax.f32 %v941, 0.0
      %v974 = vmax.f32 %v942, 0.0
      %v975 = vmax.f32 %v943, 0.0
      %v976 = vmax.f32 %v944, 0.0
      %v977 = vmax.f32 %v945, 0.0
      %v978 = vmax.f32 %v946, 0.0
      %v979 = vmax.f32 %v947, 0.0
      %v980 = vmax.f32 %v948, 0.0
      %v981 = vmax.f32 %v949, 0.0
      %v982 = vmax.f32 %v950, 0.0
      %v983 = vmax.f32 %v951, 0.0
      %v984 = vmax.f32 %v952, 0.0
      %v985 = vmax.f32 %v953, 0.0
      %v986 = vmax.f32 %v954, 0.0
      %v987 = vmax.f32 %v955, 0.0
      %v988 = vmax.f32 %v956, 0.0
      %v989 = vmax.f32 %v957, 0.0
      %v990 = vmax.f32 %v958, 0.0
      %v991 = vmax.f32 %v959, 0.0
      %v992 = vmax.f32 %v960, 0.0
      %v993 = vmax.f32 %v961, 0.0
      %v994 = vmax.f32 %v962, 0.0
      %v995 = vmax.f32 %v963, 0.0
      %vm996 = vcmask 64512
      %997 = vst.msk [vmem:[%s172] sm:$0xff] %vm996, %v964
      %998 = vst.msk [vmem:[%s172 + $0x8] sm:$0xff] %vm996, %v965
      %999 = vst.msk [vmem:[%s172 + $0x10] sm:$0xff] %vm996, %v966
      %1000 = vst.msk [vmem:[%s172 + $0x18] sm:$0xff] %vm996, %v967
      %1001 = vst.msk [vmem:[%s172 + $0x20] sm:$0xff] %vm996, %v968
      %1002 = vst.msk [vmem:[%s172 + $0x28] sm:$0xff] %vm996, %v969
      %1003 = vst.msk [vmem:[%s172 + $0x30] sm:$0xff] %vm996, %v970
      %1004 = vst.msk [vmem:[%s172 + $0x38] sm:$0xff] %vm996, %v971
      %1005 = vst.msk [vmem:[%s172 + $0x40] sm:$0xff] %vm996, %v972
      %1006 = vst.msk [vmem:[%s172 + $0x48] sm:$0xff] %vm996, %v973
      %1007 = vst.msk [vmem:[%s172 + $0x50] sm:$0xff] %vm996, %v974
      %1008 = vst.msk [vmem:[%s172 + $0x58] sm:$0xff] %vm996, %v975
      %1009 = vst.msk [vmem:[%s172 + $0x60] sm:$0xff] %vm996, %v976
      %1010 = vst.msk [vmem:[%s172 + $0x68] sm:$0xff] %vm996, %v977
      %1011 = vst.msk [vmem:[%s172 + $0x70] sm:$0xff] %vm996, %v978
      %1012 = vst.msk [vmem:[%s172 + $0x78] sm:$0xff] %vm996, %v979
      %1013 = vst.msk [vmem:[%s172 + $0x80] sm:$0xff] %vm996, %v980
      %1014 = vst.msk [vmem:[%s172 + $0x88] sm:$0xff] %vm996, %v981
      %1015 = vst.msk [vmem:[%s172 + $0x90] sm:$0xff] %vm996, %v982
      %1016 = vst.msk [vmem:[%s172 + $0x98] sm:$0xff] %vm996, %v983
      %1017 = vst.msk [vmem:[%s172 + $0xa0] sm:$0xff] %vm996, %v984
      %1018 = vst.msk [vmem:[%s172 + $0xa8] sm:$0xff] %vm996, %v985
      %1019 = vst.msk [vmem:[%s172 + $0xb0] sm:$0xff] %vm996, %v986
      %1020 = vst.msk [vmem:[%s172 + $0xb8] sm:$0xff] %vm996, %v987
      %1021 = vst.msk [vmem:[%s172 + $0xc0] sm:$0xff] %vm996, %v988
      %1022 = vst.msk [vmem:[%s172 + $0xc8] sm:$0xff] %vm996, %v989
      %1023 = vst.msk [vmem:[%s172 + $0xd0] sm:$0xff] %vm996, %v990
      %1024 = vst.msk [vmem:[%s172 + $0xd8] sm:$0xff] %vm996, %v991
      %1025 = vst.msk [vmem:[%s172 + $0xe0] sm:$0xff] %vm996, %v992
      %1026 = vst.msk [vmem:[%s172 + $0xe8] sm:$0xff] %vm996, %v993
      %1027 = vst.msk [vmem:[%s172 + $0xf0] sm:$0xff] %vm996, %v994
      %1028 = vst.msk [vmem:[%s172 + $0xf8] sm:$0xff] %vm996, %v995
      %s1029 = smul.u32 32, %s14
      %p1030 = scmp.lt.s32.totalorder %s1029, 63
      %s1031 = scalar_select %p1030, %s1029, 63
      %s1032 = smul.addr %s1031, 8
      %s1033 = scalar_lea.vmem %s3, %s1032
      // Predicated region
      $region33: #{unet_ag_forward.14} parent=31 // pred_check
        %p1034 = pneg %p100
      $region34: #{unet_ag_forward.14} parent=31 // pred_check_branch
        %1036 = sbr.rel (%p1034) target = $region36
      $region35: #{unet_ag_forward.14} parent=31 // pred_region
        %s1037 = smul.u32 32, %s14
      $region36: #{unet_ag_forward.14} parent=31 // pred_fallthru
        _
    $region32: #{unet_ag_forward.14} parent=5 // pred_fallthru
      _
    %p1038 = scmp.le.s32.totalorder 2, %s9
    // Predicated region
    $region37: #{unet_ag_forward.14} parent=5 // pred_check
      %p1039 = pneg %p1038
    $region38: #{unet_ag_forward.14} parent=5 // pred_check_branch
      %1041 = sbr.rel (%p1039) target = $region40
    $region39: #{unet_ag_forward.14} parent=5 // pred_region
      %s1042 = ssub.s32 %s9, 2
      // Predicated region
      $region41: #{unet_ag_forward.14} parent=39 // pred_check
        %p1043 = pneg %p106
      $region42: #{unet_ag_forward.14} parent=39 // pred_check_branch
        %1045 = sbr.rel (%p1043) target = $region44
      $region43: #{unet_ag_forward.14} parent=39 // pred_region
        %s1046 = smul.u32 32, %s15
        %p1047 = scmp.lt.s32.totalorder %s1046, 63
        %s1048 = scalar_select %p1047, %s1046, 63
        %s1049 = smul.addr %s1048, 8
        %s1050 = scalar_lea.vmem %s3, %s1049
      $region44: #{unet_ag_forward.14} parent=39 // pred_fallthru
        _
    $region40: #{unet_ag_forward.14} parent=5 // pred_fallthru
      _
  $region6: #{unet_ag_forward.14} parent=0 // loop_footer
    %s13 = sadd.s32 1, %s9
  $region7: #{unet_ag_forward.14} parent=0 // loop_footer_branch
    %8 = sbr.rel target = $region3
  $region8: #{unet_ag_forward.14} parent=0 // loop_exit
    _

// kernel: unet_ag_forward.16
$region0: #{unet_ag_forward.16}
  #allocation0 [shape = 'u32[]', space=smem, size = 0x4, offset = 0x4, fixed_abs, tag = 'smem constant byte address 0x4 - core index']
  #allocation1 [shape = 'u32[144,128]{1,0:T(1,128)}', space=vmem, size = 0x12000, scoped, tag = 'internal scratch']
  %s0 = inlined_call_operand.vmem [shape: f32[16,2,8,2,8], index: 0, kind: input, shape index: {}]
  %s1 = inlined_call_operand.vmem [shape: f32[16,8,8], index: 1, kind: output, shape index: {}]
  %s2 = sld [smem:[#allocation0]]
  $region37: #{unet_ag_forward.16} parent=0
    _
  %s4 = ssub.s32 1, %s2
  %s5 = scalar_select 0, %s4, %s2
  loop: start=0, step=1, limit=4
  $region2: #{unet_ag_forward.16} parent=0 // loop_pre_header
    _
  $region3: #{unet_ag_forward.16} parent=0 // loop_header
    %s7 = sphi 0, %s11
    %p8 = scmp.ge.s32.totalorder %s7, 4
    %s17 = sphi 0, %s19
    %s20 = sphi 0, %s17
    %s21 = sphi 0, %s20
    %s37 = sphi 0, %s21
    %s43 = sphi 0, %s45
    %s46 = sphi 0, %s43
    %s47 = sphi 0, %s46
    %s63 = sphi 0, %s47
  $region4: #{unet_ag_forward.16} parent=0 // loop_header_branch
    %10 = sbr.rel (%p8) target = $region8
  $region5: #{unet_ag_forward.16} parent=0 // loop_body
    %s12 = ssub.s32 %s7, 1
    %s13 = ssub.s32 %s7, 2
    %s14 = sadd.s32 %s7, 1
    %s15 = ssub.s32 %s7, %s14
    %p16 = scmp.eq.s32.totalorder %s15, 0
    %s18 = sadd.s32 %s17, 1
    %s19 = scalar_select %p16, %s17, %s18
    %p22 = pneg %p16
    %p23 = scmp.eq.s32.totalorder %s7, 1
    %p24 = por %p22, %p23
    %p25 = scmp.ne.s32.totalorder %s17, %s20
    %p26 = scmp.eq.s32.totalorder %s7, 0
    %p27 = por %p25, %p26
    %p28 = scmp.ne.s32.totalorder %s17, %s20
    %p29 = scmp.eq.s32.totalorder %s12, 1
    %p30 = por %p28, %p29
    %p31 = scmp.ne.s32.totalorder %s20, %s21
    %p32 = scmp.eq.s32.totalorder %s12, 0
    %p33 = por %p31, %p32
    %p34 = scmp.ne.s32.totalorder %s20, %s21
    %p35 = scmp.eq.s32.totalorder %s13, 1
    %p36 = por %p34, %p35
    %p38 = scmp.ne.s32.totalorder %s21, %s37
    %p39 = scmp.eq.s32.totalorder %s13, 0
    %p40 = por %p38, %p39
    %s41 = ssub.s32 %s7, %s14
    %p42 = scmp.eq.s32.totalorder %s41, 0
    %s44 = sadd.s32 %s43, 1
    %s45 = scalar_select %p42, %s43, %s44
    %p48 = pneg %p42
    %p49 = scmp.eq.s32.totalorder %s7, 1
    %p50 = por %p48, %p49
    %p51 = scmp.ne.s32.totalorder %s43, %s46
    %p52 = scmp.eq.s32.totalorder %s7, 0
    %p53 = por %p51, %p52
    %p54 = scmp.ne.s32.totalorder %s43, %s46
    %p55 = scmp.eq.s32.totalorder %s12, 1
    %p56 = por %p54, %p55
    %p57 = scmp.ne.s32.totalorder %s46, %s47
    %p58 = scmp.eq.s32.totalorder %s12, 0
    %p59 = por %p57, %p58
    %p60 = scmp.ne.s32.totalorder %s46, %s47
    %p61 = scmp.eq.s32.totalorder %s13, 1
    %p62 = por %p60, %p61
    %p64 = scmp.ne.s32.totalorder %s47, %s63
    %p65 = scmp.eq.s32.totalorder %s13, 0
    %p66 = por %p64, %p65
    %p67 = scmp.le.s32.totalorder 1, %s7
    %p68 = scmp.lt.s32.totalorder %s7, 3
    %p69 = pnand %p67, %p68
    %p70 = pneg %p69
    // Predicated region
    $region9: #{unet_ag_forward.16} parent=5 // pred_check
      _
    $region10: #{unet_ag_forward.16} parent=5 // pred_check_branch
      %72 = sbr.rel (%p69) target = $region12
    $region11: #{unet_ag_forward.16} parent=5 // pred_region
      %s73 = ssub.s32 %s7, 1
    $region12: #{unet_ag_forward.16} parent=5 // pred_fallthru
      _
    %p74 = scmp.lt.s32.totalorder %s7, 2
    // Predicated region
    $region13: #{unet_ag_forward.16} parent=5 // pred_check
      %p75 = pneg %p74
    $region14: #{unet_ag_forward.16} parent=5 // pred_check_branch
      %77 = sbr.rel (%p75) target = $region16
    $region15: #{unet_ag_forward.16} parent=5 // pred_region
      // Predicated region
      $region17: #{unet_ag_forward.16} parent=15 // pred_check
        %p78 = pneg %p27
      $region18: #{unet_ag_forward.16} parent=15 // pred_check_branch
        %80 = sbr.rel (%p78) target = $region20
      $region19: #{unet_ag_forward.16} parent=15 // pred_region
        %s81 = smul.u32 8, %s7
        %p82 = scmp.lt.s32.totalorder %s81, 15
        %s83 = scalar_select %p82, %s81, 15
        %s84 = smul.addr %s83, 16
        %s85 = smul.addr %s84, 2
        %s86 = scalar_lea.vmem %s0, %s85
        %s87 = smul.u32 8, %s7
      $region20: #{unet_ag_forward.16} parent=15 // pred_fallthru
        _
    $region16: #{unet_ag_forward.16} parent=5 // pred_fallthru
      _
    %p88 = scmp.le.s32.totalorder 1, %s7
    %p89 = scmp.lt.s32.totalorder %s7, 3
    %p90 = pnand %p88, %p89
    %p91 = pneg %p90
    // Predicated region
    $region21: #{unet_ag_forward.16} parent=5 // pred_check
      _
    $region22: #{unet_ag_forward.16} parent=5 // pred_check_branch
      %93 = sbr.rel (%p90) target = $region24
    $region23: #{unet_ag_forward.16} parent=5 // pred_region
      %s94 = ssub.s32 %s7, 1
      %s95 = smul.u32 8, %s12
      %p96 = scmp.lt.s32.totalorder %s95, 15
      %s97 = scalar_select %p96, %s95, 15
      %s98 = smul.addr %s97, 16
      %s99 = smul.addr %s98, 2
      %s100 = scalar_lea.vmem %s0, %s99
      %p101 = pneg %p33
      %p102 = pneg %p30
      %p103 = pneg %p59
      %p104 = pneg %p56
      %s105 = smul.u32 8, %s12
      %p106 = scmp.lt.s32.totalorder %s105, 15
      %s107 = scalar_select %p106, %s105, 15
      %s108 = smul.addr %s107, 8
      %s109 = scalar_lea.vmem %s1, %s108
      %s110 = smul.u32 8, %s12
      %p111 = scmp.lt.s32.totalorder %s110, 15
      %s112 = scalar_select %p111, %s110, 15
      %s113 = smul.addr %s112, 16
      %s114 = smul.addr %s113, 2
      %s115 = scalar_lea.vmem %s0, %s114
      %s116 = smul.u32 8, %s12
      %s117 = smul.u32 8, %s12
      %p118 = scmp.lt.s32.totalorder %s117, 15
      %s119 = scalar_select %p118, %s117, 15
      %s120 = smul.addr %s119, 8
      %s121 = scalar_lea.vmem %s1, %s120
      %s122 = smul.u32 8, %s12
      %v123 = vld [vmem:[%s115] sm:$0x1]
      %v124 = vld [vmem:[%s115 + $0x2] sm:$0x1]
      %v125 = vld [vmem:[%s115 + $0x4] sm:$0x1]
      %v126 = vld [vmem:[%s115 + $0x6] sm:$0x1]
      %v127 = vld [vmem:[%s115 + $0x8] sm:$0x1]
      %v128 = vld [vmem:[%s115 + $0xa] sm:$0x1]
      %v129 = vld [vmem:[%s115 + $0xc] sm:$0x1]
      %v130 = vld [vmem:[%s115 + $0xe] sm:$0x1]
      %v131 = vld [vmem:[%s115 + $0x20] sm:$0x1]
      %v132 = vld [vmem:[%s115 + $0x22] sm:$0x1]
      %v133 = vld [vmem:[%s115 + $0x24] sm:$0x1]
      %v134 = vld [vmem:[%s115 + $0x26] sm:$0x1]
      %v135 = vld [vmem:[%s115 + $0x28] sm:$0x1]
      %v136 = vld [vmem:[%s115 + $0x2a] sm:$0x1]
      %v137 = vld [vmem:[%s115 + $0x2c] sm:$0x1]
      %v138 = vld [vmem:[%s115 + $0x2e] sm:$0x1]
      %v139 = vld [vmem:[%s115 + $0x40] sm:$0x1]
      %v140 = vld [vmem:[%s115 + $0x42] sm:$0x1]
      %v141 = vld [vmem:[%s115 + $0x44] sm:$0x1]
      %v142 = vld [vmem:[%s115 + $0x46] sm:$0x1]
      %v143 = vld [vmem:[%s115 + $0x48] sm:$0x1]
      %v144 = vld [vmem:[%s115 + $0x4a] sm:$0x1]
      %v145 = vld [vmem:[%s115 + $0x4c] sm:$0x1]
      %v146 = vld [vmem:[%s115 + $0x4e] sm:$0x1]
      %v147 = vld [vmem:[%s115 + $0x60] sm:$0x1]
      %v148 = vld [vmem:[%s115 + $0x62] sm:$0x1]
      %v149 = vld [vmem:[%s115 + $0x64] sm:$0x1]
      %v150 = vld [vmem:[%s115 + $0x66] sm:$0x1]
      %v151 = vld [vmem:[%s115 + $0x68] sm:$0x1]
      %v152 = vld [vmem:[%s115 + $0x6a] sm:$0x1]
      %v153 = vld [vmem:[%s115 + $0x6c] sm:$0x1]
      %v154 = vld [vmem:[%s115 + $0x6e] sm:$0x1]
      %v155 = vld [vmem:[%s115 + $0x80] sm:$0x1]
      %v156 = vld [vmem:[%s115 + $0x82] sm:$0x1]
      %v157 = vld [vmem:[%s115 + $0x84] sm:$0x1]
      %v158 = vld [vmem:[%s115 + $0x86] sm:$0x1]
      %v159 = vld [vmem:[%s115 + $0x88] sm:$0x1]
      %v160 = vld [vmem:[%s115 + $0x8a] sm:$0x1]
      %v161 = vld [vmem:[%s115 + $0x8c] sm:$0x1]
      %v162 = vld [vmem:[%s115 + $0x8e] sm:$0x1]
      %v163 = vld [vmem:[%s115 + $0xa0] sm:$0x1]
      %v164 = vld [vmem:[%s115 + $0xa2] sm:$0x1]
      %v165 = vld [vmem:[%s115 + $0xa4] sm:$0x1]
      %v166 = vld [vmem:[%s115 + $0xa6] sm:$0x1]
      %v167 = vld [vmem:[%s115 + $0xa8] sm:$0x1]
      %v168 = vld [vmem:[%s115 + $0xaa] sm:$0x1]
      %v169 = vld [vmem:[%s115 + $0xac] sm:$0x1]
      %v170 = vld [vmem:[%s115 + $0xae] sm:$0x1]
      %v171 = vld [vmem:[%s115 + $0xc0] sm:$0x1]
      %v172 = vld [vmem:[%s115 + $0xc2] sm:$0x1]
      %v173 = vld [vmem:[%s115 + $0xc4] sm:$0x1]
      %v174 = vld [vmem:[%s115 + $0xc6] sm:$0x1]
      %v175 = vld [vmem:[%s115 + $0xc8] sm:$0x1]
      %v176 = vld [vmem:[%s115 + $0xca] sm:$0x1]
      %v177 = vld [vmem:[%s115 + $0xcc] sm:$0x1]
      %v178 = vld [vmem:[%s115 + $0xce] sm:$0x1]
      %v179 = vld [vmem:[%s115 + $0xe0] sm:$0x1]
      %v180 = vld [vmem:[%s115 + $0xe2] sm:$0x1]
      %v181 = vld [vmem:[%s115 + $0xe4] sm:$0x1]
      %v182 = vld [vmem:[%s115 + $0xe6] sm:$0x1]
      %v183 = vld [vmem:[%s115 + $0xe8] sm:$0x1]
      %v184 = vld [vmem:[%s115 + $0xea] sm:$0x1]
      %v185 = vld [vmem:[%s115 + $0xec] sm:$0x1]
      %v186 = vld [vmem:[%s115 + $0xee] sm:$0x1]
      %v187 = vld [vmem:[%s115 + $0x1] sm:$0x1]
      %v188 = vld [vmem:[%s115 + $0x3] sm:$0x1]
      %v189 = vld [vmem:[%s115 + $0x5] sm:$0x1]
      %v190 = vld [vmem:[%s115 + $0x7] sm:$0x1]
      %v191 = vld [vmem:[%s115 + $0x9] sm:$0x1]
      %v192 = vld [vmem:[%s115 + $0xb] sm:$0x1]
      %v193 = vld [vmem:[%s115 + $0xd] sm:$0x1]
      %v194 = vld [vmem:[%s115 + $0xf] sm:$0x1]
      %v195 = vld [vmem:[%s115 + $0x21] sm:$0x1]
      %v196 = vld [vmem:[%s115 + $0x23] sm:$0x1]
      %v197 = vld [vmem:[%s115 + $0x25] sm:$0x1]
      %v198 = vld [vmem:[%s115 + $0x27] sm:$0x1]
      %v199 = vld [vmem:[%s115 + $0x29] sm:$0x1]
      %v200 = vld [vmem:[%s115 + $0x2b] sm:$0x1]
      %v201 = vld [vmem:[%s115 + $0x2d] sm:$0x1]
      %v202 = vld [vmem:[%s115 + $0x2f] sm:$0x1]
      %v203 = vld [vmem:[%s115 + $0x41] sm:$0x1]
      %v204 = vld [vmem:[%s115 + $0x43] sm:$0x1]
      %v205 = vld [vmem:[%s115 + $0x45] sm:$0x1]
      %v206 = vld [vmem:[%s115 + $0x47] sm:$0x1]
      %v207 = vld [vmem:[%s115 + $0x49] sm:$0x1]
      %v208 = vld [vmem:[%s115 + $0x4b] sm:$0x1]
      %v209 = vld [vmem:[%s115 + $0x4d] sm:$0x1]
      %v210 = vld [vmem:[%s115 + $0x4f] sm:$0x1]
      %v211 = vld [vmem:[%s115 + $0x61] sm:$0x1]
      %v212 = vld [vmem:[%s115 + $0x63] sm:$0x1]
      %v213 = vld [vmem:[%s115 + $0x65] sm:$0x1]
      %v214 = vld [vmem:[%s115 + $0x67] sm:$0x1]
      %v215 = vld [vmem:[%s115 + $0x69] sm:$0x1]
      %v216 = vld [vmem:[%s115 + $0x6b] sm:$0x1]
      %v217 = vld [vmem:[%s115 + $0x6d] sm:$0x1]
      %v218 = vld [vmem:[%s115 + $0x6f] sm:$0x1]
      %v219 = vld [vmem:[%s115 + $0x81] sm:$0x1]
      %v220 = vld [vmem:[%s115 + $0x83] sm:$0x1]
      %v221 = vld [vmem:[%s115 + $0x85] sm:$0x1]
      %v222 = vld [vmem:[%s115 + $0x87] sm:$0x1]
      %v223 = vld [vmem:[%s115 + $0x89] sm:$0x1]
      %v224 = vld [vmem:[%s115 + $0x8b] sm:$0x1]
      %v225 = vld [vmem:[%s115 + $0x8d] sm:$0x1]
      %v226 = vld [vmem:[%s115 + $0x8f] sm:$0x1]
      %v227 = vld [vmem:[%s115 + $0xa1] sm:$0x1]
      %v228 = vld [vmem:[%s115 + $0xa3] sm:$0x1]
      %v229 = vld [vmem:[%s115 + $0xa5] sm:$0x1]
      %v230 = vld [vmem:[%s115 + $0xa7] sm:$0x1]
      %v231 = vld [vmem:[%s115 + $0xa9] sm:$0x1]
      %v232 = vld [vmem:[%s115 + $0xab] sm:$0x1]
      %v233 = vld [vmem:[%s115 + $0xad] sm:$0x1]
      %v234 = vld [vmem:[%s115 + $0xaf] sm:$0x1]
      %v235 = vld [vmem:[%s115 + $0xc1] sm:$0x1]
      %v236 = vld [vmem:[%s115 + $0xc3] sm:$0x1]
      %v237 = vld [vmem:[%s115 + $0xc5] sm:$0x1]
      %v238 = vld [vmem:[%s115 + $0xc7] sm:$0x1]
      %v239 = vld [vmem:[%s115 + $0xc9] sm:$0x1]
      %v240 = vld [vmem:[%s115 + $0xcb] sm:$0x1]
      %v241 = vld [vmem:[%s115 + $0xcd] sm:$0x1]
      %v242 = vld [vmem:[%s115 + $0xcf] sm:$0x1]
      %v243 = vld [vmem:[%s115 + $0xe1] sm:$0x1]
      %v244 = vld [vmem:[%s115 + $0xe3] sm:$0x1]
      %v245 = vld [vmem:[%s115 + $0xe5] sm:$0x1]
      %v246 = vld [vmem:[%s115 + $0xe7] sm:$0x1]
      %v247 = vld [vmem:[%s115 + $0xe9] sm:$0x1]
      %v248 = vld [vmem:[%s115 + $0xeb] sm:$0x1]
      %v249 = vld [vmem:[%s115 + $0xed] sm:$0x1]
      %v250 = vld [vmem:[%s115 + $0xef] sm:$0x1]
      %v251 = vmax.f32 %v123, %v187
      %v252 = vmax.f32 %v124, %v188
      %v253 = vmax.f32 %v125, %v189
      %v254 = vmax.f32 %v126, %v190
      %v255 = vmax.f32 %v127, %v191
      %v256 = vmax.f32 %v128, %v192
      %v257 = vmax.f32 %v129, %v193
      %v258 = vmax.f32 %v130, %v194
      %v259 = vmax.f32 %v131, %v195
      %v260 = vmax.f32 %v132, %v196
      %v261 = vmax.f32 %v133, %v197
      %v262 = vmax.f32 %v134, %v198
      %v263 = vmax.f32 %v135, %v199
      %v264 = vmax.f32 %v136, %v200
      %v265 = vmax.f32 %v137, %v201
      %v266 = vmax.f32 %v138, %v202
      %v267 = vmax.f32 %v139, %v203
      %v268 = vmax.f32 %v140, %v204
      %v269 = vmax.f32 %v141, %v205
      %v270 = vmax.f32 %v142, %v206
      %v271 = vmax.f32 %v143, %v207
      %v272 = vmax.f32 %v144, %v208
      %v273 = vmax.f32 %v145, %v209
      %v274 = vmax.f32 %v146, %v210
      %v275 = vmax.f32 %v147, %v211
      %v276 = vmax.f32 %v148, %v212
      %v277 = vmax.f32 %v149, %v213
      %v278 = vmax.f32 %v150, %v214
      %v279 = vmax.f32 %v151, %v215
      %v280 = vmax.f32 %v152, %v216
      %v281 = vmax.f32 %v153, %v217
      %v282 = vmax.f32 %v154, %v218
      %v283 = vmax.f32 %v155, %v219
      %v284 = vmax.f32 %v156, %v220
      %v285 = vmax.f32 %v157, %v221
      %v286 = vmax.f32 %v158, %v222
      %v287 = vmax.f32 %v159, %v223
      %v288 = vmax.f32 %v160, %v224
      %v289 = vmax.f32 %v161, %v225
      %v290 = vmax.f32 %v162, %v226
      %v291 = vmax.f32 %v163, %v227
      %v292 = vmax.f32 %v164, %v228
      %v293 = vmax.f32 %v165, %v229
      %v294 = vmax.f32 %v166, %v230
      %v295 = vmax.f32 %v167, %v231
      %v296 = vmax.f32 %v168, %v232
      %v297 = vmax.f32 %v169, %v233
      %v298 = vmax.f32 %v170, %v234
      %v299 = vmax.f32 %v171, %v235
      %v300 = vmax.f32 %v172, %v236
      %v301 = vmax.f32 %v173, %v237
      %v302 = vmax.f32 %v174, %v238
      %v303 = vmax.f32 %v175, %v239
      %v304 = vmax.f32 %v176, %v240
      %v305 = vmax.f32 %v177, %v241
      %v306 = vmax.f32 %v178, %v242
      %v307 = vmax.f32 %v179, %v243
      %v308 = vmax.f32 %v180, %v244
      %v309 = vmax.f32 %v181, %v245
      %v310 = vmax.f32 %v182, %v246
      %v311 = vmax.f32 %v183, %v247
      %v312 = vmax.f32 %v184, %v248
      %v313 = vmax.f32 %v185, %v249
      %v314 = vmax.f32 %v186, %v250
      %s315 = scalar_lea.vmem %s115, 16
      %v316 = vld [vmem:[%s315] sm:$0x1]
      %v317 = vld [vmem:[%s315 + $0x2] sm:$0x1]
      %v318 = vld [vmem:[%s315 + $0x4] sm:$0x1]
      %v319 = vld [vmem:[%s315 + $0x6] sm:$0x1]
      %v320 = vld [vmem:[%s315 + $0x8] sm:$0x1]
      %v321 = vld [vmem:[%s315 + $0xa] sm:$0x1]
      %v322 = vld [vmem:[%s315 + $0xc] sm:$0x1]
      %v323 = vld [vmem:[%s315 + $0xe] sm:$0x1]
      %v324 = vld [vmem:[%s315 + $0x20] sm:$0x1]
      %v325 = vld [vmem:[%s315 + $0x22] sm:$0x1]
      %v326 = vld [vmem:[%s315 + $0x24] sm:$0x1]
      %v327 = vld [vmem:[%s315 + $0x26] sm:$0x1]
      %v328 = vld [vmem:[%s315 + $0x28] sm:$0x1]
      %v329 = vld [vmem:[%s315 + $0x2a] sm:$0x1]
      %v330 = vld [vmem:[%s315 + $0x2c] sm:$0x1]
      %v331 = vld [vmem:[%s315 + $0x2e] sm:$0x1]
      %v332 = vld [vmem:[%s315 + $0x40] sm:$0x1]
      %v333 = vld [vmem:[%s315 + $0x42] sm:$0x1]
      %v334 = vld [vmem:[%s315 + $0x44] sm:$0x1]
      %v335 = vld [vmem:[%s315 + $0x46] sm:$0x1]
      %v336 = vld [vmem:[%s315 + $0x48] sm:$0x1]
      %v337 = vld [vmem:[%s315 + $0x4a] sm:$0x1]
      %v338 = vld [vmem:[%s315 + $0x4c] sm:$0x1]
      %v339 = vld [vmem:[%s315 + $0x4e] sm:$0x1]
      %v340 = vld [vmem:[%s315 + $0x60] sm:$0x1]
      %v341 = vld [vmem:[%s315 + $0x62] sm:$0x1]
      %v342 = vld [vmem:[%s315 + $0x64] sm:$0x1]
      %v343 = vld [vmem:[%s315 + $0x66] sm:$0x1]
      %v344 = vld [vmem:[%s315 + $0x68] sm:$0x1]
      %v345 = vld [vmem:[%s315 + $0x6a] sm:$0x1]
      %v346 = vld [vmem:[%s315 + $0x6c] sm:$0x1]
      %v347 = vld [vmem:[%s315 + $0x6e] sm:$0x1]
      %v348 = vld [vmem:[%s315 + $0x80] sm:$0x1]
      %v349 = vld [vmem:[%s315 + $0x82] sm:$0x1]
      %v350 = vld [vmem:[%s315 + $0x84] sm:$0x1]
      %v351 = vld [vmem:[%s315 + $0x86] sm:$0x1]
      %v352 = vld [vmem:[%s315 + $0x88] sm:$0x1]
      %v353 = vld [vmem:[%s315 + $0x8a] sm:$0x1]
      %v354 = vld [vmem:[%s315 + $0x8c] sm:$0x1]
      %v355 = vld [vmem:[%s315 + $0x8e] sm:$0x1]
      %v356 = vld [vmem:[%s315 + $0xa0] sm:$0x1]
      %v357 = vld [vmem:[%s315 + $0xa2] sm:$0x1]
      %v358 = vld [vmem:[%s315 + $0xa4] sm:$0x1]
      %v359 = vld [vmem:[%s315 + $0xa6] sm:$0x1]
      %v360 = vld [vmem:[%s315 + $0xa8] sm:$0x1]
      %v361 = vld [vmem:[%s315 + $0xaa] sm:$0x1]
      %v362 = vld [vmem:[%s315 + $0xac] sm:$0x1]
      %v363 = vld [vmem:[%s315 + $0xae] sm:$0x1]
      %v364 = vld [vmem:[%s315 + $0xc0] sm:$0x1]
      %v365 = vld [vmem:[%s315 + $0xc2] sm:$0x1]
      %v366 = vld [vmem:[%s315 + $0xc4] sm:$0x1]
      %v367 = vld [vmem:[%s315 + $0xc6] sm:$0x1]
      %v368 = vld [vmem:[%s315 + $0xc8] sm:$0x1]
      %v369 = vld [vmem:[%s315 + $0xca] sm:$0x1]
      %v370 = vld [vmem:[%s315 + $0xcc] sm:$0x1]
      %v371 = vld [vmem:[%s315 + $0xce] sm:$0x1]
      %v372 = vld [vmem:[%s315 + $0xe0] sm:$0x1]
      %v373 = vld [vmem:[%s315 + $0xe2] sm:$0x1]
      %v374 = vld [vmem:[%s315 + $0xe4] sm:$0x1]
      %v375 = vld [vmem:[%s315 + $0xe6] sm:$0x1]
      %v376 = vld [vmem:[%s315 + $0xe8] sm:$0x1]
      %v377 = vld [vmem:[%s315 + $0xea] sm:$0x1]
      %v378 = vld [vmem:[%s315 + $0xec] sm:$0x1]
      %v379 = vld [vmem:[%s315 + $0xee] sm:$0x1]
      %v380 = vld [vmem:[%s315 + $0x1] sm:$0x1]
      %v381 = vld [vmem:[%s315 + $0x3] sm:$0x1]
      %v382 = vld [vmem:[%s315 + $0x5] sm:$0x1]
      %v383 = vld [vmem:[%s315 + $0x7] sm:$0x1]
      %v384 = vld [vmem:[%s315 + $0x9] sm:$0x1]
      %v385 = vld [vmem:[%s315 + $0xb] sm:$0x1]
      %v386 = vld [vmem:[%s315 + $0xd] sm:$0x1]
      %v387 = vld [vmem:[%s315 + $0xf] sm:$0x1]
      %v388 = vld [vmem:[%s315 + $0x21] sm:$0x1]
      %v389 = vld [vmem:[%s315 + $0x23] sm:$0x1]
      %v390 = vld [vmem:[%s315 + $0x25] sm:$0x1]
      %v391 = vld [vmem:[%s315 + $0x27] sm:$0x1]
      %v392 = vld [vmem:[%s315 + $0x29] sm:$0x1]
      %v393 = vld [vmem:[%s315 + $0x2b] sm:$0x1]
      %v394 = vld [vmem:[%s315 + $0x2d] sm:$0x1]
      %v395 = vld [vmem:[%s315 + $0x2f] sm:$0x1]
      %v396 = vld [vmem:[%s315 + $0x41] sm:$0x1]
      %v397 = vld [vmem:[%s315 + $0x43] sm:$0x1]
      %v398 = vld [vmem:[%s315 + $0x45] sm:$0x1]
      %v399 = vld [vmem:[%s315 + $0x47] sm:$0x1]
      %v400 = vld [vmem:[%s315 + $0x49] sm:$0x1]
      %v401 = vld [vmem:[%s315 + $0x4b] sm:$0x1]
      %v402 = vld [vmem:[%s315 + $0x4d] sm:$0x1]
      %v403 = vld [vmem:[%s315 + $0x4f] sm:$0x1]
      %v404 = vld [vmem:[%s315 + $0x61] sm:$0x1]
      %v405 = vld [vmem:[%s315 + $0x63] sm:$0x1]
      %v406 = vld [vmem:[%s315 + $0x65] sm:$0x1]
      %v407 = vld [vmem:[%s315 + $0x67] sm:$0x1]
      %v408 = vld [vmem:[%s315 + $0x69] sm:$0x1]
      %v409 = vld [vmem:[%s315 + $0x6b] sm:$0x1]
      %v410 = vld [vmem:[%s315 + $0x6d] sm:$0x1]
      %v411 = vld [vmem:[%s315 + $0x6f] sm:$0x1]
      %v412 = vld [vmem:[%s315 + $0x81] sm:$0x1]
      %v413 = vld [vmem:[%s315 + $0x83] sm:$0x1]
      %v414 = vld [vmem:[%s315 + $0x85] sm:$0x1]
      %v415 = vld [vmem:[%s315 + $0x87] sm:$0x1]
      %v416 = vld [vmem:[%s315 + $0x89] sm:$0x1]
      %v417 = vld [vmem:[%s315 + $0x8b] sm:$0x1]
      %v418 = vld [vmem:[%s315 + $0x8d] sm:$0x1]
      %v419 = vld [vmem:[%s315 + $0x8f] sm:$0x1]
      %v420 = vld [vmem:[%s315 + $0xa1] sm:$0x1]
      %v421 = vld [vmem:[%s315 + $0xa3] sm:$0x1]
      %v422 = vld [vmem:[%s315 + $0xa5] sm:$0x1]
      %v423 = vld [vmem:[%s315 + $0xa7] sm:$0x1]
      %v424 = vld [vmem:[%s315 + $0xa9] sm:$0x1]
      %v425 = vld [vmem:[%s315 + $0xab] sm:$0x1]
      %v426 = vld [vmem:[%s315 + $0xad] sm:$0x1]
      %v427 = vld [vmem:[%s315 + $0xaf] sm:$0x1]
      %v428 = vld [vmem:[%s315 + $0xc1] sm:$0x1]
      %v429 = vld [vmem:[%s315 + $0xc3] sm:$0x1]
      %v430 = vld [vmem:[%s315 + $0xc5] sm:$0x1]
      %v431 = vld [vmem:[%s315 + $0xc7] sm:$0x1]
      %v432 = vld [vmem:[%s315 + $0xc9] sm:$0x1]
      %v433 = vld [vmem:[%s315 + $0xcb] sm:$0x1]
      %v434 = vld [vmem:[%s315 + $0xcd] sm:$0x1]
      %v435 = vld [vmem:[%s315 + $0xcf] sm:$0x1]
      %v436 = vld [vmem:[%s315 + $0xe1] sm:$0x1]
      %v437 = vld [vmem:[%s315 + $0xe3] sm:$0x1]
      %v438 = vld [vmem:[%s315 + $0xe5] sm:$0x1]
      %v439 = vld [vmem:[%s315 + $0xe7] sm:$0x1]
      %v440 = vld [vmem:[%s315 + $0xe9] sm:$0x1]
      %v441 = vld [vmem:[%s315 + $0xeb] sm:$0x1]
      %v442 = vld [vmem:[%s315 + $0xed] sm:$0x1]
      %v443 = vld [vmem:[%s315 + $0xef] sm:$0x1]
      %v444 = vmax.f32 %v316, %v380
      %v445 = vmax.f32 %v317, %v381
      %v446 = vmax.f32 %v318, %v382
      %v447 = vmax.f32 %v319, %v383
      %v448 = vmax.f32 %v320, %v384
      %v449 = vmax.f32 %v321, %v385
      %v450 = vmax.f32 %v322, %v386
      %v451 = vmax.f32 %v323, %v387
      %v452 = vmax.f32 %v324, %v388
      %v453 = vmax.f32 %v325, %v389
      %v454 = vmax.f32 %v326, %v390
      %v455 = vmax.f32 %v327, %v391
      %v456 = vmax.f32 %v328, %v392
      %v457 = vmax.f32 %v329, %v393
      %v458 = vmax.f32 %v330, %v394
      %v459 = vmax.f32 %v331, %v395
      %v460 = vmax.f32 %v332, %v396
      %v461 = vmax.f32 %v333, %v397
      %v462 = vmax.f32 %v334, %v398
      %v463 = vmax.f32 %v335, %v399
      %v464 = vmax.f32 %v336, %v400
      %v465 = vmax.f32 %v337, %v401
      %v466 = vmax.f32 %v338, %v402
      %v467 = vmax.f32 %v339, %v403
      %v468 = vmax.f32 %v340, %v404
      %v469 = vmax.f32 %v341, %v405
      %v470 = vmax.f32 %v342, %v406
      %v471 = vmax.f32 %v343, %v407
      %v472 = vmax.f32 %v344, %v408
      %v473 = vmax.f32 %v345, %v409
      %v474 = vmax.f32 %v346, %v410
      %v475 = vmax.f32 %v347, %v411
      %v476 = vmax.f32 %v348, %v412
      %v477 = vmax.f32 %v349, %v413
      %v478 = vmax.f32 %v350, %v414
      %v479 = vmax.f32 %v351, %v415
      %v480 = vmax.f32 %v352, %v416
      %v481 = vmax.f32 %v353, %v417
      %v482 = vmax.f32 %v354, %v418
      %v483 = vmax.f32 %v355, %v419
      %v484 = vmax.f32 %v356, %v420
      %v485 = vmax.f32 %v357, %v421
      %v486 = vmax.f32 %v358, %v422
      %v487 = vmax.f32 %v359, %v423
      %v488 = vmax.f32 %v360, %v424
      %v489 = vmax.f32 %v361, %v425
      %v490 = vmax.f32 %v362, %v426
      %v491 = vmax.f32 %v363, %v427
      %v492 = vmax.f32 %v364, %v428
      %v493 = vmax.f32 %v365, %v429
      %v494 = vmax.f32 %v366, %v430
      %v495 = vmax.f32 %v367, %v431
      %v496 = vmax.f32 %v368, %v432
      %v497 = vmax.f32 %v369, %v433
      %v498 = vmax.f32 %v370, %v434
      %v499 = vmax.f32 %v371, %v435
      %v500 = vmax.f32 %v372, %v436
      %v501 = vmax.f32 %v373, %v437
      %v502 = vmax.f32 %v374, %v438
      %v503 = vmax.f32 %v375, %v439
      %v504 = vmax.f32 %v376, %v440
      %v505 = vmax.f32 %v377, %v441
      %v506 = vmax.f32 %v378, %v442
      %v507 = vmax.f32 %v379, %v443
      %v508 = vmax.f32 %v251, %v444
      %v509 = vmax.f32 %v252, %v445
      %v510 = vmax.f32 %v253, %v446
      %v511 = vmax.f32 %v254, %v447
      %v512 = vmax.f32 %v255, %v448
      %v513 = vmax.f32 %v256, %v449
      %v514 = vmax.f32 %v257, %v450
      %v515 = vmax.f32 %v258, %v451
      %v516 = vmax.f32 %v259, %v452
      %v517 = vmax.f32 %v260, %v453
      %v518 = vmax.f32 %v261, %v454
      %v519 = vmax.f32 %v262, %v455
      %v520 = vmax.f32 %v263, %v456
      %v521 = vmax.f32 %v264, %v457
      %v522 = vmax.f32 %v265, %v458
      %v523 = vmax.f32 %v266, %v459
      %v524 = vmax.f32 %v267, %v460
      %v525 = vmax.f32 %v268, %v461
      %v526 = vmax.f32 %v269, %v462
      %v527 = vmax.f32 %v270, %v463
      %v528 = vmax.f32 %v271, %v464
      %v529 = vmax.f32 %v272, %v465
      %v530 = vmax.f32 %v273, %v466
      %v531 = vmax.f32 %v274, %v467
      %v532 = vmax.f32 %v275, %v468
      %v533 = vmax.f32 %v276, %v469
      %v534 = vmax.f32 %v277, %v470
      %v535 = vmax.f32 %v278, %v471
      %v536 = vmax.f32 %v279, %v472
      %v537 = vmax.f32 %v280, %v473
      %v538 = vmax.f32 %v281, %v474
      %v539 = vmax.f32 %v282, %v475
      %v540 = vmax.f32 %v283, %v476
      %v541 = vmax.f32 %v284, %v477
      %v542 = vmax.f32 %v285, %v478
      %v543 = vmax.f32 %v286, %v479
      %v544 = vmax.f32 %v287, %v480
      %v545 = vmax.f32 %v288, %v481
      %v546 = vmax.f32 %v289, %v482
      %v547 = vmax.f32 %v290, %v483
      %v548 = vmax.f32 %v291, %v484
      %v549 = vmax.f32 %v292, %v485
      %v550 = vmax.f32 %v293, %v486
      %v551 = vmax.f32 %v294, %v487
      %v552 = vmax.f32 %v295, %v488
      %v553 = vmax.f32 %v296, %v489
      %v554 = vmax.f32 %v297, %v490
      %v555 = vmax.f32 %v298, %v491
      %v556 = vmax.f32 %v299, %v492
      %v557 = vmax.f32 %v300, %v493
      %v558 = vmax.f32 %v301, %v494
      %v559 = vmax.f32 %v302, %v495
      %v560 = vmax.f32 %v303, %v496
      %v561 = vmax.f32 %v304, %v497
      %v562 = vmax.f32 %v305, %v498
      %v563 = vmax.f32 %v306, %v499
      %v564 = vmax.f32 %v307, %v500
      %v565 = vmax.f32 %v308, %v501
      %v566 = vmax.f32 %v309, %v502
      %v567 = vmax.f32 %v310, %v503
      %v568 = vmax.f32 %v311, %v504
      %v569 = vmax.f32 %v312, %v505
      %v570 = vmax.f32 %v313, %v506
      %v571 = vmax.f32 %v314, %v507
      %v636 = vrot.slane %v509, 7
      %vm637 = vcmask 1041409
      %v638 = vsel %vm637, %v636, %v508
      %v639 = vrot.slane %v510, 6
      %vm640 = vcmask 1042434
      %v641 = vsel %vm640, %v639, %v638
      %v642 = vrot.slane %v511, 5
      %vm643 = vcmask 1043459
      %v644 = vsel %vm643, %v642, %v641
      %v645 = vrot.slane %v512, 4
      %vm646 = vcmask 1044484
      %v647 = vsel %vm646, %v645, %v644
      %v648 = vrot.slane %v513, 3
      %vm649 = vcmask 1045509
      %v650 = vsel %vm649, %v648, %v647
      %v651 = vrot.slane %v514, 2
      %vm652 = vcmask 1046534
      %v653 = vsel %vm652, %v651, %v650
      %v654 = vrot.slane %v515, 1
      %vm655 = vcmask 1047559
      %v656 = vsel %vm655, %v654, %v653
      %v657 = vrot.slane %v517, 7
      %v658 = vsel %vm637, %v657, %v516
      %v659 = vrot.slane %v518, 6
      %v660 = vsel %vm640, %v659, %v658
      %v661 = vrot.slane %v519, 5
      %v662 = vsel %vm643, %v661, %v660
      %v663 = vrot.slane %v520, 4
      %v664 = vsel %vm646, %v663, %v662
      %v665 = vrot.slane %v521, 3
      %v666 = vsel %vm649, %v665, %v664
      %v667 = vrot.slane %v522, 2
      %v668 = vsel %vm652, %v667, %v666
      %v669 = vrot.slane %v523, 1
      %v670 = vsel %vm655, %v669, %v668
      %v671 = vrot.slane %v525, 7
      %v672 = vsel %vm637, %v671, %v524
      %v673 = vrot.slane %v526, 6
      %v674 = vsel %vm640, %v673, %v672
      %v675 = vrot.slane %v527, 5
      %v676 = vsel %vm643, %v675, %v674
      %v677 = vrot.slane %v528, 4
      %v678 = vsel %vm646, %v677, %v676
      %v679 = vrot.slane %v529, 3
      %v680 = vsel %vm649, %v679, %v678
      %v681 = vrot.slane %v530, 2
      %v682 = vsel %vm652, %v681, %v680
      %v683 = vrot.slane %v531, 1
      %v684 = vsel %vm655, %v683, %v682
      %v685 = vrot.slane %v533, 7
      %v686 = vsel %vm637, %v685, %v532
      %v687 = vrot.slane %v534, 6
      %v688 = vsel %vm640, %v687, %v686
      %v689 = vrot.slane %v535, 5
      %v690 = vsel %vm643, %v689, %v688
      %v691 = vrot.slane %v536, 4
      %v692 = vsel %vm646, %v691, %v690
      %v693 = vrot.slane %v537, 3
      %v694 = vsel %vm649, %v693, %v692
      %v695 = vrot.slane %v538, 2
      %v696 = vsel %vm652, %v695, %v694
      %v697 = vrot.slane %v539, 1
      %v698 = vsel %vm655, %v697, %v696
      %v699 = vrot.slane %v541, 7
      %v700 = vsel %vm637, %v699, %v540
      %v701 = vrot.slane %v542, 6
      %v702 = vsel %vm640, %v701, %v700
      %v703 = vrot.slane %v543, 5
      %v704 = vsel %vm643, %v703, %v702
      %v705 = vrot.slane %v544, 4
      %v706 = vsel %vm646, %v705, %v704
      %v707 = vrot.slane %v545, 3
      %v708 = vsel %vm649, %v707, %v706
      %v709 = vrot.slane %v546, 2
      %v710 = vsel %vm652, %v709, %v708
      %v711 = vrot.slane %v547, 1
      %v712 = vsel %vm655, %v711, %v710
      %v713 = vrot.slane %v549, 7
      %v714 = vsel %vm637, %v713, %v548
      %v715 = vrot.slane %v550, 6
      %v716 = vsel %vm640, %v715, %v714
      %v717 = vrot.slane %v551, 5
      %v718 = vsel %vm643, %v717, %v716
      %v719 = vrot.slane %v552, 4
      %v720 = vsel %vm646, %v719, %v718
      %v721 = vrot.slane %v553, 3
      %v722 = vsel %vm649, %v721, %v720
      %v723 = vrot.slane %v554, 2
      %v724 = vsel %vm652, %v723, %v722
      %v725 = vrot.slane %v555, 1
      %v726 = vsel %vm655, %v725, %v724
      %v727 = vrot.slane %v557, 7
      %v728 = vsel %vm637, %v727, %v556
      %v729 = vrot.slane %v558, 6
      %v730 = vsel %vm640, %v729, %v728
      %v731 = vrot.slane %v559, 5
      %v732 = vsel %vm643, %v731, %v730
      %v733 = vrot.slane %v560, 4
      %v734 = vsel %vm646, %v733, %v732
      %v735 = vrot.slane %v561, 3
      %v736 = vsel %vm649, %v735, %v734
      %v737 = vrot.slane %v562, 2
      %v738 = vsel %vm652, %v737, %v736
      %v739 = vrot.slane %v563, 1
      %v740 = vsel %vm655, %v739, %v738
      %v741 = vrot.slane %v565, 7
      %v742 = vsel %vm637, %v741, %v564
      %v743 = vrot.slane %v566, 6
      %v744 = vsel %vm640, %v743, %v742
      %v745 = vrot.slane %v567, 5
      %v746 = vsel %vm643, %v745, %v744
      %v747 = vrot.slane %v568, 4
      %v748 = vsel %vm646, %v747, %v746
      %v749 = vrot.slane %v569, 3
      %v750 = vsel %vm649, %v749, %v748
      %v751 = vrot.slane %v570, 2
      %v752 = vsel %vm652, %v751, %v750
      %v753 = vrot.slane %v571, 1
      %v754 = vsel %vm655, %v753, %v752
      %vm763 = vcmask 64512
      %764 = vst.msk [vmem:[%s121] sm:$0xff] %vm763, %v656
      %765 = vst.msk [vmem:[%s121 + $0x8] sm:$0xff] %vm763, %v670
      %766 = vst.msk [vmem:[%s121 + $0x10] sm:$0xff] %vm763, %v684
      %767 = vst.msk [vmem:[%s121 + $0x18] sm:$0xff] %vm763, %v698
      %768 = vst.msk [vmem:[%s121 + $0x20] sm:$0xff] %vm763, %v712
      %769 = vst.msk [vmem:[%s121 + $0x28] sm:$0xff] %vm763, %v726
      %770 = vst.msk [vmem:[%s121 + $0x30] sm:$0xff] %vm763, %v740
      %771 = vst.msk [vmem:[%s121 + $0x38] sm:$0xff] %vm763, %v754
      %s772 = smul.u32 8, %s12
      %p773 = scmp.lt.s32.totalorder %s772, 15
      %s774 = scalar_select %p773, %s772, 15
      %s775 = smul.addr %s774, 8
      %s776 = scalar_lea.vmem %s1, %s775
      // Predicated region
      $region25: #{unet_ag_forward.16} parent=23 // pred_check
        %p777 = pneg %p56
      $region26: #{unet_ag_forward.16} parent=23 // pred_check_branch
        %779 = sbr.rel (%p777) target = $region28
      $region27: #{unet_ag_forward.16} parent=23 // pred_region
        %s780 = smul.u32 8, %s12
      $region28: #{unet_ag_forward.16} parent=23 // pred_fallthru
        _
    $region24: #{unet_ag_forward.16} parent=5 // pred_fallthru
      _
    %p781 = scmp.le.s32.totalorder 2, %s7
    // Predicated region
    $region29: #{unet_ag_forward.16} parent=5 // pred_check
      %p782 = pneg %p781
    $region30: #{unet_ag_forward.16} parent=5 // pred_check_branch
      %784 = sbr.rel (%p782) target = $region32
    $region31: #{unet_ag_forward.16} parent=5 // pred_region
      %s785 = ssub.s32 %s7, 2
      // Predicated region
      $region33: #{unet_ag_forward.16} parent=31 // pred_check
        %p786 = pneg %p62
      $region34: #{unet_ag_forward.16} parent=31 // pred_check_branch
        %788 = sbr.rel (%p786) target = $region36
      $region35: #{unet_ag_forward.16} parent=31 // pred_region
        %s789 = smul.u32 8, %s13
        %p790 = scmp.lt.s32.totalorder %s789, 15
        %s791 = scalar_select %p790, %s789, 15
        %s792 = smul.addr %s791, 8
        %s793 = scalar_lea.vmem %s1, %s792
      $region36: #{unet_ag_forward.16} parent=31 // pred_fallthru
        _
    $region32: #{unet_ag_forward.16} parent=5 // pred_fallthru
      _
  $region6: #{unet_ag_forward.16} parent=0 // loop_footer
    %s11 = sadd.s32 1, %s7
  $region7: #{unet_ag_forward.16} parent=0 // loop_footer_branch
    %6 = sbr.rel target = $region3
  $region8: #{unet_ag_forward.16} parent=0 // loop_exit
    _

// kernel: unet_ag_forward.18
$region0: #{unet_ag_forward.18}
  #allocation0 [shape = 'u32[]', space=smem, size = 0x4, offset = 0x4, fixed_abs, tag = 'smem constant byte address 0x4 - core index']
  #allocation1 [shape = 'u32[144,128]{1,0:T(1,128)}', space=vmem, size = 0x12000, scoped, tag = 'internal scratch']
  %s0 = inlined_call_operand.vmem [shape: f32[160,48], index: 0, kind: input, shape index: {}]
  %s1 = inlined_call_operand.vmem [shape: bf16[3,48,16], index: 1, kind: input, shape index: {}]
  %s2 = inlined_call_operand.vmem [shape: f32[1,16], index: 2, kind: input, shape index: {}]
  %s3 = inlined_call_operand.vmem [shape: f32[128,16], index: 3, kind: output, shape index: {}]
  %s4 = sld [smem:[#allocation0]]
  $region45: #{unet_ag_forward.18} parent=0
    _
  %s6 = ssub.s32 1, %s4
  %s7 = scalar_select 0, %s6, %s4
  loop: start=0, step=1, limit=4
  $region2: #{unet_ag_forward.18} parent=0 // loop_pre_header
    _
  $region3: #{unet_ag_forward.18} parent=0 // loop_header
    %s9 = sphi 0, %s13
    %p10 = scmp.ge.s32.totalorder %s9, 4
    %s19 = sphi 0, %s21
    %s22 = sphi 0, %s19
    %s23 = sphi 0, %s22
    %s39 = sphi 0, %s23
    %s43 = sphi 0, %s43
    %s45 = sphi 0, %s43
    %s46 = sphi 0, %s45
    %s60 = sphi 0, %s46
    %s64 = sphi 0, %s64
    %s66 = sphi 0, %s64
    %s67 = sphi 0, %s66
    %s81 = sphi 0, %s67
    %s87 = sphi 0, %s89
    %s90 = sphi 0, %s87
    %s91 = sphi 0, %s90
    %s107 = sphi 0, %s91
  $region4: #{unet_ag_forward.18} parent=0 // loop_header_branch
    %12 = sbr.rel (%p10) target = $region8
  $region5: #{unet_ag_forward.18} parent=0 // loop_body
    %s14 = ssub.s32 %s9, 1
    %s15 = ssub.s32 %s9, 2
    %s16 = sadd.s32 %s9, 1
    %s17 = ssub.s32 %s9, %s16
    %p18 = scmp.eq.s32.totalorder %s17, 0
    %s20 = sadd.s32 %s19, 1
    %s21 = scalar_select %p18, %s19, %s20
    %p24 = pneg %p18
    %p25 = scmp.eq.s32.totalorder %s9, 1
    %p26 = por %p24, %p25
    %p27 = scmp.ne.s32.totalorder %s19, %s22
    %p28 = scmp.eq.s32.totalorder %s9, 0
    %p29 = por %p27, %p28
    %p30 = scmp.ne.s32.totalorder %s19, %s22
    %p31 = scmp.eq.s32.totalorder %s14, 1
    %p32 = por %p30, %p31
    %p33 = scmp.ne.s32.totalorder %s22, %s23
    %p34 = scmp.eq.s32.totalorder %s14, 0
    %p35 = por %p33, %p34
    %p36 = scmp.ne.s32.totalorder %s22, %s23
    %p37 = scmp.eq.s32.totalorder %s15, 1
    %p38 = por %p36, %p37
    %p40 = scmp.ne.s32.totalorder %s23, %s39
    %p41 = scmp.eq.s32.totalorder %s15, 0
    %p42 = por %p40, %p41
    %s44 = sadd.s32 %s43, 1
    %p47 = scmp.eq.s32.totalorder %s9, 1
    %p48 = scmp.ne.s32.totalorder %s43, %s45
    %p49 = scmp.eq.s32.totalorder %s9, 0
    %p50 = por %p48, %p49
    %p51 = scmp.ne.s32.totalorder %s43, %s45
    %p52 = scmp.eq.s32.totalorder %s14, 1
    %p53 = por %p51, %p52
    %p54 = scmp.ne.s32.totalorder %s45, %s46
    %p55 = scmp.eq.s32.totalorder %s14, 0
    %p56 = por %p54, %p55
    %p57 = scmp.ne.s32.totalorder %s45, %s46
    %p58 = scmp.eq.s32.totalorder %s15, 1
    %p59 = por %p57, %p58
    %p61 = scmp.ne.s32.totalorder %s46, %s60
    %p62 = scmp.eq.s32.totalorder %s15, 0
    %p63 = por %p61, %p62
    %s65 = sadd.s32 %s64, 1
    %p68 = scmp.eq.s32.totalorder %s9, 1
    %p69 = scmp.ne.s32.totalorder %s64, %s66
    %p70 = scmp.eq.s32.totalorder %s9, 0
    %p71 = por %p69, %p70
    %p72 = scmp.ne.s32.totalorder %s64, %s66
    %p73 = scmp.eq.s32.totalorder %s14, 1
    %p74 = por %p72, %p73
    %p75 = scmp.ne.s32.totalorder %s66, %s67
    %p76 = scmp.eq.s32.totalorder %s14, 0
    %p77 = por %p75, %p76
    %p78 = scmp.ne.s32.totalorder %s66, %s67
    %p79 = scmp.eq.s32.totalorder %s15, 1
    %p80 = por %p78, %p79
    %p82 = scmp.ne.s32.totalorder %s67, %s81
    %p83 = scmp.eq.s32.totalorder %s15, 0
    %p84 = por %p82, %p83
    %s85 = ssub.s32 %s9, %s16
    %p86 = scmp.eq.s32.totalorder %s85, 0
    %s88 = sadd.s32 %s87, 1
    %s89 = scalar_select %p86, %s87, %s88
    %p92 = pneg %p86
    %p93 = scmp.eq.s32.totalorder %s9, 1
    %p94 = por %p92, %p93
    %p95 = scmp.ne.s32.totalorder %s87, %s90
    %p96 = scmp.eq.s32.totalorder %s9, 0
    %p97 = por %p95, %p96
    %p98 = scmp.ne.s32.totalorder %s87, %s90
    %p99 = scmp.eq.s32.totalorder %s14, 1
    %p100 = por %p98, %p99
    %p101 = scmp.ne.s32.totalorder %s90, %s91
    %p102 = scmp.eq.s32.totalorder %s14, 0
    %p103 = por %p101, %p102
    %p104 = scmp.ne.s32.totalorder %s90, %s91
    %p105 = scmp.eq.s32.totalorder %s15, 1
    %p106 = por %p104, %p105
    %p108 = scmp.ne.s32.totalorder %s91, %s107
    %p109 = scmp.eq.s32.totalorder %s15, 0
    %p110 = por %p108, %p109
    %p111 = scmp.le.s32.totalorder 1, %s9
    %p112 = scmp.lt.s32.totalorder %s9, 3
    %p113 = pnand %p111, %p112
    %p114 = pneg %p113
    // Predicated region
    $region9: #{unet_ag_forward.18} parent=5 // pred_check
      _
    $region10: #{unet_ag_forward.18} parent=5 // pred_check_branch
      %116 = sbr.rel (%p113) target = $region12
    $region11: #{unet_ag_forward.18} parent=5 // pred_region
      %s117 = ssub.s32 %s9, 1
      // Predicated region
      $region13: #{unet_ag_forward.18} parent=11 // pred_check
        %p118 = pneg %p56
      $region14: #{unet_ag_forward.18} parent=11 // pred_check_branch
        %120 = sbr.rel (%p118) target = $region16
      $region15: #{unet_ag_forward.18} parent=11 // pred_region
        _
      $region16: #{unet_ag_forward.18} parent=11 // pred_fallthru
        _
      // Predicated region
      $region17: #{unet_ag_forward.18} parent=11 // pred_check
        %p121 = pneg %p77
      $region18: #{unet_ag_forward.18} parent=11 // pred_check_branch
        %123 = sbr.rel (%p121) target = $region20
      $region19: #{unet_ag_forward.18} parent=11 // pred_region
        _
      $region20: #{unet_ag_forward.18} parent=11 // pred_fallthru
        _
    $region12: #{unet_ag_forward.18} parent=5 // pred_fallthru
      _
    %p124 = scmp.lt.s32.totalorder %s9, 2
    // Predicated region
    $region21: #{unet_ag_forward.18} parent=5 // pred_check
      %p125 = pneg %p124
    $region22: #{unet_ag_forward.18} parent=5 // pred_check_branch
      %127 = sbr.rel (%p125) target = $region24
    $region23: #{unet_ag_forward.18} parent=5 // pred_region
      // Predicated region
      $region25: #{unet_ag_forward.18} parent=23 // pred_check
        %p128 = pneg %p29
      $region26: #{unet_ag_forward.18} parent=23 // pred_check_branch
        %130 = sbr.rel (%p128) target = $region28
      $region27: #{unet_ag_forward.18} parent=23 // pred_region
        %s131 = smul.u32 10, %s9
        %p132 = scmp.lt.s32.totalorder %s131, 19
        %s133 = scalar_select %p132, %s131, 19
        %s134 = smul.addr %s133, 8
        %s135 = scalar_lea.vmem %s0, %s134
        %s136 = smul.u32 10, %s9
      $region28: #{unet_ag_forward.18} parent=23 // pred_fallthru
        _
    $region24: #{unet_ag_forward.18} parent=5 // pred_fallthru
      _
    %p137 = scmp.le.s32.totalorder 1, %s9
    %p138 = scmp.lt.s32.totalorder %s9, 3
    %p139 = pnand %p137, %p138
    %p140 = pneg %p139
    // Predicated region
    $region29: #{unet_ag_forward.18} parent=5 // pred_check
      _
    $region30: #{unet_ag_forward.18} parent=5 // pred_check_branch
      %142 = sbr.rel (%p139) target = $region32
    $region31: #{unet_ag_forward.18} parent=5 // pred_region
      %s143 = ssub.s32 %s9, 1
      %s144 = smul.u32 10, %s14
      %p145 = scmp.lt.s32.totalorder %s144, 19
      %s146 = scalar_select %p145, %s144, 19
      %s147 = smul.addr %s146, 8
      %s148 = scalar_lea.vmem %s0, %s147
      %p149 = pneg %p35
      %p150 = pneg %p32
      %p151 = pneg %p56
      %p152 = pneg %p53
      %p153 = pneg %p77
      %p154 = pneg %p74
      %p155 = pneg %p103
      %p156 = pneg %p100
      %s157 = smul.u32 8, %s14
      %p158 = scmp.lt.s32.totalorder %s157, 15
      %s159 = scalar_select %p158, %s157, 15
      %s160 = smul.addr %s159, 8
      %s161 = scalar_lea.vmem %s3, %s160
      %s162 = smul.u32 10, %s14
      %p163 = scmp.lt.s32.totalorder %s162, 19
      %s164 = scalar_select %p163, %s162, 19
      %s165 = smul.addr %s164, 8
      %s166 = scalar_lea.vmem %s0, %s165
      %s167 = smul.u32 10, %s14
      %s168 = smul.u32 8, %s14
      %p169 = scmp.lt.s32.totalorder %s168, 15
      %s170 = scalar_select %p169, %s168, 15
      %s171 = smul.addr %s170, 8
      %s172 = scalar_lea.vmem %s3, %s171
      %s173 = smul.u32 8, %s14
      %v175 = vld [vmem:[%s166] sm:$0xff]
      %v176 = vld [vmem:[%s166 + $0x8] sm:$0xff]
      %v177 = vld [vmem:[%s166 + $0x10] sm:$0xff]
      %v178 = vld [vmem:[%s166 + $0x18] sm:$0xff]
      %v179 = vld [vmem:[%s166 + $0x20] sm:$0xff]
      %v180 = vld [vmem:[%s166 + $0x28] sm:$0xff]
      %v181 = vld [vmem:[%s166 + $0x30] sm:$0xff]
      %v182 = vld [vmem:[%s166 + $0x38] sm:$0xff]
      %v183 = vpack.c.bf16 %v176, %v175
      %v184 = vpack.c.bf16 %v178, %v177
      %v185 = vpack.c.bf16 %v180, %v179
      %v186 = vpack.c.bf16 %v182, %v181
      %v187 = vld [vmem:[%s1] sm:$0xf]
      %v188 = vld [vmem:[%s1 + $0x4] sm:$0xf]
      %v189 = vld [vmem:[%s1 + $0x8] sm:$0xf]
      %v190 = vld [vmem:[%s1 + $0xc] sm:$0xf]
      %v191 = vld [vmem:[%s1 + $0x10] sm:$0xf]
      %v192 = vld [vmem:[%s1 + $0x14] sm:$0xf]
      %v193 = vld [vmem:[%s166 + $0x40] sm:$0xff]
      %v194 = vpack.c.bf16 %v177, %v176
      %v195 = vpack.c.bf16 %v179, %v178
      %v196 = vpack.c.bf16 %v181, %v180
      %v197 = vpack.c.bf16 %v193, %v182
      %s198 = scalar_lea.vmem %s1, 24
      %v199 = vld [vmem:[%s198] sm:$0xf]
      %v200 = vld [vmem:[%s198 + $0x4] sm:$0xf]
      %v201 = vld [vmem:[%s198 + $0x8] sm:$0xf]
      %v202 = vld [vmem:[%s198 + $0xc] sm:$0xf]
      %v203 = vld [vmem:[%s198 + $0x10] sm:$0xf]
      %v204 = vld [vmem:[%s198 + $0x14] sm:$0xf]
      %v211 = vunpack.c.l.b16 %v199
      %v212 = vunpack.c.l.b16 %v200
      %v213 = vunpack.c.l.b16 %v201
      %v214 = vunpack.c.l.b16 %v202
      %v215 = vunpack.c.l.b16 %v203
      %v216 = vunpack.c.l.b16 %v204
      %v217 = vpack.c.b16 %v212, %v211
      %v218 = vpack.c.b16 %v214, %v213
      %v219 = vpack.c.b16 %v216, %v215
      %vm223 = vcmask 392192
      %v225 = vsel %vm223, %v194, 0
      %v228 = vsel %vm223, %v195, 0
      %v231 = vsel %vm223, %v196, 0
      %v234 = vsel %vm223, %v197, 0
      %236 = vmatprep.subr.bf16.mxu0 0
      %237 = vmatpush1.bf16.msra.mxu0 %v217
      %238 = vmatprep.subr.bf16.mxu0 0
      %239 = vmatpush1.bf16.msra.mxu0 %v218
      %240 = vmatprep.subr.bf16.mxu0 0
      %241 = vmatpush1.bf16.msra.mxu0 %v219
      %242 = vmatprep.subr.bf16.mxu0 0
      %243 = vmatpush1.bf16.msra.mxu0 0
      %244 = vmatprep.subr.bf16.mxu0 0
      %245 = vmatpush1.bf16.msra.mxu0 0
      %246 = vmatprep.subr.bf16.mxu0 0
      %247 = vmatpush1.bf16.msra.mxu0 0
      %248 = vmatprep.subr.bf16.mxu0 0
      %249 = vmatpush1.bf16.msra.mxu0 0
      %250 = vmatprep.subr.bf16.mxu0 0
      %251 = vmatpush1.bf16.msra.mxu0 0
      %252 = vmatprep.subr.bf16.mxu0 0
      %253 = vmatpush1.bf16.msra.mxu0 0
      %254 = vmatprep.subr.bf16.mxu0 0
      %255 = vmatpush1.bf16.msra.mxu0 0
      %256 = vmatprep.subr.bf16.mxu0 0
      %257 = vmatpush1.bf16.msra.mxu0 0
      %258 = vmatprep.subr.bf16.mxu0 0
      %259 = vmatpush1.bf16.msra.mxu0 0
      %260 = vmatprep.subr.bf16.mxu0 0
      %261 = vmatpush1.bf16.msra.mxu0 0
      %262 = vmatprep.subr.bf16.mxu0 0
      %263 = vmatpush1.bf16.msra.mxu0 0
      %264 = vmatprep.subr.bf16.mxu0 0
      %265 = vmatpush1.bf16.msra.mxu0 0
      %266 = vmatprep.subr.bf16.mxu0 0
      %267 = vmatpush1.bf16.msra.mxu0 0
      %268 = vmatprep.mubr.bf16.mxu0 0
      %269 = vmatmul.mubr.bf16.gmra.mrb[0].mxu0 %v225
      %v270 = vpop.f32.mrb[0].mxu0
      %v271 = vadd.f32 0.0, %v270
      %v272 = vpop.f32.mrb[0].mxu0
      %v273 = vpop.f32.mrb[0].mxu0
      %v274 = vadd.f32 0.0, %v273
      %v275 = vpop.f32.mrb[0].mxu0
      %276 = vmatprep.mubr.bf16.mxu0 0
      %277 = vmatmul.mubr.bf16.gmra.mrb[0].mxu0 %v228
      %v278 = vpop.f32.mrb[0].mxu0
      %v279 = vadd.f32 0.0, %v278
      %v280 = vpop.f32.mrb[0].mxu0
      %v281 = vpop.f32.mrb[0].mxu0
      %v282 = vadd.f32 0.0, %v281
      %v283 = vpop.f32.mrb[0].mxu0
      %284 = vmatprep.mubr.bf16.mxu0 0
      %285 = vmatmul.mubr.bf16.gmra.mrb[0].mxu0 %v231
      %v286 = vpop.f32.mrb[0].mxu0
      %v287 = vadd.f32 0.0, %v286
      %v288 = vpop.f32.mrb[0].mxu0
      %v289 = vpop.f32.mrb[0].mxu0
      %v290 = vadd.f32 0.0, %v289
      %v291 = vpop.f32.mrb[0].mxu0
      %292 = vmatprep.mubr.bf16.mxu0 0
      %293 = vmatmul.mubr.bf16.gmra.mrb[0].mxu0 %v234
      %v294 = vpop.f32.mrb[0].mxu0
      %v295 = vadd.f32 0.0, %v294
      %v296 = vpop.f32.mrb[0].mxu0
      %v297 = vpop.f32.mrb[0].mxu0
      %v298 = vadd.f32 0.0, %v297
      %v299 = vpop.f32.mrb[0].mxu0
      %300 = vdwg.mxu0
      %v307 = vunpack.c.l.b16 %v187
      %v308 = vunpack.c.l.b16 %v188
      %v309 = vunpack.c.l.b16 %v189
      %v310 = vunpack.c.l.b16 %v190
      %v311 = vunpack.c.l.b16 %v191
      %v312 = vunpack.c.l.b16 %v192
      %v313 = vpack.c.b16 %v308, %v307
      %v314 = vpack.c.b16 %v310, %v309
      %v315 = vpack.c.b16 %v312, %v311
      %v320 = vsel %vm223, %v183, 0
      %v323 = vsel %vm223, %v184, 0
      %v326 = vsel %vm223, %v185, 0
      %v329 = vsel %vm223, %v186, 0
      %331 = vmatprep.subr.bf16.mxu0 0
      %332 = vmatpush1.bf16.msra.mxu0 %v313
      %333 = vmatprep.subr.bf16.mxu0 0
      %334 = vmatpush1.bf16.msra.mxu0 %v314
      %335 = vmatprep.subr.bf16.mxu0 0
      %336 = vmatpush1.bf16.msra.mxu0 %v315
      %337 = vmatprep.subr.bf16.mxu0 0
      %338 = vmatpush1.bf16.msra.mxu0 0
      %339 = vmatprep.subr.bf16.mxu0 0
      %340 = vmatpush1.bf16.msra.mxu0 0
      %341 = vmatprep.subr.bf16.mxu0 0
      %342 = vmatpush1.bf16.msra.mxu0 0
      %343 = vmatprep.subr.bf16.mxu0 0
      %344 = vmatpush1.bf16.msra.mxu0 0
      %345 = vmatprep.subr.bf16.mxu0 0
      %346 = vmatpush1.bf16.msra.mxu0 0
      %347 = vmatprep.subr.bf16.mxu0 0
      %348 = vmatpush1.bf16.msra.mxu0 0
      %349 = vmatprep.subr.bf16.mxu0 0
      %350 = vmatpush1.bf16.msra.mxu0 0
      %351 = vmatprep.subr.bf16.mxu0 0
      %352 = vmatpush1.bf16.msra.mxu0 0
      %353 = vmatprep.subr.bf16.mxu0 0
      %354 = vmatpush1.bf16.msra.mxu0 0
      %355 = vmatprep.subr.bf16.mxu0 0
      %356 = vmatpush1.bf16.msra.mxu0 0
      %357 = vmatprep.subr.bf16.mxu0 0
      %358 = vmatpush1.bf16.msra.mxu0 0
      %359 = vmatprep.subr.bf16.mxu0 0
      %360 = vmatpush1.bf16.msra.mxu0 0
      %361 = vmatprep.subr.bf16.mxu0 0
      %362 = vmatpush1.bf16.msra.mxu0 0
      %363 = vmatprep.mubr.bf16.mxu0 0
      %364 = vmatmul.mubr.bf16.gmra.mrb[0].mxu0 %v320
      %v365 = vpop.f32.mrb[0].mxu0
      %v366 = vadd.f32 %v271, %v365
      %v367 = vpop.f32.mrb[0].mxu0
      %v368 = vpop.f32.mrb[0].mxu0
      %v369 = vadd.f32 %v274, %v368
      %v370 = vpop.f32.mrb[0].mxu0
      %371 = vmatprep.mubr.bf16.mxu0 0
      %372 = vmatmul.mubr.bf16.gmra.mrb[0].mxu0 %v323
      %v373 = vpop.f32.mrb[0].mxu0
      %v374 = vadd.f32 %v279, %v373
      %v375 = vpop.f32.mrb[0].mxu0
      %v376 = vpop.f32.mrb[0].mxu0
      %v377 = vadd.f32 %v282, %v376
      %v378 = vpop.f32.mrb[0].mxu0
      %379 = vmatprep.mubr.bf16.mxu0 0
      %380 = vmatmul.mubr.bf16.gmra.mrb[0].mxu0 %v326
      %v381 = vpop.f32.mrb[0].mxu0
      %v382 = vadd.f32 %v287, %v381
      %v383 = vpop.f32.mrb[0].mxu0
      %v384 = vpop.f32.mrb[0].mxu0
      %v385 = vadd.f32 %v290, %v384
      %v386 = vpop.f32.mrb[0].mxu0
      %387 = vmatprep.mubr.bf16.mxu0 0
      %388 = vmatmul.mubr.bf16.gmra.mrb[0].mxu0 %v329
      %v389 = vpop.f32.mrb[0].mxu0
      %v390 = vadd.f32 %v295, %v389
      %v391 = vpop.f32.mrb[0].mxu0
      %v392 = vpop.f32.mrb[0].mxu0
      %v393 = vadd.f32 %v298, %v392
      %v394 = vpop.f32.mrb[0].mxu0
      %395 = vdwg.mxu0
      %v396 = vld [vmem:[%s166 + $0x10] sm:$0xff]
      %v397 = vld [vmem:[%s166 + $0x18] sm:$0xff]
      %v398 = vld [vmem:[%s166 + $0x20] sm:$0xff]
      %v399 = vld [vmem:[%s166 + $0x28] sm:$0xff]
      %v400 = vld [vmem:[%s166 + $0x30] sm:$0xff]
      %v401 = vld [vmem:[%s166 + $0x38] sm:$0xff]
      %v402 = vld [vmem:[%s166 + $0x40] sm:$0xff]
      %v403 = vld [vmem:[%s166 + $0x48] sm:$0xff]
      %v404 = vpack.c.bf16 %v397, %v396
      %v405 = vpack.c.bf16 %v399, %v398
      %v406 = vpack.c.bf16 %v401, %v400
      %v407 = vpack.c.bf16 %v403, %v402
      %s408 = scalar_lea.vmem %s1, 48
      %v409 = vld [vmem:[%s408] sm:$0xf]
      %v410 = vld [vmem:[%s408 + $0x4] sm:$0xf]
      %v411 = vld [vmem:[%s408 + $0x8] sm:$0xf]
      %v412 = vld [vmem:[%s408 + $0xc] sm:$0xf]
      %v413 = vld [vmem:[%s408 + $0x10] sm:$0xf]
      %v414 = vld [vmem:[%s408 + $0x14] sm:$0xf]
      %v421 = vunpack.c.l.b16 %v409
      %v422 = vunpack.c.l.b16 %v410
      %v423 = vunpack.c.l.b16 %v411
      %v424 = vunpack.c.l.b16 %v412
      %v425 = vunpack.c.l.b16 %v413
      %v426 = vunpack.c.l.b16 %v414
      %v427 = vpack.c.b16 %v422, %v421
      %v428 = vpack.c.b16 %v424, %v423
      %v429 = vpack.c.b16 %v426, %v425
      %v434 = vsel %vm223, %v404, 0
      %v437 = vsel %vm223, %v405, 0
      %v440 = vsel %vm223, %v406, 0
      %v443 = vsel %vm223, %v407, 0
      %445 = vmatprep.subr.bf16.mxu0 0
      %446 = vmatpush1.bf16.msra.mxu0 %v427
      %447 = vmatprep.subr.bf16.mxu0 0
      %448 = vmatpush1.bf16.msra.mxu0 %v428
      %449 = vmatprep.subr.bf16.mxu0 0
      %450 = vmatpush1.bf16.msra.mxu0 %v429
      %451 = vmatprep.subr.bf16.mxu0 0
      %452 = vmatpush1.bf16.msra.mxu0 0
      %453 = vmatprep.subr.bf16.mxu0 0
      %454 = vmatpush1.bf16.msra.mxu0 0
      %455 = vmatprep.subr.bf16.mxu0 0
      %456 = vmatpush1.bf16.msra.mxu0 0
      %457 = vmatprep.subr.bf16.mxu0 0
      %458 = vmatpush1.bf16.msra.mxu0 0
      %459 = vmatprep.subr.bf16.mxu0 0
      %460 = vmatpush1.bf16.msra.mxu0 0
      %461 = vmatprep.subr.bf16.mxu0 0
      %462 = vmatpush1.bf16.msra.mxu0 0
      %463 = vmatprep.subr.bf16.mxu0 0
      %464 = vmatpush1.bf16.msra.mxu0 0
      %465 = vmatprep.subr.bf16.mxu0 0
      %466 = vmatpush1.bf16.msra.mxu0 0
      %467 = vmatprep.subr.bf16.mxu0 0
      %468 = vmatpush1.bf16.msra.mxu0 0
      %469 = vmatprep.subr.bf16.mxu0 0
      %470 = vmatpush1.bf16.msra.mxu0 0
      %471 = vmatprep.subr.bf16.mxu0 0
      %472 = vmatpush1.bf16.msra.mxu0 0
      %473 = vmatprep.subr.bf16.mxu0 0
      %474 = vmatpush1.bf16.msra.mxu0 0
      %475 = vmatprep.subr.bf16.mxu0 0
      %476 = vmatpush1.bf16.msra.mxu0 0
      %477 = vmatprep.mubr.bf16.mxu0 0
      %478 = vmatmul.mubr.bf16.gmra.mrb[0].mxu0 %v434
      %v479 = vpop.f32.mrb[0].mxu0
      %v480 = vadd.f32 0.0, %v479
      %v481 = vpop.f32.mrb[0].mxu0
      %v482 = vpop.f32.mrb[0].mxu0
      %v483 = vadd.f32 0.0, %v482
      %v484 = vpop.f32.mrb[0].mxu0
      %485 = vmatprep.mubr.bf16.mxu0 0
      %486 = vmatmul.mubr.bf16.gmra.mrb[0].mxu0 %v437
      %v487 = vpop.f32.mrb[0].mxu0
      %v488 = vadd.f32 0.0, %v487
      %v489 = vpop.f32.mrb[0].mxu0
      %v490 = vpop.f32.mrb[0].mxu0
      %v491 = vadd.f32 0.0, %v490
      %v492 = vpop.f32.mrb[0].mxu0
      %493 = vmatprep.mubr.bf16.mxu0 0
      %494 = vmatmul.mubr.bf16.gmra.mrb[0].mxu0 %v440
      %v495 = vpop.f32.mrb[0].mxu0
      %v496 = vadd.f32 0.0, %v495
      %v497 = vpop.f32.mrb[0].mxu0
      %v498 = vpop.f32.mrb[0].mxu0
      %v499 = vadd.f32 0.0, %v498
      %v500 = vpop.f32.mrb[0].mxu0
      %501 = vmatprep.mubr.bf16.mxu0 0
      %502 = vmatmul.mubr.bf16.gmra.mrb[0].mxu0 %v443
      %v503 = vpop.f32.mrb[0].mxu0
      %v504 = vadd.f32 0.0, %v503
      %v505 = vpop.f32.mrb[0].mxu0
      %v506 = vpop.f32.mrb[0].mxu0
      %v507 = vadd.f32 0.0, %v506
      %v508 = vpop.f32.mrb[0].mxu0
      %509 = vdwg.mxu0
      %v510 = vadd.f32 %v366, %v480
      %v511 = vadd.f32 %v369, %v483
      %v512 = vadd.f32 %v374, %v488
      %v513 = vadd.f32 %v377, %v491
      %v514 = vadd.f32 %v382, %v496
      %v515 = vadd.f32 %v385, %v499
      %v516 = vadd.f32 %v390, %v504
      %v517 = vadd.f32 %v393, %v507
      %v518 = vld [vmem:[%s2] sm:$0x1]
      %v520 = vlaneseq
      %v521 = vshrl.u32 %v520, 7
      %v522 = vsub.s32 0, %v521
      %v523 = vrot.slane %v518, %v522
      %v525 = vadd.f32 %v510, %v523
      %v526 = vadd.f32 %v511, %v523
      %v527 = vadd.f32 %v512, %v523
      %v528 = vadd.f32 %v513, %v523
      %v529 = vadd.f32 %v514, %v523
      %v530 = vadd.f32 %v515, %v523
      %v531 = vadd.f32 %v516, %v523
      %v532 = vadd.f32 %v517, %v523
      %v533 = vmax.f32 %v525, 0.0
      %v534 = vmax.f32 %v526, 0.0
      %v535 = vmax.f32 %v527, 0.0
      %v536 = vmax.f32 %v528, 0.0
      %v537 = vmax.f32 %v529, 0.0
      %v538 = vmax.f32 %v530, 0.0
      %v539 = vmax.f32 %v531, 0.0
      %v540 = vmax.f32 %v532, 0.0
      %vm541 = vcmask 130048
      %542 = vst.msk [vmem:[%s172] sm:$0xff] %vm541, %v533
      %543 = vst.msk [vmem:[%s172 + $0x8] sm:$0xff] %vm541, %v534
      %544 = vst.msk [vmem:[%s172 + $0x10] sm:$0xff] %vm541, %v535
      %545 = vst.msk [vmem:[%s172 + $0x18] sm:$0xff] %vm541, %v536
      %546 = vst.msk [vmem:[%s172 + $0x20] sm:$0xff] %vm541, %v537
      %547 = vst.msk [vmem:[%s172 + $0x28] sm:$0xff] %vm541, %v538
      %548 = vst.msk [vmem:[%s172 + $0x30] sm:$0xff] %vm541, %v539
      %549 = vst.msk [vmem:[%s172 + $0x38] sm:$0xff] %vm541, %v540
      %s550 = smul.u32 8, %s14
      %p551 = scmp.lt.s32.totalorder %s550, 15
      %s552 = scalar_select %p551, %s550, 15
      %s553 = smul.addr %s552, 8
      %s554 = scalar_lea.vmem %s3, %s553
      // Predicated region
      $region33: #{unet_ag_forward.18} parent=31 // pred_check
        %p555 = pneg %p100
      $region34: #{unet_ag_forward.18} parent=31 // pred_check_branch
        %557 = sbr.rel (%p555) target = $region36
      $region35: #{unet_ag_forward.18} parent=31 // pred_region
        %s558 = smul.u32 8, %s14
      $region36: #{unet_ag_forward.18} parent=31 // pred_fallthru
        _
    $region32: #{unet_ag_forward.18} parent=5 // pred_fallthru
      _
    %p559 = scmp.le.s32.totalorder 2, %s9
    // Predicated region
    $region37: #{unet_ag_forward.18} parent=5 // pred_check
      %p560 = pneg %p559
    $region38: #{unet_ag_forward.18} parent=5 // pred_check_branch
      %562 = sbr.rel (%p560) target = $region40
    $region39: #{unet_ag_forward.18} parent=5 // pred_region
      %s563 = ssub.s32 %s9, 2
      // Predicated region
      $region41: #{unet_ag_forward.18} parent=39 // pred_check
        %p564 = pneg %p106
      $region42: #{unet_ag_forward.18} parent=39 // pred_check_branch
        %566 = sbr.rel (%p564) target = $region44
      $region43: #{unet_ag_forward.18} parent=39 // pred_region
        %s567 = smul.u32 8, %s15
        %p568 = scmp.lt.s32.totalorder %s567, 15
        %s569 = scalar_select %p568, %s567, 15
        %s570 = smul.addr %s569, 8
        %s571 = scalar_lea.vmem %s3, %s570
      $region44: #{unet_ag_forward.18} parent=39 // pred_fallthru
        _
    $region40: #{unet_ag_forward.18} parent=5 // pred_fallthru
      _
  $region6: #{unet_ag_forward.18} parent=0 // loop_footer
    %s13 = sadd.s32 1, %s9
  $region7: #{unet_ag_forward.18} parent=0 // loop_footer_branch
    %8 = sbr.rel target = $region3
  $region8: #{unet_ag_forward.18} parent=0 // loop_exit
    _

// kernel: unet_ag_forward.19
$region0: #{unet_ag_forward.19}
  #allocation0 [shape = 'u32[]', space=smem, size = 0x4, offset = 0x4, fixed_abs, tag = 'smem constant byte address 0x4 - core index']
  #allocation1 [shape = 'u32[144,128]{1,0:T(1,128)}', space=vmem, size = 0x12000, scoped, tag = 'internal scratch']
  %s0 = inlined_call_operand.vmem [shape: f32[8,2,4,2,16], index: 0, kind: input, shape index: {}]
  %s1 = inlined_call_operand.vmem [shape: f32[8,4,16], index: 1, kind: output, shape index: {}]
  %s2 = sld [smem:[#allocation0]]
  $region37: #{unet_ag_forward.19} parent=0
    _
  %s4 = ssub.s32 1, %s2
  %s5 = scalar_select 0, %s4, %s2
  loop: start=0, step=1, limit=4
  $region2: #{unet_ag_forward.19} parent=0 // loop_pre_header
    _
  $region3: #{unet_ag_forward.19} parent=0 // loop_header
    %s7 = sphi 0, %s11
    %p8 = scmp.ge.s32.totalorder %s7, 4
    %s17 = sphi 0, %s19
    %s20 = sphi 0, %s17
    %s21 = sphi 0, %s20
    %s37 = sphi 0, %s21
    %s43 = sphi 0, %s45
    %s46 = sphi 0, %s43
    %s47 = sphi 0, %s46
    %s63 = sphi 0, %s47
  $region4: #{unet_ag_forward.19} parent=0 // loop_header_branch
    %10 = sbr.rel (%p8) target = $region8
  $region5: #{unet_ag_forward.19} parent=0 // loop_body
    %s12 = ssub.s32 %s7, 1
    %s13 = ssub.s32 %s7, 2
    %s14 = sadd.s32 %s7, 1
    %s15 = ssub.s32 %s7, %s14
    %p16 = scmp.eq.s32.totalorder %s15, 0
    %s18 = sadd.s32 %s17, 1
    %s19 = scalar_select %p16, %s17, %s18
    %p22 = pneg %p16
    %p23 = scmp.eq.s32.totalorder %s7, 1
    %p24 = por %p22, %p23
    %p25 = scmp.ne.s32.totalorder %s17, %s20
    %p26 = scmp.eq.s32.totalorder %s7, 0
    %p27 = por %p25, %p26
    %p28 = scmp.ne.s32.totalorder %s17, %s20
    %p29 = scmp.eq.s32.totalorder %s12, 1
    %p30 = por %p28, %p29
    %p31 = scmp.ne.s32.totalorder %s20, %s21
    %p32 = scmp.eq.s32.totalorder %s12, 0
    %p33 = por %p31, %p32
    %p34 = scmp.ne.s32.totalorder %s20, %s21
    %p35 = scmp.eq.s32.totalorder %s13, 1
    %p36 = por %p34, %p35
    %p38 = scmp.ne.s32.totalorder %s21, %s37
    %p39 = scmp.eq.s32.totalorder %s13, 0
    %p40 = por %p38, %p39
    %s41 = ssub.s32 %s7, %s14
    %p42 = scmp.eq.s32.totalorder %s41, 0
    %s44 = sadd.s32 %s43, 1
    %s45 = scalar_select %p42, %s43, %s44
    %p48 = pneg %p42
    %p49 = scmp.eq.s32.totalorder %s7, 1
    %p50 = por %p48, %p49
    %p51 = scmp.ne.s32.totalorder %s43, %s46
    %p52 = scmp.eq.s32.totalorder %s7, 0
    %p53 = por %p51, %p52
    %p54 = scmp.ne.s32.totalorder %s43, %s46
    %p55 = scmp.eq.s32.totalorder %s12, 1
    %p56 = por %p54, %p55
    %p57 = scmp.ne.s32.totalorder %s46, %s47
    %p58 = scmp.eq.s32.totalorder %s12, 0
    %p59 = por %p57, %p58
    %p60 = scmp.ne.s32.totalorder %s46, %s47
    %p61 = scmp.eq.s32.totalorder %s13, 1
    %p62 = por %p60, %p61
    %p64 = scmp.ne.s32.totalorder %s47, %s63
    %p65 = scmp.eq.s32.totalorder %s13, 0
    %p66 = por %p64, %p65
    %p67 = scmp.le.s32.totalorder 1, %s7
    %p68 = scmp.lt.s32.totalorder %s7, 3
    %p69 = pnand %p67, %p68
    %p70 = pneg %p69
    // Predicated region
    $region9: #{unet_ag_forward.19} parent=5 // pred_check
      _
    $region10: #{unet_ag_forward.19} parent=5 // pred_check_branch
      %72 = sbr.rel (%p69) target = $region12
    $region11: #{unet_ag_forward.19} parent=5 // pred_region
      %s73 = ssub.s32 %s7, 1
    $region12: #{unet_ag_forward.19} parent=5 // pred_fallthru
      _
    %p74 = scmp.lt.s32.totalorder %s7, 2
    // Predicated region
    $region13: #{unet_ag_forward.19} parent=5 // pred_check
      %p75 = pneg %p74
    $region14: #{unet_ag_forward.19} parent=5 // pred_check_branch
      %77 = sbr.rel (%p75) target = $region16
    $region15: #{unet_ag_forward.19} parent=5 // pred_region
      // Predicated region
      $region17: #{unet_ag_forward.19} parent=15 // pred_check
        %p78 = pneg %p27
      $region18: #{unet_ag_forward.19} parent=15 // pred_check_branch
        %80 = sbr.rel (%p78) target = $region20
      $region19: #{unet_ag_forward.19} parent=15 // pred_region
        %s81 = smul.u32 4, %s7
        %p82 = scmp.lt.s32.totalorder %s81, 7
        %s83 = scalar_select %p82, %s81, 7
        %s84 = smul.addr %s83, 8
        %s85 = smul.addr %s84, 2
        %s86 = scalar_lea.vmem %s0, %s85
        %s87 = smul.u32 4, %s7
      $region20: #{unet_ag_forward.19} parent=15 // pred_fallthru
        _
    $region16: #{unet_ag_forward.19} parent=5 // pred_fallthru
      _
    %p88 = scmp.le.s32.totalorder 1, %s7
    %p89 = scmp.lt.s32.totalorder %s7, 3
    %p90 = pnand %p88, %p89
    %p91 = pneg %p90
    // Predicated region
    $region21: #{unet_ag_forward.19} parent=5 // pred_check
      _
    $region22: #{unet_ag_forward.19} parent=5 // pred_check_branch
      %93 = sbr.rel (%p90) target = $region24
    $region23: #{unet_ag_forward.19} parent=5 // pred_region
      %s94 = ssub.s32 %s7, 1
      %s95 = smul.u32 4, %s12
      %p96 = scmp.lt.s32.totalorder %s95, 7
      %s97 = scalar_select %p96, %s95, 7
      %s98 = smul.addr %s97, 8
      %s99 = smul.addr %s98, 2
      %s100 = scalar_lea.vmem %s0, %s99
      %p101 = pneg %p33
      %p102 = pneg %p30
      %p103 = pneg %p59
      %p104 = pneg %p56
      %s105 = smul.u32 4, %s12
      %p106 = scmp.lt.s32.totalorder %s105, 7
      %s107 = scalar_select %p106, %s105, 7
      %s108 = smul.addr %s107, 4
      %s109 = scalar_lea.vmem %s1, %s108
      %s110 = smul.u32 4, %s12
      %p111 = scmp.lt.s32.totalorder %s110, 7
      %s112 = scalar_select %p111, %s110, 7
      %s113 = smul.addr %s112, 8
      %s114 = smul.addr %s113, 2
      %s115 = scalar_lea.vmem %s0, %s114
      %s116 = smul.u32 4, %s12
      %s117 = smul.u32 4, %s12
      %p118 = scmp.lt.s32.totalorder %s117, 7
      %s119 = scalar_select %p118, %s117, 7
      %s120 = smul.addr %s119, 4
      %s121 = scalar_lea.vmem %s1, %s120
      %s122 = smul.u32 4, %s12
      %v123 = vld [vmem:[%s115] sm:$0x1]
      %v124 = vld [vmem:[%s115 + $0x2] sm:$0x1]
      %v125 = vld [vmem:[%s115 + $0x4] sm:$0x1]
      %v126 = vld [vmem:[%s115 + $0x6] sm:$0x1]
      %v127 = vld [vmem:[%s115 + $0x10] sm:$0x1]
      %v128 = vld [vmem:[%s115 + $0x12] sm:$0x1]
      %v129 = vld [vmem:[%s115 + $0x14] sm:$0x1]
      %v130 = vld [vmem:[%s115 + $0x16] sm:$0x1]
      %v131 = vld [vmem:[%s115 + $0x20] sm:$0x1]
      %v132 = vld [vmem:[%s115 + $0x22] sm:$0x1]
      %v133 = vld [vmem:[%s115 + $0x24] sm:$0x1]
      %v134 = vld [vmem:[%s115 + $0x26] sm:$0x1]
      %v135 = vld [vmem:[%s115 + $0x30] sm:$0x1]
      %v136 = vld [vmem:[%s115 + $0x32] sm:$0x1]
      %v137 = vld [vmem:[%s115 + $0x34] sm:$0x1]
      %v138 = vld [vmem:[%s115 + $0x36] sm:$0x1]
      %v139 = vld [vmem:[%s115 + $0x1] sm:$0x1]
      %v140 = vld [vmem:[%s115 + $0x3] sm:$0x1]
      %v141 = vld [vmem:[%s115 + $0x5] sm:$0x1]
      %v142 = vld [vmem:[%s115 + $0x7] sm:$0x1]
      %v143 = vld [vmem:[%s115 + $0x11] sm:$0x1]
      %v144 = vld [vmem:[%s115 + $0x13] sm:$0x1]
      %v145 = vld [vmem:[%s115 + $0x15] sm:$0x1]
      %v146 = vld [vmem:[%s115 + $0x17] sm:$0x1]
      %v147 = vld [vmem:[%s115 + $0x21] sm:$0x1]
      %v148 = vld [vmem:[%s115 + $0x23] sm:$0x1]
      %v149 = vld [vmem:[%s115 + $0x25] sm:$0x1]
      %v150 = vld [vmem:[%s115 + $0x27] sm:$0x1]
      %v151 = vld [vmem:[%s115 + $0x31] sm:$0x1]
      %v152 = vld [vmem:[%s115 + $0x33] sm:$0x1]
      %v153 = vld [vmem:[%s115 + $0x35] sm:$0x1]
      %v154 = vld [vmem:[%s115 + $0x37] sm:$0x1]
      %v155 = vmax.f32 %v123, %v139
      %v156 = vmax.f32 %v124, %v140
      %v157 = vmax.f32 %v125, %v141
      %v158 = vmax.f32 %v126, %v142
      %v159 = vmax.f32 %v127, %v143
      %v160 = vmax.f32 %v128, %v144
      %v161 = vmax.f32 %v129, %v145
      %v162 = vmax.f32 %v130, %v146
      %v163 = vmax.f32 %v131, %v147
      %v164 = vmax.f32 %v132, %v148
      %v165 = vmax.f32 %v133, %v149
      %v166 = vmax.f32 %v134, %v150
      %v167 = vmax.f32 %v135, %v151
      %v168 = vmax.f32 %v136, %v152
      %v169 = vmax.f32 %v137, %v153
      %v170 = vmax.f32 %v138, %v154
      %s171 = scalar_lea.vmem %s115, 8
      %v172 = vld [vmem:[%s171] sm:$0x1]
      %v173 = vld [vmem:[%s171 + $0x2] sm:$0x1]
      %v174 = vld [vmem:[%s171 + $0x4] sm:$0x1]
      %v175 = vld [vmem:[%s171 + $0x6] sm:$0x1]
      %v176 = vld [vmem:[%s171 + $0x10] sm:$0x1]
      %v177 = vld [vmem:[%s171 + $0x12] sm:$0x1]
      %v178 = vld [vmem:[%s171 + $0x14] sm:$0x1]
      %v179 = vld [vmem:[%s171 + $0x16] sm:$0x1]
      %v180 = vld [vmem:[%s171 + $0x20] sm:$0x1]
      %v181 = vld [vmem:[%s171 + $0x22] sm:$0x1]
      %v182 = vld [vmem:[%s171 + $0x24] sm:$0x1]
      %v183 = vld [vmem:[%s171 + $0x26] sm:$0x1]
      %v184 = vld [vmem:[%s171 + $0x30] sm:$0x1]
      %v185 = vld [vmem:[%s171 + $0x32] sm:$0x1]
      %v186 = vld [vmem:[%s171 + $0x34] sm:$0x1]
      %v187 = vld [vmem:[%s171 + $0x36] sm:$0x1]
      %v188 = vld [vmem:[%s171 + $0x1] sm:$0x1]
      %v189 = vld [vmem:[%s171 + $0x3] sm:$0x1]
      %v190 = vld [vmem:[%s171 + $0x5] sm:$0x1]
      %v191 = vld [vmem:[%s171 + $0x7] sm:$0x1]
      %v192 = vld [vmem:[%s171 + $0x11] sm:$0x1]
      %v193 = vld [vmem:[%s171 + $0x13] sm:$0x1]
      %v194 = vld [vmem:[%s171 + $0x15] sm:$0x1]
      %v195 = vld [vmem:[%s171 + $0x17] sm:$0x1]
      %v196 = vld [vmem:[%s171 + $0x21] sm:$0x1]
      %v197 = vld [vmem:[%s171 + $0x23] sm:$0x1]
      %v198 = vld [vmem:[%s171 + $0x25] sm:$0x1]
      %v199 = vld [vmem:[%s171 + $0x27] sm:$0x1]
      %v200 = vld [vmem:[%s171 + $0x31] sm:$0x1]
      %v201 = vld [vmem:[%s171 + $0x33] sm:$0x1]
      %v202 = vld [vmem:[%s171 + $0x35] sm:$0x1]
      %v203 = vld [vmem:[%s171 + $0x37] sm:$0x1]
      %v204 = vmax.f32 %v172, %v188
      %v205 = vmax.f32 %v173, %v189
      %v206 = vmax.f32 %v174, %v190
      %v207 = vmax.f32 %v175, %v191
      %v208 = vmax.f32 %v176, %v192
      %v209 = vmax.f32 %v177, %v193
      %v210 = vmax.f32 %v178, %v194
      %v211 = vmax.f32 %v179, %v195
      %v212 = vmax.f32 %v180, %v196
      %v213 = vmax.f32 %v181, %v197
      %v214 = vmax.f32 %v182, %v198
      %v215 = vmax.f32 %v183, %v199
      %v216 = vmax.f32 %v184, %v200
      %v217 = vmax.f32 %v185, %v201
      %v218 = vmax.f32 %v186, %v202
      %v219 = vmax.f32 %v187, %v203
      %v220 = vmax.f32 %v155, %v204
      %v221 = vmax.f32 %v156, %v205
      %v222 = vmax.f32 %v157, %v206
      %v223 = vmax.f32 %v158, %v207
      %v224 = vmax.f32 %v159, %v208
      %v225 = vmax.f32 %v160, %v209
      %v226 = vmax.f32 %v161, %v210
      %v227 = vmax.f32 %v162, %v211
      %v228 = vmax.f32 %v163, %v212
      %v229 = vmax.f32 %v164, %v213
      %v230 = vmax.f32 %v165, %v214
      %v231 = vmax.f32 %v166, %v215
      %v232 = vmax.f32 %v167, %v216
      %v233 = vmax.f32 %v168, %v217
      %v234 = vmax.f32 %v169, %v218
      %v235 = vmax.f32 %v170, %v219
      %v252 = vrot.slane %v221, 7
      %vm253 = vcmask 1041409
      %v254 = vsel %vm253, %v252, %v220
      %v255 = vrot.slane %v222, 6
      %vm256 = vcmask 1042434
      %v257 = vsel %vm256, %v255, %v254
      %v258 = vrot.slane %v223, 5
      %vm259 = vcmask 1043459
      %v260 = vsel %vm259, %v258, %v257
      %v261 = vrot.slane %v225, 7
      %v262 = vsel %vm253, %v261, %v224
      %v263 = vrot.slane %v226, 6
      %v264 = vsel %vm256, %v263, %v262
      %v265 = vrot.slane %v227, 5
      %v266 = vsel %vm259, %v265, %v264
      %v267 = vrot.slane %v229, 7
      %v268 = vsel %vm253, %v267, %v228
      %v269 = vrot.slane %v230, 6
      %v270 = vsel %vm256, %v269, %v268
      %v271 = vrot.slane %v231, 5
      %v272 = vsel %vm259, %v271, %v270
      %v273 = vrot.slane %v233, 7
      %v274 = vsel %vm253, %v273, %v232
      %v275 = vrot.slane %v234, 6
      %v276 = vsel %vm256, %v275, %v274
      %v277 = vrot.slane %v235, 5
      %v278 = vsel %vm259, %v277, %v276
      %vm283 = vcmask 125952
      %284 = vst.msk [vmem:[%s121] sm:$0xf] %vm283, %v260
      %285 = vst.msk [vmem:[%s121 + $0x4] sm:$0xf] %vm283, %v266
      %286 = vst.msk [vmem:[%s121 + $0x8] sm:$0xf] %vm283, %v272
      %287 = vst.msk [vmem:[%s121 + $0xc] sm:$0xf] %vm283, %v278
      %s288 = smul.u32 4, %s12
      %p289 = scmp.lt.s32.totalorder %s288, 7
      %s290 = scalar_select %p289, %s288, 7
      %s291 = smul.addr %s290, 4
      %s292 = scalar_lea.vmem %s1, %s291
      // Predicated region
      $region25: #{unet_ag_forward.19} parent=23 // pred_check
        %p293 = pneg %p56
      $region26: #{unet_ag_forward.19} parent=23 // pred_check_branch
        %295 = sbr.rel (%p293) target = $region28
      $region27: #{unet_ag_forward.19} parent=23 // pred_region
        %s296 = smul.u32 4, %s12
      $region28: #{unet_ag_forward.19} parent=23 // pred_fallthru
        _
    $region24: #{unet_ag_forward.19} parent=5 // pred_fallthru
      _
    %p297 = scmp.le.s32.totalorder 2, %s7
    // Predicated region
    $region29: #{unet_ag_forward.19} parent=5 // pred_check
      %p298 = pneg %p297
    $region30: #{unet_ag_forward.19} parent=5 // pred_check_branch
      %300 = sbr.rel (%p298) target = $region32
    $region31: #{unet_ag_forward.19} parent=5 // pred_region
      %s301 = ssub.s32 %s7, 2
      // Predicated region
      $region33: #{unet_ag_forward.19} parent=31 // pred_check
        %p302 = pneg %p62
      $region34: #{unet_ag_forward.19} parent=31 // pred_check_branch
        %304 = sbr.rel (%p302) target = $region36
      $region35: #{unet_ag_forward.19} parent=31 // pred_region
        %s305 = smul.u32 4, %s13
        %p306 = scmp.lt.s32.totalorder %s305, 7
        %s307 = scalar_select %p306, %s305, 7
        %s308 = smul.addr %s307, 4
        %s309 = scalar_lea.vmem %s1, %s308
      $region36: #{unet_ag_forward.19} parent=31 // pred_fallthru
        _
    $region32: #{unet_ag_forward.19} parent=5 // pred_fallthru
      _
  $region6: #{unet_ag_forward.19} parent=0 // loop_footer
    %s11 = sadd.s32 1, %s7
  $region7: #{unet_ag_forward.19} parent=0 // loop_footer_branch
    %6 = sbr.rel target = $region3
  $region8: #{unet_ag_forward.19} parent=0 // loop_exit
    _

// kernel: unet_ag_forward.20
$region0: #{unet_ag_forward.20}
  #allocation0 [shape = 'u32[]', space=smem, size = 0x4, offset = 0x4, fixed_abs, tag = 'smem constant byte address 0x4 - core index']
  #allocation1 [shape = 'u32[144,128]{1,0:T(1,128)}', space=vmem, size = 0x12000, scoped, tag = 'internal scratch']
  %s0 = inlined_call_operand.vmem [shape: f32[32,144], index: 0, kind: input, shape index: {}]
  %s1 = inlined_call_operand.vmem [shape: bf16[1,144,32], index: 1, kind: input, shape index: {}]
  %s2 = inlined_call_operand.vmem [shape: f32[1,32], index: 2, kind: input, shape index: {}]
  %s3 = inlined_call_operand.vmem [shape: f32[32,32], index: 3, kind: output, shape index: {}]
  %s4 = sld [smem:[#allocation0]]
  $region45: #{unet_ag_forward.20} parent=0
    _
  %s6 = ssub.s32 1, %s4
  %s7 = scalar_select 0, %s6, %s4
  loop: start=0, step=1, limit=4
  $region2: #{unet_ag_forward.20} parent=0 // loop_pre_header
    _
  $region3: #{unet_ag_forward.20} parent=0 // loop_header
    %s9 = sphi 0, %s13
    %p10 = scmp.ge.s32.totalorder %s9, 4
    %s19 = sphi 0, %s21
    %s22 = sphi 0, %s19
    %s23 = sphi 0, %s22
    %s39 = sphi 0, %s23
    %s43 = sphi 0, %s43
    %s45 = sphi 0, %s43
    %s46 = sphi 0, %s45
    %s60 = sphi 0, %s46
    %s64 = sphi 0, %s64
    %s66 = sphi 0, %s64
    %s67 = sphi 0, %s66
    %s81 = sphi 0, %s67
    %s87 = sphi 0, %s89
    %s90 = sphi 0, %s87
    %s91 = sphi 0, %s90
    %s107 = sphi 0, %s91
  $region4: #{unet_ag_forward.20} parent=0 // loop_header_branch
    %12 = sbr.rel (%p10) target = $region8
  $region5: #{unet_ag_forward.20} parent=0 // loop_body
    %s14 = ssub.s32 %s9, 1
    %s15 = ssub.s32 %s9, 2
    %s16 = sadd.s32 %s9, 1
    %s17 = ssub.s32 %s9, %s16
    %p18 = scmp.eq.s32.totalorder %s17, 0
    %s20 = sadd.s32 %s19, 1
    %s21 = scalar_select %p18, %s19, %s20
    %p24 = pneg %p18
    %p25 = scmp.eq.s32.totalorder %s9, 1
    %p26 = por %p24, %p25
    %p27 = scmp.ne.s32.totalorder %s19, %s22
    %p28 = scmp.eq.s32.totalorder %s9, 0
    %p29 = por %p27, %p28
    %p30 = scmp.ne.s32.totalorder %s19, %s22
    %p31 = scmp.eq.s32.totalorder %s14, 1
    %p32 = por %p30, %p31
    %p33 = scmp.ne.s32.totalorder %s22, %s23
    %p34 = scmp.eq.s32.totalorder %s14, 0
    %p35 = por %p33, %p34
    %p36 = scmp.ne.s32.totalorder %s22, %s23
    %p37 = scmp.eq.s32.totalorder %s15, 1
    %p38 = por %p36, %p37
    %p40 = scmp.ne.s32.totalorder %s23, %s39
    %p41 = scmp.eq.s32.totalorder %s15, 0
    %p42 = por %p40, %p41
    %s44 = sadd.s32 %s43, 1
    %p47 = scmp.eq.s32.totalorder %s9, 1
    %p48 = scmp.ne.s32.totalorder %s43, %s45
    %p49 = scmp.eq.s32.totalorder %s9, 0
    %p50 = por %p48, %p49
    %p51 = scmp.ne.s32.totalorder %s43, %s45
    %p52 = scmp.eq.s32.totalorder %s14, 1
    %p53 = por %p51, %p52
    %p54 = scmp.ne.s32.totalorder %s45, %s46
    %p55 = scmp.eq.s32.totalorder %s14, 0
    %p56 = por %p54, %p55
    %p57 = scmp.ne.s32.totalorder %s45, %s46
    %p58 = scmp.eq.s32.totalorder %s15, 1
    %p59 = por %p57, %p58
    %p61 = scmp.ne.s32.totalorder %s46, %s60
    %p62 = scmp.eq.s32.totalorder %s15, 0
    %p63 = por %p61, %p62
    %s65 = sadd.s32 %s64, 1
    %p68 = scmp.eq.s32.totalorder %s9, 1
    %p69 = scmp.ne.s32.totalorder %s64, %s66
    %p70 = scmp.eq.s32.totalorder %s9, 0
    %p71 = por %p69, %p70
    %p72 = scmp.ne.s32.totalorder %s64, %s66
    %p73 = scmp.eq.s32.totalorder %s14, 1
    %p74 = por %p72, %p73
    %p75 = scmp.ne.s32.totalorder %s66, %s67
    %p76 = scmp.eq.s32.totalorder %s14, 0
    %p77 = por %p75, %p76
    %p78 = scmp.ne.s32.totalorder %s66, %s67
    %p79 = scmp.eq.s32.totalorder %s15, 1
    %p80 = por %p78, %p79
    %p82 = scmp.ne.s32.totalorder %s67, %s81
    %p83 = scmp.eq.s32.totalorder %s15, 0
    %p84 = por %p82, %p83
    %s85 = ssub.s32 %s9, %s16
    %p86 = scmp.eq.s32.totalorder %s85, 0
    %s88 = sadd.s32 %s87, 1
    %s89 = scalar_select %p86, %s87, %s88
    %p92 = pneg %p86
    %p93 = scmp.eq.s32.totalorder %s9, 1
    %p94 = por %p92, %p93
    %p95 = scmp.ne.s32.totalorder %s87, %s90
    %p96 = scmp.eq.s32.totalorder %s9, 0
    %p97 = por %p95, %p96
    %p98 = scmp.ne.s32.totalorder %s87, %s90
    %p99 = scmp.eq.s32.totalorder %s14, 1
    %p100 = por %p98, %p99
    %p101 = scmp.ne.s32.totalorder %s90, %s91
    %p102 = scmp.eq.s32.totalorder %s14, 0
    %p103 = por %p101, %p102
    %p104 = scmp.ne.s32.totalorder %s90, %s91
    %p105 = scmp.eq.s32.totalorder %s15, 1
    %p106 = por %p104, %p105
    %p108 = scmp.ne.s32.totalorder %s91, %s107
    %p109 = scmp.eq.s32.totalorder %s15, 0
    %p110 = por %p108, %p109
    %p111 = scmp.le.s32.totalorder 1, %s9
    %p112 = scmp.lt.s32.totalorder %s9, 3
    %p113 = pnand %p111, %p112
    %p114 = pneg %p113
    // Predicated region
    $region9: #{unet_ag_forward.20} parent=5 // pred_check
      _
    $region10: #{unet_ag_forward.20} parent=5 // pred_check_branch
      %116 = sbr.rel (%p113) target = $region12
    $region11: #{unet_ag_forward.20} parent=5 // pred_region
      %s117 = ssub.s32 %s9, 1
      // Predicated region
      $region13: #{unet_ag_forward.20} parent=11 // pred_check
        %p118 = pneg %p56
      $region14: #{unet_ag_forward.20} parent=11 // pred_check_branch
        %120 = sbr.rel (%p118) target = $region16
      $region15: #{unet_ag_forward.20} parent=11 // pred_region
        _
      $region16: #{unet_ag_forward.20} parent=11 // pred_fallthru
        _
      // Predicated region
      $region17: #{unet_ag_forward.20} parent=11 // pred_check
        %p121 = pneg %p77
      $region18: #{unet_ag_forward.20} parent=11 // pred_check_branch
        %123 = sbr.rel (%p121) target = $region20
      $region19: #{unet_ag_forward.20} parent=11 // pred_region
        _
      $region20: #{unet_ag_forward.20} parent=11 // pred_fallthru
        _
    $region12: #{unet_ag_forward.20} parent=5 // pred_fallthru
      _
    %p124 = scmp.lt.s32.totalorder %s9, 2
    // Predicated region
    $region21: #{unet_ag_forward.20} parent=5 // pred_check
      %p125 = pneg %p124
    $region22: #{unet_ag_forward.20} parent=5 // pred_check_branch
      %127 = sbr.rel (%p125) target = $region24
    $region23: #{unet_ag_forward.20} parent=5 // pred_region
      // Predicated region
      $region25: #{unet_ag_forward.20} parent=23 // pred_check
        %p128 = pneg %p29
      $region26: #{unet_ag_forward.20} parent=23 // pred_check_branch
        %130 = sbr.rel (%p128) target = $region28
      $region27: #{unet_ag_forward.20} parent=23 // pred_region
        %s131 = smul.u32 2, %s9
        %p132 = scmp.lt.s32.totalorder %s131, 3
        %s133 = scalar_select %p132, %s131, 3
        %s134 = smul.addr %s133, 2
        %s135 = smul.addr %s134, 8
        %s136 = scalar_lea.vmem %s0, %s135
        %s137 = smul.u32 2, %s9
      $region28: #{unet_ag_forward.20} parent=23 // pred_fallthru
        _
    $region24: #{unet_ag_forward.20} parent=5 // pred_fallthru
      _
    %p138 = scmp.le.s32.totalorder 1, %s9
    %p139 = scmp.lt.s32.totalorder %s9, 3
    %p140 = pnand %p138, %p139
    %p141 = pneg %p140
    // Predicated region
    $region29: #{unet_ag_forward.20} parent=5 // pred_check
      _
    $region30: #{unet_ag_forward.20} parent=5 // pred_check_branch
      %143 = sbr.rel (%p140) target = $region32
    $region31: #{unet_ag_forward.20} parent=5 // pred_region
      %s144 = ssub.s32 %s9, 1
      %s145 = smul.u32 2, %s14
      %p146 = scmp.lt.s32.totalorder %s145, 3
      %s147 = scalar_select %p146, %s145, 3
      %s148 = smul.addr %s147, 2
      %s149 = smul.addr %s148, 8
      %s150 = scalar_lea.vmem %s0, %s149
      %p151 = pneg %p35
      %p152 = pneg %p32
      %p153 = pneg %p56
      %p154 = pneg %p53
      %p155 = pneg %p77
      %p156 = pneg %p74
      %p157 = pneg %p103
      %p158 = pneg %p100
      %s159 = smul.u32 2, %s14
      %p160 = scmp.lt.s32.totalorder %s159, 3
      %s161 = scalar_select %p160, %s159, 3
      %s162 = smul.addr %s161, 8
      %s163 = scalar_lea.vmem %s3, %s162
      %s164 = smul.u32 2, %s14
      %p165 = scmp.lt.s32.totalorder %s164, 3
      %s166 = scalar_select %p165, %s164, 3
      %s167 = smul.addr %s166, 2
      %s168 = smul.addr %s167, 8
      %s169 = scalar_lea.vmem %s0, %s168
      %s170 = smul.u32 2, %s14
      %s171 = smul.u32 2, %s14
      %p172 = scmp.lt.s32.totalorder %s171, 3
      %s173 = scalar_select %p172, %s171, 3
      %s174 = smul.addr %s173, 8
      %s175 = scalar_lea.vmem %s3, %s174
      %s176 = smul.u32 2, %s14
      %v178 = vld [vmem:[%s169] sm:$0xff]
      %v179 = vld [vmem:[%s169 + $0x8] sm:$0xff]
      %v180 = vld [vmem:[%s169 + $0x10] sm:$0xff]
      %v181 = vld [vmem:[%s169 + $0x18] sm:$0xff]
      %v182 = vpack.c.bf16 %v180, %v178
      %v183 = vpack.c.bf16 %v181, %v179
      %v184 = vld [vmem:[%s1] sm:$0xf]
      %v185 = vld [vmem:[%s1 + $0x4] sm:$0xf]
      %v186 = vld [vmem:[%s1 + $0x8] sm:$0xf]
      %v187 = vld [vmem:[%s1 + $0xc] sm:$0xf]
      %v188 = vld [vmem:[%s1 + $0x10] sm:$0xf]
      %v189 = vld [vmem:[%s1 + $0x14] sm:$0xf]
      %v190 = vld [vmem:[%s1 + $0x18] sm:$0xf]
      %v191 = vld [vmem:[%s1 + $0x1c] sm:$0xf]
      %v192 = vld [vmem:[%s1 + $0x20] sm:$0xf]
      %v193 = vld [vmem:[%s1 + $0x24] sm:$0xf]
      %v194 = vld [vmem:[%s1 + $0x28] sm:$0xf]
      %v195 = vld [vmem:[%s1 + $0x2c] sm:$0xf]
      %v196 = vld [vmem:[%s1 + $0x30] sm:$0xf]
      %v197 = vld [vmem:[%s1 + $0x34] sm:$0xf]
      %v198 = vld [vmem:[%s1 + $0x38] sm:$0xf]
      %v199 = vld [vmem:[%s1 + $0x3c] sm:$0xf]
      %v200 = vld [vmem:[%s1 + $0x40] sm:$0xf]
      %v201 = vld [vmem:[%s1 + $0x44] sm:$0xf]
      %v202 = vld [vmem:[%s2] sm:$0x1]
      %v204 = vlaneseq
      %v205 = vshrl.u32 %v204, 7
      %v206 = vsub.s32 0, %v205
      %v207 = vrot.slane %v202, %v206
      %v227 = vunpack.c.l.b16 %v184
      %v228 = vunpack.c.l.b16 %v185
      %v229 = vunpack.c.l.b16 %v186
      %v230 = vunpack.c.l.b16 %v187
      %v231 = vunpack.c.l.b16 %v188
      %v232 = vunpack.c.l.b16 %v189
      %v233 = vunpack.c.l.b16 %v190
      %v234 = vunpack.c.l.b16 %v191
      %v235 = vunpack.c.l.b16 %v192
      %v236 = vunpack.c.l.b16 %v193
      %v237 = vunpack.c.l.b16 %v194
      %v238 = vunpack.c.l.b16 %v195
      %v239 = vunpack.c.l.b16 %v196
      %v240 = vunpack.c.l.b16 %v197
      %v241 = vunpack.c.l.b16 %v198
      %v242 = vunpack.c.l.b16 %v199
      %v243 = vunpack.c.l.b16 %v200
      %v244 = vunpack.c.l.b16 %v201
      %v245 = vpack.c.b16 %v228, %v227
      %v246 = vpack.c.b16 %v230, %v229
      %v247 = vpack.c.b16 %v232, %v231
      %v248 = vpack.c.b16 %v234, %v233
      %v249 = vpack.c.b16 %v236, %v235
      %v250 = vpack.c.b16 %v238, %v237
      %v251 = vpack.c.b16 %v240, %v239
      %v252 = vpack.c.b16 %v242, %v241
      %v253 = vpack.c.b16 %v244, %v243
      %vm263 = vcmask 130048
      %v265 = vsel %vm263, %v183, 0
      %267 = vmatprep.subr.bf16.mxu0 0
      %268 = vmatpush1.bf16.msra.mxu0 %v245
      %269 = vmatprep.subr.bf16.mxu0 0
      %270 = vmatpush1.bf16.msra.mxu0 %v246
      %271 = vmatprep.subr.bf16.mxu0 0
      %272 = vmatpush1.bf16.msra.mxu0 %v247
      %273 = vmatprep.subr.bf16.mxu0 0
      %274 = vmatpush1.bf16.msra.mxu0 %v248
      %275 = vmatprep.subr.bf16.mxu0 0
      %276 = vmatpush1.bf16.msra.mxu0 %v249
      %277 = vmatprep.subr.bf16.mxu0 0
      %278 = vmatpush1.bf16.msra.mxu0 %v250
      %279 = vmatprep.subr.bf16.mxu0 0
      %280 = vmatpush1.bf16.msra.mxu0 %v251
      %281 = vmatprep.subr.bf16.mxu0 0
      %282 = vmatpush1.bf16.msra.mxu0 %v252
      %283 = vmatprep.subr.bf16.mxu0 0
      %284 = vmatpush1.bf16.msra.mxu0 %v253
      %285 = vmatprep.subr.bf16.mxu0 0
      %286 = vmatpush1.bf16.msra.mxu0 0
      %287 = vmatprep.subr.bf16.mxu0 0
      %288 = vmatpush1.bf16.msra.mxu0 0
      %289 = vmatprep.subr.bf16.mxu0 0
      %290 = vmatpush1.bf16.msra.mxu0 0
      %291 = vmatprep.subr.bf16.mxu0 0
      %292 = vmatpush1.bf16.msra.mxu0 0
      %293 = vmatprep.subr.bf16.mxu0 0
      %294 = vmatpush1.bf16.msra.mxu0 0
      %295 = vmatprep.subr.bf16.mxu0 0
      %296 = vmatpush1.bf16.msra.mxu0 0
      %297 = vmatprep.subr.bf16.mxu0 0
      %298 = vmatpush1.bf16.msra.mxu0 0
      %299 = vmatprep.mubr.bf16.mxu0 %v265
      %300 = vmatmul.mubr.bf16.gmra.mrb[0].mxu0 %v182
      %v301 = vpop.f32.mrb[0].mxu0
      %v302 = vadd.f32 %v207, %v301
      %v303 = vpop.f32.mrb[0].mxu0
      %v304 = vpop.f32.mrb[0].mxu0
      %v305 = vadd.f32 %v207, %v304
      %v306 = vpop.f32.mrb[0].mxu0
      %307 = vdwg.mxu0
      %v308 = vmax.f32 %v302, 0.0
      %v309 = vmax.f32 %v305, 0.0
      %vm310 = vcmask 261120
      %311 = vst.msk [vmem:[%s175] sm:$0xff] %vm310, %v308
      %312 = vst.msk [vmem:[%s175 + $0x8] sm:$0xff] %vm310, %v309
      %s313 = smul.u32 2, %s14
      %p314 = scmp.lt.s32.totalorder %s313, 3
      %s315 = scalar_select %p314, %s313, 3
      %s316 = smul.addr %s315, 8
      %s317 = scalar_lea.vmem %s3, %s316
      // Predicated region
      $region33: #{unet_ag_forward.20} parent=31 // pred_check
        %p318 = pneg %p100
      $region34: #{unet_ag_forward.20} parent=31 // pred_check_branch
        %320 = sbr.rel (%p318) target = $region36
      $region35: #{unet_ag_forward.20} parent=31 // pred_region
        %s321 = smul.u32 2, %s14
      $region36: #{unet_ag_forward.20} parent=31 // pred_fallthru
        _
    $region32: #{unet_ag_forward.20} parent=5 // pred_fallthru
      _
    %p322 = scmp.le.s32.totalorder 2, %s9
    // Predicated region
    $region37: #{unet_ag_forward.20} parent=5 // pred_check
      %p323 = pneg %p322
    $region38: #{unet_ag_forward.20} parent=5 // pred_check_branch
      %325 = sbr.rel (%p323) target = $region40
    $region39: #{unet_ag_forward.20} parent=5 // pred_region
      %s326 = ssub.s32 %s9, 2
      // Predicated region
      $region41: #{unet_ag_forward.20} parent=39 // pred_check
        %p327 = pneg %p106
      $region42: #{unet_ag_forward.20} parent=39 // pred_check_branch
        %329 = sbr.rel (%p327) target = $region44
      $region43: #{unet_ag_forward.20} parent=39 // pred_region
        %s330 = smul.u32 2, %s15
        %p331 = scmp.lt.s32.totalorder %s330, 3
        %s332 = scalar_select %p331, %s330, 3
        %s333 = smul.addr %s332, 8
        %s334 = scalar_lea.vmem %s3, %s333
      $region44: #{unet_ag_forward.20} parent=39 // pred_fallthru
        _
    $region40: #{unet_ag_forward.20} parent=5 // pred_fallthru
      _
  $region6: #{unet_ag_forward.20} parent=0 // loop_footer
    %s13 = sadd.s32 1, %s9
  $region7: #{unet_ag_forward.20} parent=0 // loop_footer_branch
    %8 = sbr.rel target = $region3
  $region8: #{unet_ag_forward.20} parent=0 // loop_exit
    _

// kernel: unet_ag_forward.21
$region0: #{unet_ag_forward.21}
  #allocation0 [shape = 'u32[]', space=smem, size = 0x4, offset = 0x4, fixed_abs, tag = 'smem constant byte address 0x4 - core index']
  #allocation1 [shape = 'u32[144,128]{1,0:T(1,128)}', space=vmem, size = 0x12000, scoped, tag = 'internal scratch']
  %s0 = inlined_call_operand.vmem [shape: f32[32,288], index: 0, kind: input, shape index: {}]
  %s1 = inlined_call_operand.vmem [shape: bf16[1,288,32], index: 1, kind: input, shape index: {}]
  %s2 = inlined_call_operand.vmem [shape: f32[1,32], index: 2, kind: input, shape index: {}]
  %s3 = inlined_call_operand.vmem [shape: f32[32,32], index: 3, kind: output, shape index: {}]
  %s4 = sld [smem:[#allocation0]]
  $region45: #{unet_ag_forward.21} parent=0
    _
  %s6 = ssub.s32 1, %s4
  %s7 = scalar_select 0, %s6, %s4
  loop: start=0, step=1, limit=4
  $region2: #{unet_ag_forward.21} parent=0 // loop_pre_header
    _
  $region3: #{unet_ag_forward.21} parent=0 // loop_header
    %s9 = sphi 0, %s13
    %p10 = scmp.ge.s32.totalorder %s9, 4
    %s19 = sphi 0, %s21
    %s22 = sphi 0, %s19
    %s23 = sphi 0, %s22
    %s39 = sphi 0, %s23
    %s43 = sphi 0, %s43
    %s45 = sphi 0, %s43
    %s46 = sphi 0, %s45
    %s60 = sphi 0, %s46
    %s64 = sphi 0, %s64
    %s66 = sphi 0, %s64
    %s67 = sphi 0, %s66
    %s81 = sphi 0, %s67
    %s87 = sphi 0, %s89
    %s90 = sphi 0, %s87
    %s91 = sphi 0, %s90
    %s107 = sphi 0, %s91
  $region4: #{unet_ag_forward.21} parent=0 // loop_header_branch
    %12 = sbr.rel (%p10) target = $region8
  $region5: #{unet_ag_forward.21} parent=0 // loop_body
    %s14 = ssub.s32 %s9, 1
    %s15 = ssub.s32 %s9, 2
    %s16 = sadd.s32 %s9, 1
    %s17 = ssub.s32 %s9, %s16
    %p18 = scmp.eq.s32.totalorder %s17, 0
    %s20 = sadd.s32 %s19, 1
    %s21 = scalar_select %p18, %s19, %s20
    %p24 = pneg %p18
    %p25 = scmp.eq.s32.totalorder %s9, 1
    %p26 = por %p24, %p25
    %p27 = scmp.ne.s32.totalorder %s19, %s22
    %p28 = scmp.eq.s32.totalorder %s9, 0
    %p29 = por %p27, %p28
    %p30 = scmp.ne.s32.totalorder %s19, %s22
    %p31 = scmp.eq.s32.totalorder %s14, 1
    %p32 = por %p30, %p31
    %p33 = scmp.ne.s32.totalorder %s22, %s23
    %p34 = scmp.eq.s32.totalorder %s14, 0
    %p35 = por %p33, %p34
    %p36 = scmp.ne.s32.totalorder %s22, %s23
    %p37 = scmp.eq.s32.totalorder %s15, 1
    %p38 = por %p36, %p37
    %p40 = scmp.ne.s32.totalorder %s23, %s39
    %p41 = scmp.eq.s32.totalorder %s15, 0
    %p42 = por %p40, %p41
    %s44 = sadd.s32 %s43, 1
    %p47 = scmp.eq.s32.totalorder %s9, 1
    %p48 = scmp.ne.s32.totalorder %s43, %s45
    %p49 = scmp.eq.s32.totalorder %s9, 0
    %p50 = por %p48, %p49
    %p51 = scmp.ne.s32.totalorder %s43, %s45
    %p52 = scmp.eq.s32.totalorder %s14, 1
    %p53 = por %p51, %p52
    %p54 = scmp.ne.s32.totalorder %s45, %s46
    %p55 = scmp.eq.s32.totalorder %s14, 0
    %p56 = por %p54, %p55
    %p57 = scmp.ne.s32.totalorder %s45, %s46
    %p58 = scmp.eq.s32.totalorder %s15, 1
    %p59 = por %p57, %p58
    %p61 = scmp.ne.s32.totalorder %s46, %s60
    %p62 = scmp.eq.s32.totalorder %s15, 0
    %p63 = por %p61, %p62
    %s65 = sadd.s32 %s64, 1
    %p68 = scmp.eq.s32.totalorder %s9, 1
    %p69 = scmp.ne.s32.totalorder %s64, %s66
    %p70 = scmp.eq.s32.totalorder %s9, 0
    %p71 = por %p69, %p70
    %p72 = scmp.ne.s32.totalorder %s64, %s66
    %p73 = scmp.eq.s32.totalorder %s14, 1
    %p74 = por %p72, %p73
    %p75 = scmp.ne.s32.totalorder %s66, %s67
    %p76 = scmp.eq.s32.totalorder %s14, 0
    %p77 = por %p75, %p76
    %p78 = scmp.ne.s32.totalorder %s66, %s67
    %p79 = scmp.eq.s32.totalorder %s15, 1
    %p80 = por %p78, %p79
    %p82 = scmp.ne.s32.totalorder %s67, %s81
    %p83 = scmp.eq.s32.totalorder %s15, 0
    %p84 = por %p82, %p83
    %s85 = ssub.s32 %s9, %s16
    %p86 = scmp.eq.s32.totalorder %s85, 0
    %s88 = sadd.s32 %s87, 1
    %s89 = scalar_select %p86, %s87, %s88
    %p92 = pneg %p86
    %p93 = scmp.eq.s32.totalorder %s9, 1
    %p94 = por %p92, %p93
    %p95 = scmp.ne.s32.totalorder %s87, %s90
    %p96 = scmp.eq.s32.totalorder %s9, 0
    %p97 = por %p95, %p96
    %p98 = scmp.ne.s32.totalorder %s87, %s90
    %p99 = scmp.eq.s32.totalorder %s14, 1
    %p100 = por %p98, %p99
    %p101 = scmp.ne.s32.totalorder %s90, %s91
    %p102 = scmp.eq.s32.totalorder %s14, 0
    %p103 = por %p101, %p102
    %p104 = scmp.ne.s32.totalorder %s90, %s91
    %p105 = scmp.eq.s32.totalorder %s15, 1
    %p106 = por %p104, %p105
    %p108 = scmp.ne.s32.totalorder %s91, %s107
    %p109 = scmp.eq.s32.totalorder %s15, 0
    %p110 = por %p108, %p109
    %p111 = scmp.le.s32.totalorder 1, %s9
    %p112 = scmp.lt.s32.totalorder %s9, 3
    %p113 = pnand %p111, %p112
    %p114 = pneg %p113
    // Predicated region
    $region9: #{unet_ag_forward.21} parent=5 // pred_check
      _
    $region10: #{unet_ag_forward.21} parent=5 // pred_check_branch
      %116 = sbr.rel (%p113) target = $region12
    $region11: #{unet_ag_forward.21} parent=5 // pred_region
      %s117 = ssub.s32 %s9, 1
      // Predicated region
      $region13: #{unet_ag_forward.21} parent=11 // pred_check
        %p118 = pneg %p56
      $region14: #{unet_ag_forward.21} parent=11 // pred_check_branch
        %120 = sbr.rel (%p118) target = $region16
      $region15: #{unet_ag_forward.21} parent=11 // pred_region
        _
      $region16: #{unet_ag_forward.21} parent=11 // pred_fallthru
        _
      // Predicated region
      $region17: #{unet_ag_forward.21} parent=11 // pred_check
        %p121 = pneg %p77
      $region18: #{unet_ag_forward.21} parent=11 // pred_check_branch
        %123 = sbr.rel (%p121) target = $region20
      $region19: #{unet_ag_forward.21} parent=11 // pred_region
        _
      $region20: #{unet_ag_forward.21} parent=11 // pred_fallthru
        _
    $region12: #{unet_ag_forward.21} parent=5 // pred_fallthru
      _
    %p124 = scmp.lt.s32.totalorder %s9, 2
    // Predicated region
    $region21: #{unet_ag_forward.21} parent=5 // pred_check
      %p125 = pneg %p124
    $region22: #{unet_ag_forward.21} parent=5 // pred_check_branch
      %127 = sbr.rel (%p125) target = $region24
    $region23: #{unet_ag_forward.21} parent=5 // pred_region
      // Predicated region
      $region25: #{unet_ag_forward.21} parent=23 // pred_check
        %p128 = pneg %p29
      $region26: #{unet_ag_forward.21} parent=23 // pred_check_branch
        %130 = sbr.rel (%p128) target = $region28
      $region27: #{unet_ag_forward.21} parent=23 // pred_region
        %s131 = smul.u32 2, %s9
        %p132 = scmp.lt.s32.totalorder %s131, 3
        %s133 = scalar_select %p132, %s131, 3
        %s134 = smul.addr %s133, 3
        %s135 = smul.addr %s134, 8
        %s136 = scalar_lea.vmem %s0, %s135
        %s137 = smul.u32 2, %s9
      $region28: #{unet_ag_forward.21} parent=23 // pred_fallthru
        _
    $region24: #{unet_ag_forward.21} parent=5 // pred_fallthru
      _
    %p138 = scmp.le.s32.totalorder 1, %s9
    %p139 = scmp.lt.s32.totalorder %s9, 3
    %p140 = pnand %p138, %p139
    %p141 = pneg %p140
    // Predicated region
    $region29: #{unet_ag_forward.21} parent=5 // pred_check
      _
    $region30: #{unet_ag_forward.21} parent=5 // pred_check_branch
      %143 = sbr.rel (%p140) target = $region32
    $region31: #{unet_ag_forward.21} parent=5 // pred_region
      %s144 = ssub.s32 %s9, 1
      %s145 = smul.u32 2, %s14
      %p146 = scmp.lt.s32.totalorder %s145, 3
      %s147 = scalar_select %p146, %s145, 3
      %s148 = smul.addr %s147, 3
      %s149 = smul.addr %s148, 8
      %s150 = scalar_lea.vmem %s0, %s149
      %p151 = pneg %p35
      %p152 = pneg %p32
      %p153 = pneg %p56
      %p154 = pneg %p53
      %p155 = pneg %p77
      %p156 = pneg %p74
      %p157 = pneg %p103
      %p158 = pneg %p100
      %s159 = smul.u32 2, %s14
      %p160 = scmp.lt.s32.totalorder %s159, 3
      %s161 = scalar_select %p160, %s159, 3
      %s162 = smul.addr %s161, 8
      %s163 = scalar_lea.vmem %s3, %s162
      %s164 = smul.u32 2, %s14
      %p165 = scmp.lt.s32.totalorder %s164, 3
      %s166 = scalar_select %p165, %s164, 3
      %s167 = smul.addr %s166, 3
      %s168 = smul.addr %s167, 8
      %s169 = scalar_lea.vmem %s0, %s168
      %s170 = smul.u32 2, %s14
      %s171 = smul.u32 2, %s14
      %p172 = scmp.lt.s32.totalorder %s171, 3
      %s173 = scalar_select %p172, %s171, 3
      %s174 = smul.addr %s173, 8
      %s175 = scalar_lea.vmem %s3, %s174
      %s176 = smul.u32 2, %s14
      %v178 = vld [vmem:[%s169] sm:$0xff]
      %v179 = vld [vmem:[%s169 + $0x8] sm:$0xff]
      %v180 = vld [vmem:[%s169 + $0x10] sm:$0xff]
      %v181 = vld [vmem:[%s169 + $0x18] sm:$0xff]
      %v182 = vld [vmem:[%s169 + $0x20] sm:$0xff]
      %v183 = vld [vmem:[%s169 + $0x28] sm:$0xff]
      %v184 = vpack.c.bf16 %v181, %v178
      %v185 = vpack.c.bf16 %v182, %v179
      %v186 = vpack.c.bf16 %v183, %v180
      %v187 = vld [vmem:[%s1] sm:$0xf]
      %v188 = vld [vmem:[%s1 + $0x4] sm:$0xf]
      %v189 = vld [vmem:[%s1 + $0x8] sm:$0xf]
      %v190 = vld [vmem:[%s1 + $0xc] sm:$0xf]
      %v191 = vld [vmem:[%s1 + $0x10] sm:$0xf]
      %v192 = vld [vmem:[%s1 + $0x14] sm:$0xf]
      %v193 = vld [vmem:[%s1 + $0x18] sm:$0xf]
      %v194 = vld [vmem:[%s1 + $0x1c] sm:$0xf]
      %v195 = vld [vmem:[%s1 + $0x20] sm:$0xf]
      %v196 = vld [vmem:[%s1 + $0x24] sm:$0xf]
      %v197 = vld [vmem:[%s1 + $0x28] sm:$0xf]
      %v198 = vld [vmem:[%s1 + $0x2c] sm:$0xf]
      %v199 = vld [vmem:[%s1 + $0x30] sm:$0xf]
      %v200 = vld [vmem:[%s1 + $0x34] sm:$0xf]
      %v201 = vld [vmem:[%s1 + $0x38] sm:$0xf]
      %v202 = vld [vmem:[%s1 + $0x3c] sm:$0xf]
      %v203 = vld [vmem:[%s1 + $0x40] sm:$0xf]
      %v204 = vld [vmem:[%s1 + $0x44] sm:$0xf]
      %v205 = vld [vmem:[%s1 + $0x48] sm:$0xf]
      %v206 = vld [vmem:[%s1 + $0x4c] sm:$0xf]
      %v207 = vld [vmem:[%s1 + $0x50] sm:$0xf]
      %v208 = vld [vmem:[%s1 + $0x54] sm:$0xf]
      %v209 = vld [vmem:[%s1 + $0x58] sm:$0xf]
      %v210 = vld [vmem:[%s1 + $0x5c] sm:$0xf]
      %v211 = vld [vmem:[%s1 + $0x60] sm:$0xf]
      %v212 = vld [vmem:[%s1 + $0x64] sm:$0xf]
      %v213 = vld [vmem:[%s1 + $0x68] sm:$0xf]
      %v214 = vld [vmem:[%s1 + $0x6c] sm:$0xf]
      %v215 = vld [vmem:[%s1 + $0x70] sm:$0xf]
      %v216 = vld [vmem:[%s1 + $0x74] sm:$0xf]
      %v217 = vld [vmem:[%s1 + $0x78] sm:$0xf]
      %v218 = vld [vmem:[%s1 + $0x7c] sm:$0xf]
      %v219 = vld [vmem:[%s1 + $0x80] sm:$0xf]
      %v220 = vld [vmem:[%s1 + $0x84] sm:$0xf]
      %v221 = vld [vmem:[%s1 + $0x88] sm:$0xf]
      %v222 = vld [vmem:[%s1 + $0x8c] sm:$0xf]
      %v223 = vld [vmem:[%s2] sm:$0x1]
      %v225 = vlaneseq
      %v226 = vshrl.u32 %v225, 7
      %v227 = vsub.s32 0, %v226
      %v228 = vrot.slane %v223, %v227
      %v266 = vunpack.c.l.b16 %v187
      %v267 = vunpack.c.l.b16 %v188
      %v268 = vunpack.c.l.b16 %v189
      %v269 = vunpack.c.l.b16 %v190
      %v270 = vunpack.c.l.b16 %v191
      %v271 = vunpack.c.l.b16 %v192
      %v272 = vunpack.c.l.b16 %v193
      %v273 = vunpack.c.l.b16 %v194
      %v274 = vunpack.c.l.b16 %v195
      %v275 = vunpack.c.l.b16 %v196
      %v276 = vunpack.c.l.b16 %v197
      %v277 = vunpack.c.l.b16 %v198
      %v278 = vunpack.c.l.b16 %v199
      %v279 = vunpack.c.l.b16 %v200
      %v280 = vunpack.c.l.b16 %v201
      %v281 = vunpack.c.l.b16 %v202
      %v282 = vunpack.c.l.b16 %v203
      %v283 = vunpack.c.l.b16 %v204
      %v284 = vunpack.c.l.b16 %v205
      %v285 = vunpack.c.l.b16 %v206
      %v286 = vunpack.c.l.b16 %v207
      %v287 = vunpack.c.l.b16 %v208
      %v288 = vunpack.c.l.b16 %v209
      %v289 = vunpack.c.l.b16 %v210
      %v290 = vunpack.c.l.b16 %v211
      %v291 = vunpack.c.l.b16 %v212
      %v292 = vunpack.c.l.b16 %v213
      %v293 = vunpack.c.l.b16 %v214
      %v294 = vunpack.c.l.b16 %v215
      %v295 = vunpack.c.l.b16 %v216
      %v296 = vunpack.c.l.b16 %v217
      %v297 = vunpack.c.l.b16 %v218
      %v298 = vunpack.c.l.b16 %v219
      %v299 = vunpack.c.l.b16 %v220
      %v300 = vunpack.c.l.b16 %v221
      %v301 = vunpack.c.l.b16 %v222
      %v302 = vpack.c.b16 %v267, %v266
      %v303 = vpack.c.b16 %v269, %v268
      %v304 = vpack.c.b16 %v271, %v270
      %v305 = vpack.c.b16 %v273, %v272
      %v306 = vpack.c.b16 %v275, %v274
      %v307 = vpack.c.b16 %v277, %v276
      %v308 = vpack.c.b16 %v279, %v278
      %v309 = vpack.c.b16 %v281, %v280
      %v310 = vpack.c.b16 %v283, %v282
      %v311 = vpack.c.b16 %v285, %v284
      %v312 = vpack.c.b16 %v287, %v286
      %v313 = vpack.c.b16 %v289, %v288
      %v314 = vpack.c.b16 %v291, %v290
      %v315 = vpack.c.b16 %v293, %v292
      %v316 = vpack.c.b16 %v295, %v294
      %v317 = vpack.c.b16 %v297, %v296
      %v318 = vpack.c.b16 %v299, %v298
      %v319 = vpack.c.b16 %v301, %v300
      %vm338 = vcmask 261120
      %v340 = vsel %vm338, %v186, 0
      %342 = vmatprep.subr.bf16.mxu0 0
      %343 = vmatpush1.bf16.msra.mxu0 %v302
      %344 = vmatprep.subr.bf16.mxu0 0
      %345 = vmatpush1.bf16.msra.mxu0 %v303
      %346 = vmatprep.subr.bf16.mxu0 0
      %347 = vmatpush1.bf16.msra.mxu0 %v304
      %348 = vmatprep.subr.bf16.mxu0 0
      %349 = vmatpush1.bf16.msra.mxu0 %v305
      %350 = vmatprep.subr.bf16.mxu0 0
      %351 = vmatpush1.bf16.msra.mxu0 %v306
      %352 = vmatprep.subr.bf16.mxu0 0
      %353 = vmatpush1.bf16.msra.mxu0 %v307
      %354 = vmatprep.subr.bf16.mxu0 0
      %355 = vmatpush1.bf16.msra.mxu0 %v308
      %356 = vmatprep.subr.bf16.mxu0 0
      %357 = vmatpush1.bf16.msra.mxu0 %v309
      %358 = vmatprep.subr.bf16.mxu0 0
      %359 = vmatpush1.bf16.msra.mxu0 %v310
      %360 = vmatprep.subr.bf16.mxu0 0
      %361 = vmatpush1.bf16.msra.mxu0 %v311
      %362 = vmatprep.subr.bf16.mxu0 0
      %363 = vmatpush1.bf16.msra.mxu0 %v312
      %364 = vmatprep.subr.bf16.mxu0 0
      %365 = vmatpush1.bf16.msra.mxu0 %v313
      %366 = vmatprep.subr.bf16.mxu0 0
      %367 = vmatpush1.bf16.msra.mxu0 %v314
      %368 = vmatprep.subr.bf16.mxu0 0
      %369 = vmatpush1.bf16.msra.mxu0 %v315
      %370 = vmatprep.subr.bf16.mxu0 0
      %371 = vmatpush1.bf16.msra.mxu0 %v316
      %372 = vmatprep.subr.bf16.mxu0 0
      %373 = vmatpush1.bf16.msra.mxu0 %v317
      %374 = vmatprep.mubr.bf16.mxu0 %v185
      %375 = vmatmul.mubr.bf16.gmra.mrb[0].mxu0 %v184
      %v376 = vpop.f32.mrb[0].mxu0
      %v377 = vadd.f32 %v228, %v376
      %v378 = vpop.f32.mrb[0].mxu0
      %v379 = vpop.f32.mrb[0].mxu0
      %v380 = vadd.f32 %v228, %v379
      %v381 = vpop.f32.mrb[0].mxu0
      %382 = vdwg.mxu0
      %383 = vmatprep.subr.bf16.mxu0 0
      %384 = vmatpush1.bf16.msra.mxu0 %v318
      %385 = vmatprep.subr.bf16.mxu0 0
      %386 = vmatpush1.bf16.msra.mxu0 %v319
      %387 = vmatprep.subr.bf16.mxu0 0
      %388 = vmatpush1.bf16.msra.mxu0 0
      %389 = vmatprep.subr.bf16.mxu0 0
      %390 = vmatpush1.bf16.msra.mxu0 0
      %391 = vmatprep.subr.bf16.mxu0 0
      %392 = vmatpush1.bf16.msra.mxu0 0
      %393 = vmatprep.subr.bf16.mxu0 0
      %394 = vmatpush1.bf16.msra.mxu0 0
      %395 = vmatprep.subr.bf16.mxu0 0
      %396 = vmatpush1.bf16.msra.mxu0 0
      %397 = vmatprep.subr.bf16.mxu0 0
      %398 = vmatpush1.bf16.msra.mxu0 0
      %399 = vmatprep.subr.bf16.mxu0 0
      %400 = vmatpush1.bf16.msra.mxu0 0
      %401 = vmatprep.subr.bf16.mxu0 0
      %402 = vmatpush1.bf16.msra.mxu0 0
      %403 = vmatprep.subr.bf16.mxu0 0
      %404 = vmatpush1.bf16.msra.mxu0 0
      %405 = vmatprep.subr.bf16.mxu0 0
      %406 = vmatpush1.bf16.msra.mxu0 0
      %407 = vmatprep.subr.bf16.mxu0 0
      %408 = vmatpush1.bf16.msra.mxu0 0
      %409 = vmatprep.subr.bf16.mxu0 0
      %410 = vmatpush1.bf16.msra.mxu0 0
      %411 = vmatprep.subr.bf16.mxu0 0
      %412 = vmatpush1.bf16.msra.mxu0 0
      %413 = vmatprep.subr.bf16.mxu0 0
      %414 = vmatpush1.bf16.msra.mxu0 0
      %415 = vmatprep.mubr.bf16.mxu0 0
      %416 = vmatmul.mubr.bf16.gmra.mrb[0].mxu0 %v340
      %v417 = vpop.f32.mrb[0].mxu0
      %v418 = vadd.f32 %v377, %v417
      %v419 = vpop.f32.mrb[0].mxu0
      %v420 = vpop.f32.mrb[0].mxu0
      %v421 = vadd.f32 %v380, %v420
      %v422 = vpop.f32.mrb[0].mxu0
      %423 = vdwg.mxu0
      %v424 = vmax.f32 %v418, 0.0
      %v425 = vmax.f32 %v421, 0.0
      %426 = vst.msk [vmem:[%s175] sm:$0xff] %vm338, %v424
      %427 = vst.msk [vmem:[%s175 + $0x8] sm:$0xff] %vm338, %v425
      %s428 = smul.u32 2, %s14
      %p429 = scmp.lt.s32.totalorder %s428, 3
      %s430 = scalar_select %p429, %s428, 3
      %s431 = smul.addr %s430, 8
      %s432 = scalar_lea.vmem %s3, %s431
      // Predicated region
      $region33: #{unet_ag_forward.21} parent=31 // pred_check
        %p433 = pneg %p100
      $region34: #{unet_ag_forward.21} parent=31 // pred_check_branch
        %435 = sbr.rel (%p433) target = $region36
      $region35: #{unet_ag_forward.21} parent=31 // pred_region
        %s436 = smul.u32 2, %s14
      $region36: #{unet_ag_forward.21} parent=31 // pred_fallthru
        _
    $region32: #{unet_ag_forward.21} parent=5 // pred_fallthru
      _
    %p437 = scmp.le.s32.totalorder 2, %s9
    // Predicated region
    $region37: #{unet_ag_forward.21} parent=5 // pred_check
      %p438 = pneg %p437
    $region38: #{unet_ag_forward.21} parent=5 // pred_check_branch
      %440 = sbr.rel (%p438) target = $region40
    $region39: #{unet_ag_forward.21} parent=5 // pred_region
      %s441 = ssub.s32 %s9, 2
      // Predicated region
      $region41: #{unet_ag_forward.21} parent=39 // pred_check
        %p442 = pneg %p106
      $region42: #{unet_ag_forward.21} parent=39 // pred_check_branch
        %444 = sbr.rel (%p442) target = $region44
      $region43: #{unet_ag_forward.21} parent=39 // pred_region
        %s445 = smul.u32 2, %s15
        %p446 = scmp.lt.s32.totalorder %s445, 3
        %s447 = scalar_select %p446, %s445, 3
        %s448 = smul.addr %s447, 8
        %s449 = scalar_lea.vmem %s3, %s448
      $region44: #{unet_ag_forward.21} parent=39 // pred_fallthru
        _
    $region40: #{unet_ag_forward.21} parent=5 // pred_fallthru
      _
  $region6: #{unet_ag_forward.21} parent=0 // loop_footer
    %s13 = sadd.s32 1, %s9
  $region7: #{unet_ag_forward.21} parent=0 // loop_footer_branch
    %8 = sbr.rel target = $region3
  $region8: #{unet_ag_forward.21} parent=0 // loop_exit
    _

// kernel: unet_ag_forward.22
$region0: #{unet_ag_forward.22}
  #allocation0 [shape = 'u32[]', space=smem, size = 0x4, offset = 0x4, fixed_abs, tag = 'smem constant byte address 0x4 - core index']
  #allocation1 [shape = 'u32[144,128]{1,0:T(1,128)}', space=vmem, size = 0x12000, scoped, tag = 'internal scratch']
  %s0 = inlined_call_operand.vmem [shape: f32[160,96], index: 0, kind: input, shape index: {}]
  %s1 = inlined_call_operand.vmem [shape: bf16[3,96,16], index: 1, kind: input, shape index: {}]
  %s2 = inlined_call_operand.vmem [shape: f32[160,48], index: 2, kind: input, shape index: {}]
  %s3 = inlined_call_operand.vmem [shape: bf16[3,48,16], index: 3, kind: input, shape index: {}]
  %s4 = inlined_call_operand.vmem [shape: f32[1,16], index: 4, kind: input, shape index: {}]
  %s5 = inlined_call_operand.vmem [shape: f32[128,16], index: 5, kind: output, shape index: {}]
  %s6 = sld [smem:[#allocation0]]
  $region53: #{unet_ag_forward.22} parent=0
    _
  %s8 = ssub.s32 1, %s6
  %s9 = scalar_select 0, %s8, %s6
  loop: start=0, step=1, limit=4
  $region2: #{unet_ag_forward.22} parent=0 // loop_pre_header
    _
  $region3: #{unet_ag_forward.22} parent=0 // loop_header
    %s11 = sphi 0, %s15
    %p12 = scmp.ge.s32.totalorder %s11, 4
    %s21 = sphi 0, %s23
    %s24 = sphi 0, %s21
    %s25 = sphi 0, %s24
    %s41 = sphi 0, %s25
    %s45 = sphi 0, %s45
    %s47 = sphi 0, %s45
    %s48 = sphi 0, %s47
    %s62 = sphi 0, %s48
    %s68 = sphi 0, %s70
    %s71 = sphi 0, %s68
    %s72 = sphi 0, %s71
    %s88 = sphi 0, %s72
    %s92 = sphi 0, %s92
    %s94 = sphi 0, %s92
    %s95 = sphi 0, %s94
    %s109 = sphi 0, %s95
    %s113 = sphi 0, %s113
    %s115 = sphi 0, %s113
    %s116 = sphi 0, %s115
    %s130 = sphi 0, %s116
    %s136 = sphi 0, %s138
    %s139 = sphi 0, %s136
    %s140 = sphi 0, %s139
    %s156 = sphi 0, %s140
  $region4: #{unet_ag_forward.22} parent=0 // loop_header_branch
    %14 = sbr.rel (%p12) target = $region8
  $region5: #{unet_ag_forward.22} parent=0 // loop_body
    %s16 = ssub.s32 %s11, 1
    %s17 = ssub.s32 %s11, 2
    %s18 = sadd.s32 %s11, 1
    %s19 = ssub.s32 %s11, %s18
    %p20 = scmp.eq.s32.totalorder %s19, 0
    %s22 = sadd.s32 %s21, 1
    %s23 = scalar_select %p20, %s21, %s22
    %p26 = pneg %p20
    %p27 = scmp.eq.s32.totalorder %s11, 1
    %p28 = por %p26, %p27
    %p29 = scmp.ne.s32.totalorder %s21, %s24
    %p30 = scmp.eq.s32.totalorder %s11, 0
    %p31 = por %p29, %p30
    %p32 = scmp.ne.s32.totalorder %s21, %s24
    %p33 = scmp.eq.s32.totalorder %s16, 1
    %p34 = por %p32, %p33
    %p35 = scmp.ne.s32.totalorder %s24, %s25
    %p36 = scmp.eq.s32.totalorder %s16, 0
    %p37 = por %p35, %p36
    %p38 = scmp.ne.s32.totalorder %s24, %s25
    %p39 = scmp.eq.s32.totalorder %s17, 1
    %p40 = por %p38, %p39
    %p42 = scmp.ne.s32.totalorder %s25, %s41
    %p43 = scmp.eq.s32.totalorder %s17, 0
    %p44 = por %p42, %p43
    %s46 = sadd.s32 %s45, 1
    %p49 = scmp.eq.s32.totalorder %s11, 1
    %p50 = scmp.ne.s32.totalorder %s45, %s47
    %p51 = scmp.eq.s32.totalorder %s11, 0
    %p52 = por %p50, %p51
    %p53 = scmp.ne.s32.totalorder %s45, %s47
    %p54 = scmp.eq.s32.totalorder %s16, 1
    %p55 = por %p53, %p54
    %p56 = scmp.ne.s32.totalorder %s47, %s48
    %p57 = scmp.eq.s32.totalorder %s16, 0
    %p58 = por %p56, %p57
    %p59 = scmp.ne.s32.totalorder %s47, %s48
    %p60 = scmp.eq.s32.totalorder %s17, 1
    %p61 = por %p59, %p60
    %p63 = scmp.ne.s32.totalorder %s48, %s62
    %p64 = scmp.eq.s32.totalorder %s17, 0
    %p65 = por %p63, %p64
    %s66 = ssub.s32 %s11, %s18
    %p67 = scmp.eq.s32.totalorder %s66, 0
    %s69 = sadd.s32 %s68, 1
    %s70 = scalar_select %p67, %s68, %s69
    %p73 = pneg %p67
    %p74 = scmp.eq.s32.totalorder %s11, 1
    %p75 = por %p73, %p74
    %p76 = scmp.ne.s32.totalorder %s68, %s71
    %p77 = scmp.eq.s32.totalorder %s11, 0
    %p78 = por %p76, %p77
    %p79 = scmp.ne.s32.totalorder %s68, %s71
    %p80 = scmp.eq.s32.totalorder %s16, 1
    %p81 = por %p79, %p80
    %p82 = scmp.ne.s32.totalorder %s71, %s72
    %p83 = scmp.eq.s32.totalorder %s16, 0
    %p84 = por %p82, %p83
    %p85 = scmp.ne.s32.totalorder %s71, %s72
    %p86 = scmp.eq.s32.totalorder %s17, 1
    %p87 = por %p85, %p86
    %p89 = scmp.ne.s32.totalorder %s72, %s88
    %p90 = scmp.eq.s32.totalorder %s17, 0
    %p91 = por %p89, %p90
    %s93 = sadd.s32 %s92, 1
    %p96 = scmp.eq.s32.totalorder %s11, 1
    %p97 = scmp.ne.s32.totalorder %s92, %s94
    %p98 = scmp.eq.s32.totalorder %s11, 0
    %p99 = por %p97, %p98
    %p100 = scmp.ne.s32.totalorder %s92, %s94
    %p101 = scmp.eq.s32.totalorder %s16, 1
    %p102 = por %p100, %p101
    %p103 = scmp.ne.s32.totalorder %s94, %s95
    %p104 = scmp.eq.s32.totalorder %s16, 0
    %p105 = por %p103, %p104
    %p106 = scmp.ne.s32.totalorder %s94, %s95
    %p107 = scmp.eq.s32.totalorder %s17, 1
    %p108 = por %p106, %p107
    %p110 = scmp.ne.s32.totalorder %s95, %s109
    %p111 = scmp.eq.s32.totalorder %s17, 0
    %p112 = por %p110, %p111
    %s114 = sadd.s32 %s113, 1
    %p117 = scmp.eq.s32.totalorder %s11, 1
    %p118 = scmp.ne.s32.totalorder %s113, %s115
    %p119 = scmp.eq.s32.totalorder %s11, 0
    %p120 = por %p118, %p119
    %p121 = scmp.ne.s32.totalorder %s113, %s115
    %p122 = scmp.eq.s32.totalorder %s16, 1
    %p123 = por %p121, %p122
    %p124 = scmp.ne.s32.totalorder %s115, %s116
    %p125 = scmp.eq.s32.totalorder %s16, 0
    %p126 = por %p124, %p125
    %p127 = scmp.ne.s32.totalorder %s115, %s116
    %p128 = scmp.eq.s32.totalorder %s17, 1
    %p129 = por %p127, %p128
    %p131 = scmp.ne.s32.totalorder %s116, %s130
    %p132 = scmp.eq.s32.totalorder %s17, 0
    %p133 = por %p131, %p132
    %s134 = ssub.s32 %s11, %s18
    %p135 = scmp.eq.s32.totalorder %s134, 0
    %s137 = sadd.s32 %s136, 1
    %s138 = scalar_select %p135, %s136, %s137
    %p141 = pneg %p135
    %p142 = scmp.eq.s32.totalorder %s11, 1
    %p143 = por %p141, %p142
    %p144 = scmp.ne.s32.totalorder %s136, %s139
    %p145 = scmp.eq.s32.totalorder %s11, 0
    %p146 = por %p144, %p145
    %p147 = scmp.ne.s32.totalorder %s136, %s139
    %p148 = scmp.eq.s32.totalorder %s16, 1
    %p149 = por %p147, %p148
    %p150 = scmp.ne.s32.totalorder %s139, %s140
    %p151 = scmp.eq.s32.totalorder %s16, 0
    %p152 = por %p150, %p151
    %p153 = scmp.ne.s32.totalorder %s139, %s140
    %p154 = scmp.eq.s32.totalorder %s17, 1
    %p155 = por %p153, %p154
    %p157 = scmp.ne.s32.totalorder %s140, %s156
    %p158 = scmp.eq.s32.totalorder %s17, 0
    %p159 = por %p157, %p158
    %p160 = scmp.le.s32.totalorder 1, %s11
    %p161 = scmp.lt.s32.totalorder %s11, 3
    %p162 = pnand %p160, %p161
    %p163 = pneg %p162
    // Predicated region
    $region9: #{unet_ag_forward.22} parent=5 // pred_check
      _
    $region10: #{unet_ag_forward.22} parent=5 // pred_check_branch
      %165 = sbr.rel (%p162) target = $region12
    $region11: #{unet_ag_forward.22} parent=5 // pred_region
      %s166 = ssub.s32 %s11, 1
      // Predicated region
      $region13: #{unet_ag_forward.22} parent=11 // pred_check
        %p167 = pneg %p58
      $region14: #{unet_ag_forward.22} parent=11 // pred_check_branch
        %169 = sbr.rel (%p167) target = $region16
      $region15: #{unet_ag_forward.22} parent=11 // pred_region
        _
      $region16: #{unet_ag_forward.22} parent=11 // pred_fallthru
        _
      // Predicated region
      $region17: #{unet_ag_forward.22} parent=11 // pred_check
        %p170 = pneg %p105
      $region18: #{unet_ag_forward.22} parent=11 // pred_check_branch
        %172 = sbr.rel (%p170) target = $region20
      $region19: #{unet_ag_forward.22} parent=11 // pred_region
        _
      $region20: #{unet_ag_forward.22} parent=11 // pred_fallthru
        _
      // Predicated region
      $region21: #{unet_ag_forward.22} parent=11 // pred_check
        %p173 = pneg %p126
      $region22: #{unet_ag_forward.22} parent=11 // pred_check_branch
        %175 = sbr.rel (%p173) target = $region24
      $region23: #{unet_ag_forward.22} parent=11 // pred_region
        _
      $region24: #{unet_ag_forward.22} parent=11 // pred_fallthru
        _
    $region12: #{unet_ag_forward.22} parent=5 // pred_fallthru
      _
    %p176 = scmp.lt.s32.totalorder %s11, 2
    // Predicated region
    $region25: #{unet_ag_forward.22} parent=5 // pred_check
      %p177 = pneg %p176
    $region26: #{unet_ag_forward.22} parent=5 // pred_check_branch
      %179 = sbr.rel (%p177) target = $region28
    $region27: #{unet_ag_forward.22} parent=5 // pred_region
      // Predicated region
      $region29: #{unet_ag_forward.22} parent=27 // pred_check
        %p180 = pneg %p31
      $region30: #{unet_ag_forward.22} parent=27 // pred_check_branch
        %182 = sbr.rel (%p180) target = $region32
      $region31: #{unet_ag_forward.22} parent=27 // pred_region
        %s183 = smul.u32 10, %s11
        %p184 = scmp.lt.s32.totalorder %s183, 19
        %s185 = scalar_select %p184, %s183, 19
        %s186 = smul.addr %s185, 8
        %s187 = scalar_lea.vmem %s0, %s186
        %s188 = smul.u32 10, %s11
      $region32: #{unet_ag_forward.22} parent=27 // pred_fallthru
        _
      // Predicated region
      $region33: #{unet_ag_forward.22} parent=27 // pred_check
        %p189 = pneg %p78
      $region34: #{unet_ag_forward.22} parent=27 // pred_check_branch
        %191 = sbr.rel (%p189) target = $region36
      $region35: #{unet_ag_forward.22} parent=27 // pred_region
        %s192 = smul.u32 10, %s11
        %p193 = scmp.lt.s32.totalorder %s192, 19
        %s194 = scalar_select %p193, %s192, 19
        %s195 = smul.addr %s194, 8
        %s196 = scalar_lea.vmem %s2, %s195
        %s197 = smul.u32 10, %s11
      $region36: #{unet_ag_forward.22} parent=27 // pred_fallthru
        _
    $region28: #{unet_ag_forward.22} parent=5 // pred_fallthru
      _
    %p198 = scmp.le.s32.totalorder 1, %s11
    %p199 = scmp.lt.s32.totalorder %s11, 3
    %p200 = pnand %p198, %p199
    %p201 = pneg %p200
    // Predicated region
    $region37: #{unet_ag_forward.22} parent=5 // pred_check
      _
    $region38: #{unet_ag_forward.22} parent=5 // pred_check_branch
      %203 = sbr.rel (%p200) target = $region40
    $region39: #{unet_ag_forward.22} parent=5 // pred_region
      %s204 = ssub.s32 %s11, 1
      %s205 = smul.u32 10, %s16
      %p206 = scmp.lt.s32.totalorder %s205, 19
      %s207 = scalar_select %p206, %s205, 19
      %s208 = smul.addr %s207, 8
      %s209 = scalar_lea.vmem %s0, %s208
      %p210 = pneg %p37
      %p211 = pneg %p34
      %p212 = pneg %p58
      %p213 = pneg %p55
      %s214 = smul.u32 10, %s16
      %p215 = scmp.lt.s32.totalorder %s214, 19
      %s216 = scalar_select %p215, %s214, 19
      %s217 = smul.addr %s216, 8
      %s218 = scalar_lea.vmem %s2, %s217
      %p219 = pneg %p84
      %p220 = pneg %p81
      %p221 = pneg %p105
      %p222 = pneg %p102
      %p223 = pneg %p126
      %p224 = pneg %p123
      %p225 = pneg %p152
      %p226 = pneg %p149
      %s227 = smul.u32 8, %s16
      %p228 = scmp.lt.s32.totalorder %s227, 15
      %s229 = scalar_select %p228, %s227, 15
      %s230 = smul.addr %s229, 8
      %s231 = scalar_lea.vmem %s5, %s230
      %s232 = smul.u32 10, %s16
      %p233 = scmp.lt.s32.totalorder %s232, 19
      %s234 = scalar_select %p233, %s232, 19
      %s235 = smul.addr %s234, 8
      %s236 = scalar_lea.vmem %s0, %s235
      %s237 = smul.u32 10, %s16
      %s238 = smul.u32 10, %s16
      %p239 = scmp.lt.s32.totalorder %s238, 19
      %s240 = scalar_select %p239, %s238, 19
      %s241 = smul.addr %s240, 8
      %s242 = scalar_lea.vmem %s2, %s241
      %s243 = smul.u32 10, %s16
      %s244 = smul.u32 8, %s16
      %p245 = scmp.lt.s32.totalorder %s244, 15
      %s246 = scalar_select %p245, %s244, 15
      %s247 = smul.addr %s246, 8
      %s248 = scalar_lea.vmem %s5, %s247
      %s249 = smul.u32 8, %s16
      %v251 = vld [vmem:[%s236] sm:$0xff]
      %v252 = vld [vmem:[%s236 + $0x8] sm:$0xff]
      %v253 = vld [vmem:[%s236 + $0x10] sm:$0xff]
      %v254 = vld [vmem:[%s236 + $0x18] sm:$0xff]
      %v255 = vld [vmem:[%s236 + $0x20] sm:$0xff]
      %v256 = vld [vmem:[%s236 + $0x28] sm:$0xff]
      %v257 = vld [vmem:[%s236 + $0x30] sm:$0xff]
      %v258 = vld [vmem:[%s236 + $0x38] sm:$0xff]
      %v259 = vpack.c.bf16 %v252, %v251
      %v260 = vpack.c.bf16 %v254, %v253
      %v261 = vpack.c.bf16 %v256, %v255
      %v262 = vpack.c.bf16 %v258, %v257
      %v263 = vld [vmem:[%s1] sm:$0xf]
      %v264 = vld [vmem:[%s1 + $0x4] sm:$0xf]
      %v265 = vld [vmem:[%s1 + $0x8] sm:$0xf]
      %v266 = vld [vmem:[%s1 + $0xc] sm:$0xf]
      %v267 = vld [vmem:[%s1 + $0x10] sm:$0xf]
      %v268 = vld [vmem:[%s1 + $0x14] sm:$0xf]
      %v269 = vld [vmem:[%s1 + $0x18] sm:$0xf]
      %v270 = vld [vmem:[%s1 + $0x1c] sm:$0xf]
      %v271 = vld [vmem:[%s1 + $0x20] sm:$0xf]
      %v272 = vld [vmem:[%s1 + $0x24] sm:$0xf]
      %v273 = vld [vmem:[%s1 + $0x28] sm:$0xf]
      %v274 = vld [vmem:[%s1 + $0x2c] sm:$0xf]
      %v275 = vld [vmem:[%s236 + $0x40] sm:$0xff]
      %v276 = vpack.c.bf16 %v253, %v252
      %v277 = vpack.c.bf16 %v255, %v254
      %v278 = vpack.c.bf16 %v257, %v256
      %v279 = vpack.c.bf16 %v275, %v258
      %s280 = scalar_lea.vmem %s1, 48
      %v281 = vld [vmem:[%s280] sm:$0xf]
      %v282 = vld [vmem:[%s280 + $0x4] sm:$0xf]
      %v283 = vld [vmem:[%s280 + $0x8] sm:$0xf]
      %v284 = vld [vmem:[%s280 + $0xc] sm:$0xf]
      %v285 = vld [vmem:[%s280 + $0x10] sm:$0xf]
      %v286 = vld [vmem:[%s280 + $0x14] sm:$0xf]
      %v287 = vld [vmem:[%s280 + $0x18] sm:$0xf]
      %v288 = vld [vmem:[%s280 + $0x1c] sm:$0xf]
      %v289 = vld [vmem:[%s280 + $0x20] sm:$0xf]
      %v290 = vld [vmem:[%s280 + $0x24] sm:$0xf]
      %v291 = vld [vmem:[%s280 + $0x28] sm:$0xf]
      %v292 = vld [vmem:[%s280 + $0x2c] sm:$0xf]
      %v305 = vunpack.c.l.b16 %v281
      %v306 = vunpack.c.l.b16 %v282
      %v307 = vunpack.c.l.b16 %v283
      %v308 = vunpack.c.l.b16 %v284
      %v309 = vunpack.c.l.b16 %v285
      %v310 = vunpack.c.l.b16 %v286
      %v311 = vunpack.c.l.b16 %v287
      %v312 = vunpack.c.l.b16 %v288
      %v313 = vunpack.c.l.b16 %v289
      %v314 = vunpack.c.l.b16 %v290
      %v315 = vunpack.c.l.b16 %v291
      %v316 = vunpack.c.l.b16 %v292
      %v317 = vpack.c.b16 %v306, %v305
      %v318 = vpack.c.b16 %v308, %v307
      %v319 = vpack.c.b16 %v310, %v309
      %v320 = vpack.c.b16 %v312, %v311
      %v321 = vpack.c.b16 %v314, %v313
      %v322 = vpack.c.b16 %v316, %v315
      %vm329 = vcmask 785408
      %v331 = vsel %vm329, %v276, 0
      %v334 = vsel %vm329, %v277, 0
      %v337 = vsel %vm329, %v278, 0
      %v340 = vsel %vm329, %v279, 0
      %342 = vmatprep.subr.bf16.mxu0 0
      %343 = vmatpush1.bf16.msra.mxu0 %v317
      %344 = vmatprep.subr.bf16.mxu0 0
      %345 = vmatpush1.bf16.msra.mxu0 %v318
      %346 = vmatprep.subr.bf16.mxu0 0
      %347 = vmatpush1.bf16.msra.mxu0 %v319
      %348 = vmatprep.subr.bf16.mxu0 0
      %349 = vmatpush1.bf16.msra.mxu0 %v320
      %350 = vmatprep.subr.bf16.mxu0 0
      %351 = vmatpush1.bf16.msra.mxu0 %v321
      %352 = vmatprep.subr.bf16.mxu0 0
      %353 = vmatpush1.bf16.msra.mxu0 %v322
      %354 = vmatprep.subr.bf16.mxu0 0
      %355 = vmatpush1.bf16.msra.mxu0 0
      %356 = vmatprep.subr.bf16.mxu0 0
      %357 = vmatpush1.bf16.msra.mxu0 0
      %358 = vmatprep.subr.bf16.mxu0 0
      %359 = vmatpush1.bf16.msra.mxu0 0
      %360 = vmatprep.subr.bf16.mxu0 0
      %361 = vmatpush1.bf16.msra.mxu0 0
      %362 = vmatprep.subr.bf16.mxu0 0
      %363 = vmatpush1.bf16.msra.mxu0 0
      %364 = vmatprep.subr.bf16.mxu0 0
      %365 = vmatpush1.bf16.msra.mxu0 0
      %366 = vmatprep.subr.bf16.mxu0 0
      %367 = vmatpush1.bf16.msra.mxu0 0
      %368 = vmatprep.subr.bf16.mxu0 0
      %369 = vmatpush1.bf16.msra.mxu0 0
      %370 = vmatprep.subr.bf16.mxu0 0
      %371 = vmatpush1.bf16.msra.mxu0 0
      %372 = vmatprep.subr.bf16.mxu0 0
      %373 = vmatpush1.bf16.msra.mxu0 0
      %374 = vmatprep.mubr.bf16.mxu0 0
      %375 = vmatmul.mubr.bf16.gmra.mrb[0].mxu0 %v331
      %v376 = vpop.f32.mrb[0].mxu0
      %v377 = vadd.f32 0.0, %v376
      %v378 = vpop.f32.mrb[0].mxu0
      %v379 = vpop.f32.mrb[0].mxu0
      %v380 = vadd.f32 0.0, %v379
      %v381 = vpop.f32.mrb[0].mxu0
      %382 = vmatprep.mubr.bf16.mxu0 0
      %383 = vmatmul.mubr.bf16.gmra.mrb[0].mxu0 %v334
      %v384 = vpop.f32.mrb[0].mxu0
      %v385 = vadd.f32 0.0, %v384
      %v386 = vpop.f32.mrb[0].mxu0
      %v387 = vpop.f32.mrb[0].mxu0
      %v388 = vadd.f32 0.0, %v387
      %v389 = vpop.f32.mrb[0].mxu0
      %390 = vmatprep.mubr.bf16.mxu0 0
      %391 = vmatmul.mubr.bf16.gmra.mrb[0].mxu0 %v337
      %v392 = vpop.f32.mrb[0].mxu0
      %v393 = vadd.f32 0.0, %v392
      %v394 = vpop.f32.mrb[0].mxu0
      %v395 = vpop.f32.mrb[0].mxu0
      %v396 = vadd.f32 0.0, %v395
      %v397 = vpop.f32.mrb[0].mxu0
      %398 = vmatprep.mubr.bf16.mxu0 0
      %399 = vmatmul.mubr.bf16.gmra.mrb[0].mxu0 %v340
      %v400 = vpop.f32.mrb[0].mxu0
      %v401 = vadd.f32 0.0, %v400
      %v402 = vpop.f32.mrb[0].mxu0
      %v403 = vpop.f32.mrb[0].mxu0
      %v404 = vadd.f32 0.0, %v403
      %v405 = vpop.f32.mrb[0].mxu0
      %406 = vdwg.mxu0
      %v419 = vunpack.c.l.b16 %v263
      %v420 = vunpack.c.l.b16 %v264
      %v421 = vunpack.c.l.b16 %v265
      %v422 = vunpack.c.l.b16 %v266
      %v423 = vunpack.c.l.b16 %v267
      %v424 = vunpack.c.l.b16 %v268
      %v425 = vunpack.c.l.b16 %v269
      %v426 = vunpack.c.l.b16 %v270
      %v427 = vunpack.c.l.b16 %v271
      %v428 = vunpack.c.l.b16 %v272
      %v429 = vunpack.c.l.b16 %v273
      %v430 = vunpack.c.l.b16 %v274
      %v431 = vpack.c.b16 %v420, %v419
      %v432 = vpack.c.b16 %v422, %v421
      %v433 = vpack.c.b16 %v424, %v423
      %v434 = vpack.c.b16 %v426, %v425
      %v435 = vpack.c.b16 %v428, %v427
      %v436 = vpack.c.b16 %v430, %v429
      %v444 = vsel %vm329, %v259, 0
      %v447 = vsel %vm329, %v260, 0
      %v450 = vsel %vm329, %v261, 0
      %v453 = vsel %vm329, %v262, 0
      %455 = vmatprep.subr.bf16.mxu0 0
      %456 = vmatpush1.bf16.msra.mxu0 %v431
      %457 = vmatprep.subr.bf16.mxu0 0
      %458 = vmatpush1.bf16.msra.mxu0 %v432
      %459 = vmatprep.subr.bf16.mxu0 0
      %460 = vmatpush1.bf16.msra.mxu0 %v433
      %461 = vmatprep.subr.bf16.mxu0 0
      %462 = vmatpush1.bf16.msra.mxu0 %v434
      %463 = vmatprep.subr.bf16.mxu0 0
      %464 = vmatpush1.bf16.msra.mxu0 %v435
      %465 = vmatprep.subr.bf16.mxu0 0
      %466 = vmatpush1.bf16.msra.mxu0 %v436
      %467 = vmatprep.subr.bf16.mxu0 0
      %468 = vmatpush1.bf16.msra.mxu0 0
      %469 = vmatprep.subr.bf16.mxu0 0
      %470 = vmatpush1.bf16.msra.mxu0 0
      %471 = vmatprep.subr.bf16.mxu0 0
      %472 = vmatpush1.bf16.msra.mxu0 0
      %473 = vmatprep.subr.bf16.mxu0 0
      %474 = vmatpush1.bf16.msra.mxu0 0
      %475 = vmatprep.subr.bf16.mxu0 0
      %476 = vmatpush1.bf16.msra.mxu0 0
      %477 = vmatprep.subr.bf16.mxu0 0
      %478 = vmatpush1.bf16.msra.mxu0 0
      %479 = vmatprep.subr.bf16.mxu0 0
      %480 = vmatpush1.bf16.msra.mxu0 0
      %481 = vmatprep.subr.bf16.mxu0 0
      %482 = vmatpush1.bf16.msra.mxu0 0
      %483 = vmatprep.subr.bf16.mxu0 0
      %484 = vmatpush1.bf16.msra.mxu0 0
      %485 = vmatprep.subr.bf16.mxu0 0
      %486 = vmatpush1.bf16.msra.mxu0 0
      %487 = vmatprep.mubr.bf16.mxu0 0
      %488 = vmatmul.mubr.bf16.gmra.mrb[0].mxu0 %v444
      %v489 = vpop.f32.mrb[0].mxu0
      %v490 = vadd.f32 %v377, %v489
      %v491 = vpop.f32.mrb[0].mxu0
      %v492 = vpop.f32.mrb[0].mxu0
      %v493 = vadd.f32 %v380, %v492
      %v494 = vpop.f32.mrb[0].mxu0
      %495 = vmatprep.mubr.bf16.mxu0 0
      %496 = vmatmul.mubr.bf16.gmra.mrb[0].mxu0 %v447
      %v497 = vpop.f32.mrb[0].mxu0
      %v498 = vadd.f32 %v385, %v497
      %v499 = vpop.f32.mrb[0].mxu0
      %v500 = vpop.f32.mrb[0].mxu0
      %v501 = vadd.f32 %v388, %v500
      %v502 = vpop.f32.mrb[0].mxu0
      %503 = vmatprep.mubr.bf16.mxu0 0
      %504 = vmatmul.mubr.bf16.gmra.mrb[0].mxu0 %v450
      %v505 = vpop.f32.mrb[0].mxu0
      %v506 = vadd.f32 %v393, %v505
      %v507 = vpop.f32.mrb[0].mxu0
      %v508 = vpop.f32.mrb[0].mxu0
      %v509 = vadd.f32 %v396, %v508
      %v510 = vpop.f32.mrb[0].mxu0
      %511 = vmatprep.mubr.bf16.mxu0 0
      %512 = vmatmul.mubr.bf16.gmra.mrb[0].mxu0 %v453
      %v513 = vpop.f32.mrb[0].mxu0
      %v514 = vadd.f32 %v401, %v513
      %v515 = vpop.f32.mrb[0].mxu0
      %v516 = vpop.f32.mrb[0].mxu0
      %v517 = vadd.f32 %v404, %v516
      %v518 = vpop.f32.mrb[0].mxu0
      %519 = vdwg.mxu0
      %v520 = vld [vmem:[%s236 + $0x10] sm:$0xff]
      %v521 = vld [vmem:[%s236 + $0x18] sm:$0xff]
      %v522 = vld [vmem:[%s236 + $0x20] sm:$0xff]
      %v523 = vld [vmem:[%s236 + $0x28] sm:$0xff]
      %v524 = vld [vmem:[%s236 + $0x30] sm:$0xff]
      %v525 = vld [vmem:[%s236 + $0x38] sm:$0xff]
      %v526 = vld [vmem:[%s236 + $0x40] sm:$0xff]
      %v527 = vld [vmem:[%s236 + $0x48] sm:$0xff]
      %v528 = vpack.c.bf16 %v521, %v520
      %v529 = vpack.c.bf16 %v523, %v522
      %v530 = vpack.c.bf16 %v525, %v524
      %v531 = vpack.c.bf16 %v527, %v526
      %s532 = scalar_lea.vmem %s1, 96
      %v533 = vld [vmem:[%s532] sm:$0xf]
      %v534 = vld [vmem:[%s532 + $0x4] sm:$0xf]
      %v535 = vld [vmem:[%s532 + $0x8] sm:$0xf]
      %v536 = vld [vmem:[%s532 + $0xc] sm:$0xf]
      %v537 = vld [vmem:[%s532 + $0x10] sm:$0xf]
      %v538 = vld [vmem:[%s532 + $0x14] sm:$0xf]
      %v539 = vld [vmem:[%s532 + $0x18] sm:$0xf]
      %v540 = vld [vmem:[%s532 + $0x1c] sm:$0xf]
      %v541 = vld [vmem:[%s532 + $0x20] sm:$0xf]
      %v542 = vld [vmem:[%s532 + $0x24] sm:$0xf]
      %v543 = vld [vmem:[%s532 + $0x28] sm:$0xf]
      %v544 = vld [vmem:[%s532 + $0x2c] sm:$0xf]
      %v557 = vunpack.c.l.b16 %v533
      %v558 = vunpack.c.l.b16 %v534
      %v559 = vunpack.c.l.b16 %v535
      %v560 = vunpack.c.l.b16 %v536
      %v561 = vunpack.c.l.b16 %v537
      %v562 = vunpack.c.l.b16 %v538
      %v563 = vunpack.c.l.b16 %v539
      %v564 = vunpack.c.l.b16 %v540
      %v565 = vunpack.c.l.b16 %v541
      %v566 = vunpack.c.l.b16 %v542
      %v567 = vunpack.c.l.b16 %v543
      %v568 = vunpack.c.l.b16 %v544
      %v569 = vpack.c.b16 %v558, %v557
      %v570 = vpack.c.b16 %v560, %v559
      %v571 = vpack.c.b16 %v562, %v561
      %v572 = vpack.c.b16 %v564, %v563
      %v573 = vpack.c.b16 %v566, %v565
      %v574 = vpack.c.b16 %v568, %v567
      %v582 = vsel %vm329, %v528, 0
      %v585 = vsel %vm329, %v529, 0
      %v588 = vsel %vm329, %v530, 0
      %v591 = vsel %vm329, %v531, 0
      %593 = vmatprep.subr.bf16.mxu0 0
      %594 = vmatpush1.bf16.msra.mxu0 %v569
      %595 = vmatprep.subr.bf16.mxu0 0
      %596 = vmatpush1.bf16.msra.mxu0 %v570
      %597 = vmatprep.subr.bf16.mxu0 0
      %598 = vmatpush1.bf16.msra.mxu0 %v571
      %599 = vmatprep.subr.bf16.mxu0 0
      %600 = vmatpush1.bf16.msra.mxu0 %v572
      %601 = vmatprep.subr.bf16.mxu0 0
      %602 = vmatpush1.bf16.msra.mxu0 %v573
      %603 = vmatprep.subr.bf16.mxu0 0
      %604 = vmatpush1.bf16.msra.mxu0 %v574
      %605 = vmatprep.subr.bf16.mxu0 0
      %606 = vmatpush1.bf16.msra.mxu0 0
      %607 = vmatprep.subr.bf16.mxu0 0
      %608 = vmatpush1.bf16.msra.mxu0 0
      %609 = vmatprep.subr.bf16.mxu0 0
      %610 = vmatpush1.bf16.msra.mxu0 0
      %611 = vmatprep.subr.bf16.mxu0 0
      %612 = vmatpush1.bf16.msra.mxu0 0
      %613 = vmatprep.subr.bf16.mxu0 0
      %614 = vmatpush1.bf16.msra.mxu0 0
      %615 = vmatprep.subr.bf16.mxu0 0
      %616 = vmatpush1.bf16.msra.mxu0 0
      %617 = vmatprep.subr.bf16.mxu0 0
      %618 = vmatpush1.bf16.msra.mxu0 0
      %619 = vmatprep.subr.bf16.mxu0 0
      %620 = vmatpush1.bf16.msra.mxu0 0
      %621 = vmatprep.subr.bf16.mxu0 0
      %622 = vmatpush1.bf16.msra.mxu0 0
      %623 = vmatprep.subr.bf16.mxu0 0
      %624 = vmatpush1.bf16.msra.mxu0 0
      %625 = vmatprep.mubr.bf16.mxu0 0
      %626 = vmatmul.mubr.bf16.gmra.mrb[0].mxu0 %v582
      %v627 = vpop.f32.mrb[0].mxu0
      %v628 = vadd.f32 0.0, %v627
      %v629 = vpop.f32.mrb[0].mxu0
      %v630 = vpop.f32.mrb[0].mxu0
      %v631 = vadd.f32 0.0, %v630
      %v632 = vpop.f32.mrb[0].mxu0
      %633 = vmatprep.mubr.bf16.mxu0 0
      %634 = vmatmul.mubr.bf16.gmra.mrb[0].mxu0 %v585
      %v635 = vpop.f32.mrb[0].mxu0
      %v636 = vadd.f32 0.0, %v635
      %v637 = vpop.f32.mrb[0].mxu0
      %v638 = vpop.f32.mrb[0].mxu0
      %v639 = vadd.f32 0.0, %v638
      %v640 = vpop.f32.mrb[0].mxu0
      %641 = vmatprep.mubr.bf16.mxu0 0
      %642 = vmatmul.mubr.bf16.gmra.mrb[0].mxu0 %v588
      %v643 = vpop.f32.mrb[0].mxu0
      %v644 = vadd.f32 0.0, %v643
      %v645 = vpop.f32.mrb[0].mxu0
      %v646 = vpop.f32.mrb[0].mxu0
      %v647 = vadd.f32 0.0, %v646
      %v648 = vpop.f32.mrb[0].mxu0
      %649 = vmatprep.mubr.bf16.mxu0 0
      %650 = vmatmul.mubr.bf16.gmra.mrb[0].mxu0 %v591
      %v651 = vpop.f32.mrb[0].mxu0
      %v652 = vadd.f32 0.0, %v651
      %v653 = vpop.f32.mrb[0].mxu0
      %v654 = vpop.f32.mrb[0].mxu0
      %v655 = vadd.f32 0.0, %v654
      %v656 = vpop.f32.mrb[0].mxu0
      %657 = vdwg.mxu0
      %v658 = vadd.f32 %v490, %v628
      %v659 = vadd.f32 %v493, %v631
      %v660 = vadd.f32 %v498, %v636
      %v661 = vadd.f32 %v501, %v639
      %v662 = vadd.f32 %v506, %v644
      %v663 = vadd.f32 %v509, %v647
      %v664 = vadd.f32 %v514, %v652
      %v665 = vadd.f32 %v517, %v655
      %v666 = vld [vmem:[%s242] sm:$0xff]
      %v667 = vld [vmem:[%s242 + $0x8] sm:$0xff]
      %v668 = vld [vmem:[%s242 + $0x10] sm:$0xff]
      %v669 = vld [vmem:[%s242 + $0x18] sm:$0xff]
      %v670 = vld [vmem:[%s242 + $0x20] sm:$0xff]
      %v671 = vld [vmem:[%s242 + $0x28] sm:$0xff]
      %v672 = vld [vmem:[%s242 + $0x30] sm:$0xff]
      %v673 = vld [vmem:[%s242 + $0x38] sm:$0xff]
      %v674 = vpack.c.bf16 %v667, %v666
      %v675 = vpack.c.bf16 %v669, %v668
      %v676 = vpack.c.bf16 %v671, %v670
      %v677 = vpack.c.bf16 %v673, %v672
      %v678 = vld [vmem:[%s3] sm:$0xf]
      %v679 = vld [vmem:[%s3 + $0x4] sm:$0xf]
      %v680 = vld [vmem:[%s3 + $0x8] sm:$0xf]
      %v681 = vld [vmem:[%s3 + $0xc] sm:$0xf]
      %v682 = vld [vmem:[%s3 + $0x10] sm:$0xf]
      %v683 = vld [vmem:[%s3 + $0x14] sm:$0xf]
      %v690 = vunpack.c.l.b16 %v678
      %v691 = vunpack.c.l.b16 %v679
      %v692 = vunpack.c.l.b16 %v680
      %v693 = vunpack.c.l.b16 %v681
      %v694 = vunpack.c.l.b16 %v682
      %v695 = vunpack.c.l.b16 %v683
      %v696 = vpack.c.b16 %v691, %v690
      %v697 = vpack.c.b16 %v693, %v692
      %v698 = vpack.c.b16 %v695, %v694
      %vm702 = vcmask 392192
      %v704 = vsel %vm702, %v674, 0
      %v707 = vsel %vm702, %v675, 0
      %v710 = vsel %vm702, %v676, 0
      %v713 = vsel %vm702, %v677, 0
      %715 = vmatprep.subr.bf16.mxu0 0
      %716 = vmatpush1.bf16.msra.mxu0 %v696
      %717 = vmatprep.subr.bf16.mxu0 0
      %718 = vmatpush1.bf16.msra.mxu0 %v697
      %719 = vmatprep.subr.bf16.mxu0 0
      %720 = vmatpush1.bf16.msra.mxu0 %v698
      %721 = vmatprep.subr.bf16.mxu0 0
      %722 = vmatpush1.bf16.msra.mxu0 0
      %723 = vmatprep.subr.bf16.mxu0 0
      %724 = vmatpush1.bf16.msra.mxu0 0
      %725 = vmatprep.subr.bf16.mxu0 0
      %726 = vmatpush1.bf16.msra.mxu0 0
      %727 = vmatprep.subr.bf16.mxu0 0
      %728 = vmatpush1.bf16.msra.mxu0 0
      %729 = vmatprep.subr.bf16.mxu0 0
      %730 = vmatpush1.bf16.msra.mxu0 0
      %731 = vmatprep.subr.bf16.mxu0 0
      %732 = vmatpush1.bf16.msra.mxu0 0
      %733 = vmatprep.subr.bf16.mxu0 0
      %734 = vmatpush1.bf16.msra.mxu0 0
      %735 = vmatprep.subr.bf16.mxu0 0
      %736 = vmatpush1.bf16.msra.mxu0 0
      %737 = vmatprep.subr.bf16.mxu0 0
      %738 = vmatpush1.bf16.msra.mxu0 0
      %739 = vmatprep.subr.bf16.mxu0 0
      %740 = vmatpush1.bf16.msra.mxu0 0
      %741 = vmatprep.subr.bf16.mxu0 0
      %742 = vmatpush1.bf16.msra.mxu0 0
      %743 = vmatprep.subr.bf16.mxu0 0
      %744 = vmatpush1.bf16.msra.mxu0 0
      %745 = vmatprep.subr.bf16.mxu0 0
      %746 = vmatpush1.bf16.msra.mxu0 0
      %747 = vmatprep.mubr.bf16.mxu0 0
      %748 = vmatmul.mubr.bf16.gmra.mrb[0].mxu0 %v704
      %v749 = vpop.f32.mrb[0].mxu0
      %v750 = vadd.f32 0.0, %v749
      %v751 = vpop.f32.mrb[0].mxu0
      %v752 = vpop.f32.mrb[0].mxu0
      %v753 = vadd.f32 0.0, %v752
      %v754 = vpop.f32.mrb[0].mxu0
      %755 = vmatprep.mubr.bf16.mxu0 0
      %756 = vmatmul.mubr.bf16.gmra.mrb[0].mxu0 %v707
      %v757 = vpop.f32.mrb[0].mxu0
      %v758 = vadd.f32 0.0, %v757
      %v759 = vpop.f32.mrb[0].mxu0
      %v760 = vpop.f32.mrb[0].mxu0
      %v761 = vadd.f32 0.0, %v760
      %v762 = vpop.f32.mrb[0].mxu0
      %763 = vmatprep.mubr.bf16.mxu0 0
      %764 = vmatmul.mubr.bf16.gmra.mrb[0].mxu0 %v710
      %v765 = vpop.f32.mrb[0].mxu0
      %v766 = vadd.f32 0.0, %v765
      %v767 = vpop.f32.mrb[0].mxu0
      %v768 = vpop.f32.mrb[0].mxu0
      %v769 = vadd.f32 0.0, %v768
      %v770 = vpop.f32.mrb[0].mxu0
      %771 = vmatprep.mubr.bf16.mxu0 0
      %772 = vmatmul.mubr.bf16.gmra.mrb[0].mxu0 %v713
      %v773 = vpop.f32.mrb[0].mxu0
      %v774 = vadd.f32 0.0, %v773
      %v775 = vpop.f32.mrb[0].mxu0
      %v776 = vpop.f32.mrb[0].mxu0
      %v777 = vadd.f32 0.0, %v776
      %v778 = vpop.f32.mrb[0].mxu0
      %779 = vdwg.mxu0
      %v780 = vadd.f32 %v658, %v750
      %v781 = vadd.f32 %v659, %v753
      %v782 = vadd.f32 %v660, %v758
      %v783 = vadd.f32 %v661, %v761
      %v784 = vadd.f32 %v662, %v766
      %v785 = vadd.f32 %v663, %v769
      %v786 = vadd.f32 %v664, %v774
      %v787 = vadd.f32 %v665, %v777
      %v788 = vld [vmem:[%s242 + $0x8] sm:$0xff]
      %v789 = vld [vmem:[%s242 + $0x10] sm:$0xff]
      %v790 = vld [vmem:[%s242 + $0x18] sm:$0xff]
      %v791 = vld [vmem:[%s242 + $0x20] sm:$0xff]
      %v792 = vld [vmem:[%s242 + $0x28] sm:$0xff]
      %v793 = vld [vmem:[%s242 + $0x30] sm:$0xff]
      %v794 = vld [vmem:[%s242 + $0x38] sm:$0xff]
      %v795 = vld [vmem:[%s242 + $0x40] sm:$0xff]
      %v796 = vpack.c.bf16 %v789, %v788
      %v797 = vpack.c.bf16 %v791, %v790
      %v798 = vpack.c.bf16 %v793, %v792
      %v799 = vpack.c.bf16 %v795, %v794
      %s800 = scalar_lea.vmem %s3, 24
      %v801 = vld [vmem:[%s800] sm:$0xf]
      %v802 = vld [vmem:[%s800 + $0x4] sm:$0xf]
      %v803 = vld [vmem:[%s800 + $0x8] sm:$0xf]
      %v804 = vld [vmem:[%s800 + $0xc] sm:$0xf]
      %v805 = vld [vmem:[%s800 + $0x10] sm:$0xf]
      %v806 = vld [vmem:[%s800 + $0x14] sm:$0xf]
      %v813 = vunpack.c.l.b16 %v801
      %v814 = vunpack.c.l.b16 %v802
      %v815 = vunpack.c.l.b16 %v803
      %v816 = vunpack.c.l.b16 %v804
      %v817 = vunpack.c.l.b16 %v805
      %v818 = vunpack.c.l.b16 %v806
      %v819 = vpack.c.b16 %v814, %v813
      %v820 = vpack.c.b16 %v816, %v815
      %v821 = vpack.c.b16 %v818, %v817
      %v826 = vsel %vm702, %v796, 0
      %v829 = vsel %vm702, %v797, 0
      %v832 = vsel %vm702, %v798, 0
      %v835 = vsel %vm702, %v799, 0
      %837 = vmatprep.subr.bf16.mxu0 0
      %838 = vmatpush1.bf16.msra.mxu0 %v819
      %839 = vmatprep.subr.bf16.mxu0 0
      %840 = vmatpush1.bf16.msra.mxu0 %v820
      %841 = vmatprep.subr.bf16.mxu0 0
      %842 = vmatpush1.bf16.msra.mxu0 %v821
      %843 = vmatprep.subr.bf16.mxu0 0
      %844 = vmatpush1.bf16.msra.mxu0 0
      %845 = vmatprep.subr.bf16.mxu0 0
      %846 = vmatpush1.bf16.msra.mxu0 0
      %847 = vmatprep.subr.bf16.mxu0 0
      %848 = vmatpush1.bf16.msra.mxu0 0
      %849 = vmatprep.subr.bf16.mxu0 0
      %850 = vmatpush1.bf16.msra.mxu0 0
      %851 = vmatprep.subr.bf16.mxu0 0
      %852 = vmatpush1.bf16.msra.mxu0 0
      %853 = vmatprep.subr.bf16.mxu0 0
      %854 = vmatpush1.bf16.msra.mxu0 0
      %855 = vmatprep.subr.bf16.mxu0 0
      %856 = vmatpush1.bf16.msra.mxu0 0
      %857 = vmatprep.subr.bf16.mxu0 0
      %858 = vmatpush1.bf16.msra.mxu0 0
      %859 = vmatprep.subr.bf16.mxu0 0
      %860 = vmatpush1.bf16.msra.mxu0 0
      %861 = vmatprep.subr.bf16.mxu0 0
      %862 = vmatpush1.bf16.msra.mxu0 0
      %863 = vmatprep.subr.bf16.mxu0 0
      %864 = vmatpush1.bf16.msra.mxu0 0
      %865 = vmatprep.subr.bf16.mxu0 0
      %866 = vmatpush1.bf16.msra.mxu0 0
      %867 = vmatprep.subr.bf16.mxu0 0
      %868 = vmatpush1.bf16.msra.mxu0 0
      %869 = vmatprep.mubr.bf16.mxu0 0
      %870 = vmatmul.mubr.bf16.gmra.mrb[0].mxu0 %v826
      %v871 = vpop.f32.mrb[0].mxu0
      %v872 = vadd.f32 0.0, %v871
      %v873 = vpop.f32.mrb[0].mxu0
      %v874 = vpop.f32.mrb[0].mxu0
      %v875 = vadd.f32 0.0, %v874
      %v876 = vpop.f32.mrb[0].mxu0
      %877 = vmatprep.mubr.bf16.mxu0 0
      %878 = vmatmul.mubr.bf16.gmra.mrb[0].mxu0 %v829
      %v879 = vpop.f32.mrb[0].mxu0
      %v880 = vadd.f32 0.0, %v879
      %v881 = vpop.f32.mrb[0].mxu0
      %v882 = vpop.f32.mrb[0].mxu0
      %v883 = vadd.f32 0.0, %v882
      %v884 = vpop.f32.mrb[0].mxu0
      %885 = vmatprep.mubr.bf16.mxu0 0
      %886 = vmatmul.mubr.bf16.gmra.mrb[0].mxu0 %v832
      %v887 = vpop.f32.mrb[0].mxu0
      %v888 = vadd.f32 0.0, %v887
      %v889 = vpop.f32.mrb[0].mxu0
      %v890 = vpop.f32.mrb[0].mxu0
      %v891 = vadd.f32 0.0, %v890
      %v892 = vpop.f32.mrb[0].mxu0
      %893 = vmatprep.mubr.bf16.mxu0 0
      %894 = vmatmul.mubr.bf16.gmra.mrb[0].mxu0 %v835
      %v895 = vpop.f32.mrb[0].mxu0
      %v896 = vadd.f32 0.0, %v895
      %v897 = vpop.f32.mrb[0].mxu0
      %v898 = vpop.f32.mrb[0].mxu0
      %v899 = vadd.f32 0.0, %v898
      %v900 = vpop.f32.mrb[0].mxu0
      %901 = vdwg.mxu0
      %v902 = vadd.f32 %v780, %v872
      %v903 = vadd.f32 %v781, %v875
      %v904 = vadd.f32 %v782, %v880
      %v905 = vadd.f32 %v783, %v883
      %v906 = vadd.f32 %v784, %v888
      %v907 = vadd.f32 %v785, %v891
      %v908 = vadd.f32 %v786, %v896
      %v909 = vadd.f32 %v787, %v899
      %v910 = vld [vmem:[%s242 + $0x10] sm:$0xff]
      %v911 = vld [vmem:[%s242 + $0x18] sm:$0xff]
      %v912 = vld [vmem:[%s242 + $0x20] sm:$0xff]
      %v913 = vld [vmem:[%s242 + $0x28] sm:$0xff]
      %v914 = vld [vmem:[%s242 + $0x30] sm:$0xff]
      %v915 = vld [vmem:[%s242 + $0x38] sm:$0xff]
      %v916 = vld [vmem:[%s242 + $0x40] sm:$0xff]
      %v917 = vld [vmem:[%s242 + $0x48] sm:$0xff]
      %v918 = vpack.c.bf16 %v911, %v910
      %v919 = vpack.c.bf16 %v913, %v912
      %v920 = vpack.c.bf16 %v915, %v914
      %v921 = vpack.c.bf16 %v917, %v916
      %s922 = scalar_lea.vmem %s3, 48
      %v923 = vld [vmem:[%s922] sm:$0xf]
      %v924 = vld [vmem:[%s922 + $0x4] sm:$0xf]
      %v925 = vld [vmem:[%s922 + $0x8] sm:$0xf]
      %v926 = vld [vmem:[%s922 + $0xc] sm:$0xf]
      %v927 = vld [vmem:[%s922 + $0x10] sm:$0xf]
      %v928 = vld [vmem:[%s922 + $0x14] sm:$0xf]
      %v935 = vunpack.c.l.b16 %v923
      %v936 = vunpack.c.l.b16 %v924
      %v937 = vunpack.c.l.b16 %v925
      %v938 = vunpack.c.l.b16 %v926
      %v939 = vunpack.c.l.b16 %v927
      %v940 = vunpack.c.l.b16 %v928
      %v941 = vpack.c.b16 %v936, %v935
      %v942 = vpack.c.b16 %v938, %v937
      %v943 = vpack.c.b16 %v940, %v939
      %v948 = vsel %vm702, %v918, 0
      %v951 = vsel %vm702, %v919, 0
      %v954 = vsel %vm702, %v920, 0
      %v957 = vsel %vm702, %v921, 0
      %959 = vmatprep.subr.bf16.mxu0 0
      %960 = vmatpush1.bf16.msra.mxu0 %v941
      %961 = vmatprep.subr.bf16.mxu0 0
      %962 = vmatpush1.bf16.msra.mxu0 %v942
      %963 = vmatprep.subr.bf16.mxu0 0
      %964 = vmatpush1.bf16.msra.mxu0 %v943
      %965 = vmatprep.subr.bf16.mxu0 0
      %966 = vmatpush1.bf16.msra.mxu0 0
      %967 = vmatprep.subr.bf16.mxu0 0
      %968 = vmatpush1.bf16.msra.mxu0 0
      %969 = vmatprep.subr.bf16.mxu0 0
      %970 = vmatpush1.bf16.msra.mxu0 0
      %971 = vmatprep.subr.bf16.mxu0 0
      %972 = vmatpush1.bf16.msra.mxu0 0
      %973 = vmatprep.subr.bf16.mxu0 0
      %974 = vmatpush1.bf16.msra.mxu0 0
      %975 = vmatprep.subr.bf16.mxu0 0
      %976 = vmatpush1.bf16.msra.mxu0 0
      %977 = vmatprep.subr.bf16.mxu0 0
      %978 = vmatpush1.bf16.msra.mxu0 0
      %979 = vmatprep.subr.bf16.mxu0 0
      %980 = vmatpush1.bf16.msra.mxu0 0
      %981 = vmatprep.subr.bf16.mxu0 0
      %982 = vmatpush1.bf16.msra.mxu0 0
      %983 = vmatprep.subr.bf16.mxu0 0
      %984 = vmatpush1.bf16.msra.mxu0 0
      %985 = vmatprep.subr.bf16.mxu0 0
      %986 = vmatpush1.bf16.msra.mxu0 0
      %987 = vmatprep.subr.bf16.mxu0 0
      %988 = vmatpush1.bf16.msra.mxu0 0
      %989 = vmatprep.subr.bf16.mxu0 0
      %990 = vmatpush1.bf16.msra.mxu0 0
      %991 = vmatprep.mubr.bf16.mxu0 0
      %992 = vmatmul.mubr.bf16.gmra.mrb[0].mxu0 %v948
      %v993 = vpop.f32.mrb[0].mxu0
      %v994 = vadd.f32 0.0, %v993
      %v995 = vpop.f32.mrb[0].mxu0
      %v996 = vpop.f32.mrb[0].mxu0
      %v997 = vadd.f32 0.0, %v996
      %v998 = vpop.f32.mrb[0].mxu0
      %999 = vmatprep.mubr.bf16.mxu0 0
      %1000 = vmatmul.mubr.bf16.gmra.mrb[0].mxu0 %v951
      %v1001 = vpop.f32.mrb[0].mxu0
      %v1002 = vadd.f32 0.0, %v1001
      %v1003 = vpop.f32.mrb[0].mxu0
      %v1004 = vpop.f32.mrb[0].mxu0
      %v1005 = vadd.f32 0.0, %v1004
      %v1006 = vpop.f32.mrb[0].mxu0
      %1007 = vmatprep.mubr.bf16.mxu0 0
      %1008 = vmatmul.mubr.bf16.gmra.mrb[0].mxu0 %v954
      %v1009 = vpop.f32.mrb[0].mxu0
      %v1010 = vadd.f32 0.0, %v1009
      %v1011 = vpop.f32.mrb[0].mxu0
      %v1012 = vpop.f32.mrb[0].mxu0
      %v1013 = vadd.f32 0.0, %v1012
      %v1014 = vpop.f32.mrb[0].mxu0
      %1015 = vmatprep.mubr.bf16.mxu0 0
      %1016 = vmatmul.mubr.bf16.gmra.mrb[0].mxu0 %v957
      %v1017 = vpop.f32.mrb[0].mxu0
      %v1018 = vadd.f32 0.0, %v1017
      %v1019 = vpop.f32.mrb[0].mxu0
      %v1020 = vpop.f32.mrb[0].mxu0
      %v1021 = vadd.f32 0.0, %v1020
      %v1022 = vpop.f32.mrb[0].mxu0
      %1023 = vdwg.mxu0
      %v1024 = vadd.f32 %v902, %v994
      %v1025 = vadd.f32 %v903, %v997
      %v1026 = vadd.f32 %v904, %v1002
      %v1027 = vadd.f32 %v905, %v1005
      %v1028 = vadd.f32 %v906, %v1010
      %v1029 = vadd.f32 %v907, %v1013
      %v1030 = vadd.f32 %v908, %v1018
      %v1031 = vadd.f32 %v909, %v1021
      %v1032 = vld [vmem:[%s4] sm:$0x1]
      %v1034 = vlaneseq
      %v1035 = vshrl.u32 %v1034, 7
      %v1036 = vsub.s32 0, %v1035
      %v1037 = vrot.slane %v1032, %v1036
      %v1039 = vadd.f32 %v1024, %v1037
      %v1040 = vadd.f32 %v1025, %v1037
      %v1041 = vadd.f32 %v1026, %v1037
      %v1042 = vadd.f32 %v1027, %v1037
      %v1043 = vadd.f32 %v1028, %v1037
      %v1044 = vadd.f32 %v1029, %v1037
      %v1045 = vadd.f32 %v1030, %v1037
      %v1046 = vadd.f32 %v1031, %v1037
      %v1047 = vmax.f32 %v1039, 0.0
      %v1048 = vmax.f32 %v1040, 0.0
      %v1049 = vmax.f32 %v1041, 0.0
      %v1050 = vmax.f32 %v1042, 0.0
      %v1051 = vmax.f32 %v1043, 0.0
      %v1052 = vmax.f32 %v1044, 0.0
      %v1053 = vmax.f32 %v1045, 0.0
      %v1054 = vmax.f32 %v1046, 0.0
      %vm1055 = vcmask 130048
      %1056 = vst.msk [vmem:[%s248] sm:$0xff] %vm1055, %v1047
      %1057 = vst.msk [vmem:[%s248 + $0x8] sm:$0xff] %vm1055, %v1048
      %1058 = vst.msk [vmem:[%s248 + $0x10] sm:$0xff] %vm1055, %v1049
      %1059 = vst.msk [vmem:[%s248 + $0x18] sm:$0xff] %vm1055, %v1050
      %1060 = vst.msk [vmem:[%s248 + $0x20] sm:$0xff] %vm1055, %v1051
      %1061 = vst.msk [vmem:[%s248 + $0x28] sm:$0xff] %vm1055, %v1052
      %1062 = vst.msk [vmem:[%s248 + $0x30] sm:$0xff] %vm1055, %v1053
      %1063 = vst.msk [vmem:[%s248 + $0x38] sm:$0xff] %vm1055, %v1054
      %s1064 = smul.u32 8, %s16
      %p1065 = scmp.lt.s32.totalorder %s1064, 15
      %s1066 = scalar_select %p1065, %s1064, 15
      %s1067 = smul.addr %s1066, 8
      %s1068 = scalar_lea.vmem %s5, %s1067
      // Predicated region
      $region41: #{unet_ag_forward.22} parent=39 // pred_check
        %p1069 = pneg %p149
      $region42: #{unet_ag_forward.22} parent=39 // pred_check_branch
        %1071 = sbr.rel (%p1069) target = $region44
      $region43: #{unet_ag_forward.22} parent=39 // pred_region
        %s1072 = smul.u32 8, %s16
      $region44: #{unet_ag_forward.22} parent=39 // pred_fallthru
        _
    $region40: #{unet_ag_forward.22} parent=5 // pred_fallthru
      _
    %p1073 = scmp.le.s32.totalorder 2, %s11
    // Predicated region
    $region45: #{unet_ag_forward.22} parent=5 // pred_check
      %p1074 = pneg %p1073
    $region46: #{unet_ag_forward.22} parent=5 // pred_check_branch
      %1076 = sbr.rel (%p1074) target = $region48
    $region47: #{unet_ag_forward.22} parent=5 // pred_region
      %s1077 = ssub.s32 %s11, 2
      // Predicated region
      $region49: #{unet_ag_forward.22} parent=47 // pred_check
        %p1078 = pneg %p155
      $region50: #{unet_ag_forward.22} parent=47 // pred_check_branch
        %1080 = sbr.rel (%p1078) target = $region52
      $region51: #{unet_ag_forward.22} parent=47 // pred_region
        %s1081 = smul.u32 8, %s17
        %p1082 = scmp.lt.s32.totalorder %s1081, 15
        %s1083 = scalar_select %p1082, %s1081, 15
        %s1084 = smul.addr %s1083, 8
        %s1085 = scalar_lea.vmem %s5, %s1084
      $region52: #{unet_ag_forward.22} parent=47 // pred_fallthru
        _
    $region48: #{unet_ag_forward.22} parent=5 // pred_fallthru
      _
  $region6: #{unet_ag_forward.22} parent=0 // loop_footer
    %s15 = sadd.s32 1, %s11
  $region7: #{unet_ag_forward.22} parent=0 // loop_footer_branch
    %10 = sbr.rel target = $region3
  $region8: #{unet_ag_forward.22} parent=0 // loop_exit
    _

// kernel: unet_ag_forward.26
$region0: #{unet_ag_forward.26}
  #allocation0 [shape = 'u32[]', space=smem, size = 0x4, offset = 0x4, fixed_abs, tag = 'smem constant byte address 0x4 - core index']
  #allocation1 [shape = 'u32[144,128]{1,0:T(1,128)}', space=vmem, size = 0x12000, scoped, tag = 'internal scratch']
  %s0 = inlined_call_operand.vmem [shape: f32[512,8], index: 0, kind: input, shape index: {}]
  %s1 = inlined_call_operand.vmem [shape: bf16[1,8,2], index: 1, kind: input, shape index: {}]
  %s2 = inlined_call_operand.vmem [shape: f32[1,2], index: 2, kind: input, shape index: {}]
  %s3 = inlined_call_operand.vmem [shape: f32[512,2], index: 3, kind: output, shape index: {}]
  %s4 = sld [smem:[#allocation0]]
  $region45: #{unet_ag_forward.26} parent=0
    _
  %s6 = ssub.s32 1, %s4
  %s7 = scalar_select 0, %s6, %s4
  loop: start=0, step=1, limit=4
  $region2: #{unet_ag_forward.26} parent=0 // loop_pre_header
    _
  $region3: #{unet_ag_forward.26} parent=0 // loop_header
    %s9 = sphi 0, %s13
    %p10 = scmp.ge.s32.totalorder %s9, 4
    %s19 = sphi 0, %s21
    %s22 = sphi 0, %s19
    %s23 = sphi 0, %s22
    %s39 = sphi 0, %s23
    %s43 = sphi 0, %s43
    %s45 = sphi 0, %s43
    %s46 = sphi 0, %s45
    %s60 = sphi 0, %s46
    %s64 = sphi 0, %s64
    %s66 = sphi 0, %s64
    %s67 = sphi 0, %s66
    %s81 = sphi 0, %s67
    %s87 = sphi 0, %s89
    %s90 = sphi 0, %s87
    %s91 = sphi 0, %s90
    %s107 = sphi 0, %s91
  $region4: #{unet_ag_forward.26} parent=0 // loop_header_branch
    %12 = sbr.rel (%p10) target = $region8
  $region5: #{unet_ag_forward.26} parent=0 // loop_body
    %s14 = ssub.s32 %s9, 1
    %s15 = ssub.s32 %s9, 2
    %s16 = sadd.s32 %s9, 1
    %s17 = ssub.s32 %s9, %s16
    %p18 = scmp.eq.s32.totalorder %s17, 0
    %s20 = sadd.s32 %s19, 1
    %s21 = scalar_select %p18, %s19, %s20
    %p24 = pneg %p18
    %p25 = scmp.eq.s32.totalorder %s9, 1
    %p26 = por %p24, %p25
    %p27 = scmp.ne.s32.totalorder %s19, %s22
    %p28 = scmp.eq.s32.totalorder %s9, 0
    %p29 = por %p27, %p28
    %p30 = scmp.ne.s32.totalorder %s19, %s22
    %p31 = scmp.eq.s32.totalorder %s14, 1
    %p32 = por %p30, %p31
    %p33 = scmp.ne.s32.totalorder %s22, %s23
    %p34 = scmp.eq.s32.totalorder %s14, 0
    %p35 = por %p33, %p34
    %p36 = scmp.ne.s32.totalorder %s22, %s23
    %p37 = scmp.eq.s32.totalorder %s15, 1
    %p38 = por %p36, %p37
    %p40 = scmp.ne.s32.totalorder %s23, %s39
    %p41 = scmp.eq.s32.totalorder %s15, 0
    %p42 = por %p40, %p41
    %s44 = sadd.s32 %s43, 1
    %p47 = scmp.eq.s32.totalorder %s9, 1
    %p48 = scmp.ne.s32.totalorder %s43, %s45
    %p49 = scmp.eq.s32.totalorder %s9, 0
    %p50 = por %p48, %p49
    %p51 = scmp.ne.s32.totalorder %s43, %s45
    %p52 = scmp.eq.s32.totalorder %s14, 1
    %p53 = por %p51, %p52
    %p54 = scmp.ne.s32.totalorder %s45, %s46
    %p55 = scmp.eq.s32.totalorder %s14, 0
    %p56 = por %p54, %p55
    %p57 = scmp.ne.s32.totalorder %s45, %s46
    %p58 = scmp.eq.s32.totalorder %s15, 1
    %p59 = por %p57, %p58
    %p61 = scmp.ne.s32.totalorder %s46, %s60
    %p62 = scmp.eq.s32.totalorder %s15, 0
    %p63 = por %p61, %p62
    %s65 = sadd.s32 %s64, 1
    %p68 = scmp.eq.s32.totalorder %s9, 1
    %p69 = scmp.ne.s32.totalorder %s64, %s66
    %p70 = scmp.eq.s32.totalorder %s9, 0
    %p71 = por %p69, %p70
    %p72 = scmp.ne.s32.totalorder %s64, %s66
    %p73 = scmp.eq.s32.totalorder %s14, 1
    %p74 = por %p72, %p73
    %p75 = scmp.ne.s32.totalorder %s66, %s67
    %p76 = scmp.eq.s32.totalorder %s14, 0
    %p77 = por %p75, %p76
    %p78 = scmp.ne.s32.totalorder %s66, %s67
    %p79 = scmp.eq.s32.totalorder %s15, 1
    %p80 = por %p78, %p79
    %p82 = scmp.ne.s32.totalorder %s67, %s81
    %p83 = scmp.eq.s32.totalorder %s15, 0
    %p84 = por %p82, %p83
    %s85 = ssub.s32 %s9, %s16
    %p86 = scmp.eq.s32.totalorder %s85, 0
    %s88 = sadd.s32 %s87, 1
    %s89 = scalar_select %p86, %s87, %s88
    %p92 = pneg %p86
    %p93 = scmp.eq.s32.totalorder %s9, 1
    %p94 = por %p92, %p93
    %p95 = scmp.ne.s32.totalorder %s87, %s90
    %p96 = scmp.eq.s32.totalorder %s9, 0
    %p97 = por %p95, %p96
    %p98 = scmp.ne.s32.totalorder %s87, %s90
    %p99 = scmp.eq.s32.totalorder %s14, 1
    %p100 = por %p98, %p99
    %p101 = scmp.ne.s32.totalorder %s90, %s91
    %p102 = scmp.eq.s32.totalorder %s14, 0
    %p103 = por %p101, %p102
    %p104 = scmp.ne.s32.totalorder %s90, %s91
    %p105 = scmp.eq.s32.totalorder %s15, 1
    %p106 = por %p104, %p105
    %p108 = scmp.ne.s32.totalorder %s91, %s107
    %p109 = scmp.eq.s32.totalorder %s15, 0
    %p110 = por %p108, %p109
    %p111 = scmp.le.s32.totalorder 1, %s9
    %p112 = scmp.lt.s32.totalorder %s9, 3
    %p113 = pnand %p111, %p112
    %p114 = pneg %p113
    // Predicated region
    $region9: #{unet_ag_forward.26} parent=5 // pred_check
      _
    $region10: #{unet_ag_forward.26} parent=5 // pred_check_branch
      %116 = sbr.rel (%p113) target = $region12
    $region11: #{unet_ag_forward.26} parent=5 // pred_region
      %s117 = ssub.s32 %s9, 1
      // Predicated region
      $region13: #{unet_ag_forward.26} parent=11 // pred_check
        %p118 = pneg %p56
      $region14: #{unet_ag_forward.26} parent=11 // pred_check_branch
        %120 = sbr.rel (%p118) target = $region16
      $region15: #{unet_ag_forward.26} parent=11 // pred_region
        _
      $region16: #{unet_ag_forward.26} parent=11 // pred_fallthru
        _
      // Predicated region
      $region17: #{unet_ag_forward.26} parent=11 // pred_check
        %p121 = pneg %p77
      $region18: #{unet_ag_forward.26} parent=11 // pred_check_branch
        %123 = sbr.rel (%p121) target = $region20
      $region19: #{unet_ag_forward.26} parent=11 // pred_region
        _
      $region20: #{unet_ag_forward.26} parent=11 // pred_fallthru
        _
    $region12: #{unet_ag_forward.26} parent=5 // pred_fallthru
      _
    %p124 = scmp.lt.s32.totalorder %s9, 2
    // Predicated region
    $region21: #{unet_ag_forward.26} parent=5 // pred_check
      %p125 = pneg %p124
    $region22: #{unet_ag_forward.26} parent=5 // pred_check_branch
      %127 = sbr.rel (%p125) target = $region24
    $region23: #{unet_ag_forward.26} parent=5 // pred_region
      // Predicated region
      $region25: #{unet_ag_forward.26} parent=23 // pred_check
        %p128 = pneg %p29
      $region26: #{unet_ag_forward.26} parent=23 // pred_check_branch
        %130 = sbr.rel (%p128) target = $region28
      $region27: #{unet_ag_forward.26} parent=23 // pred_region
        %s131 = smul.u32 32, %s9
        %p132 = scmp.lt.s32.totalorder %s131, 63
        %s133 = scalar_select %p132, %s131, 63
        %s134 = smul.addr %s133, 8
        %s135 = scalar_lea.vmem %s0, %s134
        %s136 = smul.u32 32, %s9
      $region28: #{unet_ag_forward.26} parent=23 // pred_fallthru
        _
    $region24: #{unet_ag_forward.26} parent=5 // pred_fallthru
      _
    %p137 = scmp.le.s32.totalorder 1, %s9
    %p138 = scmp.lt.s32.totalorder %s9, 3
    %p139 = pnand %p137, %p138
    %p140 = pneg %p139
    // Predicated region
    $region29: #{unet_ag_forward.26} parent=5 // pred_check
      _
    $region30: #{unet_ag_forward.26} parent=5 // pred_check_branch
      %142 = sbr.rel (%p139) target = $region32
    $region31: #{unet_ag_forward.26} parent=5 // pred_region
      %s143 = ssub.s32 %s9, 1
      %s144 = smul.u32 32, %s14
      %p145 = scmp.lt.s32.totalorder %s144, 63
      %s146 = scalar_select %p145, %s144, 63
      %s147 = smul.addr %s146, 8
      %s148 = scalar_lea.vmem %s0, %s147
      %p149 = pneg %p35
      %p150 = pneg %p32
      %p151 = pneg %p56
      %p152 = pneg %p53
      %p153 = pneg %p77
      %p154 = pneg %p74
      %p155 = pneg %p103
      %p156 = pneg %p100
      %s157 = smul.u32 32, %s14
      %p158 = scmp.lt.s32.totalorder %s157, 63
      %s159 = scalar_select %p158, %s157, 63
      %s160 = smul.addr %s159, 8
      %s161 = scalar_lea.vmem %s3, %s160
      %s162 = smul.u32 32, %s14
      %p163 = scmp.lt.s32.totalorder %s162, 63
      %s164 = scalar_select %p163, %s162, 63
      %s165 = smul.addr %s164, 8
      %s166 = scalar_lea.vmem %s0, %s165
      %s167 = smul.u32 32, %s14
      %s168 = smul.u32 32, %s14
      %p169 = scmp.lt.s32.totalorder %s168, 63
      %s170 = scalar_select %p169, %s168, 63
      %s171 = smul.addr %s170, 8
      %s172 = scalar_lea.vmem %s3, %s171
      %s173 = smul.u32 32, %s14
      %v175 = vld [vmem:[%s166] sm:$0xff]
      %v176 = vld [vmem:[%s166 + $0x8] sm:$0xff]
      %v177 = vld [vmem:[%s166 + $0x10] sm:$0xff]
      %v178 = vld [vmem:[%s166 + $0x18] sm:$0xff]
      %v179 = vld [vmem:[%s166 + $0x20] sm:$0xff]
      %v180 = vld [vmem:[%s166 + $0x28] sm:$0xff]
      %v181 = vld [vmem:[%s166 + $0x30] sm:$0xff]
      %v182 = vld [vmem:[%s166 + $0x38] sm:$0xff]
      %v183 = vld [vmem:[%s166 + $0x40] sm:$0xff]
      %v184 = vld [vmem:[%s166 + $0x48] sm:$0xff]
      %v185 = vld [vmem:[%s166 + $0x50] sm:$0xff]
      %v186 = vld [vmem:[%s166 + $0x58] sm:$0xff]
      %v187 = vld [vmem:[%s166 + $0x60] sm:$0xff]
      %v188 = vld [vmem:[%s166 + $0x68] sm:$0xff]
      %v189 = vld [vmem:[%s166 + $0x70] sm:$0xff]
      %v190 = vld [vmem:[%s166 + $0x78] sm:$0xff]
      %v191 = vld [vmem:[%s166 + $0x80] sm:$0xff]
      %v192 = vld [vmem:[%s166 + $0x88] sm:$0xff]
      %v193 = vld [vmem:[%s166 + $0x90] sm:$0xff]
      %v194 = vld [vmem:[%s166 + $0x98] sm:$0xff]
      %v195 = vld [vmem:[%s166 + $0xa0] sm:$0xff]
      %v196 = vld [vmem:[%s166 + $0xa8] sm:$0xff]
      %v197 = vld [vmem:[%s166 + $0xb0] sm:$0xff]
      %v198 = vld [vmem:[%s166 + $0xb8] sm:$0xff]
      %v199 = vld [vmem:[%s166 + $0xc0] sm:$0xff]
      %v200 = vld [vmem:[%s166 + $0xc8] sm:$0xff]
      %v201 = vld [vmem:[%s166 + $0xd0] sm:$0xff]
      %v202 = vld [vmem:[%s166 + $0xd8] sm:$0xff]
      %v203 = vld [vmem:[%s166 + $0xe0] sm:$0xff]
      %v204 = vld [vmem:[%s166 + $0xe8] sm:$0xff]
      %v205 = vld [vmem:[%s166 + $0xf0] sm:$0xff]
      %v206 = vld [vmem:[%s166 + $0xf8] sm:$0xff]
      %v207 = vpack.c.bf16 %v176, %v175
      %v208 = vpack.c.bf16 %v178, %v177
      %v209 = vpack.c.bf16 %v180, %v179
      %v210 = vpack.c.bf16 %v182, %v181
      %v211 = vpack.c.bf16 %v184, %v183
      %v212 = vpack.c.bf16 %v186, %v185
      %v213 = vpack.c.bf16 %v188, %v187
      %v214 = vpack.c.bf16 %v190, %v189
      %v215 = vpack.c.bf16 %v192, %v191
      %v216 = vpack.c.bf16 %v194, %v193
      %v217 = vpack.c.bf16 %v196, %v195
      %v218 = vpack.c.bf16 %v198, %v197
      %v219 = vpack.c.bf16 %v200, %v199
      %v220 = vpack.c.bf16 %v202, %v201
      %v221 = vpack.c.bf16 %v204, %v203
      %v222 = vpack.c.bf16 %v206, %v205
      %v223 = vld [vmem:[%s1] sm:$0xf]
      %v224 = vld [vmem:[%s2] sm:$0x1]
      %v226 = vlaneseq
      %v227 = vshrl.u32 %v226, 7
      %v228 = vsub.s32 0, %v227
      %v229 = vrot.slane %v224, %v228
      %vm231 = vcmask 64512
      %v233 = vsel %vm231, %v207, 0
      %v236 = vsel %vm231, %v208, 0
      %v239 = vsel %vm231, %v209, 0
      %v242 = vsel %vm231, %v210, 0
      %v245 = vsel %vm231, %v211, 0
      %v248 = vsel %vm231, %v212, 0
      %v251 = vsel %vm231, %v213, 0
      %v254 = vsel %vm231, %v214, 0
      %v257 = vsel %vm231, %v215, 0
      %v260 = vsel %vm231, %v216, 0
      %v263 = vsel %vm231, %v217, 0
      %v266 = vsel %vm231, %v218, 0
      %v269 = vsel %vm231, %v219, 0
      %v272 = vsel %vm231, %v220, 0
      %v275 = vsel %vm231, %v221, 0
      %v278 = vsel %vm231, %v222, 0
      %vm280 = vcmask 1043456
      %v282 = vsel %vm280, %v223, 0
      %284 = vmatprep.subr.bf16.mxu0 0
      %285 = vmatpush1.bf16.msra.mxu0 %v282
      %286 = vmatprep.subr.bf16.mxu0 0
      %287 = vmatpush1.bf16.msra.mxu0 0
      %288 = vmatprep.subr.bf16.mxu0 0
      %289 = vmatpush1.bf16.msra.mxu0 0
      %290 = vmatprep.subr.bf16.mxu0 0
      %291 = vmatpush1.bf16.msra.mxu0 0
      %292 = vmatprep.subr.bf16.mxu0 0
      %293 = vmatpush1.bf16.msra.mxu0 0
      %294 = vmatprep.subr.bf16.mxu0 0
      %295 = vmatpush1.bf16.msra.mxu0 0
      %296 = vmatprep.subr.bf16.mxu0 0
      %297 = vmatpush1.bf16.msra.mxu0 0
      %298 = vmatprep.subr.bf16.mxu0 0
      %299 = vmatpush1.bf16.msra.mxu0 0
      %300 = vmatprep.subr.bf16.mxu0 0
      %301 = vmatpush1.bf16.msra.mxu0 0
      %302 = vmatprep.subr.bf16.mxu0 0
      %303 = vmatpush1.bf16.msra.mxu0 0
      %304 = vmatprep.subr.bf16.mxu0 0
      %305 = vmatpush1.bf16.msra.mxu0 0
      %306 = vmatprep.subr.bf16.mxu0 0
      %307 = vmatpush1.bf16.msra.mxu0 0
      %308 = vmatprep.subr.bf16.mxu0 0
      %309 = vmatpush1.bf16.msra.mxu0 0
      %310 = vmatprep.subr.bf16.mxu0 0
      %311 = vmatpush1.bf16.msra.mxu0 0
      %312 = vmatprep.subr.bf16.mxu0 0
      %313 = vmatpush1.bf16.msra.mxu0 0
      %314 = vmatprep.subr.bf16.mxu0 0
      %315 = vmatpush1.bf16.msra.mxu0 0
      %316 = vmatprep.mubr.bf16.mxu0 0
      %317 = vmatmul.mubr.bf16.gmra.mrb[0].mxu0 %v233
      %v318 = vpop.f32.mrb[0].mxu0
      %v319 = vadd.f32 %v229, %v318
      %v320 = vpop.f32.mrb[0].mxu0
      %v321 = vpop.f32.mrb[0].mxu0
      %v322 = vadd.f32 %v229, %v321
      %v323 = vpop.f32.mrb[0].mxu0
      %324 = vmatprep.mubr.bf16.mxu0 0
      %325 = vmatmul.mubr.bf16.gmra.mrb[0].mxu0 %v236
      %v326 = vpop.f32.mrb[0].mxu0
      %v327 = vadd.f32 %v229, %v326
      %v328 = vpop.f32.mrb[0].mxu0
      %v329 = vpop.f32.mrb[0].mxu0
      %v330 = vadd.f32 %v229, %v329
      %v331 = vpop.f32.mrb[0].mxu0
      %332 = vmatprep.mubr.bf16.mxu0 0
      %333 = vmatmul.mubr.bf16.gmra.mrb[0].mxu0 %v239
      %v334 = vpop.f32.mrb[0].mxu0
      %v335 = vadd.f32 %v229, %v334
      %v336 = vpop.f32.mrb[0].mxu0
      %v337 = vpop.f32.mrb[0].mxu0
      %v338 = vadd.f32 %v229, %v337
      %v339 = vpop.f32.mrb[0].mxu0
      %340 = vmatprep.mubr.bf16.mxu0 0
      %341 = vmatmul.mubr.bf16.gmra.mrb[0].mxu0 %v242
      %v342 = vpop.f32.mrb[0].mxu0
      %v343 = vadd.f32 %v229, %v342
      %v344 = vpop.f32.mrb[0].mxu0
      %v345 = vpop.f32.mrb[0].mxu0
      %v346 = vadd.f32 %v229, %v345
      %v347 = vpop.f32.mrb[0].mxu0
      %348 = vmatprep.mubr.bf16.mxu0 0
      %349 = vmatmul.mubr.bf16.gmra.mrb[0].mxu0 %v245
      %v350 = vpop.f32.mrb[0].mxu0
      %v351 = vadd.f32 %v229, %v350
      %v352 = vpop.f32.mrb[0].mxu0
      %v353 = vpop.f32.mrb[0].mxu0
      %v354 = vadd.f32 %v229, %v353
      %v355 = vpop.f32.mrb[0].mxu0
      %356 = vmatprep.mubr.bf16.mxu0 0
      %357 = vmatmul.mubr.bf16.gmra.mrb[0].mxu0 %v248
      %v358 = vpop.f32.mrb[0].mxu0
      %v359 = vadd.f32 %v229, %v358
      %v360 = vpop.f32.mrb[0].mxu0
      %v361 = vpop.f32.mrb[0].mxu0
      %v362 = vadd.f32 %v229, %v361
      %v363 = vpop.f32.mrb[0].mxu0
      %364 = vmatprep.mubr.bf16.mxu0 0
      %365 = vmatmul.mubr.bf16.gmra.mrb[0].mxu0 %v251
      %v366 = vpop.f32.mrb[0].mxu0
      %v367 = vadd.f32 %v229, %v366
      %v368 = vpop.f32.mrb[0].mxu0
      %v369 = vpop.f32.mrb[0].mxu0
      %v370 = vadd.f32 %v229, %v369
      %v371 = vpop.f32.mrb[0].mxu0
      %372 = vmatprep.mubr.bf16.mxu0 0
      %373 = vmatmul.mubr.bf16.gmra.mrb[0].mxu0 %v254
      %v374 = vpop.f32.mrb[0].mxu0
      %v375 = vadd.f32 %v229, %v374
      %v376 = vpop.f32.mrb[0].mxu0
      %v377 = vpop.f32.mrb[0].mxu0
      %v378 = vadd.f32 %v229, %v377
      %v379 = vpop.f32.mrb[0].mxu0
      %380 = vmatprep.mubr.bf16.mxu0 0
      %381 = vmatmul.mubr.bf16.gmra.mrb[0].mxu0 %v257
      %v382 = vpop.f32.mrb[0].mxu0
      %v383 = vadd.f32 %v229, %v382
      %v384 = vpop.f32.mrb[0].mxu0
      %v385 = vpop.f32.mrb[0].mxu0
      %v386 = vadd.f32 %v229, %v385
      %v387 = vpop.f32.mrb[0].mxu0
      %388 = vmatprep.mubr.bf16.mxu0 0
      %389 = vmatmul.mubr.bf16.gmra.mrb[0].mxu0 %v260
      %v390 = vpop.f32.mrb[0].mxu0
      %v391 = vadd.f32 %v229, %v390
      %v392 = vpop.f32.mrb[0].mxu0
      %v393 = vpop.f32.mrb[0].mxu0
      %v394 = vadd.f32 %v229, %v393
      %v395 = vpop.f32.mrb[0].mxu0
      %396 = vmatprep.mubr.bf16.mxu0 0
      %397 = vmatmul.mubr.bf16.gmra.mrb[0].mxu0 %v263
      %v398 = vpop.f32.mrb[0].mxu0
      %v399 = vadd.f32 %v229, %v398
      %v400 = vpop.f32.mrb[0].mxu0
      %v401 = vpop.f32.mrb[0].mxu0
      %v402 = vadd.f32 %v229, %v401
      %v403 = vpop.f32.mrb[0].mxu0
      %404 = vmatprep.mubr.bf16.mxu0 0
      %405 = vmatmul.mubr.bf16.gmra.mrb[0].mxu0 %v266
      %v406 = vpop.f32.mrb[0].mxu0
      %v407 = vadd.f32 %v229, %v406
      %v408 = vpop.f32.mrb[0].mxu0
      %v409 = vpop.f32.mrb[0].mxu0
      %v410 = vadd.f32 %v229, %v409
      %v411 = vpop.f32.mrb[0].mxu0
      %412 = vmatprep.mubr.bf16.mxu0 0
      %413 = vmatmul.mubr.bf16.gmra.mrb[0].mxu0 %v269
      %v414 = vpop.f32.mrb[0].mxu0
      %v415 = vadd.f32 %v229, %v414
      %v416 = vpop.f32.mrb[0].mxu0
      %v417 = vpop.f32.mrb[0].mxu0
      %v418 = vadd.f32 %v229, %v417
      %v419 = vpop.f32.mrb[0].mxu0
      %420 = vmatprep.mubr.bf16.mxu0 0
      %421 = vmatmul.mubr.bf16.gmra.mrb[0].mxu0 %v272
      %v422 = vpop.f32.mrb[0].mxu0
      %v423 = vadd.f32 %v229, %v422
      %v424 = vpop.f32.mrb[0].mxu0
      %v425 = vpop.f32.mrb[0].mxu0
      %v426 = vadd.f32 %v229, %v425
      %v427 = vpop.f32.mrb[0].mxu0
      %428 = vmatprep.mubr.bf16.mxu0 0
      %429 = vmatmul.mubr.bf16.gmra.mrb[0].mxu0 %v275
      %v430 = vpop.f32.mrb[0].mxu0
      %v431 = vadd.f32 %v229, %v430
      %v432 = vpop.f32.mrb[0].mxu0
      %v433 = vpop.f32.mrb[0].mxu0
      %v434 = vadd.f32 %v229, %v433
      %v435 = vpop.f32.mrb[0].mxu0
      %436 = vmatprep.mubr.bf16.mxu0 0
      %437 = vmatmul.mubr.bf16.gmra.mrb[0].mxu0 %v278
      %v438 = vpop.f32.mrb[0].mxu0
      %v439 = vadd.f32 %v229, %v438
      %v440 = vpop.f32.mrb[0].mxu0
      %v441 = vpop.f32.mrb[0].mxu0
      %v442 = vadd.f32 %v229, %v441
      %v443 = vpop.f32.mrb[0].mxu0
      %444 = vdwg.mxu0
      %477 = vrot.lane.b32.xlu0 %v319, 1
      %v478 = vpop.permute.xlu0 %477
      %479 = vrot.lane.b32.xlu0 %v322, 1
      %v480 = vpop.permute.xlu0 %479
      %481 = vrot.lane.b32.xlu0 %v327, 1
      %v482 = vpop.permute.xlu0 %481
      %483 = vrot.lane.b32.xlu0 %v330, 1
      %v484 = vpop.permute.xlu0 %483
      %485 = vrot.lane.b32.xlu0 %v335, 1
      %v486 = vpop.permute.xlu0 %485
      %487 = vrot.lane.b32.xlu0 %v338, 1
      %v488 = vpop.permute.xlu0 %487
      %489 = vrot.lane.b32.xlu0 %v343, 1
      %v490 = vpop.permute.xlu0 %489
      %491 = vrot.lane.b32.xlu0 %v346, 1
      %v492 = vpop.permute.xlu0 %491
      %493 = vrot.lane.b32.xlu0 %v351, 1
      %v494 = vpop.permute.xlu0 %493
      %495 = vrot.lane.b32.xlu0 %v354, 1
      %v496 = vpop.permute.xlu0 %495
      %497 = vrot.lane.b32.xlu0 %v359, 1
      %v498 = vpop.permute.xlu0 %497
      %499 = vrot.lane.b32.xlu0 %v362, 1
      %v500 = vpop.permute.xlu0 %499
      %501 = vrot.lane.b32.xlu0 %v367, 1
      %v502 = vpop.permute.xlu0 %501
      %503 = vrot.lane.b32.xlu0 %v370, 1
      %v504 = vpop.permute.xlu0 %503
      %505 = vrot.lane.b32.xlu0 %v375, 1
      %v506 = vpop.permute.xlu0 %505
      %507 = vrot.lane.b32.xlu0 %v378, 1
      %v508 = vpop.permute.xlu0 %507
      %509 = vrot.lane.b32.xlu0 %v383, 1
      %v510 = vpop.permute.xlu0 %509
      %511 = vrot.lane.b32.xlu0 %v386, 1
      %v512 = vpop.permute.xlu0 %511
      %513 = vrot.lane.b32.xlu0 %v391, 1
      %v514 = vpop.permute.xlu0 %513
      %515 = vrot.lane.b32.xlu0 %v394, 1
      %v516 = vpop.permute.xlu0 %515
      %517 = vrot.lane.b32.xlu0 %v399, 1
      %v518 = vpop.permute.xlu0 %517
      %519 = vrot.lane.b32.xlu0 %v402, 1
      %v520 = vpop.permute.xlu0 %519
      %521 = vrot.lane.b32.xlu0 %v407, 1
      %v522 = vpop.permute.xlu0 %521
      %523 = vrot.lane.b32.xlu0 %v410, 1
      %v524 = vpop.permute.xlu0 %523
      %525 = vrot.lane.b32.xlu0 %v415, 1
      %v526 = vpop.permute.xlu0 %525
      %527 = vrot.lane.b32.xlu0 %v418, 1
      %v528 = vpop.permute.xlu0 %527
      %529 = vrot.lane.b32.xlu0 %v423, 1
      %v530 = vpop.permute.xlu0 %529
      %531 = vrot.lane.b32.xlu0 %v426, 1
      %v532 = vpop.permute.xlu0 %531
      %533 = vrot.lane.b32.xlu0 %v431, 1
      %v534 = vpop.permute.xlu0 %533
      %535 = vrot.lane.b32.xlu0 %v434, 1
      %v536 = vpop.permute.xlu0 %535
      %537 = vrot.lane.b32.xlu0 %v439, 1
      %v538 = vpop.permute.xlu0 %537
      %539 = vrot.lane.b32.xlu0 %v442, 1
      %v540 = vpop.permute.xlu0 %539
      %v573 = vsub.f32 %v319, %v478
      %v574 = vsub.f32 %v322, %v480
      %v575 = vsub.f32 %v327, %v482
      %v576 = vsub.f32 %v330, %v484
      %v577 = vsub.f32 %v335, %v486
      %v578 = vsub.f32 %v338, %v488
      %v579 = vsub.f32 %v343, %v490
      %v580 = vsub.f32 %v346, %v492
      %v581 = vsub.f32 %v351, %v494
      %v582 = vsub.f32 %v354, %v496
      %v583 = vsub.f32 %v359, %v498
      %v584 = vsub.f32 %v362, %v500
      %v585 = vsub.f32 %v367, %v502
      %v586 = vsub.f32 %v370, %v504
      %v587 = vsub.f32 %v375, %v506
      %v588 = vsub.f32 %v378, %v508
      %v589 = vsub.f32 %v383, %v510
      %v590 = vsub.f32 %v386, %v512
      %v591 = vsub.f32 %v391, %v514
      %v592 = vsub.f32 %v394, %v516
      %v593 = vsub.f32 %v399, %v518
      %v594 = vsub.f32 %v402, %v520
      %v595 = vsub.f32 %v407, %v522
      %v596 = vsub.f32 %v410, %v524
      %v597 = vsub.f32 %v415, %v526
      %v598 = vsub.f32 %v418, %v528
      %v599 = vsub.f32 %v423, %v530
      %v600 = vsub.f32 %v426, %v532
      %v601 = vsub.f32 %v431, %v534
      %v602 = vsub.f32 %v434, %v536
      %v603 = vsub.f32 %v439, %v538
      %v604 = vsub.f32 %v442, %v540
      %v605 = vsub.f32 0.0, %v573
      %v606 = vsub.f32 0.0, %v574
      %v607 = vsub.f32 0.0, %v575
      %v608 = vsub.f32 0.0, %v576
      %v609 = vsub.f32 0.0, %v577
      %v610 = vsub.f32 0.0, %v578
      %v611 = vsub.f32 0.0, %v579
      %v612 = vsub.f32 0.0, %v580
      %v613 = vsub.f32 0.0, %v581
      %v614 = vsub.f32 0.0, %v582
      %v615 = vsub.f32 0.0, %v583
      %v616 = vsub.f32 0.0, %v584
      %v617 = vsub.f32 0.0, %v585
      %v618 = vsub.f32 0.0, %v586
      %v619 = vsub.f32 0.0, %v587
      %v620 = vsub.f32 0.0, %v588
      %v621 = vsub.f32 0.0, %v589
      %v622 = vsub.f32 0.0, %v590
      %v623 = vsub.f32 0.0, %v591
      %v624 = vsub.f32 0.0, %v592
      %v625 = vsub.f32 0.0, %v593
      %v626 = vsub.f32 0.0, %v594
      %v627 = vsub.f32 0.0, %v595
      %v628 = vsub.f32 0.0, %v596
      %v629 = vsub.f32 0.0, %v597
      %v630 = vsub.f32 0.0, %v598
      %v631 = vsub.f32 0.0, %v599
      %v632 = vsub.f32 0.0, %v600
      %v633 = vsub.f32 0.0, %v601
      %v634 = vsub.f32 0.0, %v602
      %v635 = vsub.f32 0.0, %v603
      %v636 = vsub.f32 0.0, %v604
      %v637 = vmul.f32 %v605, 1.442695
      %v638 = vpow.pop %v637
      %v639 = vmul.f32 %v606, 1.442695
      %v640 = vpow.pop %v639
      %v641 = vmul.f32 %v607, 1.442695
      %v642 = vpow.pop %v641
      %v643 = vmul.f32 %v608, 1.442695
      %v644 = vpow.pop %v643
      %v645 = vmul.f32 %v609, 1.442695
      %v646 = vpow.pop %v645
      %v647 = vmul.f32 %v610, 1.442695
      %v648 = vpow.pop %v647
      %v649 = vmul.f32 %v611, 1.442695
      %v650 = vpow.pop %v649
      %v651 = vmul.f32 %v612, 1.442695
      %v652 = vpow.pop %v651
      %v653 = vmul.f32 %v613, 1.442695
      %v654 = vpow.pop %v653
      %v655 = vmul.f32 %v614, 1.442695
      %v656 = vpow.pop %v655
      %v657 = vmul.f32 %v615, 1.442695
      %v658 = vpow.pop %v657
      %v659 = vmul.f32 %v616, 1.442695
      %v660 = vpow.pop %v659
      %v661 = vmul.f32 %v617, 1.442695
      %v662 = vpow.pop %v661
      %v663 = vmul.f32 %v618, 1.442695
      %v664 = vpow.pop %v663
      %v665 = vmul.f32 %v619, 1.442695
      %v666 = vpow.pop %v665
      %v667 = vmul.f32 %v620, 1.442695
      %v668 = vpow.pop %v667
      %v669 = vmul.f32 %v621, 1.442695
      %v670 = vpow.pop %v669
      %v671 = vmul.f32 %v622, 1.442695
      %v672 = vpow.pop %v671
      %v673 = vmul.f32 %v623, 1.442695
      %v674 = vpow.pop %v673
      %v675 = vmul.f32 %v624, 1.442695
      %v676 = vpow.pop %v675
      %v677 = vmul.f32 %v625, 1.442695
      %v678 = vpow.pop %v677
      %v679 = vmul.f32 %v626, 1.442695
      %v680 = vpow.pop %v679
      %v681 = vmul.f32 %v627, 1.442695
      %v682 = vpow.pop %v681
      %v683 = vmul.f32 %v628, 1.442695
      %v684 = vpow.pop %v683
      %v685 = vmul.f32 %v629, 1.442695
      %v686 = vpow.pop %v685
      %v687 = vmul.f32 %v630, 1.442695
      %v688 = vpow.pop %v687
      %v689 = vmul.f32 %v631, 1.442695
      %v690 = vpow.pop %v689
      %v691 = vmul.f32 %v632, 1.442695
      %v692 = vpow.pop %v691
      %v693 = vmul.f32 %v633, 1.442695
      %v694 = vpow.pop %v693
      %v695 = vmul.f32 %v634, 1.442695
      %v696 = vpow.pop %v695
      %v697 = vmul.f32 %v635, 1.442695
      %v698 = vpow.pop %v697
      %v699 = vmul.f32 %v636, 1.442695
      %v700 = vpow.pop %v699
      %v701 = vadd.f32 %v638, 1.0
      %v702 = vadd.f32 %v640, 1.0
      %v703 = vadd.f32 %v642, 1.0
      %v704 = vadd.f32 %v644, 1.0
      %v705 = vadd.f32 %v646, 1.0
      %v706 = vadd.f32 %v648, 1.0
      %v707 = vadd.f32 %v650, 1.0
      %v708 = vadd.f32 %v652, 1.0
      %v709 = vadd.f32 %v654, 1.0
      %v710 = vadd.f32 %v656, 1.0
      %v711 = vadd.f32 %v658, 1.0
      %v712 = vadd.f32 %v660, 1.0
      %v713 = vadd.f32 %v662, 1.0
      %v714 = vadd.f32 %v664, 1.0
      %v715 = vadd.f32 %v666, 1.0
      %v716 = vadd.f32 %v668, 1.0
      %v717 = vadd.f32 %v670, 1.0
      %v718 = vadd.f32 %v672, 1.0
      %v719 = vadd.f32 %v674, 1.0
      %v720 = vadd.f32 %v676, 1.0
      %v721 = vadd.f32 %v678, 1.0
      %v722 = vadd.f32 %v680, 1.0
      %v723 = vadd.f32 %v682, 1.0
      %v724 = vadd.f32 %v684, 1.0
      %v725 = vadd.f32 %v686, 1.0
      %v726 = vadd.f32 %v688, 1.0
      %v727 = vadd.f32 %v690, 1.0
      %v728 = vadd.f32 %v692, 1.0
      %v729 = vadd.f32 %v694, 1.0
      %v730 = vadd.f32 %v696, 1.0
      %v731 = vadd.f32 %v698, 1.0
      %v732 = vadd.f32 %v700, 1.0
      %v733 = vrcp.pop %v701
      %v734 = vrcp.pop %v702
      %v735 = vrcp.pop %v703
      %v736 = vrcp.pop %v704
      %v737 = vrcp.pop %v705
      %v738 = vrcp.pop %v706
      %v739 = vrcp.pop %v707
      %v740 = vrcp.pop %v708
      %v741 = vrcp.pop %v709
      %v742 = vrcp.pop %v710
      %v743 = vrcp.pop %v711
      %v744 = vrcp.pop %v712
      %v745 = vrcp.pop %v713
      %v746 = vrcp.pop %v714
      %v747 = vrcp.pop %v715
      %v748 = vrcp.pop %v716
      %v749 = vrcp.pop %v717
      %v750 = vrcp.pop %v718
      %v751 = vrcp.pop %v719
      %v752 = vrcp.pop %v720
      %v753 = vrcp.pop %v721
      %v754 = vrcp.pop %v722
      %v755 = vrcp.pop %v723
      %v756 = vrcp.pop %v724
      %v757 = vrcp.pop %v725
      %v758 = vrcp.pop %v726
      %v759 = vrcp.pop %v727
      %v760 = vrcp.pop %v728
      %v761 = vrcp.pop %v729
      %v762 = vrcp.pop %v730
      %v763 = vrcp.pop %v731
      %v764 = vrcp.pop %v732
      %v765 = vsub.f32 1.0, %v733
      %v766 = vsub.f32 1.0, %v734
      %v767 = vsub.f32 1.0, %v735
      %v768 = vsub.f32 1.0, %v736
      %v769 = vsub.f32 1.0, %v737
      %v770 = vsub.f32 1.0, %v738
      %v771 = vsub.f32 1.0, %v739
      %v772 = vsub.f32 1.0, %v740
      %v773 = vsub.f32 1.0, %v741
      %v774 = vsub.f32 1.0, %v742
      %v775 = vsub.f32 1.0, %v743
      %v776 = vsub.f32 1.0, %v744
      %v777 = vsub.f32 1.0, %v745
      %v778 = vsub.f32 1.0, %v746
      %v779 = vsub.f32 1.0, %v747
      %v780 = vsub.f32 1.0, %v748
      %v781 = vsub.f32 1.0, %v749
      %v782 = vsub.f32 1.0, %v750
      %v783 = vsub.f32 1.0, %v751
      %v784 = vsub.f32 1.0, %v752
      %v785 = vsub.f32 1.0, %v753
      %v786 = vsub.f32 1.0, %v754
      %v787 = vsub.f32 1.0, %v755
      %v788 = vsub.f32 1.0, %v756
      %v789 = vsub.f32 1.0, %v757
      %v790 = vsub.f32 1.0, %v758
      %v791 = vsub.f32 1.0, %v759
      %v792 = vsub.f32 1.0, %v760
      %v793 = vsub.f32 1.0, %v761
      %v794 = vsub.f32 1.0, %v762
      %v795 = vsub.f32 1.0, %v763
      %v796 = vsub.f32 1.0, %v764
      %829 = vrot.lane.b32.xlu0 %v765, 127
      %v830 = vpop.permute.xlu0 %829
      %831 = vrot.lane.b32.xlu0 %v766, 127
      %v832 = vpop.permute.xlu0 %831
      %833 = vrot.lane.b32.xlu0 %v767, 127
      %v834 = vpop.permute.xlu0 %833
      %835 = vrot.lane.b32.xlu0 %v768, 127
      %v836 = vpop.permute.xlu0 %835
      %837 = vrot.lane.b32.xlu0 %v769, 127
      %v838 = vpop.permute.xlu0 %837
      %839 = vrot.lane.b32.xlu0 %v770, 127
      %v840 = vpop.permute.xlu0 %839
      %841 = vrot.lane.b32.xlu0 %v771, 127
      %v842 = vpop.permute.xlu0 %841
      %843 = vrot.lane.b32.xlu0 %v772, 127
      %v844 = vpop.permute.xlu0 %843
      %845 = vrot.lane.b32.xlu0 %v773, 127
      %v846 = vpop.permute.xlu0 %845
      %847 = vrot.lane.b32.xlu0 %v774, 127
      %v848 = vpop.permute.xlu0 %847
      %849 = vrot.lane.b32.xlu0 %v775, 127
      %v850 = vpop.permute.xlu0 %849
      %851 = vrot.lane.b32.xlu0 %v776, 127
      %v852 = vpop.permute.xlu0 %851
      %853 = vrot.lane.b32.xlu0 %v777, 127
      %v854 = vpop.permute.xlu0 %853
      %855 = vrot.lane.b32.xlu0 %v778, 127
      %v856 = vpop.permute.xlu0 %855
      %857 = vrot.lane.b32.xlu0 %v779, 127
      %v858 = vpop.permute.xlu0 %857
      %859 = vrot.lane.b32.xlu0 %v780, 127
      %v860 = vpop.permute.xlu0 %859
      %861 = vrot.lane.b32.xlu0 %v781, 127
      %v862 = vpop.permute.xlu0 %861
      %863 = vrot.lane.b32.xlu0 %v782, 127
      %v864 = vpop.permute.xlu0 %863
      %865 = vrot.lane.b32.xlu0 %v783, 127
      %v866 = vpop.permute.xlu0 %865
      %867 = vrot.lane.b32.xlu0 %v784, 127
      %v868 = vpop.permute.xlu0 %867
      %869 = vrot.lane.b32.xlu0 %v785, 127
      %v870 = vpop.permute.xlu0 %869
      %871 = vrot.lane.b32.xlu0 %v786, 127
      %v872 = vpop.permute.xlu0 %871
      %873 = vrot.lane.b32.xlu0 %v787, 127
      %v874 = vpop.permute.xlu0 %873
      %875 = vrot.lane.b32.xlu0 %v788, 127
      %v876 = vpop.permute.xlu0 %875
      %877 = vrot.lane.b32.xlu0 %v789, 127
      %v878 = vpop.permute.xlu0 %877
      %879 = vrot.lane.b32.xlu0 %v790, 127
      %v880 = vpop.permute.xlu0 %879
      %881 = vrot.lane.b32.xlu0 %v791, 127
      %v882 = vpop.permute.xlu0 %881
      %883 = vrot.lane.b32.xlu0 %v792, 127
      %v884 = vpop.permute.xlu0 %883
      %885 = vrot.lane.b32.xlu0 %v793, 127
      %v886 = vpop.permute.xlu0 %885
      %887 = vrot.lane.b32.xlu0 %v794, 127
      %v888 = vpop.permute.xlu0 %887
      %889 = vrot.lane.b32.xlu0 %v795, 127
      %v890 = vpop.permute.xlu0 %889
      %891 = vrot.lane.b32.xlu0 %v796, 127
      %v892 = vpop.permute.xlu0 %891
      %vm925 = vcmask 7168
      %v926 = vsel %vm925, %v830, %v733
      %v927 = vsel %vm925, %v832, %v734
      %v928 = vsel %vm925, %v834, %v735
      %v929 = vsel %vm925, %v836, %v736
      %v930 = vsel %vm925, %v838, %v737
      %v931 = vsel %vm925, %v840, %v738
      %v932 = vsel %vm925, %v842, %v739
      %v933 = vsel %vm925, %v844, %v740
      %v934 = vsel %vm925, %v846, %v741
      %v935 = vsel %vm925, %v848, %v742
      %v936 = vsel %vm925, %v850, %v743
      %v937 = vsel %vm925, %v852, %v744
      %v938 = vsel %vm925, %v854, %v745
      %v939 = vsel %vm925, %v856, %v746
      %v940 = vsel %vm925, %v858, %v747
      %v941 = vsel %vm925, %v860, %v748
      %v942 = vsel %vm925, %v862, %v749
      %v943 = vsel %vm925, %v864, %v750
      %v944 = vsel %vm925, %v866, %v751
      %v945 = vsel %vm925, %v868, %v752
      %v946 = vsel %vm925, %v870, %v753
      %v947 = vsel %vm925, %v872, %v754
      %v948 = vsel %vm925, %v874, %v755
      %v949 = vsel %vm925, %v876, %v756
      %v950 = vsel %vm925, %v878, %v757
      %v951 = vsel %vm925, %v880, %v758
      %v952 = vsel %vm925, %v882, %v759
      %v953 = vsel %vm925, %v884, %v760
      %v954 = vsel %vm925, %v886, %v761
      %v955 = vsel %vm925, %v888, %v762
      %v956 = vsel %vm925, %v890, %v763
      %v957 = vsel %vm925, %v892, %v764
      %vm958 = vcmask 15360
      %959 = vst.msk [vmem:[%s172] sm:$0xff] %vm958, %v926
      %960 = vst.msk [vmem:[%s172 + $0x8] sm:$0xff] %vm958, %v927
      %961 = vst.msk [vmem:[%s172 + $0x10] sm:$0xff] %vm958, %v928
      %962 = vst.msk [vmem:[%s172 + $0x18] sm:$0xff] %vm958, %v929
      %963 = vst.msk [vmem:[%s172 + $0x20] sm:$0xff] %vm958, %v930
      %964 = vst.msk [vmem:[%s172 + $0x28] sm:$0xff] %vm958, %v931
      %965 = vst.msk [vmem:[%s172 + $0x30] sm:$0xff] %vm958, %v932
      %966 = vst.msk [vmem:[%s172 + $0x38] sm:$0xff] %vm958, %v933
      %967 = vst.msk [vmem:[%s172 + $0x40] sm:$0xff] %vm958, %v934
      %968 = vst.msk [vmem:[%s172 + $0x48] sm:$0xff] %vm958, %v935
      %969 = vst.msk [vmem:[%s172 + $0x50] sm:$0xff] %vm958, %v936
      %970 = vst.msk [vmem:[%s172 + $0x58] sm:$0xff] %vm958, %v937
      %971 = vst.msk [vmem:[%s172 + $0x60] sm:$0xff] %vm958, %v938
      %972 = vst.msk [vmem:[%s172 + $0x68] sm:$0xff] %vm958, %v939
      %973 = vst.msk [vmem:[%s172 + $0x70] sm:$0xff] %vm958, %v940
      %974 = vst.msk [vmem:[%s172 + $0x78] sm:$0xff] %vm958, %v941
      %975 = vst.msk [vmem:[%s172 + $0x80] sm:$0xff] %vm958, %v942
      %976 = vst.msk [vmem:[%s172 + $0x88] sm:$0xff] %vm958, %v943
      %977 = vst.msk [vmem:[%s172 + $0x90] sm:$0xff] %vm958, %v944
      %978 = vst.msk [vmem:[%s172 + $0x98] sm:$0xff] %vm958, %v945
      %979 = vst.msk [vmem:[%s172 + $0xa0] sm:$0xff] %vm958, %v946
      %980 = vst.msk [vmem:[%s172 + $0xa8] sm:$0xff] %vm958, %v947
      %981 = vst.msk [vmem:[%s172 + $0xb0] sm:$0xff] %vm958, %v948
      %982 = vst.msk [vmem:[%s172 + $0xb8] sm:$0xff] %vm958, %v949
      %983 = vst.msk [vmem:[%s172 + $0xc0] sm:$0xff] %vm958, %v950
      %984 = vst.msk [vmem:[%s172 + $0xc8] sm:$0xff] %vm958, %v951
      %985 = vst.msk [vmem:[%s172 + $0xd0] sm:$0xff] %vm958, %v952
      %986 = vst.msk [vmem:[%s172 + $0xd8] sm:$0xff] %vm958, %v953
      %987 = vst.msk [vmem:[%s172 + $0xe0] sm:$0xff] %vm958, %v954
      %988 = vst.msk [vmem:[%s172 + $0xe8] sm:$0xff] %vm958, %v955
      %989 = vst.msk [vmem:[%s172 + $0xf0] sm:$0xff] %vm958, %v956
      %990 = vst.msk [vmem:[%s172 + $0xf8] sm:$0xff] %vm958, %v957
      %s991 = smul.u32 32, %s14
      %p992 = scmp.lt.s32.totalorder %s991, 63
      %s993 = scalar_select %p992, %s991, 63
      %s994 = smul.addr %s993, 8
      %s995 = scalar_lea.vmem %s3, %s994
      // Predicated region
      $region33: #{unet_ag_forward.26} parent=31 // pred_check
        %p996 = pneg %p100
      $region34: #{unet_ag_forward.26} parent=31 // pred_check_branch
        %998 = sbr.rel (%p996) target = $region36
      $region35: #{unet_ag_forward.26} parent=31 // pred_region
        %s999 = smul.u32 32, %s14
      $region36: #{unet_ag_forward.26} parent=31 // pred_fallthru
        _
    $region32: #{unet_ag_forward.26} parent=5 // pred_fallthru
      _
    %p1000 = scmp.le.s32.totalorder 2, %s9
    // Predicated region
    $region37: #{unet_ag_forward.26} parent=5 // pred_check
      %p1001 = pneg %p1000
    $region38: #{unet_ag_forward.26} parent=5 // pred_check_branch
      %1003 = sbr.rel (%p1001) target = $region40
    $region39: #{unet_ag_forward.26} parent=5 // pred_region
      %s1004 = ssub.s32 %s9, 2
      // Predicated region
      $region41: #{unet_ag_forward.26} parent=39 // pred_check
        %p1005 = pneg %p106
      $region42: #{unet_ag_forward.26} parent=39 // pred_check_branch
        %1007 = sbr.rel (%p1005) target = $region44
      $region43: #{unet_ag_forward.26} parent=39 // pred_region
        %s1008 = smul.u32 32, %s15
        %p1009 = scmp.lt.s32.totalorder %s1008, 63
        %s1010 = scalar_select %p1009, %s1008, 63
        %s1011 = smul.addr %s1010, 8
        %s1012 = scalar_lea.vmem %s3, %s1011
      $region44: #{unet_ag_forward.26} parent=39 // pred_fallthru
        _
    $region40: #{unet_ag_forward.26} parent=5 // pred_fallthru
      _
  $region6: #{unet_ag_forward.26} parent=0 // loop_footer
    %s13 = sadd.s32 1, %s9
  $region7: #{unet_ag_forward.26} parent=0 // loop_footer_branch
    %8 = sbr.rel target = $region3
  $region8: #{unet_ag_forward.26} parent=0 // loop_exit
    _

// kernel: unet_ag_forward.24
$region0: #{unet_ag_forward.24}
  #allocation0 [shape = 'u32[]', space=smem, size = 0x4, offset = 0x4, fixed_abs, tag = 'smem constant byte address 0x4 - core index']
  #allocation1 [shape = 'u32[144,128]{1,0:T(1,128)}', space=vmem, size = 0x12000, scoped, tag = 'internal scratch']
  %s0 = inlined_call_operand.vmem [shape: f32[576,48], index: 0, kind: input, shape index: {}]
  %s1 = inlined_call_operand.vmem [shape: bf16[3,48,8], index: 1, kind: input, shape index: {}]
  %s2 = inlined_call_operand.vmem [shape: f32[576,24], index: 2, kind: input, shape index: {}]
  %s3 = inlined_call_operand.vmem [shape: bf16[3,24,8], index: 3, kind: input, shape index: {}]
  %s4 = inlined_call_operand.vmem [shape: f32[1,8], index: 4, kind: input, shape index: {}]
  %s5 = inlined_call_operand.vmem [shape: f32[512,8], index: 5, kind: output, shape index: {}]
  %s6 = sld [smem:[#allocation0]]
  $region53: #{unet_ag_forward.24} parent=0
    _
  %s8 = ssub.s32 1, %s6
  %s9 = scalar_select 0, %s8, %s6
  loop: start=0, step=1, limit=4
  $region2: #{unet_ag_forward.24} parent=0 // loop_pre_header
    _
  $region3: #{unet_ag_forward.24} parent=0 // loop_header
    %s11 = sphi 0, %s15
    %p12 = scmp.ge.s32.totalorder %s11, 4
    %s21 = sphi 0, %s23
    %s24 = sphi 0, %s21
    %s25 = sphi 0, %s24
    %s41 = sphi 0, %s25
    %s45 = sphi 0, %s45
    %s47 = sphi 0, %s45
    %s48 = sphi 0, %s47
    %s62 = sphi 0, %s48
    %s68 = sphi 0, %s70
    %s71 = sphi 0, %s68
    %s72 = sphi 0, %s71
    %s88 = sphi 0, %s72
    %s92 = sphi 0, %s92
    %s94 = sphi 0, %s92
    %s95 = sphi 0, %s94
    %s109 = sphi 0, %s95
    %s113 = sphi 0, %s113
    %s115 = sphi 0, %s113
    %s116 = sphi 0, %s115
    %s130 = sphi 0, %s116
    %s136 = sphi 0, %s138
    %s139 = sphi 0, %s136
    %s140 = sphi 0, %s139
    %s156 = sphi 0, %s140
  $region4: #{unet_ag_forward.24} parent=0 // loop_header_branch
    %14 = sbr.rel (%p12) target = $region8
  $region5: #{unet_ag_forward.24} parent=0 // loop_body
    %s16 = ssub.s32 %s11, 1
    %s17 = ssub.s32 %s11, 2
    %s18 = sadd.s32 %s11, 1
    %s19 = ssub.s32 %s11, %s18
    %p20 = scmp.eq.s32.totalorder %s19, 0
    %s22 = sadd.s32 %s21, 1
    %s23 = scalar_select %p20, %s21, %s22
    %p26 = pneg %p20
    %p27 = scmp.eq.s32.totalorder %s11, 1
    %p28 = por %p26, %p27
    %p29 = scmp.ne.s32.totalorder %s21, %s24
    %p30 = scmp.eq.s32.totalorder %s11, 0
    %p31 = por %p29, %p30
    %p32 = scmp.ne.s32.totalorder %s21, %s24
    %p33 = scmp.eq.s32.totalorder %s16, 1
    %p34 = por %p32, %p33
    %p35 = scmp.ne.s32.totalorder %s24, %s25
    %p36 = scmp.eq.s32.totalorder %s16, 0
    %p37 = por %p35, %p36
    %p38 = scmp.ne.s32.totalorder %s24, %s25
    %p39 = scmp.eq.s32.totalorder %s17, 1
    %p40 = por %p38, %p39
    %p42 = scmp.ne.s32.totalorder %s25, %s41
    %p43 = scmp.eq.s32.totalorder %s17, 0
    %p44 = por %p42, %p43
    %s46 = sadd.s32 %s45, 1
    %p49 = scmp.eq.s32.totalorder %s11, 1
    %p50 = scmp.ne.s32.totalorder %s45, %s47
    %p51 = scmp.eq.s32.totalorder %s11, 0
    %p52 = por %p50, %p51
    %p53 = scmp.ne.s32.totalorder %s45, %s47
    %p54 = scmp.eq.s32.totalorder %s16, 1
    %p55 = por %p53, %p54
    %p56 = scmp.ne.s32.totalorder %s47, %s48
    %p57 = scmp.eq.s32.totalorder %s16, 0
    %p58 = por %p56, %p57
    %p59 = scmp.ne.s32.totalorder %s47, %s48
    %p60 = scmp.eq.s32.totalorder %s17, 1
    %p61 = por %p59, %p60
    %p63 = scmp.ne.s32.totalorder %s48, %s62
    %p64 = scmp.eq.s32.totalorder %s17, 0
    %p65 = por %p63, %p64
    %s66 = ssub.s32 %s11, %s18
    %p67 = scmp.eq.s32.totalorder %s66, 0
    %s69 = sadd.s32 %s68, 1
    %s70 = scalar_select %p67, %s68, %s69
    %p73 = pneg %p67
    %p74 = scmp.eq.s32.totalorder %s11, 1
    %p75 = por %p73, %p74
    %p76 = scmp.ne.s32.totalorder %s68, %s71
    %p77 = scmp.eq.s32.totalorder %s11, 0
    %p78 = por %p76, %p77
    %p79 = scmp.ne.s32.totalorder %s68, %s71
    %p80 = scmp.eq.s32.totalorder %s16, 1
    %p81 = por %p79, %p80
    %p82 = scmp.ne.s32.totalorder %s71, %s72
    %p83 = scmp.eq.s32.totalorder %s16, 0
    %p84 = por %p82, %p83
    %p85 = scmp.ne.s32.totalorder %s71, %s72
    %p86 = scmp.eq.s32.totalorder %s17, 1
    %p87 = por %p85, %p86
    %p89 = scmp.ne.s32.totalorder %s72, %s88
    %p90 = scmp.eq.s32.totalorder %s17, 0
    %p91 = por %p89, %p90
    %s93 = sadd.s32 %s92, 1
    %p96 = scmp.eq.s32.totalorder %s11, 1
    %p97 = scmp.ne.s32.totalorder %s92, %s94
    %p98 = scmp.eq.s32.totalorder %s11, 0
    %p99 = por %p97, %p98
    %p100 = scmp.ne.s32.totalorder %s92, %s94
    %p101 = scmp.eq.s32.totalorder %s16, 1
    %p102 = por %p100, %p101
    %p103 = scmp.ne.s32.totalorder %s94, %s95
    %p104 = scmp.eq.s32.totalorder %s16, 0
    %p105 = por %p103, %p104
    %p106 = scmp.ne.s32.totalorder %s94, %s95
    %p107 = scmp.eq.s32.totalorder %s17, 1
    %p108 = por %p106, %p107
    %p110 = scmp.ne.s32.totalorder %s95, %s109
    %p111 = scmp.eq.s32.totalorder %s17, 0
    %p112 = por %p110, %p111
    %s114 = sadd.s32 %s113, 1
    %p117 = scmp.eq.s32.totalorder %s11, 1
    %p118 = scmp.ne.s32.totalorder %s113, %s115
    %p119 = scmp.eq.s32.totalorder %s11, 0
    %p120 = por %p118, %p119
    %p121 = scmp.ne.s32.totalorder %s113, %s115
    %p122 = scmp.eq.s32.totalorder %s16, 1
    %p123 = por %p121, %p122
    %p124 = scmp.ne.s32.totalorder %s115, %s116
    %p125 = scmp.eq.s32.totalorder %s16, 0
    %p126 = por %p124, %p125
    %p127 = scmp.ne.s32.totalorder %s115, %s116
    %p128 = scmp.eq.s32.totalorder %s17, 1
    %p129 = por %p127, %p128
    %p131 = scmp.ne.s32.totalorder %s116, %s130
    %p132 = scmp.eq.s32.totalorder %s17, 0
    %p133 = por %p131, %p132
    %s134 = ssub.s32 %s11, %s18
    %p135 = scmp.eq.s32.totalorder %s134, 0
    %s137 = sadd.s32 %s136, 1
    %s138 = scalar_select %p135, %s136, %s137
    %p141 = pneg %p135
    %p142 = scmp.eq.s32.totalorder %s11, 1
    %p143 = por %p141, %p142
    %p144 = scmp.ne.s32.totalorder %s136, %s139
    %p145 = scmp.eq.s32.totalorder %s11, 0
    %p146 = por %p144, %p145
    %p147 = scmp.ne.s32.totalorder %s136, %s139
    %p148 = scmp.eq.s32.totalorder %s16, 1
    %p149 = por %p147, %p148
    %p150 = scmp.ne.s32.totalorder %s139, %s140
    %p151 = scmp.eq.s32.totalorder %s16, 0
    %p152 = por %p150, %p151
    %p153 = scmp.ne.s32.totalorder %s139, %s140
    %p154 = scmp.eq.s32.totalorder %s17, 1
    %p155 = por %p153, %p154
    %p157 = scmp.ne.s32.totalorder %s140, %s156
    %p158 = scmp.eq.s32.totalorder %s17, 0
    %p159 = por %p157, %p158
    %p160 = scmp.le.s32.totalorder 1, %s11
    %p161 = scmp.lt.s32.totalorder %s11, 3
    %p162 = pnand %p160, %p161
    %p163 = pneg %p162
    // Predicated region
    $region9: #{unet_ag_forward.24} parent=5 // pred_check
      _
    $region10: #{unet_ag_forward.24} parent=5 // pred_check_branch
      %165 = sbr.rel (%p162) target = $region12
    $region11: #{unet_ag_forward.24} parent=5 // pred_region
      %s166 = ssub.s32 %s11, 1
      // Predicated region
      $region13: #{unet_ag_forward.24} parent=11 // pred_check
        %p167 = pneg %p58
      $region14: #{unet_ag_forward.24} parent=11 // pred_check_branch
        %169 = sbr.rel (%p167) target = $region16
      $region15: #{unet_ag_forward.24} parent=11 // pred_region
        _
      $region16: #{unet_ag_forward.24} parent=11 // pred_fallthru
        _
      // Predicated region
      $region17: #{unet_ag_forward.24} parent=11 // pred_check
        %p170 = pneg %p105
      $region18: #{unet_ag_forward.24} parent=11 // pred_check_branch
        %172 = sbr.rel (%p170) target = $region20
      $region19: #{unet_ag_forward.24} parent=11 // pred_region
        _
      $region20: #{unet_ag_forward.24} parent=11 // pred_fallthru
        _
      // Predicated region
      $region21: #{unet_ag_forward.24} parent=11 // pred_check
        %p173 = pneg %p126
      $region22: #{unet_ag_forward.24} parent=11 // pred_check_branch
        %175 = sbr.rel (%p173) target = $region24
      $region23: #{unet_ag_forward.24} parent=11 // pred_region
        _
      $region24: #{unet_ag_forward.24} parent=11 // pred_fallthru
        _
    $region12: #{unet_ag_forward.24} parent=5 // pred_fallthru
      _
    %p176 = scmp.lt.s32.totalorder %s11, 2
    // Predicated region
    $region25: #{unet_ag_forward.24} parent=5 // pred_check
      %p177 = pneg %p176
    $region26: #{unet_ag_forward.24} parent=5 // pred_check_branch
      %179 = sbr.rel (%p177) target = $region28
    $region27: #{unet_ag_forward.24} parent=5 // pred_region
      // Predicated region
      $region29: #{unet_ag_forward.24} parent=27 // pred_check
        %p180 = pneg %p31
      $region30: #{unet_ag_forward.24} parent=27 // pred_check_branch
        %182 = sbr.rel (%p180) target = $region32
      $region31: #{unet_ag_forward.24} parent=27 // pred_region
        %s183 = smul.u32 36, %s11
        %p184 = scmp.lt.s32.totalorder %s183, 71
        %s185 = scalar_select %p184, %s183, 71
        %s186 = smul.addr %s185, 8
        %s187 = scalar_lea.vmem %s0, %s186
        %s188 = smul.u32 36, %s11
      $region32: #{unet_ag_forward.24} parent=27 // pred_fallthru
        _
      // Predicated region
      $region33: #{unet_ag_forward.24} parent=27 // pred_check
        %p189 = pneg %p78
      $region34: #{unet_ag_forward.24} parent=27 // pred_check_branch
        %191 = sbr.rel (%p189) target = $region36
      $region35: #{unet_ag_forward.24} parent=27 // pred_region
        %s192 = smul.u32 36, %s11
        %p193 = scmp.lt.s32.totalorder %s192, 71
        %s194 = scalar_select %p193, %s192, 71
        %s195 = smul.addr %s194, 8
        %s196 = scalar_lea.vmem %s2, %s195
        %s197 = smul.u32 36, %s11
      $region36: #{unet_ag_forward.24} parent=27 // pred_fallthru
        _
    $region28: #{unet_ag_forward.24} parent=5 // pred_fallthru
      _
    %p198 = scmp.le.s32.totalorder 1, %s11
    %p199 = scmp.lt.s32.totalorder %s11, 3
    %p200 = pnand %p198, %p199
    %p201 = pneg %p200
    // Predicated region
    $region37: #{unet_ag_forward.24} parent=5 // pred_check
      _
    $region38: #{unet_ag_forward.24} parent=5 // pred_check_branch
      %203 = sbr.rel (%p200) target = $region40
    $region39: #{unet_ag_forward.24} parent=5 // pred_region
      %s204 = ssub.s32 %s11, 1
      %s205 = smul.u32 36, %s16
      %p206 = scmp.lt.s32.totalorder %s205, 71
      %s207 = scalar_select %p206, %s205, 71
      %s208 = smul.addr %s207, 8
      %s209 = scalar_lea.vmem %s0, %s208
      %p210 = pneg %p37
      %p211 = pneg %p34
      %p212 = pneg %p58
      %p213 = pneg %p55
      %s214 = smul.u32 36, %s16
      %p215 = scmp.lt.s32.totalorder %s214, 71
      %s216 = scalar_select %p215, %s214, 71
      %s217 = smul.addr %s216, 8
      %s218 = scalar_lea.vmem %s2, %s217
      %p219 = pneg %p84
      %p220 = pneg %p81
      %p221 = pneg %p105
      %p222 = pneg %p102
      %p223 = pneg %p126
      %p224 = pneg %p123
      %p225 = pneg %p152
      %p226 = pneg %p149
      %s227 = smul.u32 32, %s16
      %p228 = scmp.lt.s32.totalorder %s227, 63
      %s229 = scalar_select %p228, %s227, 63
      %s230 = smul.addr %s229, 8
      %s231 = scalar_lea.vmem %s5, %s230
      %s232 = smul.u32 36, %s16
      %p233 = scmp.lt.s32.totalorder %s232, 71
      %s234 = scalar_select %p233, %s232, 71
      %s235 = smul.addr %s234, 8
      %s236 = scalar_lea.vmem %s0, %s235
      %s237 = smul.u32 36, %s16
      %s238 = smul.u32 36, %s16
      %p239 = scmp.lt.s32.totalorder %s238, 71
      %s240 = scalar_select %p239, %s238, 71
      %s241 = smul.addr %s240, 8
      %s242 = scalar_lea.vmem %s2, %s241
      %s243 = smul.u32 36, %s16
      %s244 = smul.u32 32, %s16
      %p245 = scmp.lt.s32.totalorder %s244, 63
      %s246 = scalar_select %p245, %s244, 63
      %s247 = smul.addr %s246, 8
      %s248 = scalar_lea.vmem %s5, %s247
      %s249 = smul.u32 32, %s16
      %v251 = vld [vmem:[%s236] sm:$0xff]
      %v252 = vld [vmem:[%s236 + $0x8] sm:$0xff]
      %v253 = vld [vmem:[%s236 + $0x10] sm:$0xff]
      %v254 = vld [vmem:[%s236 + $0x18] sm:$0xff]
      %v255 = vld [vmem:[%s236 + $0x20] sm:$0xff]
      %v256 = vld [vmem:[%s236 + $0x28] sm:$0xff]
      %v257 = vld [vmem:[%s236 + $0x30] sm:$0xff]
      %v258 = vld [vmem:[%s236 + $0x38] sm:$0xff]
      %v259 = vld [vmem:[%s236 + $0x40] sm:$0xff]
      %v260 = vld [vmem:[%s236 + $0x48] sm:$0xff]
      %v261 = vld [vmem:[%s236 + $0x50] sm:$0xff]
      %v262 = vld [vmem:[%s236 + $0x58] sm:$0xff]
      %v263 = vld [vmem:[%s236 + $0x60] sm:$0xff]
      %v264 = vld [vmem:[%s236 + $0x68] sm:$0xff]
      %v265 = vld [vmem:[%s236 + $0x70] sm:$0xff]
      %v266 = vld [vmem:[%s236 + $0x78] sm:$0xff]
      %v267 = vld [vmem:[%s236 + $0x80] sm:$0xff]
      %v268 = vld [vmem:[%s236 + $0x88] sm:$0xff]
      %v269 = vld [vmem:[%s236 + $0x90] sm:$0xff]
      %v270 = vld [vmem:[%s236 + $0x98] sm:$0xff]
      %v271 = vld [vmem:[%s236 + $0xa0] sm:$0xff]
      %v272 = vld [vmem:[%s236 + $0xa8] sm:$0xff]
      %v273 = vld [vmem:[%s236 + $0xb0] sm:$0xff]
      %v274 = vld [vmem:[%s236 + $0xb8] sm:$0xff]
      %v275 = vld [vmem:[%s236 + $0xc0] sm:$0xff]
      %v276 = vld [vmem:[%s236 + $0xc8] sm:$0xff]
      %v277 = vld [vmem:[%s236 + $0xd0] sm:$0xff]
      %v278 = vld [vmem:[%s236 + $0xd8] sm:$0xff]
      %v279 = vld [vmem:[%s236 + $0xe0] sm:$0xff]
      %v280 = vld [vmem:[%s236 + $0xe8] sm:$0xff]
      %v281 = vld [vmem:[%s236 + $0xf0] sm:$0xff]
      %v282 = vld [vmem:[%s236 + $0xf8] sm:$0xff]
      %v283 = vpack.c.bf16 %v252, %v251
      %v284 = vpack.c.bf16 %v254, %v253
      %v285 = vpack.c.bf16 %v256, %v255
      %v286 = vpack.c.bf16 %v258, %v257
      %v287 = vpack.c.bf16 %v260, %v259
      %v288 = vpack.c.bf16 %v262, %v261
      %v289 = vpack.c.bf16 %v264, %v263
      %v290 = vpack.c.bf16 %v266, %v265
      %v291 = vpack.c.bf16 %v268, %v267
      %v292 = vpack.c.bf16 %v270, %v269
      %v293 = vpack.c.bf16 %v272, %v271
      %v294 = vpack.c.bf16 %v274, %v273
      %v295 = vpack.c.bf16 %v276, %v275
      %v296 = vpack.c.bf16 %v278, %v277
      %v297 = vpack.c.bf16 %v280, %v279
      %v298 = vpack.c.bf16 %v282, %v281
      %v299 = vld [vmem:[%s1] sm:$0xf]
      %v300 = vld [vmem:[%s1 + $0x4] sm:$0xf]
      %v301 = vld [vmem:[%s1 + $0x8] sm:$0xf]
      %v302 = vld [vmem:[%s1 + $0xc] sm:$0xf]
      %v303 = vld [vmem:[%s1 + $0x10] sm:$0xf]
      %v304 = vld [vmem:[%s1 + $0x14] sm:$0xf]
      %v305 = vld [vmem:[%s236 + $0x100] sm:$0xff]
      %v306 = vld [vmem:[%s236 + $0x108] sm:$0xff]
      %v307 = vpack.c.bf16 %v306, %v305
      %s308 = scalar_lea.vmem %s1, 24
      %v309 = vld [vmem:[%s308] sm:$0xf]
      %v310 = vld [vmem:[%s308 + $0x4] sm:$0xf]
      %v311 = vld [vmem:[%s308 + $0x8] sm:$0xf]
      %v312 = vld [vmem:[%s308 + $0xc] sm:$0xf]
      %v313 = vld [vmem:[%s308 + $0x10] sm:$0xf]
      %v314 = vld [vmem:[%s308 + $0x14] sm:$0xf]
      %v321 = vunpack.c.l.b16 %v309
      %v322 = vunpack.c.l.b16 %v310
      %v323 = vunpack.c.l.b16 %v311
      %v324 = vunpack.c.l.b16 %v312
      %v325 = vunpack.c.l.b16 %v313
      %v326 = vunpack.c.l.b16 %v314
      %v327 = vpack.c.b16 %v322, %v321
      %v328 = vpack.c.b16 %v324, %v323
      %v329 = vpack.c.b16 %v326, %v325
      %vm333 = vcmask 392192
      %v335 = vsel %vm333, %v284, 0
      %v338 = vsel %vm333, %v285, 0
      %v341 = vsel %vm333, %v286, 0
      %v344 = vsel %vm333, %v287, 0
      %v347 = vsel %vm333, %v288, 0
      %v350 = vsel %vm333, %v289, 0
      %v353 = vsel %vm333, %v290, 0
      %v356 = vsel %vm333, %v291, 0
      %v359 = vsel %vm333, %v292, 0
      %v362 = vsel %vm333, %v293, 0
      %v365 = vsel %vm333, %v294, 0
      %v368 = vsel %vm333, %v295, 0
      %v371 = vsel %vm333, %v296, 0
      %v374 = vsel %vm333, %v297, 0
      %v377 = vsel %vm333, %v298, 0
      %v380 = vsel %vm333, %v307, 0
      %382 = vmatprep.subr.bf16.mxu0 0
      %383 = vmatpush1.bf16.msra.mxu0 %v327
      %384 = vmatprep.subr.bf16.mxu0 0
      %385 = vmatpush1.bf16.msra.mxu0 %v328
      %386 = vmatprep.subr.bf16.mxu0 0
      %387 = vmatpush1.bf16.msra.mxu0 %v329
      %388 = vmatprep.subr.bf16.mxu0 0
      %389 = vmatpush1.bf16.msra.mxu0 0
      %390 = vmatprep.subr.bf16.mxu0 0
      %391 = vmatpush1.bf16.msra.mxu0 0
      %392 = vmatprep.subr.bf16.mxu0 0
      %393 = vmatpush1.bf16.msra.mxu0 0
      %394 = vmatprep.subr.bf16.mxu0 0
      %395 = vmatpush1.bf16.msra.mxu0 0
      %396 = vmatprep.subr.bf16.mxu0 0
      %397 = vmatpush1.bf16.msra.mxu0 0
      %398 = vmatprep.subr.bf16.mxu0 0
      %399 = vmatpush1.bf16.msra.mxu0 0
      %400 = vmatprep.subr.bf16.mxu0 0
      %401 = vmatpush1.bf16.msra.mxu0 0
      %402 = vmatprep.subr.bf16.mxu0 0
      %403 = vmatpush1.bf16.msra.mxu0 0
      %404 = vmatprep.subr.bf16.mxu0 0
      %405 = vmatpush1.bf16.msra.mxu0 0
      %406 = vmatprep.subr.bf16.mxu0 0
      %407 = vmatpush1.bf16.msra.mxu0 0
      %408 = vmatprep.subr.bf16.mxu0 0
      %409 = vmatpush1.bf16.msra.mxu0 0
      %410 = vmatprep.subr.bf16.mxu0 0
      %411 = vmatpush1.bf16.msra.mxu0 0
      %412 = vmatprep.subr.bf16.mxu0 0
      %413 = vmatpush1.bf16.msra.mxu0 0
      %414 = vmatprep.mubr.bf16.mxu0 0
      %415 = vmatmul.mubr.bf16.gmra.mrb[0].mxu0 %v335
      %v416 = vpop.f32.mrb[0].mxu0
      %v417 = vadd.f32 0.0, %v416
      %v418 = vpop.f32.mrb[0].mxu0
      %v419 = vpop.f32.mrb[0].mxu0
      %v420 = vadd.f32 0.0, %v419
      %v421 = vpop.f32.mrb[0].mxu0
      %422 = vmatprep.mubr.bf16.mxu0 0
      %423 = vmatmul.mubr.bf16.gmra.mrb[0].mxu0 %v338
      %v424 = vpop.f32.mrb[0].mxu0
      %v425 = vadd.f32 0.0, %v424
      %v426 = vpop.f32.mrb[0].mxu0
      %v427 = vpop.f32.mrb[0].mxu0
      %v428 = vadd.f32 0.0, %v427
      %v429 = vpop.f32.mrb[0].mxu0
      %430 = vmatprep.mubr.bf16.mxu0 0
      %431 = vmatmul.mubr.bf16.gmra.mrb[0].mxu0 %v341
      %v432 = vpop.f32.mrb[0].mxu0
      %v433 = vadd.f32 0.0, %v432
      %v434 = vpop.f32.mrb[0].mxu0
      %v435 = vpop.f32.mrb[0].mxu0
      %v436 = vadd.f32 0.0, %v435
      %v437 = vpop.f32.mrb[0].mxu0
      %438 = vmatprep.mubr.bf16.mxu0 0
      %439 = vmatmul.mubr.bf16.gmra.mrb[0].mxu0 %v344
      %v440 = vpop.f32.mrb[0].mxu0
      %v441 = vadd.f32 0.0, %v440
      %v442 = vpop.f32.mrb[0].mxu0
      %v443 = vpop.f32.mrb[0].mxu0
      %v444 = vadd.f32 0.0, %v443
      %v445 = vpop.f32.mrb[0].mxu0
      %446 = vmatprep.mubr.bf16.mxu0 0
      %447 = vmatmul.mubr.bf16.gmra.mrb[0].mxu0 %v347
      %v448 = vpop.f32.mrb[0].mxu0
      %v449 = vadd.f32 0.0, %v448
      %v450 = vpop.f32.mrb[0].mxu0
      %v451 = vpop.f32.mrb[0].mxu0
      %v452 = vadd.f32 0.0, %v451
      %v453 = vpop.f32.mrb[0].mxu0
      %454 = vmatprep.mubr.bf16.mxu0 0
      %455 = vmatmul.mubr.bf16.gmra.mrb[0].mxu0 %v350
      %v456 = vpop.f32.mrb[0].mxu0
      %v457 = vadd.f32 0.0, %v456
      %v458 = vpop.f32.mrb[0].mxu0
      %v459 = vpop.f32.mrb[0].mxu0
      %v460 = vadd.f32 0.0, %v459
      %v461 = vpop.f32.mrb[0].mxu0
      %462 = vmatprep.mubr.bf16.mxu0 0
      %463 = vmatmul.mubr.bf16.gmra.mrb[0].mxu0 %v353
      %v464 = vpop.f32.mrb[0].mxu0
      %v465 = vadd.f32 0.0, %v464
      %v466 = vpop.f32.mrb[0].mxu0
      %v467 = vpop.f32.mrb[0].mxu0
      %v468 = vadd.f32 0.0, %v467
      %v469 = vpop.f32.mrb[0].mxu0
      %470 = vmatprep.mubr.bf16.mxu0 0
      %471 = vmatmul.mubr.bf16.gmra.mrb[0].mxu0 %v356
      %v472 = vpop.f32.mrb[0].mxu0
      %v473 = vadd.f32 0.0, %v472
      %v474 = vpop.f32.mrb[0].mxu0
      %v475 = vpop.f32.mrb[0].mxu0
      %v476 = vadd.f32 0.0, %v475
      %v477 = vpop.f32.mrb[0].mxu0
      %478 = vmatprep.mubr.bf16.mxu0 0
      %479 = vmatmul.mubr.bf16.gmra.mrb[0].mxu0 %v359
      %v480 = vpop.f32.mrb[0].mxu0
      %v481 = vadd.f32 0.0, %v480
      %v482 = vpop.f32.mrb[0].mxu0
      %v483 = vpop.f32.mrb[0].mxu0
      %v484 = vadd.f32 0.0, %v483
      %v485 = vpop.f32.mrb[0].mxu0
      %486 = vmatprep.mubr.bf16.mxu0 0
      %487 = vmatmul.mubr.bf16.gmra.mrb[0].mxu0 %v362
      %v488 = vpop.f32.mrb[0].mxu0
      %v489 = vadd.f32 0.0, %v488
      %v490 = vpop.f32.mrb[0].mxu0
      %v491 = vpop.f32.mrb[0].mxu0
      %v492 = vadd.f32 0.0, %v491
      %v493 = vpop.f32.mrb[0].mxu0
      %494 = vmatprep.mubr.bf16.mxu0 0
      %495 = vmatmul.mubr.bf16.gmra.mrb[0].mxu0 %v365
      %v496 = vpop.f32.mrb[0].mxu0
      %v497 = vadd.f32 0.0, %v496
      %v498 = vpop.f32.mrb[0].mxu0
      %v499 = vpop.f32.mrb[0].mxu0
      %v500 = vadd.f32 0.0, %v499
      %v501 = vpop.f32.mrb[0].mxu0
      %502 = vmatprep.mubr.bf16.mxu0 0
      %503 = vmatmul.mubr.bf16.gmra.mrb[0].mxu0 %v368
      %v504 = vpop.f32.mrb[0].mxu0
      %v505 = vadd.f32 0.0, %v504
      %v506 = vpop.f32.mrb[0].mxu0
      %v507 = vpop.f32.mrb[0].mxu0
      %v508 = vadd.f32 0.0, %v507
      %v509 = vpop.f32.mrb[0].mxu0
      %510 = vmatprep.mubr.bf16.mxu0 0
      %511 = vmatmul.mubr.bf16.gmra.mrb[0].mxu0 %v371
      %v512 = vpop.f32.mrb[0].mxu0
      %v513 = vadd.f32 0.0, %v512
      %v514 = vpop.f32.mrb[0].mxu0
      %v515 = vpop.f32.mrb[0].mxu0
      %v516 = vadd.f32 0.0, %v515
      %v517 = vpop.f32.mrb[0].mxu0
      %518 = vmatprep.mubr.bf16.mxu0 0
      %519 = vmatmul.mubr.bf16.gmra.mrb[0].mxu0 %v374
      %v520 = vpop.f32.mrb[0].mxu0
      %v521 = vadd.f32 0.0, %v520
      %v522 = vpop.f32.mrb[0].mxu0
      %v523 = vpop.f32.mrb[0].mxu0
      %v524 = vadd.f32 0.0, %v523
      %v525 = vpop.f32.mrb[0].mxu0
      %526 = vmatprep.mubr.bf16.mxu0 0
      %527 = vmatmul.mubr.bf16.gmra.mrb[0].mxu0 %v377
      %v528 = vpop.f32.mrb[0].mxu0
      %v529 = vadd.f32 0.0, %v528
      %v530 = vpop.f32.mrb[0].mxu0
      %v531 = vpop.f32.mrb[0].mxu0
      %v532 = vadd.f32 0.0, %v531
      %v533 = vpop.f32.mrb[0].mxu0
      %534 = vmatprep.mubr.bf16.mxu0 0
      %535 = vmatmul.mubr.bf16.gmra.mrb[0].mxu0 %v380
      %v536 = vpop.f32.mrb[0].mxu0
      %v537 = vadd.f32 0.0, %v536
      %v538 = vpop.f32.mrb[0].mxu0
      %v539 = vpop.f32.mrb[0].mxu0
      %v540 = vadd.f32 0.0, %v539
      %v541 = vpop.f32.mrb[0].mxu0
      %542 = vdwg.mxu0
      %v549 = vunpack.c.l.b16 %v299
      %v550 = vunpack.c.l.b16 %v300
      %v551 = vunpack.c.l.b16 %v301
      %v552 = vunpack.c.l.b16 %v302
      %v553 = vunpack.c.l.b16 %v303
      %v554 = vunpack.c.l.b16 %v304
      %v555 = vpack.c.b16 %v550, %v549
      %v556 = vpack.c.b16 %v552, %v551
      %v557 = vpack.c.b16 %v554, %v553
      %v562 = vsel %vm333, %v283, 0
      %564 = vmatprep.subr.bf16.mxu0 0
      %565 = vmatpush1.bf16.msra.mxu0 %v555
      %566 = vmatprep.subr.bf16.mxu0 0
      %567 = vmatpush1.bf16.msra.mxu0 %v556
      %568 = vmatprep.subr.bf16.mxu0 0
      %569 = vmatpush1.bf16.msra.mxu0 %v557
      %570 = vmatprep.subr.bf16.mxu0 0
      %571 = vmatpush1.bf16.msra.mxu0 0
      %572 = vmatprep.subr.bf16.mxu0 0
      %573 = vmatpush1.bf16.msra.mxu0 0
      %574 = vmatprep.subr.bf16.mxu0 0
      %575 = vmatpush1.bf16.msra.mxu0 0
      %576 = vmatprep.subr.bf16.mxu0 0
      %577 = vmatpush1.bf16.msra.mxu0 0
      %578 = vmatprep.subr.bf16.mxu0 0
      %579 = vmatpush1.bf16.msra.mxu0 0
      %580 = vmatprep.subr.bf16.mxu0 0
      %581 = vmatpush1.bf16.msra.mxu0 0
      %582 = vmatprep.subr.bf16.mxu0 0
      %583 = vmatpush1.bf16.msra.mxu0 0
      %584 = vmatprep.subr.bf16.mxu0 0
      %585 = vmatpush1.bf16.msra.mxu0 0
      %586 = vmatprep.subr.bf16.mxu0 0
      %587 = vmatpush1.bf16.msra.mxu0 0
      %588 = vmatprep.subr.bf16.mxu0 0
      %589 = vmatpush1.bf16.msra.mxu0 0
      %590 = vmatprep.subr.bf16.mxu0 0
      %591 = vmatpush1.bf16.msra.mxu0 0
      %592 = vmatprep.subr.bf16.mxu0 0
      %593 = vmatpush1.bf16.msra.mxu0 0
      %594 = vmatprep.subr.bf16.mxu0 0
      %595 = vmatpush1.bf16.msra.mxu0 0
      %596 = vmatprep.mubr.bf16.mxu0 0
      %597 = vmatmul.mubr.bf16.gmra.mrb[0].mxu0 %v562
      %v598 = vpop.f32.mrb[0].mxu0
      %v599 = vadd.f32 %v417, %v598
      %v600 = vpop.f32.mrb[0].mxu0
      %v601 = vpop.f32.mrb[0].mxu0
      %v602 = vadd.f32 %v420, %v601
      %v603 = vpop.f32.mrb[0].mxu0
      %604 = vmatprep.mubr.bf16.mxu0 0
      %605 = vmatmul.mubr.bf16.gmra.mrb[0].mxu0 %v335
      %v606 = vpop.f32.mrb[0].mxu0
      %v607 = vadd.f32 %v425, %v606
      %v608 = vpop.f32.mrb[0].mxu0
      %v609 = vpop.f32.mrb[0].mxu0
      %v610 = vadd.f32 %v428, %v609
      %v611 = vpop.f32.mrb[0].mxu0
      %612 = vmatprep.mubr.bf16.mxu0 0
      %613 = vmatmul.mubr.bf16.gmra.mrb[0].mxu0 %v338
      %v614 = vpop.f32.mrb[0].mxu0
      %v615 = vadd.f32 %v433, %v614
      %v616 = vpop.f32.mrb[0].mxu0
      %v617 = vpop.f32.mrb[0].mxu0
      %v618 = vadd.f32 %v436, %v617
      %v619 = vpop.f32.mrb[0].mxu0
      %620 = vmatprep.mubr.bf16.mxu0 0
      %621 = vmatmul.mubr.bf16.gmra.mrb[0].mxu0 %v341
      %v622 = vpop.f32.mrb[0].mxu0
      %v623 = vadd.f32 %v441, %v622
      %v624 = vpop.f32.mrb[0].mxu0
      %v625 = vpop.f32.mrb[0].mxu0
      %v626 = vadd.f32 %v444, %v625
      %v627 = vpop.f32.mrb[0].mxu0
      %628 = vmatprep.mubr.bf16.mxu0 0
      %629 = vmatmul.mubr.bf16.gmra.mrb[0].mxu0 %v344
      %v630 = vpop.f32.mrb[0].mxu0
      %v631 = vadd.f32 %v449, %v630
      %v632 = vpop.f32.mrb[0].mxu0
      %v633 = vpop.f32.mrb[0].mxu0
      %v634 = vadd.f32 %v452, %v633
      %v635 = vpop.f32.mrb[0].mxu0
      %636 = vmatprep.mubr.bf16.mxu0 0
      %637 = vmatmul.mubr.bf16.gmra.mrb[0].mxu0 %v347
      %v638 = vpop.f32.mrb[0].mxu0
      %v639 = vadd.f32 %v457, %v638
      %v640 = vpop.f32.mrb[0].mxu0
      %v641 = vpop.f32.mrb[0].mxu0
      %v642 = vadd.f32 %v460, %v641
      %v643 = vpop.f32.mrb[0].mxu0
      %644 = vmatprep.mubr.bf16.mxu0 0
      %645 = vmatmul.mubr.bf16.gmra.mrb[0].mxu0 %v350
      %v646 = vpop.f32.mrb[0].mxu0
      %v647 = vadd.f32 %v465, %v646
      %v648 = vpop.f32.mrb[0].mxu0
      %v649 = vpop.f32.mrb[0].mxu0
      %v650 = vadd.f32 %v468, %v649
      %v651 = vpop.f32.mrb[0].mxu0
      %652 = vmatprep.mubr.bf16.mxu0 0
      %653 = vmatmul.mubr.bf16.gmra.mrb[0].mxu0 %v353
      %v654 = vpop.f32.mrb[0].mxu0
      %v655 = vadd.f32 %v473, %v654
      %v656 = vpop.f32.mrb[0].mxu0
      %v657 = vpop.f32.mrb[0].mxu0
      %v658 = vadd.f32 %v476, %v657
      %v659 = vpop.f32.mrb[0].mxu0
      %660 = vmatprep.mubr.bf16.mxu0 0
      %661 = vmatmul.mubr.bf16.gmra.mrb[0].mxu0 %v356
      %v662 = vpop.f32.mrb[0].mxu0
      %v663 = vadd.f32 %v481, %v662
      %v664 = vpop.f32.mrb[0].mxu0
      %v665 = vpop.f32.mrb[0].mxu0
      %v666 = vadd.f32 %v484, %v665
      %v667 = vpop.f32.mrb[0].mxu0
      %668 = vmatprep.mubr.bf16.mxu0 0
      %669 = vmatmul.mubr.bf16.gmra.mrb[0].mxu0 %v359
      %v670 = vpop.f32.mrb[0].mxu0
      %v671 = vadd.f32 %v489, %v670
      %v672 = vpop.f32.mrb[0].mxu0
      %v673 = vpop.f32.mrb[0].mxu0
      %v674 = vadd.f32 %v492, %v673
      %v675 = vpop.f32.mrb[0].mxu0
      %676 = vmatprep.mubr.bf16.mxu0 0
      %677 = vmatmul.mubr.bf16.gmra.mrb[0].mxu0 %v362
      %v678 = vpop.f32.mrb[0].mxu0
      %v679 = vadd.f32 %v497, %v678
      %v680 = vpop.f32.mrb[0].mxu0
      %v681 = vpop.f32.mrb[0].mxu0
      %v682 = vadd.f32 %v500, %v681
      %v683 = vpop.f32.mrb[0].mxu0
      %684 = vmatprep.mubr.bf16.mxu0 0
      %685 = vmatmul.mubr.bf16.gmra.mrb[0].mxu0 %v365
      %v686 = vpop.f32.mrb[0].mxu0
      %v687 = vadd.f32 %v505, %v686
      %v688 = vpop.f32.mrb[0].mxu0
      %v689 = vpop.f32.mrb[0].mxu0
      %v690 = vadd.f32 %v508, %v689
      %v691 = vpop.f32.mrb[0].mxu0
      %692 = vmatprep.mubr.bf16.mxu0 0
      %693 = vmatmul.mubr.bf16.gmra.mrb[0].mxu0 %v368
      %v694 = vpop.f32.mrb[0].mxu0
      %v695 = vadd.f32 %v513, %v694
      %v696 = vpop.f32.mrb[0].mxu0
      %v697 = vpop.f32.mrb[0].mxu0
      %v698 = vadd.f32 %v516, %v697
      %v699 = vpop.f32.mrb[0].mxu0
      %700 = vmatprep.mubr.bf16.mxu0 0
      %701 = vmatmul.mubr.bf16.gmra.mrb[0].mxu0 %v371
      %v702 = vpop.f32.mrb[0].mxu0
      %v703 = vadd.f32 %v521, %v702
      %v704 = vpop.f32.mrb[0].mxu0
      %v705 = vpop.f32.mrb[0].mxu0
      %v706 = vadd.f32 %v524, %v705
      %v707 = vpop.f32.mrb[0].mxu0
      %708 = vmatprep.mubr.bf16.mxu0 0
      %709 = vmatmul.mubr.bf16.gmra.mrb[0].mxu0 %v374
      %v710 = vpop.f32.mrb[0].mxu0
      %v711 = vadd.f32 %v529, %v710
      %v712 = vpop.f32.mrb[0].mxu0
      %v713 = vpop.f32.mrb[0].mxu0
      %v714 = vadd.f32 %v532, %v713
      %v715 = vpop.f32.mrb[0].mxu0
      %716 = vmatprep.mubr.bf16.mxu0 0
      %717 = vmatmul.mubr.bf16.gmra.mrb[0].mxu0 %v377
      %v718 = vpop.f32.mrb[0].mxu0
      %v719 = vadd.f32 %v537, %v718
      %v720 = vpop.f32.mrb[0].mxu0
      %v721 = vpop.f32.mrb[0].mxu0
      %v722 = vadd.f32 %v540, %v721
      %v723 = vpop.f32.mrb[0].mxu0
      %724 = vdwg.mxu0
      %v725 = vld [vmem:[%s236 + $0x20] sm:$0xff]
      %v726 = vld [vmem:[%s236 + $0x28] sm:$0xff]
      %v727 = vld [vmem:[%s236 + $0x30] sm:$0xff]
      %v728 = vld [vmem:[%s236 + $0x38] sm:$0xff]
      %v729 = vld [vmem:[%s236 + $0x40] sm:$0xff]
      %v730 = vld [vmem:[%s236 + $0x48] sm:$0xff]
      %v731 = vld [vmem:[%s236 + $0x50] sm:$0xff]
      %v732 = vld [vmem:[%s236 + $0x58] sm:$0xff]
      %v733 = vld [vmem:[%s236 + $0x60] sm:$0xff]
      %v734 = vld [vmem:[%s236 + $0x68] sm:$0xff]
      %v735 = vld [vmem:[%s236 + $0x70] sm:$0xff]
      %v736 = vld [vmem:[%s236 + $0x78] sm:$0xff]
      %v737 = vld [vmem:[%s236 + $0x80] sm:$0xff]
      %v738 = vld [vmem:[%s236 + $0x88] sm:$0xff]
      %v739 = vld [vmem:[%s236 + $0x90] sm:$0xff]
      %v740 = vld [vmem:[%s236 + $0x98] sm:$0xff]
      %v741 = vld [vmem:[%s236 + $0xa0] sm:$0xff]
      %v742 = vld [vmem:[%s236 + $0xa8] sm:$0xff]
      %v743 = vld [vmem:[%s236 + $0xb0] sm:$0xff]
      %v744 = vld [vmem:[%s236 + $0xb8] sm:$0xff]
      %v745 = vld [vmem:[%s236 + $0xc0] sm:$0xff]
      %v746 = vld [vmem:[%s236 + $0xc8] sm:$0xff]
      %v747 = vld [vmem:[%s236 + $0xd0] sm:$0xff]
      %v748 = vld [vmem:[%s236 + $0xd8] sm:$0xff]
      %v749 = vld [vmem:[%s236 + $0xe0] sm:$0xff]
      %v750 = vld [vmem:[%s236 + $0xe8] sm:$0xff]
      %v751 = vld [vmem:[%s236 + $0xf0] sm:$0xff]
      %v752 = vld [vmem:[%s236 + $0xf8] sm:$0xff]
      %v753 = vld [vmem:[%s236 + $0x100] sm:$0xff]
      %v754 = vld [vmem:[%s236 + $0x108] sm:$0xff]
      %v755 = vld [vmem:[%s236 + $0x110] sm:$0xff]
      %v756 = vld [vmem:[%s236 + $0x118] sm:$0xff]
      %v757 = vpack.c.bf16 %v726, %v725
      %v758 = vpack.c.bf16 %v728, %v727
      %v759 = vpack.c.bf16 %v730, %v729
      %v760 = vpack.c.bf16 %v732, %v731
      %v761 = vpack.c.bf16 %v734, %v733
      %v762 = vpack.c.bf16 %v736, %v735
      %v763 = vpack.c.bf16 %v738, %v737
      %v764 = vpack.c.bf16 %v740, %v739
      %v765 = vpack.c.bf16 %v742, %v741
      %v766 = vpack.c.bf16 %v744, %v743
      %v767 = vpack.c.bf16 %v746, %v745
      %v768 = vpack.c.bf16 %v748, %v747
      %v769 = vpack.c.bf16 %v750, %v749
      %v770 = vpack.c.bf16 %v752, %v751
      %v771 = vpack.c.bf16 %v754, %v753
      %v772 = vpack.c.bf16 %v756, %v755
      %s773 = scalar_lea.vmem %s1, 48
      %v774 = vld [vmem:[%s773] sm:$0xf]
      %v775 = vld [vmem:[%s773 + $0x4] sm:$0xf]
      %v776 = vld [vmem:[%s773 + $0x8] sm:$0xf]
      %v777 = vld [vmem:[%s773 + $0xc] sm:$0xf]
      %v778 = vld [vmem:[%s773 + $0x10] sm:$0xf]
      %v779 = vld [vmem:[%s773 + $0x14] sm:$0xf]
      %v786 = vunpack.c.l.b16 %v774
      %v787 = vunpack.c.l.b16 %v775
      %v788 = vunpack.c.l.b16 %v776
      %v789 = vunpack.c.l.b16 %v777
      %v790 = vunpack.c.l.b16 %v778
      %v791 = vunpack.c.l.b16 %v779
      %v792 = vpack.c.b16 %v787, %v786
      %v793 = vpack.c.b16 %v789, %v788
      %v794 = vpack.c.b16 %v791, %v790
      %v799 = vsel %vm333, %v757, 0
      %v802 = vsel %vm333, %v758, 0
      %v805 = vsel %vm333, %v759, 0
      %v808 = vsel %vm333, %v760, 0
      %v811 = vsel %vm333, %v761, 0
      %v814 = vsel %vm333, %v762, 0
      %v817 = vsel %vm333, %v763, 0
      %v820 = vsel %vm333, %v764, 0
      %v823 = vsel %vm333, %v765, 0
      %v826 = vsel %vm333, %v766, 0
      %v829 = vsel %vm333, %v767, 0
      %v832 = vsel %vm333, %v768, 0
      %v835 = vsel %vm333, %v769, 0
      %v838 = vsel %vm333, %v770, 0
      %v841 = vsel %vm333, %v771, 0
      %v844 = vsel %vm333, %v772, 0
      %846 = vmatprep.subr.bf16.mxu0 0
      %847 = vmatpush1.bf16.msra.mxu0 %v792
      %848 = vmatprep.subr.bf16.mxu0 0
      %849 = vmatpush1.bf16.msra.mxu0 %v793
      %850 = vmatprep.subr.bf16.mxu0 0
      %851 = vmatpush1.bf16.msra.mxu0 %v794
      %852 = vmatprep.subr.bf16.mxu0 0
      %853 = vmatpush1.bf16.msra.mxu0 0
      %854 = vmatprep.subr.bf16.mxu0 0
      %855 = vmatpush1.bf16.msra.mxu0 0
      %856 = vmatprep.subr.bf16.mxu0 0
      %857 = vmatpush1.bf16.msra.mxu0 0
      %858 = vmatprep.subr.bf16.mxu0 0
      %859 = vmatpush1.bf16.msra.mxu0 0
      %860 = vmatprep.subr.bf16.mxu0 0
      %861 = vmatpush1.bf16.msra.mxu0 0
      %862 = vmatprep.subr.bf16.mxu0 0
      %863 = vmatpush1.bf16.msra.mxu0 0
      %864 = vmatprep.subr.bf16.mxu0 0
      %865 = vmatpush1.bf16.msra.mxu0 0
      %866 = vmatprep.subr.bf16.mxu0 0
      %867 = vmatpush1.bf16.msra.mxu0 0
      %868 = vmatprep.subr.bf16.mxu0 0
      %869 = vmatpush1.bf16.msra.mxu0 0
      %870 = vmatprep.subr.bf16.mxu0 0
      %871 = vmatpush1.bf16.msra.mxu0 0
      %872 = vmatprep.subr.bf16.mxu0 0
      %873 = vmatpush1.bf16.msra.mxu0 0
      %874 = vmatprep.subr.bf16.mxu0 0
      %875 = vmatpush1.bf16.msra.mxu0 0
      %876 = vmatprep.subr.bf16.mxu0 0
      %877 = vmatpush1.bf16.msra.mxu0 0
      %878 = vmatprep.mubr.bf16.mxu0 0
      %879 = vmatmul.mubr.bf16.gmra.mrb[0].mxu0 %v799
      %v880 = vpop.f32.mrb[0].mxu0
      %v881 = vadd.f32 0.0, %v880
      %v882 = vpop.f32.mrb[0].mxu0
      %v883 = vpop.f32.mrb[0].mxu0
      %v884 = vadd.f32 0.0, %v883
      %v885 = vpop.f32.mrb[0].mxu0
      %886 = vmatprep.mubr.bf16.mxu0 0
      %887 = vmatmul.mubr.bf16.gmra.mrb[0].mxu0 %v802
      %v888 = vpop.f32.mrb[0].mxu0
      %v889 = vadd.f32 0.0, %v888
      %v890 = vpop.f32.mrb[0].mxu0
      %v891 = vpop.f32.mrb[0].mxu0
      %v892 = vadd.f32 0.0, %v891
      %v893 = vpop.f32.mrb[0].mxu0
      %894 = vmatprep.mubr.bf16.mxu0 0
      %895 = vmatmul.mubr.bf16.gmra.mrb[0].mxu0 %v805
      %v896 = vpop.f32.mrb[0].mxu0
      %v897 = vadd.f32 0.0, %v896
      %v898 = vpop.f32.mrb[0].mxu0
      %v899 = vpop.f32.mrb[0].mxu0
      %v900 = vadd.f32 0.0, %v899
      %v901 = vpop.f32.mrb[0].mxu0
      %902 = vmatprep.mubr.bf16.mxu0 0
      %903 = vmatmul.mubr.bf16.gmra.mrb[0].mxu0 %v808
      %v904 = vpop.f32.mrb[0].mxu0
      %v905 = vadd.f32 0.0, %v904
      %v906 = vpop.f32.mrb[0].mxu0
      %v907 = vpop.f32.mrb[0].mxu0
      %v908 = vadd.f32 0.0, %v907
      %v909 = vpop.f32.mrb[0].mxu0
      %910 = vmatprep.mubr.bf16.mxu0 0
      %911 = vmatmul.mubr.bf16.gmra.mrb[0].mxu0 %v811
      %v912 = vpop.f32.mrb[0].mxu0
      %v913 = vadd.f32 0.0, %v912
      %v914 = vpop.f32.mrb[0].mxu0
      %v915 = vpop.f32.mrb[0].mxu0
      %v916 = vadd.f32 0.0, %v915
      %v917 = vpop.f32.mrb[0].mxu0
      %918 = vmatprep.mubr.bf16.mxu0 0
      %919 = vmatmul.mubr.bf16.gmra.mrb[0].mxu0 %v814
      %v920 = vpop.f32.mrb[0].mxu0
      %v921 = vadd.f32 0.0, %v920
      %v922 = vpop.f32.mrb[0].mxu0
      %v923 = vpop.f32.mrb[0].mxu0
      %v924 = vadd.f32 0.0, %v923
      %v925 = vpop.f32.mrb[0].mxu0
      %926 = vmatprep.mubr.bf16.mxu0 0
      %927 = vmatmul.mubr.bf16.gmra.mrb[0].mxu0 %v817
      %v928 = vpop.f32.mrb[0].mxu0
      %v929 = vadd.f32 0.0, %v928
      %v930 = vpop.f32.mrb[0].mxu0
      %v931 = vpop.f32.mrb[0].mxu0
      %v932 = vadd.f32 0.0, %v931
      %v933 = vpop.f32.mrb[0].mxu0
      %934 = vmatprep.mubr.bf16.mxu0 0
      %935 = vmatmul.mubr.bf16.gmra.mrb[0].mxu0 %v820
      %v936 = vpop.f32.mrb[0].mxu0
      %v937 = vadd.f32 0.0, %v936
      %v938 = vpop.f32.mrb[0].mxu0
      %v939 = vpop.f32.mrb[0].mxu0
      %v940 = vadd.f32 0.0, %v939
      %v941 = vpop.f32.mrb[0].mxu0
      %942 = vmatprep.mubr.bf16.mxu0 0
      %943 = vmatmul.mubr.bf16.gmra.mrb[0].mxu0 %v823
      %v944 = vpop.f32.mrb[0].mxu0
      %v945 = vadd.f32 0.0, %v944
      %v946 = vpop.f32.mrb[0].mxu0
      %v947 = vpop.f32.mrb[0].mxu0
      %v948 = vadd.f32 0.0, %v947
      %v949 = vpop.f32.mrb[0].mxu0
      %950 = vmatprep.mubr.bf16.mxu0 0
      %951 = vmatmul.mubr.bf16.gmra.mrb[0].mxu0 %v826
      %v952 = vpop.f32.mrb[0].mxu0
      %v953 = vadd.f32 0.0, %v952
      %v954 = vpop.f32.mrb[0].mxu0
      %v955 = vpop.f32.mrb[0].mxu0
      %v956 = vadd.f32 0.0, %v955
      %v957 = vpop.f32.mrb[0].mxu0
      %958 = vmatprep.mubr.bf16.mxu0 0
      %959 = vmatmul.mubr.bf16.gmra.mrb[0].mxu0 %v829
      %v960 = vpop.f32.mrb[0].mxu0
      %v961 = vadd.f32 0.0, %v960
      %v962 = vpop.f32.mrb[0].mxu0
      %v963 = vpop.f32.mrb[0].mxu0
      %v964 = vadd.f32 0.0, %v963
      %v965 = vpop.f32.mrb[0].mxu0
      %966 = vmatprep.mubr.bf16.mxu0 0
      %967 = vmatmul.mubr.bf16.gmra.mrb[0].mxu0 %v832
      %v968 = vpop.f32.mrb[0].mxu0
      %v969 = vadd.f32 0.0, %v968
      %v970 = vpop.f32.mrb[0].mxu0
      %v971 = vpop.f32.mrb[0].mxu0
      %v972 = vadd.f32 0.0, %v971
      %v973 = vpop.f32.mrb[0].mxu0
      %974 = vmatprep.mubr.bf16.mxu0 0
      %975 = vmatmul.mubr.bf16.gmra.mrb[0].mxu0 %v835
      %v976 = vpop.f32.mrb[0].mxu0
      %v977 = vadd.f32 0.0, %v976
      %v978 = vpop.f32.mrb[0].mxu0
      %v979 = vpop.f32.mrb[0].mxu0
      %v980 = vadd.f32 0.0, %v979
      %v981 = vpop.f32.mrb[0].mxu0
      %982 = vmatprep.mubr.bf16.mxu0 0
      %983 = vmatmul.mubr.bf16.gmra.mrb[0].mxu0 %v838
      %v984 = vpop.f32.mrb[0].mxu0
      %v985 = vadd.f32 0.0, %v984
      %v986 = vpop.f32.mrb[0].mxu0
      %v987 = vpop.f32.mrb[0].mxu0
      %v988 = vadd.f32 0.0, %v987
      %v989 = vpop.f32.mrb[0].mxu0
      %990 = vmatprep.mubr.bf16.mxu0 0
      %991 = vmatmul.mubr.bf16.gmra.mrb[0].mxu0 %v841
      %v992 = vpop.f32.mrb[0].mxu0
      %v993 = vadd.f32 0.0, %v992
      %v994 = vpop.f32.mrb[0].mxu0
      %v995 = vpop.f32.mrb[0].mxu0
      %v996 = vadd.f32 0.0, %v995
      %v997 = vpop.f32.mrb[0].mxu0
      %998 = vmatprep.mubr.bf16.mxu0 0
      %999 = vmatmul.mubr.bf16.gmra.mrb[0].mxu0 %v844
      %v1000 = vpop.f32.mrb[0].mxu0
      %v1001 = vadd.f32 0.0, %v1000
      %v1002 = vpop.f32.mrb[0].mxu0
      %v1003 = vpop.f32.mrb[0].mxu0
      %v1004 = vadd.f32 0.0, %v1003
      %v1005 = vpop.f32.mrb[0].mxu0
      %1006 = vdwg.mxu0
      %v1007 = vadd.f32 %v599, %v881
      %v1008 = vadd.f32 %v602, %v884
      %v1009 = vadd.f32 %v607, %v889
      %v1010 = vadd.f32 %v610, %v892
      %v1011 = vadd.f32 %v615, %v897
      %v1012 = vadd.f32 %v618, %v900
      %v1013 = vadd.f32 %v623, %v905
      %v1014 = vadd.f32 %v626, %v908
      %v1015 = vadd.f32 %v631, %v913
      %v1016 = vadd.f32 %v634, %v916
      %v1017 = vadd.f32 %v639, %v921
      %v1018 = vadd.f32 %v642, %v924
      %v1019 = vadd.f32 %v647, %v929
      %v1020 = vadd.f32 %v650, %v932
      %v1021 = vadd.f32 %v655, %v937
      %v1022 = vadd.f32 %v658, %v940
      %v1023 = vadd.f32 %v663, %v945
      %v1024 = vadd.f32 %v666, %v948
      %v1025 = vadd.f32 %v671, %v953
      %v1026 = vadd.f32 %v674, %v956
      %v1027 = vadd.f32 %v679, %v961
      %v1028 = vadd.f32 %v682, %v964
      %v1029 = vadd.f32 %v687, %v969
      %v1030 = vadd.f32 %v690, %v972
      %v1031 = vadd.f32 %v695, %v977
      %v1032 = vadd.f32 %v698, %v980
      %v1033 = vadd.f32 %v703, %v985
      %v1034 = vadd.f32 %v706, %v988
      %v1035 = vadd.f32 %v711, %v993
      %v1036 = vadd.f32 %v714, %v996
      %v1037 = vadd.f32 %v719, %v1001
      %v1038 = vadd.f32 %v722, %v1004
      %v1039 = vld [vmem:[%s242] sm:$0xff]
      %v1040 = vld [vmem:[%s242 + $0x8] sm:$0xff]
      %v1041 = vld [vmem:[%s242 + $0x10] sm:$0xff]
      %v1042 = vld [vmem:[%s242 + $0x18] sm:$0xff]
      %v1043 = vld [vmem:[%s242 + $0x20] sm:$0xff]
      %v1044 = vld [vmem:[%s242 + $0x28] sm:$0xff]
      %v1045 = vld [vmem:[%s242 + $0x30] sm:$0xff]
      %v1046 = vld [vmem:[%s242 + $0x38] sm:$0xff]
      %v1047 = vld [vmem:[%s242 + $0x40] sm:$0xff]
      %v1048 = vld [vmem:[%s242 + $0x48] sm:$0xff]
      %v1049 = vld [vmem:[%s242 + $0x50] sm:$0xff]
      %v1050 = vld [vmem:[%s242 + $0x58] sm:$0xff]
      %v1051 = vld [vmem:[%s242 + $0x60] sm:$0xff]
      %v1052 = vld [vmem:[%s242 + $0x68] sm:$0xff]
      %v1053 = vld [vmem:[%s242 + $0x70] sm:$0xff]
      %v1054 = vld [vmem:[%s242 + $0x78] sm:$0xff]
      %v1055 = vld [vmem:[%s242 + $0x80] sm:$0xff]
      %v1056 = vld [vmem:[%s242 + $0x88] sm:$0xff]
      %v1057 = vld [vmem:[%s242 + $0x90] sm:$0xff]
      %v1058 = vld [vmem:[%s242 + $0x98] sm:$0xff]
      %v1059 = vld [vmem:[%s242 + $0xa0] sm:$0xff]
      %v1060 = vld [vmem:[%s242 + $0xa8] sm:$0xff]
      %v1061 = vld [vmem:[%s242 + $0xb0] sm:$0xff]
      %v1062 = vld [vmem:[%s242 + $0xb8] sm:$0xff]
      %v1063 = vld [vmem:[%s242 + $0xc0] sm:$0xff]
      %v1064 = vld [vmem:[%s242 + $0xc8] sm:$0xff]
      %v1065 = vld [vmem:[%s242 + $0xd0] sm:$0xff]
      %v1066 = vld [vmem:[%s242 + $0xd8] sm:$0xff]
      %v1067 = vld [vmem:[%s242 + $0xe0] sm:$0xff]
      %v1068 = vld [vmem:[%s242 + $0xe8] sm:$0xff]
      %v1069 = vld [vmem:[%s242 + $0xf0] sm:$0xff]
      %v1070 = vld [vmem:[%s242 + $0xf8] sm:$0xff]
      %v1071 = vpack.c.bf16 %v1040, %v1039
      %v1072 = vpack.c.bf16 %v1042, %v1041
      %v1073 = vpack.c.bf16 %v1044, %v1043
      %v1074 = vpack.c.bf16 %v1046, %v1045
      %v1075 = vpack.c.bf16 %v1048, %v1047
      %v1076 = vpack.c.bf16 %v1050, %v1049
      %v1077 = vpack.c.bf16 %v1052, %v1051
      %v1078 = vpack.c.bf16 %v1054, %v1053
      %v1079 = vpack.c.bf16 %v1056, %v1055
      %v1080 = vpack.c.bf16 %v1058, %v1057
      %v1081 = vpack.c.bf16 %v1060, %v1059
      %v1082 = vpack.c.bf16 %v1062, %v1061
      %v1083 = vpack.c.bf16 %v1064, %v1063
      %v1084 = vpack.c.bf16 %v1066, %v1065
      %v1085 = vpack.c.bf16 %v1068, %v1067
      %v1086 = vpack.c.bf16 %v1070, %v1069
      %v1087 = vld [vmem:[%s3] sm:$0xf]
      %v1088 = vld [vmem:[%s3 + $0x4] sm:$0xf]
      %v1089 = vld [vmem:[%s3 + $0x8] sm:$0xf]
      %v1093 = vunpack.c.l.b16 %v1087
      %v1094 = vunpack.c.l.b16 %v1088
      %v1095 = vunpack.c.l.b16 %v1089
      %v1096 = vpack.c.b16 %v1094, %v1093
      %v1097 = vpack.c.b16 %v1095, %v1095
      %vm1099 = vcmask 195584
      %v1101 = vsel %vm1099, %v1071, 0
      %v1104 = vsel %vm1099, %v1072, 0
      %v1107 = vsel %vm1099, %v1073, 0
      %v1110 = vsel %vm1099, %v1074, 0
      %v1113 = vsel %vm1099, %v1075, 0
      %v1116 = vsel %vm1099, %v1076, 0
      %v1119 = vsel %vm1099, %v1077, 0
      %v1122 = vsel %vm1099, %v1078, 0
      %v1125 = vsel %vm1099, %v1079, 0
      %v1128 = vsel %vm1099, %v1080, 0
      %v1131 = vsel %vm1099, %v1081, 0
      %v1134 = vsel %vm1099, %v1082, 0
      %v1137 = vsel %vm1099, %v1083, 0
      %v1140 = vsel %vm1099, %v1084, 0
      %v1143 = vsel %vm1099, %v1085, 0
      %v1146 = vsel %vm1099, %v1086, 0
      %vm1148 = vcmask 1043456
      %v1150 = vsel %vm1148, %v1097, 0
      %1152 = vmatprep.subr.bf16.mxu0 0
      %1153 = vmatpush1.bf16.msra.mxu0 %v1096
      %1154 = vmatprep.subr.bf16.mxu0 0
      %1155 = vmatpush1.bf16.msra.mxu0 %v1150
      %1156 = vmatprep.subr.bf16.mxu0 0
      %1157 = vmatpush1.bf16.msra.mxu0 0
      %1158 = vmatprep.subr.bf16.mxu0 0
      %1159 = vmatpush1.bf16.msra.mxu0 0
      %1160 = vmatprep.subr.bf16.mxu0 0
      %1161 = vmatpush1.bf16.msra.mxu0 0
      %1162 = vmatprep.subr.bf16.mxu0 0
      %1163 = vmatpush1.bf16.msra.mxu0 0
      %1164 = vmatprep.subr.bf16.mxu0 0
      %1165 = vmatpush1.bf16.msra.mxu0 0
      %1166 = vmatprep.subr.bf16.mxu0 0
      %1167 = vmatpush1.bf16.msra.mxu0 0
      %1168 = vmatprep.subr.bf16.mxu0 0
      %1169 = vmatpush1.bf16.msra.mxu0 0
      %1170 = vmatprep.subr.bf16.mxu0 0
      %1171 = vmatpush1.bf16.msra.mxu0 0
      %1172 = vmatprep.subr.bf16.mxu0 0
      %1173 = vmatpush1.bf16.msra.mxu0 0
      %1174 = vmatprep.subr.bf16.mxu0 0
      %1175 = vmatpush1.bf16.msra.mxu0 0
      %1176 = vmatprep.subr.bf16.mxu0 0
      %1177 = vmatpush1.bf16.msra.mxu0 0
      %1178 = vmatprep.subr.bf16.mxu0 0
      %1179 = vmatpush1.bf16.msra.mxu0 0
      %1180 = vmatprep.subr.bf16.mxu0 0
      %1181 = vmatpush1.bf16.msra.mxu0 0
      %1182 = vmatprep.subr.bf16.mxu0 0
      %1183 = vmatpush1.bf16.msra.mxu0 0
      %1184 = vmatprep.mubr.bf16.mxu0 0
      %1185 = vmatmul.mubr.bf16.gmra.mrb[0].mxu0 %v1101
      %v1186 = vpop.f32.mrb[0].mxu0
      %v1187 = vadd.f32 0.0, %v1186
      %v1188 = vpop.f32.mrb[0].mxu0
      %v1189 = vpop.f32.mrb[0].mxu0
      %v1190 = vadd.f32 0.0, %v1189
      %v1191 = vpop.f32.mrb[0].mxu0
      %1192 = vmatprep.mubr.bf16.mxu0 0
      %1193 = vmatmul.mubr.bf16.gmra.mrb[0].mxu0 %v1104
      %v1194 = vpop.f32.mrb[0].mxu0
      %v1195 = vadd.f32 0.0, %v1194
      %v1196 = vpop.f32.mrb[0].mxu0
      %v1197 = vpop.f32.mrb[0].mxu0
      %v1198 = vadd.f32 0.0, %v1197
      %v1199 = vpop.f32.mrb[0].mxu0
      %1200 = vmatprep.mubr.bf16.mxu0 0
      %1201 = vmatmul.mubr.bf16.gmra.mrb[0].mxu0 %v1107
      %v1202 = vpop.f32.mrb[0].mxu0
      %v1203 = vadd.f32 0.0, %v1202
      %v1204 = vpop.f32.mrb[0].mxu0
      %v1205 = vpop.f32.mrb[0].mxu0
      %v1206 = vadd.f32 0.0, %v1205
      %v1207 = vpop.f32.mrb[0].mxu0
      %1208 = vmatprep.mubr.bf16.mxu0 0
      %1209 = vmatmul.mubr.bf16.gmra.mrb[0].mxu0 %v1110
      %v1210 = vpop.f32.mrb[0].mxu0
      %v1211 = vadd.f32 0.0, %v1210
      %v1212 = vpop.f32.mrb[0].mxu0
      %v1213 = vpop.f32.mrb[0].mxu0
      %v1214 = vadd.f32 0.0, %v1213
      %v1215 = vpop.f32.mrb[0].mxu0
      %1216 = vmatprep.mubr.bf16.mxu0 0
      %1217 = vmatmul.mubr.bf16.gmra.mrb[0].mxu0 %v1113
      %v1218 = vpop.f32.mrb[0].mxu0
      %v1219 = vadd.f32 0.0, %v1218
      %v1220 = vpop.f32.mrb[0].mxu0
      %v1221 = vpop.f32.mrb[0].mxu0
      %v1222 = vadd.f32 0.0, %v1221
      %v1223 = vpop.f32.mrb[0].mxu0
      %1224 = vmatprep.mubr.bf16.mxu0 0
      %1225 = vmatmul.mubr.bf16.gmra.mrb[0].mxu0 %v1116
      %v1226 = vpop.f32.mrb[0].mxu0
      %v1227 = vadd.f32 0.0, %v1226
      %v1228 = vpop.f32.mrb[0].mxu0
      %v1229 = vpop.f32.mrb[0].mxu0
      %v1230 = vadd.f32 0.0, %v1229
      %v1231 = vpop.f32.mrb[0].mxu0
      %1232 = vmatprep.mubr.bf16.mxu0 0
      %1233 = vmatmul.mubr.bf16.gmra.mrb[0].mxu0 %v1119
      %v1234 = vpop.f32.mrb[0].mxu0
      %v1235 = vadd.f32 0.0, %v1234
      %v1236 = vpop.f32.mrb[0].mxu0
      %v1237 = vpop.f32.mrb[0].mxu0
      %v1238 = vadd.f32 0.0, %v1237
      %v1239 = vpop.f32.mrb[0].mxu0
      %1240 = vmatprep.mubr.bf16.mxu0 0
      %1241 = vmatmul.mubr.bf16.gmra.mrb[0].mxu0 %v1122
      %v1242 = vpop.f32.mrb[0].mxu0
      %v1243 = vadd.f32 0.0, %v1242
      %v1244 = vpop.f32.mrb[0].mxu0
      %v1245 = vpop.f32.mrb[0].mxu0
      %v1246 = vadd.f32 0.0, %v1245
      %v1247 = vpop.f32.mrb[0].mxu0
      %1248 = vmatprep.mubr.bf16.mxu0 0
      %1249 = vmatmul.mubr.bf16.gmra.mrb[0].mxu0 %v1125
      %v1250 = vpop.f32.mrb[0].mxu0
      %v1251 = vadd.f32 0.0, %v1250
      %v1252 = vpop.f32.mrb[0].mxu0
      %v1253 = vpop.f32.mrb[0].mxu0
      %v1254 = vadd.f32 0.0, %v1253
      %v1255 = vpop.f32.mrb[0].mxu0
      %1256 = vmatprep.mubr.bf16.mxu0 0
      %1257 = vmatmul.mubr.bf16.gmra.mrb[0].mxu0 %v1128
      %v1258 = vpop.f32.mrb[0].mxu0
      %v1259 = vadd.f32 0.0, %v1258
      %v1260 = vpop.f32.mrb[0].mxu0
      %v1261 = vpop.f32.mrb[0].mxu0
      %v1262 = vadd.f32 0.0, %v1261
      %v1263 = vpop.f32.mrb[0].mxu0
      %1264 = vmatprep.mubr.bf16.mxu0 0
      %1265 = vmatmul.mubr.bf16.gmra.mrb[0].mxu0 %v1131
      %v1266 = vpop.f32.mrb[0].mxu0
      %v1267 = vadd.f32 0.0, %v1266
      %v1268 = vpop.f32.mrb[0].mxu0
      %v1269 = vpop.f32.mrb[0].mxu0
      %v1270 = vadd.f32 0.0, %v1269
      %v1271 = vpop.f32.mrb[0].mxu0
      %1272 = vmatprep.mubr.bf16.mxu0 0
      %1273 = vmatmul.mubr.bf16.gmra.mrb[0].mxu0 %v1134
      %v1274 = vpop.f32.mrb[0].mxu0
      %v1275 = vadd.f32 0.0, %v1274
      %v1276 = vpop.f32.mrb[0].mxu0
      %v1277 = vpop.f32.mrb[0].mxu0
      %v1278 = vadd.f32 0.0, %v1277
      %v1279 = vpop.f32.mrb[0].mxu0
      %1280 = vmatprep.mubr.bf16.mxu0 0
      %1281 = vmatmul.mubr.bf16.gmra.mrb[0].mxu0 %v1137
      %v1282 = vpop.f32.mrb[0].mxu0
      %v1283 = vadd.f32 0.0, %v1282
      %v1284 = vpop.f32.mrb[0].mxu0
      %v1285 = vpop.f32.mrb[0].mxu0
      %v1286 = vadd.f32 0.0, %v1285
      %v1287 = vpop.f32.mrb[0].mxu0
      %1288 = vmatprep.mubr.bf16.mxu0 0
      %1289 = vmatmul.mubr.bf16.gmra.mrb[0].mxu0 %v1140
      %v1290 = vpop.f32.mrb[0].mxu0
      %v1291 = vadd.f32 0.0, %v1290
      %v1292 = vpop.f32.mrb[0].mxu0
      %v1293 = vpop.f32.mrb[0].mxu0
      %v1294 = vadd.f32 0.0, %v1293
      %v1295 = vpop.f32.mrb[0].mxu0
      %1296 = vmatprep.mubr.bf16.mxu0 0
      %1297 = vmatmul.mubr.bf16.gmra.mrb[0].mxu0 %v1143
      %v1298 = vpop.f32.mrb[0].mxu0
      %v1299 = vadd.f32 0.0, %v1298
      %v1300 = vpop.f32.mrb[0].mxu0
      %v1301 = vpop.f32.mrb[0].mxu0
      %v1302 = vadd.f32 0.0, %v1301
      %v1303 = vpop.f32.mrb[0].mxu0
      %1304 = vmatprep.mubr.bf16.mxu0 0
      %1305 = vmatmul.mubr.bf16.gmra.mrb[0].mxu0 %v1146
      %v1306 = vpop.f32.mrb[0].mxu0
      %v1307 = vadd.f32 0.0, %v1306
      %v1308 = vpop.f32.mrb[0].mxu0
      %v1309 = vpop.f32.mrb[0].mxu0
      %v1310 = vadd.f32 0.0, %v1309
      %v1311 = vpop.f32.mrb[0].mxu0
      %1312 = vdwg.mxu0
      %v1313 = vadd.f32 %v1007, %v1187
      %v1314 = vadd.f32 %v1008, %v1190
      %v1315 = vadd.f32 %v1009, %v1195
      %v1316 = vadd.f32 %v1010, %v1198
      %v1317 = vadd.f32 %v1011, %v1203
      %v1318 = vadd.f32 %v1012, %v1206
      %v1319 = vadd.f32 %v1013, %v1211
      %v1320 = vadd.f32 %v1014, %v1214
      %v1321 = vadd.f32 %v1015, %v1219
      %v1322 = vadd.f32 %v1016, %v1222
      %v1323 = vadd.f32 %v1017, %v1227
      %v1324 = vadd.f32 %v1018, %v1230
      %v1325 = vadd.f32 %v1019, %v1235
      %v1326 = vadd.f32 %v1020, %v1238
      %v1327 = vadd.f32 %v1021, %v1243
      %v1328 = vadd.f32 %v1022, %v1246
      %v1329 = vadd.f32 %v1023, %v1251
      %v1330 = vadd.f32 %v1024, %v1254
      %v1331 = vadd.f32 %v1025, %v1259
      %v1332 = vadd.f32 %v1026, %v1262
      %v1333 = vadd.f32 %v1027, %v1267
      %v1334 = vadd.f32 %v1028, %v1270
      %v1335 = vadd.f32 %v1029, %v1275
      %v1336 = vadd.f32 %v1030, %v1278
      %v1337 = vadd.f32 %v1031, %v1283
      %v1338 = vadd.f32 %v1032, %v1286
      %v1339 = vadd.f32 %v1033, %v1291
      %v1340 = vadd.f32 %v1034, %v1294
      %v1341 = vadd.f32 %v1035, %v1299
      %v1342 = vadd.f32 %v1036, %v1302
      %v1343 = vadd.f32 %v1037, %v1307
      %v1344 = vadd.f32 %v1038, %v1310
      %v1345 = vld [vmem:[%s242 + $0x10] sm:$0xff]
      %v1346 = vld [vmem:[%s242 + $0x18] sm:$0xff]
      %v1347 = vld [vmem:[%s242 + $0x20] sm:$0xff]
      %v1348 = vld [vmem:[%s242 + $0x28] sm:$0xff]
      %v1349 = vld [vmem:[%s242 + $0x30] sm:$0xff]
      %v1350 = vld [vmem:[%s242 + $0x38] sm:$0xff]
      %v1351 = vld [vmem:[%s242 + $0x40] sm:$0xff]
      %v1352 = vld [vmem:[%s242 + $0x48] sm:$0xff]
      %v1353 = vld [vmem:[%s242 + $0x50] sm:$0xff]
      %v1354 = vld [vmem:[%s242 + $0x58] sm:$0xff]
      %v1355 = vld [vmem:[%s242 + $0x60] sm:$0xff]
      %v1356 = vld [vmem:[%s242 + $0x68] sm:$0xff]
      %v1357 = vld [vmem:[%s242 + $0x70] sm:$0xff]
      %v1358 = vld [vmem:[%s242 + $0x78] sm:$0xff]
      %v1359 = vld [vmem:[%s242 + $0x80] sm:$0xff]
      %v1360 = vld [vmem:[%s242 + $0x88] sm:$0xff]
      %v1361 = vld [vmem:[%s242 + $0x90] sm:$0xff]
      %v1362 = vld [vmem:[%s242 + $0x98] sm:$0xff]
      %v1363 = vld [vmem:[%s242 + $0xa0] sm:$0xff]
      %v1364 = vld [vmem:[%s242 + $0xa8] sm:$0xff]
      %v1365 = vld [vmem:[%s242 + $0xb0] sm:$0xff]
      %v1366 = vld [vmem:[%s242 + $0xb8] sm:$0xff]
      %v1367 = vld [vmem:[%s242 + $0xc0] sm:$0xff]
      %v1368 = vld [vmem:[%s242 + $0xc8] sm:$0xff]
      %v1369 = vld [vmem:[%s242 + $0xd0] sm:$0xff]
      %v1370 = vld [vmem:[%s242 + $0xd8] sm:$0xff]
      %v1371 = vld [vmem:[%s242 + $0xe0] sm:$0xff]
      %v1372 = vld [vmem:[%s242 + $0xe8] sm:$0xff]
      %v1373 = vld [vmem:[%s242 + $0xf0] sm:$0xff]
      %v1374 = vld [vmem:[%s242 + $0xf8] sm:$0xff]
      %v1375 = vld [vmem:[%s242 + $0x100] sm:$0xff]
      %v1376 = vld [vmem:[%s242 + $0x108] sm:$0xff]
      %v1377 = vpack.c.bf16 %v1346, %v1345
      %v1378 = vpack.c.bf16 %v1348, %v1347
      %v1379 = vpack.c.bf16 %v1350, %v1349
      %v1380 = vpack.c.bf16 %v1352, %v1351
      %v1381 = vpack.c.bf16 %v1354, %v1353
      %v1382 = vpack.c.bf16 %v1356, %v1355
      %v1383 = vpack.c.bf16 %v1358, %v1357
      %v1384 = vpack.c.bf16 %v1360, %v1359
      %v1385 = vpack.c.bf16 %v1362, %v1361
      %v1386 = vpack.c.bf16 %v1364, %v1363
      %v1387 = vpack.c.bf16 %v1366, %v1365
      %v1388 = vpack.c.bf16 %v1368, %v1367
      %v1389 = vpack.c.bf16 %v1370, %v1369
      %v1390 = vpack.c.bf16 %v1372, %v1371
      %v1391 = vpack.c.bf16 %v1374, %v1373
      %v1392 = vpack.c.bf16 %v1376, %v1375
      %s1393 = scalar_lea.vmem %s3, 12
      %v1394 = vld [vmem:[%s1393] sm:$0xf]
      %v1395 = vld [vmem:[%s1393 + $0x4] sm:$0xf]
      %v1396 = vld [vmem:[%s1393 + $0x8] sm:$0xf]
      %v1400 = vunpack.c.l.b16 %v1394
      %v1401 = vunpack.c.l.b16 %v1395
      %v1402 = vunpack.c.l.b16 %v1396
      %v1403 = vpack.c.b16 %v1401, %v1400
      %v1404 = vpack.c.b16 %v1402, %v1402
      %v1407 = vsel %vm1099, %v1377, 0
      %v1410 = vsel %vm1099, %v1378, 0
      %v1413 = vsel %vm1099, %v1379, 0
      %v1416 = vsel %vm1099, %v1380, 0
      %v1419 = vsel %vm1099, %v1381, 0
      %v1422 = vsel %vm1099, %v1382, 0
      %v1425 = vsel %vm1099, %v1383, 0
      %v1428 = vsel %vm1099, %v1384, 0
      %v1431 = vsel %vm1099, %v1385, 0
      %v1434 = vsel %vm1099, %v1386, 0
      %v1437 = vsel %vm1099, %v1387, 0
      %v1440 = vsel %vm1099, %v1388, 0
      %v1443 = vsel %vm1099, %v1389, 0
      %v1446 = vsel %vm1099, %v1390, 0
      %v1449 = vsel %vm1099, %v1391, 0
      %v1452 = vsel %vm1099, %v1392, 0
      %v1455 = vsel %vm1148, %v1404, 0
      %1457 = vmatprep.subr.bf16.mxu0 0
      %1458 = vmatpush1.bf16.msra.mxu0 %v1403
      %1459 = vmatprep.subr.bf16.mxu0 0
      %1460 = vmatpush1.bf16.msra.mxu0 %v1455
      %1461 = vmatprep.subr.bf16.mxu0 0
      %1462 = vmatpush1.bf16.msra.mxu0 0
      %1463 = vmatprep.subr.bf16.mxu0 0
      %1464 = vmatpush1.bf16.msra.mxu0 0
      %1465 = vmatprep.subr.bf16.mxu0 0
      %1466 = vmatpush1.bf16.msra.mxu0 0
      %1467 = vmatprep.subr.bf16.mxu0 0
      %1468 = vmatpush1.bf16.msra.mxu0 0
      %1469 = vmatprep.subr.bf16.mxu0 0
      %1470 = vmatpush1.bf16.msra.mxu0 0
      %1471 = vmatprep.subr.bf16.mxu0 0
      %1472 = vmatpush1.bf16.msra.mxu0 0
      %1473 = vmatprep.subr.bf16.mxu0 0
      %1474 = vmatpush1.bf16.msra.mxu0 0
      %1475 = vmatprep.subr.bf16.mxu0 0
      %1476 = vmatpush1.bf16.msra.mxu0 0
      %1477 = vmatprep.subr.bf16.mxu0 0
      %1478 = vmatpush1.bf16.msra.mxu0 0
      %1479 = vmatprep.subr.bf16.mxu0 0
      %1480 = vmatpush1.bf16.msra.mxu0 0
      %1481 = vmatprep.subr.bf16.mxu0 0
      %1482 = vmatpush1.bf16.msra.mxu0 0
      %1483 = vmatprep.subr.bf16.mxu0 0
      %1484 = vmatpush1.bf16.msra.mxu0 0
      %1485 = vmatprep.subr.bf16.mxu0 0
      %1486 = vmatpush1.bf16.msra.mxu0 0
      %1487 = vmatprep.subr.bf16.mxu0 0
      %1488 = vmatpush1.bf16.msra.mxu0 0
      %1489 = vmatprep.mubr.bf16.mxu0 0
      %1490 = vmatmul.mubr.bf16.gmra.mrb[0].mxu0 %v1407
      %v1491 = vpop.f32.mrb[0].mxu0
      %v1492 = vadd.f32 0.0, %v1491
      %v1493 = vpop.f32.mrb[0].mxu0
      %v1494 = vpop.f32.mrb[0].mxu0
      %v1495 = vadd.f32 0.0, %v1494
      %v1496 = vpop.f32.mrb[0].mxu0
      %1497 = vmatprep.mubr.bf16.mxu0 0
      %1498 = vmatmul.mubr.bf16.gmra.mrb[0].mxu0 %v1410
      %v1499 = vpop.f32.mrb[0].mxu0
      %v1500 = vadd.f32 0.0, %v1499
      %v1501 = vpop.f32.mrb[0].mxu0
      %v1502 = vpop.f32.mrb[0].mxu0
      %v1503 = vadd.f32 0.0, %v1502
      %v1504 = vpop.f32.mrb[0].mxu0
      %1505 = vmatprep.mubr.bf16.mxu0 0
      %1506 = vmatmul.mubr.bf16.gmra.mrb[0].mxu0 %v1413
      %v1507 = vpop.f32.mrb[0].mxu0
      %v1508 = vadd.f32 0.0, %v1507
      %v1509 = vpop.f32.mrb[0].mxu0
      %v1510 = vpop.f32.mrb[0].mxu0
      %v1511 = vadd.f32 0.0, %v1510
      %v1512 = vpop.f32.mrb[0].mxu0
      %1513 = vmatprep.mubr.bf16.mxu0 0
      %1514 = vmatmul.mubr.bf16.gmra.mrb[0].mxu0 %v1416
      %v1515 = vpop.f32.mrb[0].mxu0
      %v1516 = vadd.f32 0.0, %v1515
      %v1517 = vpop.f32.mrb[0].mxu0
      %v1518 = vpop.f32.mrb[0].mxu0
      %v1519 = vadd.f32 0.0, %v1518
      %v1520 = vpop.f32.mrb[0].mxu0
      %1521 = vmatprep.mubr.bf16.mxu0 0
      %1522 = vmatmul.mubr.bf16.gmra.mrb[0].mxu0 %v1419
      %v1523 = vpop.f32.mrb[0].mxu0
      %v1524 = vadd.f32 0.0, %v1523
      %v1525 = vpop.f32.mrb[0].mxu0
      %v1526 = vpop.f32.mrb[0].mxu0
      %v1527 = vadd.f32 0.0, %v1526
      %v1528 = vpop.f32.mrb[0].mxu0
      %1529 = vmatprep.mubr.bf16.mxu0 0
      %1530 = vmatmul.mubr.bf16.gmra.mrb[0].mxu0 %v1422
      %v1531 = vpop.f32.mrb[0].mxu0
      %v1532 = vadd.f32 0.0, %v1531
      %v1533 = vpop.f32.mrb[0].mxu0
      %v1534 = vpop.f32.mrb[0].mxu0
      %v1535 = vadd.f32 0.0, %v1534
      %v1536 = vpop.f32.mrb[0].mxu0
      %1537 = vmatprep.mubr.bf16.mxu0 0
      %1538 = vmatmul.mubr.bf16.gmra.mrb[0].mxu0 %v1425
      %v1539 = vpop.f32.mrb[0].mxu0
      %v1540 = vadd.f32 0.0, %v1539
      %v1541 = vpop.f32.mrb[0].mxu0
      %v1542 = vpop.f32.mrb[0].mxu0
      %v1543 = vadd.f32 0.0, %v1542
      %v1544 = vpop.f32.mrb[0].mxu0
      %1545 = vmatprep.mubr.bf16.mxu0 0
      %1546 = vmatmul.mubr.bf16.gmra.mrb[0].mxu0 %v1428
      %v1547 = vpop.f32.mrb[0].mxu0
      %v1548 = vadd.f32 0.0, %v1547
      %v1549 = vpop.f32.mrb[0].mxu0
      %v1550 = vpop.f32.mrb[0].mxu0
      %v1551 = vadd.f32 0.0, %v1550
      %v1552 = vpop.f32.mrb[0].mxu0
      %1553 = vmatprep.mubr.bf16.mxu0 0
      %1554 = vmatmul.mubr.bf16.gmra.mrb[0].mxu0 %v1431
      %v1555 = vpop.f32.mrb[0].mxu0
      %v1556 = vadd.f32 0.0, %v1555
      %v1557 = vpop.f32.mrb[0].mxu0
      %v1558 = vpop.f32.mrb[0].mxu0
      %v1559 = vadd.f32 0.0, %v1558
      %v1560 = vpop.f32.mrb[0].mxu0
      %1561 = vmatprep.mubr.bf16.mxu0 0
      %1562 = vmatmul.mubr.bf16.gmra.mrb[0].mxu0 %v1434
      %v1563 = vpop.f32.mrb[0].mxu0
      %v1564 = vadd.f32 0.0, %v1563
      %v1565 = vpop.f32.mrb[0].mxu0
      %v1566 = vpop.f32.mrb[0].mxu0
      %v1567 = vadd.f32 0.0, %v1566
      %v1568 = vpop.f32.mrb[0].mxu0
      %1569 = vmatprep.mubr.bf16.mxu0 0
      %1570 = vmatmul.mubr.bf16.gmra.mrb[0].mxu0 %v1437
      %v1571 = vpop.f32.mrb[0].mxu0
      %v1572 = vadd.f32 0.0, %v1571
      %v1573 = vpop.f32.mrb[0].mxu0
      %v1574 = vpop.f32.mrb[0].mxu0
      %v1575 = vadd.f32 0.0, %v1574
      %v1576 = vpop.f32.mrb[0].mxu0
      %1577 = vmatprep.mubr.bf16.mxu0 0
      %1578 = vmatmul.mubr.bf16.gmra.mrb[0].mxu0 %v1440
      %v1579 = vpop.f32.mrb[0].mxu0
      %v1580 = vadd.f32 0.0, %v1579
      %v1581 = vpop.f32.mrb[0].mxu0
      %v1582 = vpop.f32.mrb[0].mxu0
      %v1583 = vadd.f32 0.0, %v1582
      %v1584 = vpop.f32.mrb[0].mxu0
      %1585 = vmatprep.mubr.bf16.mxu0 0
      %1586 = vmatmul.mubr.bf16.gmra.mrb[0].mxu0 %v1443
      %v1587 = vpop.f32.mrb[0].mxu0
      %v1588 = vadd.f32 0.0, %v1587
      %v1589 = vpop.f32.mrb[0].mxu0
      %v1590 = vpop.f32.mrb[0].mxu0
      %v1591 = vadd.f32 0.0, %v1590
      %v1592 = vpop.f32.mrb[0].mxu0
      %1593 = vmatprep.mubr.bf16.mxu0 0
      %1594 = vmatmul.mubr.bf16.gmra.mrb[0].mxu0 %v1446
      %v1595 = vpop.f32.mrb[0].mxu0
      %v1596 = vadd.f32 0.0, %v1595
      %v1597 = vpop.f32.mrb[0].mxu0
      %v1598 = vpop.f32.mrb[0].mxu0
      %v1599 = vadd.f32 0.0, %v1598
      %v1600 = vpop.f32.mrb[0].mxu0
      %1601 = vmatprep.mubr.bf16.mxu0 0
      %1602 = vmatmul.mubr.bf16.gmra.mrb[0].mxu0 %v1449
      %v1603 = vpop.f32.mrb[0].mxu0
      %v1604 = vadd.f32 0.0, %v1603
      %v1605 = vpop.f32.mrb[0].mxu0
      %v1606 = vpop.f32.mrb[0].mxu0
      %v1607 = vadd.f32 0.0, %v1606
      %v1608 = vpop.f32.mrb[0].mxu0
      %1609 = vmatprep.mubr.bf16.mxu0 0
      %1610 = vmatmul.mubr.bf16.gmra.mrb[0].mxu0 %v1452
      %v1611 = vpop.f32.mrb[0].mxu0
      %v1612 = vadd.f32 0.0, %v1611
      %v1613 = vpop.f32.mrb[0].mxu0
      %v1614 = vpop.f32.mrb[0].mxu0
      %v1615 = vadd.f32 0.0, %v1614
      %v1616 = vpop.f32.mrb[0].mxu0
      %1617 = vdwg.mxu0
      %v1618 = vadd.f32 %v1313, %v1492
      %v1619 = vadd.f32 %v1314, %v1495
      %v1620 = vadd.f32 %v1315, %v1500
      %v1621 = vadd.f32 %v1316, %v1503
      %v1622 = vadd.f32 %v1317, %v1508
      %v1623 = vadd.f32 %v1318, %v1511
      %v1624 = vadd.f32 %v1319, %v1516
      %v1625 = vadd.f32 %v1320, %v1519
      %v1626 = vadd.f32 %v1321, %v1524
      %v1627 = vadd.f32 %v1322, %v1527
      %v1628 = vadd.f32 %v1323, %v1532
      %v1629 = vadd.f32 %v1324, %v1535
      %v1630 = vadd.f32 %v1325, %v1540
      %v1631 = vadd.f32 %v1326, %v1543
      %v1632 = vadd.f32 %v1327, %v1548
      %v1633 = vadd.f32 %v1328, %v1551
      %v1634 = vadd.f32 %v1329, %v1556
      %v1635 = vadd.f32 %v1330, %v1559
      %v1636 = vadd.f32 %v1331, %v1564
      %v1637 = vadd.f32 %v1332, %v1567
      %v1638 = vadd.f32 %v1333, %v1572
      %v1639 = vadd.f32 %v1334, %v1575
      %v1640 = vadd.f32 %v1335, %v1580
      %v1641 = vadd.f32 %v1336, %v1583
      %v1642 = vadd.f32 %v1337, %v1588
      %v1643 = vadd.f32 %v1338, %v1591
      %v1644 = vadd.f32 %v1339, %v1596
      %v1645 = vadd.f32 %v1340, %v1599
      %v1646 = vadd.f32 %v1341, %v1604
      %v1647 = vadd.f32 %v1342, %v1607
      %v1648 = vadd.f32 %v1343, %v1612
      %v1649 = vadd.f32 %v1344, %v1615
      %v1650 = vld [vmem:[%s242 + $0x20] sm:$0xff]
      %v1651 = vld [vmem:[%s242 + $0x28] sm:$0xff]
      %v1652 = vld [vmem:[%s242 + $0x30] sm:$0xff]
      %v1653 = vld [vmem:[%s242 + $0x38] sm:$0xff]
      %v1654 = vld [vmem:[%s242 + $0x40] sm:$0xff]
      %v1655 = vld [vmem:[%s242 + $0x48] sm:$0xff]
      %v1656 = vld [vmem:[%s242 + $0x50] sm:$0xff]
      %v1657 = vld [vmem:[%s242 + $0x58] sm:$0xff]
      %v1658 = vld [vmem:[%s242 + $0x60] sm:$0xff]
      %v1659 = vld [vmem:[%s242 + $0x68] sm:$0xff]
      %v1660 = vld [vmem:[%s242 + $0x70] sm:$0xff]
      %v1661 = vld [vmem:[%s242 + $0x78] sm:$0xff]
      %v1662 = vld [vmem:[%s242 + $0x80] sm:$0xff]
      %v1663 = vld [vmem:[%s242 + $0x88] sm:$0xff]
      %v1664 = vld [vmem:[%s242 + $0x90] sm:$0xff]
      %v1665 = vld [vmem:[%s242 + $0x98] sm:$0xff]
      %v1666 = vld [vmem:[%s242 + $0xa0] sm:$0xff]
      %v1667 = vld [vmem:[%s242 + $0xa8] sm:$0xff]
      %v1668 = vld [vmem:[%s242 + $0xb0] sm:$0xff]
      %v1669 = vld [vmem:[%s242 + $0xb8] sm:$0xff]
      %v1670 = vld [vmem:[%s242 + $0xc0] sm:$0xff]
      %v1671 = vld [vmem:[%s242 + $0xc8] sm:$0xff]
      %v1672 = vld [vmem:[%s242 + $0xd0] sm:$0xff]
      %v1673 = vld [vmem:[%s242 + $0xd8] sm:$0xff]
      %v1674 = vld [vmem:[%s242 + $0xe0] sm:$0xff]
      %v1675 = vld [vmem:[%s242 + $0xe8] sm:$0xff]
      %v1676 = vld [vmem:[%s242 + $0xf0] sm:$0xff]
      %v1677 = vld [vmem:[%s242 + $0xf8] sm:$0xff]
      %v1678 = vld [vmem:[%s242 + $0x100] sm:$0xff]
      %v1679 = vld [vmem:[%s242 + $0x108] sm:$0xff]
      %v1680 = vld [vmem:[%s242 + $0x110] sm:$0xff]
      %v1681 = vld [vmem:[%s242 + $0x118] sm:$0xff]
      %v1682 = vpack.c.bf16 %v1651, %v1650
      %v1683 = vpack.c.bf16 %v1653, %v1652
      %v1684 = vpack.c.bf16 %v1655, %v1654
      %v1685 = vpack.c.bf16 %v1657, %v1656
      %v1686 = vpack.c.bf16 %v1659, %v1658
      %v1687 = vpack.c.bf16 %v1661, %v1660
      %v1688 = vpack.c.bf16 %v1663, %v1662
      %v1689 = vpack.c.bf16 %v1665, %v1664
      %v1690 = vpack.c.bf16 %v1667, %v1666
      %v1691 = vpack.c.bf16 %v1669, %v1668
      %v1692 = vpack.c.bf16 %v1671, %v1670
      %v1693 = vpack.c.bf16 %v1673, %v1672
      %v1694 = vpack.c.bf16 %v1675, %v1674
      %v1695 = vpack.c.bf16 %v1677, %v1676
      %v1696 = vpack.c.bf16 %v1679, %v1678
      %v1697 = vpack.c.bf16 %v1681, %v1680
      %s1698 = scalar_lea.vmem %s3, 24
      %v1699 = vld [vmem:[%s1698] sm:$0xf]
      %v1700 = vld [vmem:[%s1698 + $0x4] sm:$0xf]
      %v1701 = vld [vmem:[%s1698 + $0x8] sm:$0xf]
      %v1705 = vunpack.c.l.b16 %v1699
      %v1706 = vunpack.c.l.b16 %v1700
      %v1707 = vunpack.c.l.b16 %v1701
      %v1708 = vpack.c.b16 %v1706, %v1705
      %v1709 = vpack.c.b16 %v1707, %v1707
      %v1712 = vsel %vm1099, %v1682, 0
      %v1715 = vsel %vm1099, %v1683, 0
      %v1718 = vsel %vm1099, %v1684, 0
      %v1721 = vsel %vm1099, %v1685, 0
      %v1724 = vsel %vm1099, %v1686, 0
      %v1727 = vsel %vm1099, %v1687, 0
      %v1730 = vsel %vm1099, %v1688, 0
      %v1733 = vsel %vm1099, %v1689, 0
      %v1736 = vsel %vm1099, %v1690, 0
      %v1739 = vsel %vm1099, %v1691, 0
      %v1742 = vsel %vm1099, %v1692, 0
      %v1745 = vsel %vm1099, %v1693, 0
      %v1748 = vsel %vm1099, %v1694, 0
      %v1751 = vsel %vm1099, %v1695, 0
      %v1754 = vsel %vm1099, %v1696, 0
      %v1757 = vsel %vm1099, %v1697, 0
      %v1760 = vsel %vm1148, %v1709, 0
      %1762 = vmatprep.subr.bf16.mxu0 0
      %1763 = vmatpush1.bf16.msra.mxu0 %v1708
      %1764 = vmatprep.subr.bf16.mxu0 0
      %1765 = vmatpush1.bf16.msra.mxu0 %v1760
      %1766 = vmatprep.subr.bf16.mxu0 0
      %1767 = vmatpush1.bf16.msra.mxu0 0
      %1768 = vmatprep.subr.bf16.mxu0 0
      %1769 = vmatpush1.bf16.msra.mxu0 0
      %1770 = vmatprep.subr.bf16.mxu0 0
      %1771 = vmatpush1.bf16.msra.mxu0 0
      %1772 = vmatprep.subr.bf16.mxu0 0
      %1773 = vmatpush1.bf16.msra.mxu0 0
      %1774 = vmatprep.subr.bf16.mxu0 0
      %1775 = vmatpush1.bf16.msra.mxu0 0
      %1776 = vmatprep.subr.bf16.mxu0 0
      %1777 = vmatpush1.bf16.msra.mxu0 0
      %1778 = vmatprep.subr.bf16.mxu0 0
      %1779 = vmatpush1.bf16.msra.mxu0 0
      %1780 = vmatprep.subr.bf16.mxu0 0
      %1781 = vmatpush1.bf16.msra.mxu0 0
      %1782 = vmatprep.subr.bf16.mxu0 0
      %1783 = vmatpush1.bf16.msra.mxu0 0
      %1784 = vmatprep.subr.bf16.mxu0 0
      %1785 = vmatpush1.bf16.msra.mxu0 0
      %1786 = vmatprep.subr.bf16.mxu0 0
      %1787 = vmatpush1.bf16.msra.mxu0 0
      %1788 = vmatprep.subr.bf16.mxu0 0
      %1789 = vmatpush1.bf16.msra.mxu0 0
      %1790 = vmatprep.subr.bf16.mxu0 0
      %1791 = vmatpush1.bf16.msra.mxu0 0
      %1792 = vmatprep.subr.bf16.mxu0 0
      %1793 = vmatpush1.bf16.msra.mxu0 0
      %1794 = vmatprep.mubr.bf16.mxu0 0
      %1795 = vmatmul.mubr.bf16.gmra.mrb[0].mxu0 %v1712
      %v1796 = vpop.f32.mrb[0].mxu0
      %v1797 = vadd.f32 0.0, %v1796
      %v1798 = vpop.f32.mrb[0].mxu0
      %v1799 = vpop.f32.mrb[0].mxu0
      %v1800 = vadd.f32 0.0, %v1799
      %v1801 = vpop.f32.mrb[0].mxu0
      %1802 = vmatprep.mubr.bf16.mxu0 0
      %1803 = vmatmul.mubr.bf16.gmra.mrb[0].mxu0 %v1715
      %v1804 = vpop.f32.mrb[0].mxu0
      %v1805 = vadd.f32 0.0, %v1804
      %v1806 = vpop.f32.mrb[0].mxu0
      %v1807 = vpop.f32.mrb[0].mxu0
      %v1808 = vadd.f32 0.0, %v1807
      %v1809 = vpop.f32.mrb[0].mxu0
      %1810 = vmatprep.mubr.bf16.mxu0 0
      %1811 = vmatmul.mubr.bf16.gmra.mrb[0].mxu0 %v1718
      %v1812 = vpop.f32.mrb[0].mxu0
      %v1813 = vadd.f32 0.0, %v1812
      %v1814 = vpop.f32.mrb[0].mxu0
      %v1815 = vpop.f32.mrb[0].mxu0
      %v1816 = vadd.f32 0.0, %v1815
      %v1817 = vpop.f32.mrb[0].mxu0
      %1818 = vmatprep.mubr.bf16.mxu0 0
      %1819 = vmatmul.mubr.bf16.gmra.mrb[0].mxu0 %v1721
      %v1820 = vpop.f32.mrb[0].mxu0
      %v1821 = vadd.f32 0.0, %v1820
      %v1822 = vpop.f32.mrb[0].mxu0
      %v1823 = vpop.f32.mrb[0].mxu0
      %v1824 = vadd.f32 0.0, %v1823
      %v1825 = vpop.f32.mrb[0].mxu0
      %1826 = vmatprep.mubr.bf16.mxu0 0
      %1827 = vmatmul.mubr.bf16.gmra.mrb[0].mxu0 %v1724
      %v1828 = vpop.f32.mrb[0].mxu0
      %v1829 = vadd.f32 0.0, %v1828
      %v1830 = vpop.f32.mrb[0].mxu0
      %v1831 = vpop.f32.mrb[0].mxu0
      %v1832 = vadd.f32 0.0, %v1831
      %v1833 = vpop.f32.mrb[0].mxu0
      %1834 = vmatprep.mubr.bf16.mxu0 0
      %1835 = vmatmul.mubr.bf16.gmra.mrb[0].mxu0 %v1727
      %v1836 = vpop.f32.mrb[0].mxu0
      %v1837 = vadd.f32 0.0, %v1836
      %v1838 = vpop.f32.mrb[0].mxu0
      %v1839 = vpop.f32.mrb[0].mxu0
      %v1840 = vadd.f32 0.0, %v1839
      %v1841 = vpop.f32.mrb[0].mxu0
      %1842 = vmatprep.mubr.bf16.mxu0 0
      %1843 = vmatmul.mubr.bf16.gmra.mrb[0].mxu0 %v1730
      %v1844 = vpop.f32.mrb[0].mxu0
      %v1845 = vadd.f32 0.0, %v1844
      %v1846 = vpop.f32.mrb[0].mxu0
      %v1847 = vpop.f32.mrb[0].mxu0
      %v1848 = vadd.f32 0.0, %v1847
      %v1849 = vpop.f32.mrb[0].mxu0
      %1850 = vmatprep.mubr.bf16.mxu0 0
      %1851 = vmatmul.mubr.bf16.gmra.mrb[0].mxu0 %v1733
      %v1852 = vpop.f32.mrb[0].mxu0
      %v1853 = vadd.f32 0.0, %v1852
      %v1854 = vpop.f32.mrb[0].mxu0
      %v1855 = vpop.f32.mrb[0].mxu0
      %v1856 = vadd.f32 0.0, %v1855
      %v1857 = vpop.f32.mrb[0].mxu0
      %1858 = vmatprep.mubr.bf16.mxu0 0
      %1859 = vmatmul.mubr.bf16.gmra.mrb[0].mxu0 %v1736
      %v1860 = vpop.f32.mrb[0].mxu0
      %v1861 = vadd.f32 0.0, %v1860
      %v1862 = vpop.f32.mrb[0].mxu0
      %v1863 = vpop.f32.mrb[0].mxu0
      %v1864 = vadd.f32 0.0, %v1863
      %v1865 = vpop.f32.mrb[0].mxu0
      %1866 = vmatprep.mubr.bf16.mxu0 0
      %1867 = vmatmul.mubr.bf16.gmra.mrb[0].mxu0 %v1739
      %v1868 = vpop.f32.mrb[0].mxu0
      %v1869 = vadd.f32 0.0, %v1868
      %v1870 = vpop.f32.mrb[0].mxu0
      %v1871 = vpop.f32.mrb[0].mxu0
      %v1872 = vadd.f32 0.0, %v1871
      %v1873 = vpop.f32.mrb[0].mxu0
      %1874 = vmatprep.mubr.bf16.mxu0 0
      %1875 = vmatmul.mubr.bf16.gmra.mrb[0].mxu0 %v1742
      %v1876 = vpop.f32.mrb[0].mxu0
      %v1877 = vadd.f32 0.0, %v1876
      %v1878 = vpop.f32.mrb[0].mxu0
      %v1879 = vpop.f32.mrb[0].mxu0
      %v1880 = vadd.f32 0.0, %v1879
      %v1881 = vpop.f32.mrb[0].mxu0
      %1882 = vmatprep.mubr.bf16.mxu0 0
      %1883 = vmatmul.mubr.bf16.gmra.mrb[0].mxu0 %v1745
      %v1884 = vpop.f32.mrb[0].mxu0
      %v1885 = vadd.f32 0.0, %v1884
      %v1886 = vpop.f32.mrb[0].mxu0
      %v1887 = vpop.f32.mrb[0].mxu0
      %v1888 = vadd.f32 0.0, %v1887
      %v1889 = vpop.f32.mrb[0].mxu0
      %1890 = vmatprep.mubr.bf16.mxu0 0
      %1891 = vmatmul.mubr.bf16.gmra.mrb[0].mxu0 %v1748
      %v1892 = vpop.f32.mrb[0].mxu0
      %v1893 = vadd.f32 0.0, %v1892
      %v1894 = vpop.f32.mrb[0].mxu0
      %v1895 = vpop.f32.mrb[0].mxu0
      %v1896 = vadd.f32 0.0, %v1895
      %v1897 = vpop.f32.mrb[0].mxu0
      %1898 = vmatprep.mubr.bf16.mxu0 0
      %1899 = vmatmul.mubr.bf16.gmra.mrb[0].mxu0 %v1751
      %v1900 = vpop.f32.mrb[0].mxu0
      %v1901 = vadd.f32 0.0, %v1900
      %v1902 = vpop.f32.mrb[0].mxu0
      %v1903 = vpop.f32.mrb[0].mxu0
      %v1904 = vadd.f32 0.0, %v1903
      %v1905 = vpop.f32.mrb[0].mxu0
      %1906 = vmatprep.mubr.bf16.mxu0 0
      %1907 = vmatmul.mubr.bf16.gmra.mrb[0].mxu0 %v1754
      %v1908 = vpop.f32.mrb[0].mxu0
      %v1909 = vadd.f32 0.0, %v1908
      %v1910 = vpop.f32.mrb[0].mxu0
      %v1911 = vpop.f32.mrb[0].mxu0
      %v1912 = vadd.f32 0.0, %v1911
      %v1913 = vpop.f32.mrb[0].mxu0
      %1914 = vmatprep.mubr.bf16.mxu0 0
      %1915 = vmatmul.mubr.bf16.gmra.mrb[0].mxu0 %v1757
      %v1916 = vpop.f32.mrb[0].mxu0
      %v1917 = vadd.f32 0.0, %v1916
      %v1918 = vpop.f32.mrb[0].mxu0
      %v1919 = vpop.f32.mrb[0].mxu0
      %v1920 = vadd.f32 0.0, %v1919
      %v1921 = vpop.f32.mrb[0].mxu0
      %1922 = vdwg.mxu0
      %v1923 = vadd.f32 %v1618, %v1797
      %v1924 = vadd.f32 %v1619, %v1800
      %v1925 = vadd.f32 %v1620, %v1805
      %v1926 = vadd.f32 %v1621, %v1808
      %v1927 = vadd.f32 %v1622, %v1813
      %v1928 = vadd.f32 %v1623, %v1816
      %v1929 = vadd.f32 %v1624, %v1821
      %v1930 = vadd.f32 %v1625, %v1824
      %v1931 = vadd.f32 %v1626, %v1829
      %v1932 = vadd.f32 %v1627, %v1832
      %v1933 = vadd.f32 %v1628, %v1837
      %v1934 = vadd.f32 %v1629, %v1840
      %v1935 = vadd.f32 %v1630, %v1845
      %v1936 = vadd.f32 %v1631, %v1848
      %v1937 = vadd.f32 %v1632, %v1853
      %v1938 = vadd.f32 %v1633, %v1856
      %v1939 = vadd.f32 %v1634, %v1861
      %v1940 = vadd.f32 %v1635, %v1864
      %v1941 = vadd.f32 %v1636, %v1869
      %v1942 = vadd.f32 %v1637, %v1872
      %v1943 = vadd.f32 %v1638, %v1877
      %v1944 = vadd.f32 %v1639, %v1880
      %v1945 = vadd.f32 %v1640, %v1885
      %v1946 = vadd.f32 %v1641, %v1888
      %v1947 = vadd.f32 %v1642, %v1893
      %v1948 = vadd.f32 %v1643, %v1896
      %v1949 = vadd.f32 %v1644, %v1901
      %v1950 = vadd.f32 %v1645, %v1904
      %v1951 = vadd.f32 %v1646, %v1909
      %v1952 = vadd.f32 %v1647, %v1912
      %v1953 = vadd.f32 %v1648, %v1917
      %v1954 = vadd.f32 %v1649, %v1920
      %v1955 = vld [vmem:[%s4] sm:$0x1]
      %v1957 = vlaneseq
      %v1958 = vshrl.u32 %v1957, 7
      %v1959 = vsub.s32 0, %v1958
      %v1960 = vrot.slane %v1955, %v1959
      %v1962 = vadd.f32 %v1923, %v1960
      %v1963 = vadd.f32 %v1924, %v1960
      %v1964 = vadd.f32 %v1925, %v1960
      %v1965 = vadd.f32 %v1926, %v1960
      %v1966 = vadd.f32 %v1927, %v1960
      %v1967 = vadd.f32 %v1928, %v1960
      %v1968 = vadd.f32 %v1929, %v1960
      %v1969 = vadd.f32 %v1930, %v1960
      %v1970 = vadd.f32 %v1931, %v1960
      %v1971 = vadd.f32 %v1932, %v1960
      %v1972 = vadd.f32 %v1933, %v1960
      %v1973 = vadd.f32 %v1934, %v1960
      %v1974 = vadd.f32 %v1935, %v1960
      %v1975 = vadd.f32 %v1936, %v1960
      %v1976 = vadd.f32 %v1937, %v1960
      %v1977 = vadd.f32 %v1938, %v1960
      %v1978 = vadd.f32 %v1939, %v1960
      %v1979 = vadd.f32 %v1940, %v1960
      %v1980 = vadd.f32 %v1941, %v1960
      %v1981 = vadd.f32 %v1942, %v1960
      %v1982 = vadd.f32 %v1943, %v1960
      %v1983 = vadd.f32 %v1944, %v1960
      %v1984 = vadd.f32 %v1945, %v1960
      %v1985 = vadd.f32 %v1946, %v1960
      %v1986 = vadd.f32 %v1947, %v1960
      %v1987 = vadd.f32 %v1948, %v1960
      %v1988 = vadd.f32 %v1949, %v1960
      %v1989 = vadd.f32 %v1950, %v1960
      %v1990 = vadd.f32 %v1951, %v1960
      %v1991 = vadd.f32 %v1952, %v1960
      %v1992 = vadd.f32 %v1953, %v1960
      %v1993 = vadd.f32 %v1954, %v1960
      %v1994 = vmax.f32 %v1962, 0.0
      %v1995 = vmax.f32 %v1963, 0.0
      %v1996 = vmax.f32 %v1964, 0.0
      %v1997 = vmax.f32 %v1965, 0.0
      %v1998 = vmax.f32 %v1966, 0.0
      %v1999 = vmax.f32 %v1967, 0.0
      %v2000 = vmax.f32 %v1968, 0.0
      %v2001 = vmax.f32 %v1969, 0.0
      %v2002 = vmax.f32 %v1970, 0.0
      %v2003 = vmax.f32 %v1971, 0.0
      %v2004 = vmax.f32 %v1972, 0.0
      %v2005 = vmax.f32 %v1973, 0.0
      %v2006 = vmax.f32 %v1974, 0.0
      %v2007 = vmax.f32 %v1975, 0.0
      %v2008 = vmax.f32 %v1976, 0.0
      %v2009 = vmax.f32 %v1977, 0.0
      %v2010 = vmax.f32 %v1978, 0.0
      %v2011 = vmax.f32 %v1979, 0.0
      %v2012 = vmax.f32 %v1980, 0.0
      %v2013 = vmax.f32 %v1981, 0.0
      %v2014 = vmax.f32 %v1982, 0.0
      %v2015 = vmax.f32 %v1983, 0.0
      %v2016 = vmax.f32 %v1984, 0.0
      %v2017 = vmax.f32 %v1985, 0.0
      %v2018 = vmax.f32 %v1986, 0.0
      %v2019 = vmax.f32 %v1987, 0.0
      %v2020 = vmax.f32 %v1988, 0.0
      %v2021 = vmax.f32 %v1989, 0.0
      %v2022 = vmax.f32 %v1990, 0.0
      %v2023 = vmax.f32 %v1991, 0.0
      %v2024 = vmax.f32 %v1992, 0.0
      %v2025 = vmax.f32 %v1993, 0.0
      %vm2026 = vcmask 64512
      %2027 = vst.msk [vmem:[%s248] sm:$0xff] %vm2026, %v1994
      %2028 = vst.msk [vmem:[%s248 + $0x8] sm:$0xff] %vm2026, %v1995
      %2029 = vst.msk [vmem:[%s248 + $0x10] sm:$0xff] %vm2026, %v1996
      %2030 = vst.msk [vmem:[%s248 + $0x18] sm:$0xff] %vm2026, %v1997
      %2031 = vst.msk [vmem:[%s248 + $0x20] sm:$0xff] %vm2026, %v1998
      %2032 = vst.msk [vmem:[%s248 + $0x28] sm:$0xff] %vm2026, %v1999
      %2033 = vst.msk [vmem:[%s248 + $0x30] sm:$0xff] %vm2026, %v2000
      %2034 = vst.msk [vmem:[%s248 + $0x38] sm:$0xff] %vm2026, %v2001
      %2035 = vst.msk [vmem:[%s248 + $0x40] sm:$0xff] %vm2026, %v2002
      %2036 = vst.msk [vmem:[%s248 + $0x48] sm:$0xff] %vm2026, %v2003
      %2037 = vst.msk [vmem:[%s248 + $0x50] sm:$0xff] %vm2026, %v2004
      %2038 = vst.msk [vmem:[%s248 + $0x58] sm:$0xff] %vm2026, %v2005
      %2039 = vst.msk [vmem:[%s248 + $0x60] sm:$0xff] %vm2026, %v2006
      %2040 = vst.msk [vmem:[%s248 + $0x68] sm:$0xff] %vm2026, %v2007
      %2041 = vst.msk [vmem:[%s248 + $0x70] sm:$0xff] %vm2026, %v2008
      %2042 = vst.msk [vmem:[%s248 + $0x78] sm:$0xff] %vm2026, %v2009
      %2043 = vst.msk [vmem:[%s248 + $0x80] sm:$0xff] %vm2026, %v2010
      %2044 = vst.msk [vmem:[%s248 + $0x88] sm:$0xff] %vm2026, %v2011
      %2045 = vst.msk [vmem:[%s248 + $0x90] sm:$0xff] %vm2026, %v2012
      %2046 = vst.msk [vmem:[%s248 + $0x98] sm:$0xff] %vm2026, %v2013
      %2047 = vst.msk [vmem:[%s248 + $0xa0] sm:$0xff] %vm2026, %v2014
      %2048 = vst.msk [vmem:[%s248 + $0xa8] sm:$0xff] %vm2026, %v2015
      %2049 = vst.msk [vmem:[%s248 + $0xb0] sm:$0xff] %vm2026, %v2016
      %2050 = vst.msk [vmem:[%s248 + $0xb8] sm:$0xff] %vm2026, %v2017
      %2051 = vst.msk [vmem:[%s248 + $0xc0] sm:$0xff] %vm2026, %v2018
      %2052 = vst.msk [vmem:[%s248 + $0xc8] sm:$0xff] %vm2026, %v2019
      %2053 = vst.msk [vmem:[%s248 + $0xd0] sm:$0xff] %vm2026, %v2020
      %2054 = vst.msk [vmem:[%s248 + $0xd8] sm:$0xff] %vm2026, %v2021
      %2055 = vst.msk [vmem:[%s248 + $0xe0] sm:$0xff] %vm2026, %v2022
      %2056 = vst.msk [vmem:[%s248 + $0xe8] sm:$0xff] %vm2026, %v2023
      %2057 = vst.msk [vmem:[%s248 + $0xf0] sm:$0xff] %vm2026, %v2024
      %2058 = vst.msk [vmem:[%s248 + $0xf8] sm:$0xff] %vm2026, %v2025
      %s2059 = smul.u32 32, %s16
      %p2060 = scmp.lt.s32.totalorder %s2059, 63
      %s2061 = scalar_select %p2060, %s2059, 63
      %s2062 = smul.addr %s2061, 8
      %s2063 = scalar_lea.vmem %s5, %s2062
      // Predicated region
      $region41: #{unet_ag_forward.24} parent=39 // pred_check
        %p2064 = pneg %p149
      $region42: #{unet_ag_forward.24} parent=39 // pred_check_branch
        %2066 = sbr.rel (%p2064) target = $region44
      $region43: #{unet_ag_forward.24} parent=39 // pred_region
        %s2067 = smul.u32 32, %s16
      $region44: #{unet_ag_forward.24} parent=39 // pred_fallthru
        _
    $region40: #{unet_ag_forward.24} parent=5 // pred_fallthru
      _
    %p2068 = scmp.le.s32.totalorder 2, %s11
    // Predicated region
    $region45: #{unet_ag_forward.24} parent=5 // pred_check
      %p2069 = pneg %p2068
    $region46: #{unet_ag_forward.24} parent=5 // pred_check_branch
      %2071 = sbr.rel (%p2069) target = $region48
    $region47: #{unet_ag_forward.24} parent=5 // pred_region
      %s2072 = ssub.s32 %s11, 2
      // Predicated region
      $region49: #{unet_ag_forward.24} parent=47 // pred_check
        %p2073 = pneg %p155
      $region50: #{unet_ag_forward.24} parent=47 // pred_check_branch
        %2075 = sbr.rel (%p2073) target = $region52
      $region51: #{unet_ag_forward.24} parent=47 // pred_region
        %s2076 = smul.u32 32, %s17
        %p2077 = scmp.lt.s32.totalorder %s2076, 63
        %s2078 = scalar_select %p2077, %s2076, 63
        %s2079 = smul.addr %s2078, 8
        %s2080 = scalar_lea.vmem %s5, %s2079
      $region52: #{unet_ag_forward.24} parent=47 // pred_fallthru
        _
    $region48: #{unet_ag_forward.24} parent=5 // pred_fallthru
      _
  $region6: #{unet_ag_forward.24} parent=0 // loop_footer
    %s15 = sadd.s32 1, %s11
  $region7: #{unet_ag_forward.24} parent=0 // loop_footer_branch
    %10 = sbr.rel target = $region3
  $region8: #{unet_ag_forward.24} parent=0 // loop_exit
    _

// kernel: unet_ag_forward.27
$region0: #{unet_ag_forward.27}
  #allocation0 [shape = 'u32[]', space=smem, size = 0x4, offset = 0x4, fixed_abs, tag = 'smem constant byte address 0x4 - core index']
  #allocation1 [shape = 'u32[144,128]{1,0:T(1,128)}', space=vmem, size = 0x12000, scoped, tag = 'internal scratch']
  %s0 = inlined_call_operand.vmem [shape: f32[2,1,256], index: 0, kind: input, shape index: {}]
  %s1 = inlined_call_operand.vmem [shape: f32[1,256], index: 1, kind: input, shape index: {}]
  %s2 = inlined_call_operand.vmem [shape: f32[1,256], index: 2, kind: input, shape index: {}]
  %s3 = inlined_call_operand.vmem [shape: f32[32,2], index: 3, kind: input, shape index: {}]
  %s4 = inlined_call_operand.vmem [shape: f32[8,32], index: 4, kind: input, shape index: {}]
  %s5 = inlined_call_operand.vmem [shape: f32[32,8], index: 5, kind: input, shape index: {}]
  %s6 = inlined_call_operand.vmem [shape: f32[2,2,256], index: 6, kind: output, shape index: {}]
  %s7 = sld [smem:[#allocation0]]
  $region57: #{unet_ag_forward.27} parent=0
    _
  %s9 = ssub.s32 1, %s7
  %s10 = scalar_select 0, %s9, %s7
  loop: start=0, step=1, limit=4
  $region2: #{unet_ag_forward.27} parent=0 // loop_pre_header
    _
  $region3: #{unet_ag_forward.27} parent=0 // loop_header
    %s12 = sphi 0, %s16
    %p13 = scmp.ge.s32.totalorder %s12, 4
    %s22 = sphi 0, %s24
    %s25 = sphi 0, %s22
    %s26 = sphi 0, %s25
    %s42 = sphi 0, %s26
    %s46 = sphi 0, %s46
    %s48 = sphi 0, %s46
    %s49 = sphi 0, %s48
    %s63 = sphi 0, %s49
    %s67 = sphi 0, %s67
    %s69 = sphi 0, %s67
    %s70 = sphi 0, %s69
    %s84 = sphi 0, %s70
    %s88 = sphi 0, %s88
    %s90 = sphi 0, %s88
    %s91 = sphi 0, %s90
    %s105 = sphi 0, %s91
    %s109 = sphi 0, %s109
    %s111 = sphi 0, %s109
    %s112 = sphi 0, %s111
    %s126 = sphi 0, %s112
    %s130 = sphi 0, %s130
    %s132 = sphi 0, %s130
    %s133 = sphi 0, %s132
    %s147 = sphi 0, %s133
    %s153 = sphi 0, %s155
    %s156 = sphi 0, %s153
    %s157 = sphi 0, %s156
    %s173 = sphi 0, %s157
  $region4: #{unet_ag_forward.27} parent=0 // loop_header_branch
    %15 = sbr.rel (%p13) target = $region8
  $region5: #{unet_ag_forward.27} parent=0 // loop_body
    %s17 = ssub.s32 %s12, 1
    %s18 = ssub.s32 %s12, 2
    %s19 = sadd.s32 %s12, 1
    %s20 = ssub.s32 %s12, %s19
    %p21 = scmp.eq.s32.totalorder %s20, 0
    %s23 = sadd.s32 %s22, 1
    %s24 = scalar_select %p21, %s22, %s23
    %p27 = pneg %p21
    %p28 = scmp.eq.s32.totalorder %s12, 1
    %p29 = por %p27, %p28
    %p30 = scmp.ne.s32.totalorder %s22, %s25
    %p31 = scmp.eq.s32.totalorder %s12, 0
    %p32 = por %p30, %p31
    %p33 = scmp.ne.s32.totalorder %s22, %s25
    %p34 = scmp.eq.s32.totalorder %s17, 1
    %p35 = por %p33, %p34
    %p36 = scmp.ne.s32.totalorder %s25, %s26
    %p37 = scmp.eq.s32.totalorder %s17, 0
    %p38 = por %p36, %p37
    %p39 = scmp.ne.s32.totalorder %s25, %s26
    %p40 = scmp.eq.s32.totalorder %s18, 1
    %p41 = por %p39, %p40
    %p43 = scmp.ne.s32.totalorder %s26, %s42
    %p44 = scmp.eq.s32.totalorder %s18, 0
    %p45 = por %p43, %p44
    %s47 = sadd.s32 %s46, 1
    %p50 = scmp.eq.s32.totalorder %s12, 1
    %p51 = scmp.ne.s32.totalorder %s46, %s48
    %p52 = scmp.eq.s32.totalorder %s12, 0
    %p53 = por %p51, %p52
    %p54 = scmp.ne.s32.totalorder %s46, %s48
    %p55 = scmp.eq.s32.totalorder %s17, 1
    %p56 = por %p54, %p55
    %p57 = scmp.ne.s32.totalorder %s48, %s49
    %p58 = scmp.eq.s32.totalorder %s17, 0
    %p59 = por %p57, %p58
    %p60 = scmp.ne.s32.totalorder %s48, %s49
    %p61 = scmp.eq.s32.totalorder %s18, 1
    %p62 = por %p60, %p61
    %p64 = scmp.ne.s32.totalorder %s49, %s63
    %p65 = scmp.eq.s32.totalorder %s18, 0
    %p66 = por %p64, %p65
    %s68 = sadd.s32 %s67, 1
    %p71 = scmp.eq.s32.totalorder %s12, 1
    %p72 = scmp.ne.s32.totalorder %s67, %s69
    %p73 = scmp.eq.s32.totalorder %s12, 0
    %p74 = por %p72, %p73
    %p75 = scmp.ne.s32.totalorder %s67, %s69
    %p76 = scmp.eq.s32.totalorder %s17, 1
    %p77 = por %p75, %p76
    %p78 = scmp.ne.s32.totalorder %s69, %s70
    %p79 = scmp.eq.s32.totalorder %s17, 0
    %p80 = por %p78, %p79
    %p81 = scmp.ne.s32.totalorder %s69, %s70
    %p82 = scmp.eq.s32.totalorder %s18, 1
    %p83 = por %p81, %p82
    %p85 = scmp.ne.s32.totalorder %s70, %s84
    %p86 = scmp.eq.s32.totalorder %s18, 0
    %p87 = por %p85, %p86
    %s89 = sadd.s32 %s88, 1
    %p92 = scmp.eq.s32.totalorder %s12, 1
    %p93 = scmp.ne.s32.totalorder %s88, %s90
    %p94 = scmp.eq.s32.totalorder %s12, 0
    %p95 = por %p93, %p94
    %p96 = scmp.ne.s32.totalorder %s88, %s90
    %p97 = scmp.eq.s32.totalorder %s17, 1
    %p98 = por %p96, %p97
    %p99 = scmp.ne.s32.totalorder %s90, %s91
    %p100 = scmp.eq.s32.totalorder %s17, 0
    %p101 = por %p99, %p100
    %p102 = scmp.ne.s32.totalorder %s90, %s91
    %p103 = scmp.eq.s32.totalorder %s18, 1
    %p104 = por %p102, %p103
    %p106 = scmp.ne.s32.totalorder %s91, %s105
    %p107 = scmp.eq.s32.totalorder %s18, 0
    %p108 = por %p106, %p107
    %s110 = sadd.s32 %s109, 1
    %p113 = scmp.eq.s32.totalorder %s12, 1
    %p114 = scmp.ne.s32.totalorder %s109, %s111
    %p115 = scmp.eq.s32.totalorder %s12, 0
    %p116 = por %p114, %p115
    %p117 = scmp.ne.s32.totalorder %s109, %s111
    %p118 = scmp.eq.s32.totalorder %s17, 1
    %p119 = por %p117, %p118
    %p120 = scmp.ne.s32.totalorder %s111, %s112
    %p121 = scmp.eq.s32.totalorder %s17, 0
    %p122 = por %p120, %p121
    %p123 = scmp.ne.s32.totalorder %s111, %s112
    %p124 = scmp.eq.s32.totalorder %s18, 1
    %p125 = por %p123, %p124
    %p127 = scmp.ne.s32.totalorder %s112, %s126
    %p128 = scmp.eq.s32.totalorder %s18, 0
    %p129 = por %p127, %p128
    %s131 = sadd.s32 %s130, 1
    %p134 = scmp.eq.s32.totalorder %s12, 1
    %p135 = scmp.ne.s32.totalorder %s130, %s132
    %p136 = scmp.eq.s32.totalorder %s12, 0
    %p137 = por %p135, %p136
    %p138 = scmp.ne.s32.totalorder %s130, %s132
    %p139 = scmp.eq.s32.totalorder %s17, 1
    %p140 = por %p138, %p139
    %p141 = scmp.ne.s32.totalorder %s132, %s133
    %p142 = scmp.eq.s32.totalorder %s17, 0
    %p143 = por %p141, %p142
    %p144 = scmp.ne.s32.totalorder %s132, %s133
    %p145 = scmp.eq.s32.totalorder %s18, 1
    %p146 = por %p144, %p145
    %p148 = scmp.ne.s32.totalorder %s133, %s147
    %p149 = scmp.eq.s32.totalorder %s18, 0
    %p150 = por %p148, %p149
    %s151 = ssub.s32 %s12, %s19
    %p152 = scmp.eq.s32.totalorder %s151, 0
    %s154 = sadd.s32 %s153, 1
    %s155 = scalar_select %p152, %s153, %s154
    %p158 = pneg %p152
    %p159 = scmp.eq.s32.totalorder %s12, 1
    %p160 = por %p158, %p159
    %p161 = scmp.ne.s32.totalorder %s153, %s156
    %p162 = scmp.eq.s32.totalorder %s12, 0
    %p163 = por %p161, %p162
    %p164 = scmp.ne.s32.totalorder %s153, %s156
    %p165 = scmp.eq.s32.totalorder %s17, 1
    %p166 = por %p164, %p165
    %p167 = scmp.ne.s32.totalorder %s156, %s157
    %p168 = scmp.eq.s32.totalorder %s17, 0
    %p169 = por %p167, %p168
    %p170 = scmp.ne.s32.totalorder %s156, %s157
    %p171 = scmp.eq.s32.totalorder %s18, 1
    %p172 = por %p170, %p171
    %p174 = scmp.ne.s32.totalorder %s157, %s173
    %p175 = scmp.eq.s32.totalorder %s18, 0
    %p176 = por %p174, %p175
    %p177 = scmp.le.s32.totalorder 1, %s12
    %p178 = scmp.lt.s32.totalorder %s12, 3
    %p179 = pnand %p177, %p178
    %p180 = pneg %p179
    // Predicated region
    $region9: #{unet_ag_forward.27} parent=5 // pred_check
      _
    $region10: #{unet_ag_forward.27} parent=5 // pred_check_branch
      %182 = sbr.rel (%p179) target = $region12
    $region11: #{unet_ag_forward.27} parent=5 // pred_region
      %s183 = ssub.s32 %s12, 1
      // Predicated region
      $region13: #{unet_ag_forward.27} parent=11 // pred_check
        %p184 = pneg %p59
      $region14: #{unet_ag_forward.27} parent=11 // pred_check_branch
        %186 = sbr.rel (%p184) target = $region16
      $region15: #{unet_ag_forward.27} parent=11 // pred_region
        _
      $region16: #{unet_ag_forward.27} parent=11 // pred_fallthru
        _
      // Predicated region
      $region17: #{unet_ag_forward.27} parent=11 // pred_check
        %p187 = pneg %p80
      $region18: #{unet_ag_forward.27} parent=11 // pred_check_branch
        %189 = sbr.rel (%p187) target = $region20
      $region19: #{unet_ag_forward.27} parent=11 // pred_region
        _
      $region20: #{unet_ag_forward.27} parent=11 // pred_fallthru
        _
      // Predicated region
      $region21: #{unet_ag_forward.27} parent=11 // pred_check
        %p190 = pneg %p101
      $region22: #{unet_ag_forward.27} parent=11 // pred_check_branch
        %192 = sbr.rel (%p190) target = $region24
      $region23: #{unet_ag_forward.27} parent=11 // pred_region
        _
      $region24: #{unet_ag_forward.27} parent=11 // pred_fallthru
        _
      // Predicated region
      $region25: #{unet_ag_forward.27} parent=11 // pred_check
        %p193 = pneg %p122
      $region26: #{unet_ag_forward.27} parent=11 // pred_check_branch
        %195 = sbr.rel (%p193) target = $region28
      $region27: #{unet_ag_forward.27} parent=11 // pred_region
        _
      $region28: #{unet_ag_forward.27} parent=11 // pred_fallthru
        _
      // Predicated region
      $region29: #{unet_ag_forward.27} parent=11 // pred_check
        %p196 = pneg %p143
      $region30: #{unet_ag_forward.27} parent=11 // pred_check_branch
        %198 = sbr.rel (%p196) target = $region32
      $region31: #{unet_ag_forward.27} parent=11 // pred_region
        _
      $region32: #{unet_ag_forward.27} parent=11 // pred_fallthru
        _
    $region12: #{unet_ag_forward.27} parent=5 // pred_fallthru
      _
    %p199 = scmp.lt.s32.totalorder %s12, 2
    // Predicated region
    $region33: #{unet_ag_forward.27} parent=5 // pred_check
      %p200 = pneg %p199
    $region34: #{unet_ag_forward.27} parent=5 // pred_check_branch
      %202 = sbr.rel (%p200) target = $region36
    $region35: #{unet_ag_forward.27} parent=5 // pred_region
      // Predicated region
      $region37: #{unet_ag_forward.27} parent=35 // pred_check
        %p203 = pneg %p32
      $region38: #{unet_ag_forward.27} parent=35 // pred_check_branch
        %205 = sbr.rel (%p203) target = $region40
      $region39: #{unet_ag_forward.27} parent=35 // pred_region
        %p206 = scmp.lt.s32.totalorder %s12, 1
        %s207 = scalar_select %p206, %s12, 1
        %s208 = smul.addr %s207, 2
        %s209 = scalar_lea.vmem %s0, %s208
      $region40: #{unet_ag_forward.27} parent=35 // pred_fallthru
        _
    $region36: #{unet_ag_forward.27} parent=5 // pred_fallthru
      _
    %p210 = scmp.le.s32.totalorder 1, %s12
    %p211 = scmp.lt.s32.totalorder %s12, 3
    %p212 = pnand %p210, %p211
    %p213 = pneg %p212
    // Predicated region
    $region41: #{unet_ag_forward.27} parent=5 // pred_check
      _
    $region42: #{unet_ag_forward.27} parent=5 // pred_check_branch
      %215 = sbr.rel (%p212) target = $region44
    $region43: #{unet_ag_forward.27} parent=5 // pred_region
      %s216 = ssub.s32 %s12, 1
      %p217 = scmp.lt.s32.totalorder %s17, 1
      %s218 = scalar_select %p217, %s17, 1
      %s219 = smul.addr %s218, 2
      %s220 = scalar_lea.vmem %s0, %s219
      %p221 = pneg %p38
      %p222 = pneg %p35
      %p223 = pneg %p59
      %p224 = pneg %p56
      %p225 = pneg %p80
      %p226 = pneg %p77
      %p227 = pneg %p101
      %p228 = pneg %p98
      %p229 = pneg %p122
      %p230 = pneg %p119
      %p231 = pneg %p143
      %p232 = pneg %p140
      %p233 = pneg %p169
      %p234 = pneg %p166
      %p235 = scmp.lt.s32.totalorder %s17, 1
      %s236 = scalar_select %p235, %s17, 1
      %s237 = smul.addr %s236, 2
      %s238 = smul.addr %s237, 2
      %s239 = scalar_lea.vmem %s6, %s238
      %p240 = scmp.lt.s32.totalorder %s17, 1
      %s241 = scalar_select %p240, %s17, 1
      %s242 = smul.addr %s241, 2
      %s243 = scalar_lea.vmem %s0, %s242
      %p244 = scmp.lt.s32.totalorder %s17, 1
      %s245 = scalar_select %p244, %s17, 1
      %s246 = smul.addr %s245, 2
      %s247 = smul.addr %s246, 2
      %s248 = scalar_lea.vmem %s6, %s247
      %v249 = vld [vmem:[%s243] sm:$0x3]
      %v250 = vld [vmem:[%s1] sm:$0x3]
      %v251 = vld [vmem:[%s2] sm:$0x3]
      %v253 = vlaneseq
      %v254 = vshrl.u32 %v253, 7
      %v255 = vsub.s32 0, %v254
      %v256 = vrot.slane %v249, %v255
      %v257 = vlaneseq
      %v258 = vshrl.u32 %v257, 7
      %v259 = vsub.s32 1, %v258
      %v260 = vrot.slane %v249, %v259
      %vm263 = vcmask 1040384
      %v264 = vsel %vm263, %v256, 0.0
      %v265 = vsel %vm263, %v260, 0.0
      %v266 = vadd.f32 %v264, %v265
      %267 = vadd.xlane.f32.xlu0 %v266
      %v268 = vpop.xlane.xlu0 %267
      %v269 = vrot.slane %v268, 4
      %v270 = vadd.f32 %v268, %v269
      %v271 = vrot.slane %v270, 2
      %v272 = vadd.f32 %v270, %v271
      %v273 = vrot.slane %v272, 1
      %v274 = vadd.f32 %v272, %v273
      %s275 = vtos %v274
      %s276 = sadd.f32 %s275, 1e-06
      %v277 = vmul.f32 %v249, %v250
      %v279 = vlaneseq
      %v280 = vshrl.u32 %v279, 7
      %v281 = vsub.s32 0, %v280
      %v282 = vrot.slane %v277, %v281
      %v283 = vlaneseq
      %v284 = vshrl.u32 %v283, 7
      %v285 = vsub.s32 1, %v284
      %v286 = vrot.slane %v277, %v285
      %v289 = vsel %vm263, %v282, 0.0
      %v290 = vsel %vm263, %v286, 0.0
      %v291 = vadd.f32 %v289, %v290
      %292 = vadd.xlane.f32.xlu0 %v291
      %v293 = vpop.xlane.xlu0 %292
      %v294 = vrot.slane %v293, 4
      %v295 = vadd.f32 %v293, %v294
      %v296 = vrot.slane %v295, 2
      %v297 = vadd.f32 %v295, %v296
      %v298 = vrot.slane %v297, 1
      %v299 = vadd.f32 %v297, %v298
      %s300 = vtos %v299
      %v301 = vstv %s276
      %v302 = vrcp.pop %v301
      %s303 = vtos %v302
      %s304 = smul.f32 %s300, %s303
      %v305 = vmul.f32 %v249, %v251
      %v307 = vlaneseq
      %v308 = vshrl.u32 %v307, 7
      %v309 = vsub.s32 0, %v308
      %v310 = vrot.slane %v305, %v309
      %v311 = vlaneseq
      %v312 = vshrl.u32 %v311, 7
      %v313 = vsub.s32 1, %v312
      %v314 = vrot.slane %v305, %v313
      %v317 = vsel %vm263, %v310, 0.0
      %v318 = vsel %vm263, %v314, 0.0
      %v319 = vadd.f32 %v317, %v318
      %320 = vadd.xlane.f32.xlu0 %v319
      %v321 = vpop.xlane.xlu0 %320
      %v322 = vrot.slane %v321, 4
      %v323 = vadd.f32 %v321, %v322
      %v324 = vrot.slane %v323, 2
      %v325 = vadd.f32 %v323, %v324
      %v326 = vrot.slane %v325, 1
      %v327 = vadd.f32 %v325, %v326
      %s328 = vtos %v327
      %v329 = vstv %s276
      %v330 = vrcp.pop %v329
      %s331 = vtos %v330
      %s332 = smul.f32 %s328, %s331
      %v333 = vstv %s304
      %v334 = vsub.f32 %v250, %v333
      %v335 = vstv %s332
      %v336 = vsub.f32 %v251, %v335
      %v337 = vmul.f32 %v334, %v334
      %v338 = vmul.f32 %v336, %v336
      %v339 = vadd.f32 %v337, %v338
      %v340 = vadd.f32 %v339, 1e-06
      %v341 = vrsqrt.pop %v340
      %v342 = vmul.f32 %v340, %v341
      %vm343 = vcmp.eq.f32.partialorder %v340, inf
      %v344 = vsel %vm343, %v340, %v342
      %vm345 = vcmp.eq.f32.partialorder %v340, 0.0
      %v346 = vand.u32 %v340, 2147483648
      %v347 = vsel %vm345, %v346, %v344
      %v348 = vrcp.pop %v347
      %v349 = vmul.f32 %v334, %v348
      %v350 = vmul.f32 %v336, %v348
      %v351 = vld [vmem:[%s3] sm:$0xff]
      %v352 = vld [vmem:[%s3 + $0x8] sm:$0xff]
      %v353 = vld [vmem:[%s3 + $0x10] sm:$0xff]
      %v354 = vld [vmem:[%s3 + $0x18] sm:$0xff]
      %356 = vset.pattern.permute.xlu0 0
      %357 = vperm.xlu0 %356, %v351
      %v358 = vpop.permute.xlu0 %357
      %361 = vset.pattern.permute.xlu0 0
      %362 = vperm.xlu0 %361, %v352
      %v363 = vpop.permute.xlu0 %362
      %366 = vset.pattern.permute.xlu0 0
      %367 = vperm.xlu0 %366, %v353
      %v368 = vpop.permute.xlu0 %367
      %371 = vset.pattern.permute.xlu0 0
      %372 = vperm.xlu0 %371, %v354
      %v373 = vpop.permute.xlu0 %372
      %v376 = vlaneseq
      %v377 = vshrl.u32 %v376, 7
      %v378 = vsub.s32 0, %v377
      %v379 = vrot.slane %v349, %v378
      %v380 = vlaneseq
      %v381 = vshrl.u32 %v380, 7
      %v382 = vsub.s32 1, %v381
      %v383 = vrot.slane %v349, %v382
      %v386 = vmul.f32 %v358, %v379
      %v387 = vmul.f32 %v358, %v383
      %v388 = vmul.f32 %v363, %v379
      %v389 = vmul.f32 %v363, %v383
      %v390 = vmul.f32 %v368, %v379
      %v391 = vmul.f32 %v368, %v383
      %v392 = vmul.f32 %v373, %v379
      %v393 = vmul.f32 %v373, %v383
      %394 = vset.pattern.permute.xlu0 1
      %395 = vperm.xlu0 %394, %v351
      %v396 = vpop.permute.xlu0 %395
      %398 = vset.pattern.permute.xlu0 1
      %399 = vperm.xlu0 %398, %v352
      %v400 = vpop.permute.xlu0 %399
      %402 = vset.pattern.permute.xlu0 1
      %403 = vperm.xlu0 %402, %v353
      %v404 = vpop.permute.xlu0 %403
      %406 = vset.pattern.permute.xlu0 1
      %407 = vperm.xlu0 %406, %v354
      %v408 = vpop.permute.xlu0 %407
      %v411 = vlaneseq
      %v412 = vshrl.u32 %v411, 7
      %v413 = vsub.s32 0, %v412
      %v414 = vrot.slane %v350, %v413
      %v415 = vlaneseq
      %v416 = vshrl.u32 %v415, 7
      %v417 = vsub.s32 1, %v416
      %v418 = vrot.slane %v350, %v417
      %v421 = vmul.f32 %v396, %v414
      %v422 = vmul.f32 %v396, %v418
      %v423 = vmul.f32 %v400, %v414
      %v424 = vmul.f32 %v400, %v418
      %v425 = vmul.f32 %v404, %v414
      %v426 = vmul.f32 %v404, %v418
      %v427 = vmul.f32 %v408, %v414
      %v428 = vmul.f32 %v408, %v418
      %v429 = vadd.f32 %v386, %v421
      %v430 = vadd.f32 %v387, %v422
      %v431 = vadd.f32 %v388, %v423
      %v432 = vadd.f32 %v389, %v424
      %v433 = vadd.f32 %v390, %v425
      %v434 = vadd.f32 %v391, %v426
      %v435 = vadd.f32 %v392, %v427
      %v436 = vadd.f32 %v393, %v428
      %v437 = vmul.f32 %v429, 8.0
      %v438 = vmul.f32 %v430, 8.0
      %v439 = vmul.f32 %v431, 8.0
      %v440 = vmul.f32 %v432, 8.0
      %v441 = vmul.f32 %v433, 8.0
      %v442 = vmul.f32 %v434, 8.0
      %v443 = vmul.f32 %v435, 8.0
      %v444 = vmul.f32 %v436, 8.0
      %v445 = vmul.f32 %v437, 1.442695
      %v446 = vpow.pop %v445
      %v447 = vmul.f32 %v438, 1.442695
      %v448 = vpow.pop %v447
      %v449 = vmul.f32 %v439, 1.442695
      %v450 = vpow.pop %v449
      %v451 = vmul.f32 %v440, 1.442695
      %v452 = vpow.pop %v451
      %v453 = vmul.f32 %v441, 1.442695
      %v454 = vpow.pop %v453
      %v455 = vmul.f32 %v442, 1.442695
      %v456 = vpow.pop %v455
      %v457 = vmul.f32 %v443, 1.442695
      %v458 = vpow.pop %v457
      %v459 = vmul.f32 %v444, 1.442695
      %v460 = vpow.pop %v459
      %v461 = vmul.f32 %v446, %v256
      %v462 = vmul.f32 %v448, %v260
      %v463 = vmul.f32 %v450, %v256
      %v464 = vmul.f32 %v452, %v260
      %v465 = vmul.f32 %v454, %v256
      %v466 = vmul.f32 %v456, %v260
      %v467 = vmul.f32 %v458, %v256
      %v468 = vmul.f32 %v460, %v260
      %v470 = vlaneseq
      %v471 = vshrl.u32 %v470, 7
      %v472 = vsub.s32 0, %v471
      %v473 = vrot.slane %v347, %v472
      %v474 = vlaneseq
      %v475 = vshrl.u32 %v474, 7
      %v476 = vsub.s32 1, %v475
      %v477 = vrot.slane %v347, %v476
      %v480 = vmul.f32 %v461, %v473
      %v481 = vmul.f32 %v462, %v477
      %v482 = vmul.f32 %v463, %v473
      %v483 = vmul.f32 %v464, %v477
      %v484 = vmul.f32 %v465, %v473
      %v485 = vmul.f32 %v466, %v477
      %v486 = vmul.f32 %v467, %v473
      %v487 = vmul.f32 %v468, %v477
      %v488 = vadd.f32 %v480, %v481
      %489 = vadd.xlane.f32.xlu0 %v488
      %v490 = vpop.xlane.xlu0 %489
      %v491 = vadd.f32 %v482, %v483
      %492 = vadd.xlane.f32.xlu0 %v491
      %v493 = vpop.xlane.xlu0 %492
      %v494 = vadd.f32 %v484, %v485
      %495 = vadd.xlane.f32.xlu0 %v494
      %v496 = vpop.xlane.xlu0 %495
      %v497 = vadd.f32 %v486, %v487
      %498 = vadd.xlane.f32.xlu0 %v497
      %v499 = vpop.xlane.xlu0 %498
      %v500 = vadd.f32 %v461, %v462
      %501 = vadd.xlane.f32.xlu0 %v500
      %v502 = vpop.xlane.xlu0 %501
      %v503 = vadd.f32 %v463, %v464
      %504 = vadd.xlane.f32.xlu0 %v503
      %v505 = vpop.xlane.xlu0 %504
      %v506 = vadd.f32 %v465, %v466
      %507 = vadd.xlane.f32.xlu0 %v506
      %v508 = vpop.xlane.xlu0 %507
      %v509 = vadd.f32 %v467, %v468
      %510 = vadd.xlane.f32.xlu0 %v509
      %v511 = vpop.xlane.xlu0 %510
      %v512 = vadd.f32 %v502, 1e-06
      %v513 = vadd.f32 %v505, 1e-06
      %v514 = vadd.f32 %v508, 1e-06
      %v515 = vadd.f32 %v511, 1e-06
      %v516 = vrcp.pop %v512
      %v517 = vrcp.pop %v513
      %v518 = vrcp.pop %v514
      %v519 = vrcp.pop %v515
      %v520 = vmul.f32 %v490, %v516
      %v521 = vmul.f32 %v493, %v517
      %v522 = vmul.f32 %v496, %v518
      %v523 = vmul.f32 %v499, %v519
      %v524 = vmul.f32 %v520, %v351
      %v525 = vmul.f32 %v521, %v352
      %v526 = vmul.f32 %v522, %v353
      %v527 = vmul.f32 %v523, %v354
      %v528 = vadd.f32 %v333, %v524
      %v529 = vadd.f32 %v333, %v525
      %v530 = vadd.f32 %v333, %v526
      %v531 = vadd.f32 %v333, %v527
      %v532 = vadd.f32 %v335, %v524
      %v533 = vadd.f32 %v335, %v525
      %v534 = vadd.f32 %v335, %v526
      %v535 = vadd.f32 %v335, %v527
      %vm536 = vcmask 7168
      %v537 = vsel %vm536, %v528, %v532
      %v538 = vsel %vm536, %v529, %v533
      %v539 = vsel %vm536, %v530, %v534
      %v540 = vsel %vm536, %v531, %v535
      %v541 = vld [vmem:[%s4] sm:$0xff]
      %vm542 = vcmask 261120
      %v544 = vsel %vm542, %v541, 0
      %546 = vmatprep.subr.mxu0 0.0
      %547 = vmatpush1.msra.mxu0 %v537
      %548 = vmatprep.subr.mxu0 0.0
      %549 = vmatpush1.msra.mxu0 %v538
      %550 = vmatprep.subr.mxu0 0.0
      %551 = vmatpush1.msra.mxu0 %v539
      %552 = vmatprep.subr.mxu0 0.0
      %553 = vmatpush1.msra.mxu0 %v540
      %554 = vmatprep.subr.mxu0 0.0
      %555 = vmatpush1.msra.mxu0 0.0
      %556 = vmatprep.subr.mxu0 0.0
      %557 = vmatpush1.msra.mxu0 0.0
      %558 = vmatprep.subr.mxu0 0.0
      %559 = vmatpush1.msra.mxu0 0.0
      %560 = vmatprep.subr.mxu0 0.0
      %561 = vmatpush1.msra.mxu0 0.0
      %562 = vmatprep.subr.mxu0 0.0
      %563 = vmatpush1.msra.mxu0 0.0
      %564 = vmatprep.subr.mxu0 0.0
      %565 = vmatpush1.msra.mxu0 0.0
      %566 = vmatprep.subr.mxu0 0.0
      %567 = vmatpush1.msra.mxu0 0.0
      %568 = vmatprep.subr.mxu0 0.0
      %569 = vmatpush1.msra.mxu0 0.0
      %570 = vmatprep.subr.mxu0 0.0
      %571 = vmatpush1.msra.mxu0 0.0
      %572 = vmatprep.subr.mxu0 0.0
      %573 = vmatpush1.msra.mxu0 0.0
      %574 = vmatprep.subr.mxu0 0.0
      %575 = vmatpush1.msra.mxu0 0.0
      %576 = vmatprep.subr.mxu0 0.0
      %577 = vmatpush1.msra.mxu0 0.0
      %578 = vmatprep.subr.mxu0 0.0
      %579 = vmatpush1.msra.mxu0 0.0
      %580 = vmatprep.subr.mxu0 0.0
      %581 = vmatpush1.msra.mxu0 0.0
      %582 = vmatprep.subr.mxu0 0.0
      %583 = vmatpush1.msra.mxu0 0.0
      %584 = vmatprep.subr.mxu0 0.0
      %585 = vmatpush1.msra.mxu0 0.0
      %586 = vmatprep.subr.mxu0 0.0
      %587 = vmatpush1.msra.mxu0 0.0
      %588 = vmatprep.subr.mxu0 0.0
      %589 = vmatpush1.msra.mxu0 0.0
      %590 = vmatprep.subr.mxu0 0.0
      %591 = vmatpush1.msra.mxu0 0.0
      %592 = vmatprep.subr.mxu0 0.0
      %593 = vmatpush1.msra.mxu0 0.0
      %594 = vmatprep.subr.mxu0 0.0
      %595 = vmatpush1.msra.mxu0 0.0
      %596 = vmatprep.subr.mxu0 0.0
      %597 = vmatpush1.msra.mxu0 0.0
      %598 = vmatprep.subr.mxu0 0.0
      %599 = vmatpush1.msra.mxu0 0.0
      %600 = vmatprep.subr.mxu0 0.0
      %601 = vmatpush1.msra.mxu0 0.0
      %602 = vmatprep.subr.mxu0 0.0
      %603 = vmatpush1.msra.mxu0 0.0
      %604 = vmatprep.subr.mxu0 0.0
      %605 = vmatpush1.msra.mxu0 0.0
      %606 = vmatprep.subr.mxu0 0.0
      %607 = vmatpush1.msra.mxu0 0.0
      %608 = vmatprep.subr.mxu0 0.0
      %609 = vmatpush1.msra.mxu0 0.0
      %610 = vmatprep.mubr.f32.mxu0 0.0
      %611 = vmatmul.mubr.f32.gmra.mrb[0].mxu0 %v544
      %v612 = vpop.f32.mrb[0].mxu0
      %v613 = vadd.f32 0.0, %v612
      %v614 = vpop.f32.mrb[0].mxu0
      %615 = vdwg.mxu0
      %v616 = vld [vmem:[%s5] sm:$0xff]
      %v617 = vld [vmem:[%s5 + $0x8] sm:$0xff]
      %v618 = vld [vmem:[%s5 + $0x10] sm:$0xff]
      %v619 = vld [vmem:[%s5 + $0x18] sm:$0xff]
      %vm620 = vcmask 64512
      %v622 = vsel %vm620, %v616, 0
      %v625 = vsel %vm620, %v617, 0
      %v628 = vsel %vm620, %v618, 0
      %v631 = vsel %vm620, %v619, 0
      %633 = vmatprep.subr.mxu0 0.0
      %634 = vmatpush1.msra.mxu0 %v613
      %635 = vmatprep.subr.mxu0 0.0
      %636 = vmatpush1.msra.mxu0 0.0
      %637 = vmatprep.subr.mxu0 0.0
      %638 = vmatpush1.msra.mxu0 0.0
      %639 = vmatprep.subr.mxu0 0.0
      %640 = vmatpush1.msra.mxu0 0.0
      %641 = vmatprep.subr.mxu0 0.0
      %642 = vmatpush1.msra.mxu0 0.0
      %643 = vmatprep.subr.mxu0 0.0
      %644 = vmatpush1.msra.mxu0 0.0
      %645 = vmatprep.subr.mxu0 0.0
      %646 = vmatpush1.msra.mxu0 0.0
      %647 = vmatprep.subr.mxu0 0.0
      %648 = vmatpush1.msra.mxu0 0.0
      %649 = vmatprep.subr.mxu0 0.0
      %650 = vmatpush1.msra.mxu0 0.0
      %651 = vmatprep.subr.mxu0 0.0
      %652 = vmatpush1.msra.mxu0 0.0
      %653 = vmatprep.subr.mxu0 0.0
      %654 = vmatpush1.msra.mxu0 0.0
      %655 = vmatprep.subr.mxu0 0.0
      %656 = vmatpush1.msra.mxu0 0.0
      %657 = vmatprep.subr.mxu0 0.0
      %658 = vmatpush1.msra.mxu0 0.0
      %659 = vmatprep.subr.mxu0 0.0
      %660 = vmatpush1.msra.mxu0 0.0
      %661 = vmatprep.subr.mxu0 0.0
      %662 = vmatpush1.msra.mxu0 0.0
      %663 = vmatprep.subr.mxu0 0.0
      %664 = vmatpush1.msra.mxu0 0.0
      %665 = vmatprep.subr.mxu0 0.0
      %666 = vmatpush1.msra.mxu0 0.0
      %667 = vmatprep.subr.mxu0 0.0
      %668 = vmatpush1.msra.mxu0 0.0
      %669 = vmatprep.subr.mxu0 0.0
      %670 = vmatpush1.msra.mxu0 0.0
      %671 = vmatprep.subr.mxu0 0.0
      %672 = vmatpush1.msra.mxu0 0.0
      %673 = vmatprep.subr.mxu0 0.0
      %674 = vmatpush1.msra.mxu0 0.0
      %675 = vmatprep.subr.mxu0 0.0
      %676 = vmatpush1.msra.mxu0 0.0
      %677 = vmatprep.subr.mxu0 0.0
      %678 = vmatpush1.msra.mxu0 0.0
      %679 = vmatprep.subr.mxu0 0.0
      %680 = vmatpush1.msra.mxu0 0.0
      %681 = vmatprep.subr.mxu0 0.0
      %682 = vmatpush1.msra.mxu0 0.0
      %683 = vmatprep.subr.mxu0 0.0
      %684 = vmatpush1.msra.mxu0 0.0
      %685 = vmatprep.subr.mxu0 0.0
      %686 = vmatpush1.msra.mxu0 0.0
      %687 = vmatprep.subr.mxu0 0.0
      %688 = vmatpush1.msra.mxu0 0.0
      %689 = vmatprep.subr.mxu0 0.0
      %690 = vmatpush1.msra.mxu0 0.0
      %691 = vmatprep.subr.mxu0 0.0
      %692 = vmatpush1.msra.mxu0 0.0
      %693 = vmatprep.subr.mxu0 0.0
      %694 = vmatpush1.msra.mxu0 0.0
      %695 = vmatprep.subr.mxu0 0.0
      %696 = vmatpush1.msra.mxu0 0.0
      %697 = vmatprep.mubr.f32.mxu0 0.0
      %698 = vmatmul.mubr.f32.gmra.mrb[0].mxu0 %v622
      %v699 = vpop.f32.mrb[0].mxu0
      %v700 = vadd.f32 0.0, %v699
      %v701 = vpop.f32.mrb[0].mxu0
      %702 = vmatprep.mubr.f32.mxu0 0.0
      %703 = vmatmul.mubr.f32.gmra.mrb[0].mxu0 %v625
      %v704 = vpop.f32.mrb[0].mxu0
      %v705 = vadd.f32 0.0, %v704
      %v706 = vpop.f32.mrb[0].mxu0
      %707 = vmatprep.mubr.f32.mxu0 0.0
      %708 = vmatmul.mubr.f32.gmra.mrb[0].mxu0 %v628
      %v709 = vpop.f32.mrb[0].mxu0
      %v710 = vadd.f32 0.0, %v709
      %v711 = vpop.f32.mrb[0].mxu0
      %712 = vmatprep.mubr.f32.mxu0 0.0
      %713 = vmatmul.mubr.f32.gmra.mrb[0].mxu0 %v631
      %v714 = vpop.f32.mrb[0].mxu0
      %v715 = vadd.f32 0.0, %v714
      %v716 = vpop.f32.mrb[0].mxu0
      %717 = vdwg.mxu0
      %v718 = vsel %vm536, %v700, 0.0
      %v719 = vsel %vm536, %v705, 0.0
      %v720 = vadd.f32 %v718, %v719
      %v721 = vsel %vm536, %v710, 0.0
      %v722 = vadd.f32 %v720, %v721
      %v723 = vsel %vm536, %v715, 0.0
      %v724 = vadd.f32 %v722, %v723
      %725 = vadd.xlane.f32.xlu0 %v724
      %v726 = vpop.xlane.xlu0 %725
      %v727 = vrot.slane %v726, 4
      %v728 = vadd.f32 %v726, %v727
      %v729 = vrot.slane %v728, 2
      %v730 = vadd.f32 %v728, %v729
      %v731 = vrot.slane %v730, 1
      %v732 = vadd.f32 %v730, %v731
      %s733 = vtos %v732
      %v734 = vrcp.pop 32.0
      %s735 = vtos %v734
      %s736 = smul.f32 %s733, %s735
      %741 = vrot.lane.b32.xlu0 %v700, 127
      %v742 = vpop.permute.xlu0 %741
      %743 = vrot.lane.b32.xlu0 %v705, 127
      %v744 = vpop.permute.xlu0 %743
      %745 = vrot.lane.b32.xlu0 %v710, 127
      %v746 = vpop.permute.xlu0 %745
      %747 = vrot.lane.b32.xlu0 %v715, 127
      %v748 = vpop.permute.xlu0 %747
      %v753 = vsel %vm536, %v742, 0.0
      %v754 = vsel %vm536, %v744, 0.0
      %v755 = vadd.f32 %v753, %v754
      %v756 = vsel %vm536, %v746, 0.0
      %v757 = vadd.f32 %v755, %v756
      %v758 = vsel %vm536, %v748, 0.0
      %v759 = vadd.f32 %v757, %v758
      %760 = vadd.xlane.f32.xlu0 %v759
      %v761 = vpop.xlane.xlu0 %760
      %v762 = vrot.slane %v761, 4
      %v763 = vadd.f32 %v761, %v762
      %v764 = vrot.slane %v763, 2
      %v765 = vadd.f32 %v763, %v764
      %v766 = vrot.slane %v765, 1
      %v767 = vadd.f32 %v765, %v766
      %s768 = vtos %v767
      %v769 = vrcp.pop 32.0
      %s770 = vtos %v769
      %s771 = smul.f32 %s768, %s770
      %v772 = vstv %s736
      %v773 = vsub.f32 %v700, %v772
      %v774 = vsub.f32 %v705, %v772
      %v775 = vsub.f32 %v710, %v772
      %v776 = vsub.f32 %v715, %v772
      %v777 = vstv %s771
      %v778 = vsub.f32 %v700, %v777
      %v779 = vsub.f32 %v705, %v777
      %v780 = vsub.f32 %v710, %v777
      %v781 = vsub.f32 %v715, %v777
      %v782 = vmul.f32 %v773, %v773
      %v783 = vmul.f32 %v774, %v774
      %v784 = vmul.f32 %v775, %v775
      %v785 = vmul.f32 %v776, %v776
      %v786 = vmul.f32 %v778, %v778
      %v787 = vmul.f32 %v779, %v779
      %v788 = vmul.f32 %v780, %v780
      %v789 = vmul.f32 %v781, %v781
      %794 = vrot.lane.b32.xlu0 %v786, 127
      %v795 = vpop.permute.xlu0 %794
      %796 = vrot.lane.b32.xlu0 %v787, 127
      %v797 = vpop.permute.xlu0 %796
      %798 = vrot.lane.b32.xlu0 %v788, 127
      %v799 = vpop.permute.xlu0 %798
      %800 = vrot.lane.b32.xlu0 %v789, 127
      %v801 = vpop.permute.xlu0 %800
      %v806 = vadd.f32 %v782, %v795
      %v807 = vadd.f32 %v783, %v797
      %v808 = vadd.f32 %v784, %v799
      %v809 = vadd.f32 %v785, %v801
      %v810 = vadd.f32 %v806, 1e-06
      %v811 = vadd.f32 %v807, 1e-06
      %v812 = vadd.f32 %v808, 1e-06
      %v813 = vadd.f32 %v809, 1e-06
      %v814 = vrsqrt.pop %v810
      %v815 = vmul.f32 %v810, %v814
      %vm816 = vcmp.eq.f32.partialorder %v810, inf
      %v817 = vsel %vm816, %v810, %v815
      %vm818 = vcmp.eq.f32.partialorder %v810, 0.0
      %v819 = vand.u32 %v810, 2147483648
      %v820 = vsel %vm818, %v819, %v817
      %v821 = vrsqrt.pop %v811
      %v822 = vmul.f32 %v811, %v821
      %vm823 = vcmp.eq.f32.partialorder %v811, inf
      %v824 = vsel %vm823, %v811, %v822
      %vm825 = vcmp.eq.f32.partialorder %v811, 0.0
      %v826 = vand.u32 %v811, 2147483648
      %v827 = vsel %vm825, %v826, %v824
      %v828 = vrsqrt.pop %v812
      %v829 = vmul.f32 %v812, %v828
      %vm830 = vcmp.eq.f32.partialorder %v812, inf
      %v831 = vsel %vm830, %v812, %v829
      %vm832 = vcmp.eq.f32.partialorder %v812, 0.0
      %v833 = vand.u32 %v812, 2147483648
      %v834 = vsel %vm832, %v833, %v831
      %v835 = vrsqrt.pop %v813
      %v836 = vmul.f32 %v813, %v835
      %vm837 = vcmp.eq.f32.partialorder %v813, inf
      %v838 = vsel %vm837, %v813, %v836
      %vm839 = vcmp.eq.f32.partialorder %v813, 0.0
      %v840 = vand.u32 %v813, 2147483648
      %v841 = vsel %vm839, %v840, %v838
      %v842 = vrcp.pop %v820
      %v843 = vrcp.pop %v827
      %v844 = vrcp.pop %v834
      %v845 = vrcp.pop %v841
      %v846 = vmul.f32 %v773, %v842
      %v847 = vmul.f32 %v774, %v843
      %v848 = vmul.f32 %v775, %v844
      %v849 = vmul.f32 %v776, %v845
      %854 = vrot.lane.b32.xlu0 %v842, 1
      %v855 = vpop.permute.xlu0 %854
      %856 = vrot.lane.b32.xlu0 %v843, 1
      %v857 = vpop.permute.xlu0 %856
      %858 = vrot.lane.b32.xlu0 %v844, 1
      %v859 = vpop.permute.xlu0 %858
      %860 = vrot.lane.b32.xlu0 %v845, 1
      %v861 = vpop.permute.xlu0 %860
      %v866 = vmul.f32 %v778, %v855
      %v867 = vmul.f32 %v779, %v857
      %v868 = vmul.f32 %v780, %v859
      %v869 = vmul.f32 %v781, %v861
      %v870 = vsub.f32 %v250, %v772
      %v871 = vsub.f32 %v251, %v777
      %v872 = vmul.f32 %v870, %v870
      %v873 = vmul.f32 %v871, %v871
      %v874 = vadd.f32 %v872, %v873
      %v875 = vadd.f32 %v874, 1e-06
      %v876 = vrsqrt.pop %v875
      %v877 = vmul.f32 %v875, %v876
      %vm878 = vcmp.eq.f32.partialorder %v875, inf
      %v879 = vsel %vm878, %v875, %v877
      %vm880 = vcmp.eq.f32.partialorder %v875, 0.0
      %v881 = vand.u32 %v875, 2147483648
      %v882 = vsel %vm880, %v881, %v879
      %v883 = vrcp.pop %v882
      %v884 = vmul.f32 %v870, %v883
      %v885 = vmul.f32 %v871, %v883
      %887 = vset.pattern.permute.xlu0 0
      %888 = vperm.xlu0 %887, %v846
      %v889 = vpop.permute.xlu0 %888
      %892 = vset.pattern.permute.xlu0 0
      %893 = vperm.xlu0 %892, %v847
      %v894 = vpop.permute.xlu0 %893
      %897 = vset.pattern.permute.xlu0 0
      %898 = vperm.xlu0 %897, %v848
      %v899 = vpop.permute.xlu0 %898
      %902 = vset.pattern.permute.xlu0 0
      %903 = vperm.xlu0 %902, %v849
      %v904 = vpop.permute.xlu0 %903
      %v907 = vlaneseq
      %v908 = vshrl.u32 %v907, 7
      %v909 = vsub.s32 0, %v908
      %v910 = vrot.slane %v884, %v909
      %v911 = vlaneseq
      %v912 = vshrl.u32 %v911, 7
      %v913 = vsub.s32 1, %v912
      %v914 = vrot.slane %v884, %v913
      %v917 = vmul.f32 %v889, %v910
      %v918 = vmul.f32 %v889, %v914
      %v919 = vmul.f32 %v894, %v910
      %v920 = vmul.f32 %v894, %v914
      %v921 = vmul.f32 %v899, %v910
      %v922 = vmul.f32 %v899, %v914
      %v923 = vmul.f32 %v904, %v910
      %v924 = vmul.f32 %v904, %v914
      %926 = vset.pattern.permute.xlu0 1
      %927 = vperm.xlu0 %926, %v866
      %v928 = vpop.permute.xlu0 %927
      %931 = vset.pattern.permute.xlu0 1
      %932 = vperm.xlu0 %931, %v867
      %v933 = vpop.permute.xlu0 %932
      %936 = vset.pattern.permute.xlu0 1
      %937 = vperm.xlu0 %936, %v868
      %v938 = vpop.permute.xlu0 %937
      %941 = vset.pattern.permute.xlu0 1
      %942 = vperm.xlu0 %941, %v869
      %v943 = vpop.permute.xlu0 %942
      %v946 = vlaneseq
      %v947 = vshrl.u32 %v946, 7
      %v948 = vsub.s32 0, %v947
      %v949 = vrot.slane %v885, %v948
      %v950 = vlaneseq
      %v951 = vshrl.u32 %v950, 7
      %v952 = vsub.s32 1, %v951
      %v953 = vrot.slane %v885, %v952
      %v956 = vmul.f32 %v928, %v949
      %v957 = vmul.f32 %v928, %v953
      %v958 = vmul.f32 %v933, %v949
      %v959 = vmul.f32 %v933, %v953
      %v960 = vmul.f32 %v938, %v949
      %v961 = vmul.f32 %v938, %v953
      %v962 = vmul.f32 %v943, %v949
      %v963 = vmul.f32 %v943, %v953
      %v964 = vadd.f32 %v917, %v956
      %v965 = vadd.f32 %v918, %v957
      %v966 = vadd.f32 %v919, %v958
      %v967 = vadd.f32 %v920, %v959
      %v968 = vadd.f32 %v921, %v960
      %v969 = vadd.f32 %v922, %v961
      %v970 = vadd.f32 %v923, %v962
      %v971 = vadd.f32 %v924, %v963
      %v972 = vmul.f32 %v964, 8.0
      %v973 = vmul.f32 %v965, 8.0
      %v974 = vmul.f32 %v966, 8.0
      %v975 = vmul.f32 %v967, 8.0
      %v976 = vmul.f32 %v968, 8.0
      %v977 = vmul.f32 %v969, 8.0
      %v978 = vmul.f32 %v970, 8.0
      %v979 = vmul.f32 %v971, 8.0
      %v980 = vmul.f32 %v972, 1.442695
      %v981 = vpow.pop %v980
      %v982 = vmul.f32 %v973, 1.442695
      %v983 = vpow.pop %v982
      %v984 = vmul.f32 %v974, 1.442695
      %v985 = vpow.pop %v984
      %v986 = vmul.f32 %v975, 1.442695
      %v987 = vpow.pop %v986
      %v988 = vmul.f32 %v976, 1.442695
      %v989 = vpow.pop %v988
      %v990 = vmul.f32 %v977, 1.442695
      %v991 = vpow.pop %v990
      %v992 = vmul.f32 %v978, 1.442695
      %v993 = vpow.pop %v992
      %v994 = vmul.f32 %v979, 1.442695
      %v995 = vpow.pop %v994
      %997 = vset.pattern.permute.xlu0 0
      %998 = vperm.xlu0 %997, %v820
      %v999 = vpop.permute.xlu0 %998
      %1002 = vset.pattern.permute.xlu0 0
      %1003 = vperm.xlu0 %1002, %v827
      %v1004 = vpop.permute.xlu0 %1003
      %1007 = vset.pattern.permute.xlu0 0
      %1008 = vperm.xlu0 %1007, %v834
      %v1009 = vpop.permute.xlu0 %1008
      %1012 = vset.pattern.permute.xlu0 0
      %1013 = vperm.xlu0 %1012, %v841
      %v1014 = vpop.permute.xlu0 %1013
      %v1016 = vmul.f32 %v981, %v999
      %v1017 = vmul.f32 %v983, %v999
      %v1018 = vmul.f32 %v985, %v1004
      %v1019 = vmul.f32 %v987, %v1004
      %v1020 = vmul.f32 %v989, %v1009
      %v1021 = vmul.f32 %v991, %v1009
      %v1022 = vmul.f32 %v993, %v1014
      %v1023 = vmul.f32 %v995, %v1014
      %v1024 = vadd.f32 %v1016, %v1018
      %v1025 = vadd.f32 %v1024, %v1020
      %v1026 = vadd.f32 %v1025, %v1022
      %v1027 = vrot.slane %v1026, 4
      %v1028 = vadd.f32 %v1026, %v1027
      %v1029 = vrot.slane %v1028, 2
      %v1030 = vadd.f32 %v1028, %v1029
      %v1031 = vrot.slane %v1030, 1
      %v1032 = vadd.f32 %v1030, %v1031
      %v1033 = vadd.f32 %v1017, %v1019
      %v1034 = vadd.f32 %v1033, %v1021
      %v1035 = vadd.f32 %v1034, %v1023
      %v1036 = vrot.slane %v1035, 4
      %v1037 = vadd.f32 %v1035, %v1036
      %v1038 = vrot.slane %v1037, 2
      %v1039 = vadd.f32 %v1037, %v1038
      %v1040 = vrot.slane %v1039, 1
      %v1041 = vadd.f32 %v1039, %v1040
      %v1042 = vadd.f32 %v981, %v985
      %v1043 = vadd.f32 %v1042, %v989
      %v1044 = vadd.f32 %v1043, %v993
      %v1045 = vrot.slane %v1044, 4
      %v1046 = vadd.f32 %v1044, %v1045
      %v1047 = vrot.slane %v1046, 2
      %v1048 = vadd.f32 %v1046, %v1047
      %v1049 = vrot.slane %v1048, 1
      %v1050 = vadd.f32 %v1048, %v1049
      %v1051 = vadd.f32 %v983, %v987
      %v1052 = vadd.f32 %v1051, %v991
      %v1053 = vadd.f32 %v1052, %v995
      %v1054 = vrot.slane %v1053, 4
      %v1055 = vadd.f32 %v1053, %v1054
      %v1056 = vrot.slane %v1055, 2
      %v1057 = vadd.f32 %v1055, %v1056
      %v1058 = vrot.slane %v1057, 1
      %v1059 = vadd.f32 %v1057, %v1058
      %v1060 = vadd.f32 %v1050, 1e-06
      %v1061 = vadd.f32 %v1059, 1e-06
      %v1062 = vrcp.pop %v1060
      %v1063 = vrcp.pop %v1061
      %v1064 = vmul.f32 %v1032, %v1062
      %v1065 = vmul.f32 %v1041, %v1063
      %v1067 = vlaneseq
      %v1068 = vshrl.u32 %v1067, 7
      %v1069 = vsub.s32 0, %v1068
      %v1070 = vrot.slane %v882, %v1069
      %v1071 = vlaneseq
      %v1072 = vshrl.u32 %v1071, 7
      %v1073 = vsub.s32 1, %v1072
      %v1074 = vrot.slane %v882, %v1073
      %v1077 = vsub.f32 %v1064, %v1070
      %v1078 = vsub.f32 %v1065, %v1074
      %v1079 = vmul.f32 %v1077, 2.0
      %v1080 = vmul.f32 %v1078, 2.0
      %v1081 = vsub.f32 0.0, %v1079
      %v1082 = vsub.f32 0.0, %v1080
      %v1083 = vmul.f32 %v1081, 1.442695
      %v1084 = vpow.pop %v1083
      %v1085 = vmul.f32 %v1082, 1.442695
      %v1086 = vpow.pop %v1085
      %v1087 = vadd.f32 %v1084, 1.0
      %v1088 = vadd.f32 %v1086, 1.0
      %v1089 = vrcp.pop %v1087
      %v1090 = vrcp.pop %v1088
      %v1091 = vsub.f32 1.0, %v1089
      %v1092 = vsub.f32 1.0, %v1090
      %v1095 = vrot.slane %v1089, 7
      %v1096 = vrot.slane %v1090, 7
      %v1099 = vsel %vm263, %v1091, %v1095
      %v1100 = vsel %vm263, %v1092, %v1096
      %v1103 = vcombine.low %v1099, %v1100
      %v1105 = vunpack.c.l.s4 1983009808
      %v1106 = vunpack.c.0.s8 %v1105
      %v1107 = vlaneseq
      %v1108 = vshrl.u32 %v1107, 7
      %v1109 = vsub.s32 %v1106, %v1108
      %v1110 = vrot.slane %v1103, %v1109
      %1112 = vst [vmem:[%s248] sm:$0xf] %v1110
      %p1113 = scmp.lt.s32.totalorder %s17, 1
      %s1114 = scalar_select %p1113, %s17, 1
      %s1115 = smul.addr %s1114, 2
      %s1116 = smul.addr %s1115, 2
      %s1117 = scalar_lea.vmem %s6, %s1116
      // Predicated region
      $region45: #{unet_ag_forward.27} parent=43 // pred_check
        %p1118 = pneg %p166
      $region46: #{unet_ag_forward.27} parent=43 // pred_check_branch
        %1120 = sbr.rel (%p1118) target = $region48
      $region47: #{unet_ag_forward.27} parent=43 // pred_region
        _
      $region48: #{unet_ag_forward.27} parent=43 // pred_fallthru
        _
    $region44: #{unet_ag_forward.27} parent=5 // pred_fallthru
      _
    %p1121 = scmp.le.s32.totalorder 2, %s12
    // Predicated region
    $region49: #{unet_ag_forward.27} parent=5 // pred_check
      %p1122 = pneg %p1121
    $region50: #{unet_ag_forward.27} parent=5 // pred_check_branch
      %1124 = sbr.rel (%p1122) target = $region52
    $region51: #{unet_ag_forward.27} parent=5 // pred_region
      %s1125 = ssub.s32 %s12, 2
      // Predicated region
      $region53: #{unet_ag_forward.27} parent=51 // pred_check
        %p1126 = pneg %p172
      $region54: #{unet_ag_forward.27} parent=51 // pred_check_branch
        %1128 = sbr.rel (%p1126) target = $region56
      $region55: #{unet_ag_forward.27} parent=51 // pred_region
        %p1129 = scmp.lt.s32.totalorder %s18, 1
        %s1130 = scalar_select %p1129, %s18, 1
        %s1131 = smul.addr %s1130, 2
        %s1132 = smul.addr %s1131, 2
        %s1133 = scalar_lea.vmem %s6, %s1132
      $region56: #{unet_ag_forward.27} parent=51 // pred_fallthru
        _
    $region52: #{unet_ag_forward.27} parent=5 // pred_fallthru
      _
  $region6: #{unet_ag_forward.27} parent=0 // loop_footer
    %s16 = sadd.s32 1, %s12
  $region7: #{unet_ag_forward.27} parent=0 // loop_footer_branch
    %11 = sbr.rel target = $region3
  $region8: #{unet_ag_forward.27} parent=0 // loop_exit
    _

</llo_original>
